<compile_context>
chip_gen: v5e
topology: v5e:2x2
jax: 0.10.0
libtpu: 0.0.40
codegen_flags: <defaults>
</compile_context>

<pallas_src>
import functools
import math

import jax
import jax.numpy as jnp
from jax.experimental import pallas as pl
from jax.experimental.pallas import tpu as pltpu


V_TH = 1.0      # v_threshold
DECAY = 0.5     # 1 / tau  (tau = 2.0, decay_input=True)
BN_EPS = 1e-5


def _bn_scale_shift(y, inv_n, eps):
    """Training-mode BatchNorm (gamma=1, beta=0): per-channel scale / shift."""
    mean = jnp.sum(y, axis=0, keepdims=True) * inv_n
    var = jnp.sum(y * y, axis=0, keepdims=True) * inv_n - mean * mean
    var = jnp.maximum(var, 0.0)            # guard E[y^2]-E[y]^2 cancellation -> no NaN
    scale = jax.lax.rsqrt(var + eps)
    return scale, -mean * scale


# ---------------------------------------------------------------------------
# Kernel 1: fused (linear_q | linear_k) + positional encoding + BN + LIF.
# Block-diagonal weight packs both projections into one 128-wide (lane-dense)
# output tile; single grid step, everything resident in VMEM.
# ---------------------------------------------------------------------------
def _qk_stage_kernel(x_ref, w_ref, pe_ref, o_ref, y_scr, *, num_t, nb, inv_n, eps):
    _, hw, c2 = pe_ref.shape
    b = nb // hw
    n = num_t * nb
    # bf16 operands, f32 MXU accumulation
    y = jnp.dot(x_ref[...], w_ref[...], preferred_element_type=jnp.float32)  # [N, 2C]
    # + positional encoding (single [T, HW, 2C] copy, broadcast over batch in-register)
    y = y.reshape(num_t, b, hw, c2) + pe_ref[...][:, None, :, :]
    y = y.reshape(n, c2)
    scale, shift = _bn_scale_shift(y, inv_n, eps)
    y_scr[...] = (y * scale + shift).reshape(y_scr.shape)       # BN applied once, dense
    v = jnp.zeros(y_scr.shape[1:], jnp.float32)                 # membrane potential
    for t in range(num_t):                                      # short static T: unrolled
        v = DECAY * (v + y_scr[t])                              # = v + (x - v)/tau, tau=2
        spk = (v >= V_TH).astype(jnp.float32)
        v = v - spk * V_TH                                      # soft reset (v_reset=None)
        o_ref[t] = spk.astype(o_ref.dtype)                      # spikes exact in bf16


def qk_stage(x_cat, w_blk, pe_cat, *, num_t, nb):
    n = x_cat.shape[0]
    c2 = pe_cat.shape[-1]
    kernel = functools.partial(_qk_stage_kernel, num_t=num_t, nb=nb,
                               inv_n=1.0 / n, eps=BN_EPS)
    return pl.pallas_call(
        kernel,
        out_shape=jax.ShapeDtypeStruct((num_t, nb, c2), jnp.bfloat16),
        grid_spec=pltpu.PrefetchScalarGridSpec(
            num_scalar_prefetch=0,
            grid=(1,),
            in_specs=[
                pl.BlockSpec(x_cat.shape, lambda i: (0, 0)),
                pl.BlockSpec(w_blk.shape, lambda i: (0, 0)),
                pl.BlockSpec(pe_cat.shape, lambda i: (0, 0, 0)),
            ],
            out_specs=pl.BlockSpec((num_t, nb, c2), lambda i: (0, 0, 0)),
            scratch_shapes=[pltpu.VMEM((num_t, nb, c2), jnp.float32)],
        ),
        compiler_params=pltpu.CompilerParams(dimension_semantics=("arbitrary",)),
    )(x_cat, w_blk, pe_cat)


# ---------------------------------------------------------------------------
# Kernel 2: fused linear_v(+bias)+PE and Hamming-distance attention, per batch.
# Grid over B is "parallel" (v7x can split across its 2 TensorCores).
# Emits heads already concatenated in the module's channel order [T, B, HW, C].
# ---------------------------------------------------------------------------
def _attn_kernel(vx_ref, wv_ref, pb_ref, qk_ref, vo_ref, sc_ref, *, n_head, c_v):
    t, _, hw, d = vx_ref.shape
    l = t * hw
    c = n_head * c_v
    # linear_v + (bias + positional encoding) -- bias/PE pre-combined in wrapper
    vx = vx_ref[...].reshape(l, d)                               # bf16
    vlin = jnp.dot(vx, wv_ref[...], preferred_element_type=jnp.float32)
    vlin = vlin + pb_ref[...].reshape(l, c)                      # [L, C] f32
    v_bf = vlin.astype(jnp.bfloat16)
    # spikes {0,1} -> {-1,+1}; exact in bf16. Hoisted out of the head loop.
    qk = qk_ref[...].reshape(l, 2 * c).astype(jnp.float32)
    qk_pm = (qk * 2.0 - 1.0).astype(jnp.bfloat16)
    inv_d = 1.0 / c_v
    outs = []
    for h in range(n_head):                                      # n_head static, small
        q_h = qk_pm[:, h * c_v:(h + 1) * c_v]
        k_h = qk_pm[:, c + h * c_v:c + (h + 1) * c_v]
        s = jax.lax.dot_general(q_h, k_h, (((1,), (1,)), ((), ())),
                                preferred_element_type=jnp.float32)   # q @ k^T, [L, L]
        logits = 0.5 + s * (0.5 * inv_d)                         # == 0.5*(1 + s/d), in [0,1]
        p = jnp.exp(logits)                                      # bounded -> no max shift
        probs = p * pl.reciprocal(jnp.sum(p, axis=-1, keepdims=True))
        sc_ref[0, h] = probs                                     # returned score (f32)
        outs.append(jnp.dot(probs.astype(jnp.bfloat16), v_bf[:, h * c_v:(h + 1) * c_v],
                            preferred_element_type=jnp.float32))  # [L, c_v]
    # concat heads along channels == module's concat(); single lane-dense store.
    vo_ref[...] = jnp.concatenate(outs, axis=-1).reshape(t, 1, hw, c)


def hamming_attention(v_in, wv_t, pe_bias, qk_spk, *, n_head):
    t, b, hw, d = v_in.shape
    c = wv_t.shape[1]
    c_v = c // n_head
    l = t * hw
    kernel = functools.partial(_attn_kernel, n_head=n_head, c_v=c_v)
    return pl.pallas_call(
        kernel,
        out_shape=(
            jax.ShapeDtypeStruct((t, b, hw, c), jnp.float32),
            jax.ShapeDtypeStruct((b, n_head, l, l), jnp.float32),
        ),
        grid_spec=pltpu.PrefetchScalarGridSpec(
            num_scalar_prefetch=0,
            grid=(b,),
            in_specs=[
                pl.BlockSpec((t, 1, hw, d), lambda i: (0, i, 0, 0)),
                pl.BlockSpec((d, c), lambda i: (0, 0)),
                pl.BlockSpec((t, hw, c), lambda i: (0, 0, 0)),      # PE shared over batch
                pl.BlockSpec((t, 1, hw, 2 * c), lambda i: (0, i, 0, 0)),
            ],
            out_specs=[
                pl.BlockSpec((t, 1, hw, c), lambda i: (0, i, 0, 0)),
                pl.BlockSpec((1, n_head, l, l), lambda i: (i, 0, 0, 0)),
            ],
        ),
        compiler_params=pltpu.CompilerParams(dimension_semantics=("parallel",)),
    )(v_in, wv_t, pe_bias, qk_spk)


# ---------------------------------------------------------------------------
# Kernel 3: fused bn_v + sn_v + linear_out(+bias) + bn_out + sn_out.
# Single grid step; spikes and the projected activations never leave VMEM.
# ---------------------------------------------------------------------------
def _out_stage_kernel(va_ref, w_ref, b_ref, o_ref, xn_scr, spk_scr, y2_scr,
                      *, num_t, inv_n, eps):
    va = va_ref[...]                                             # [N, C1] f32
    scale1, shift1 = _bn_scale_shift(va, inv_n, eps)             # bn_v
    xn_scr[...] = (va * scale1 + shift1).reshape(xn_scr.shape)
    v = jnp.zeros(xn_scr.shape[1:], jnp.float32)
    for t in range(num_t):                                       # sn_v
        v = DECAY * (v + xn_scr[t])
        spk = (v >= V_TH).astype(jnp.float32)
        v = v - spk * V_TH
        spk_scr[t] = spk.astype(spk_scr.dtype)                   # bf16 spikes (exact)
    # linear_out (+ bias), bf16 operands, f32 accumulation
    spk_all = spk_scr[...].reshape(va.shape[0], xn_scr.shape[-1])
    y2 = jnp.dot(spk_all, w_ref[...], preferred_element_type=jnp.float32)
    y2 = y2 + b_ref[...]
    scale2, shift2 = _bn_scale_shift(y2, inv_n, eps)             # bn_out
    y2_scr[...] = (y2 * scale2 + shift2).reshape(y2_scr.shape)
    v2 = jnp.zeros(y2_scr.shape[1:], jnp.float32)
    for t in range(num_t):                                       # sn_out
        v2 = DECAY * (v2 + y2_scr[t])
        spk2 = (v2 >= V_TH).astype(jnp.float32)
        v2 = v2 - spk2 * V_TH
        o_ref[t] = spk2


def out_stage(v_att, wo_t, b_out, *, num_t, nb):
    n, c1 = v_att.shape
    c2 = wo_t.shape[1]
    kernel = functools.partial(_out_stage_kernel, num_t=num_t, inv_n=1.0 / n, eps=BN_EPS)
    return pl.pallas_call(
        kernel,
        out_shape=jax.ShapeDtypeStruct((num_t, nb, c2), jnp.float32),
        grid_spec=pltpu.PrefetchScalarGridSpec(
            num_scalar_prefetch=0,
            grid=(1,),
            in_specs=[
                pl.BlockSpec((n, c1), lambda i: (0, 0)),
                pl.BlockSpec((c1, c2), lambda i: (0, 0)),
                pl.BlockSpec((1, c2), lambda i: (0, 0)),
            ],
            out_specs=pl.BlockSpec((num_t, nb, c2), lambda i: (0, 0, 0)),
            scratch_shapes=[
                pltpu.VMEM((num_t, nb, c1), jnp.float32),
                pltpu.VMEM((num_t, nb, c1), jnp.bfloat16),
                pltpu.VMEM((num_t, nb, c2), jnp.float32),
            ],
        ),
        compiler_params=pltpu.CompilerParams(dimension_semantics=("arbitrary",)),
    )(v_att, wo_t, b_out)


# ---------------------------------------------------------------------------
# Full MultiHeadAttention forward.  pe has batch dim of size 1 (shared over B).
# ---------------------------------------------------------------------------
def multi_head_attention(q, k, v, pe, wq, wk, wv, bv, wo, bo, *, n_head):
    t_, b_, h_, w_, d = q.shape
    c = wq.shape[0]                       # d_hidden
    hw = h_ * w_
    n = t_ * b_ * hw
    nb = b_ * hw

    # PE is shared across the batch axis: keep one [T, HW, C] copy (no B broadcast).
    pe_r = pe.reshape(t_, hw, c).astype(jnp.float32)

    # --- Q/K projections via block-diagonal weight -> one 128-lane-dense stage.
    x_cat = jnp.concatenate([q.reshape(n, d), k.reshape(n, d)], axis=-1)
    x_cat = x_cat.astype(jnp.bfloat16)
    zero = jnp.zeros((d, c), jnp.float32)
    w_blk = jnp.concatenate(
        [jnp.concatenate([wq.T, zero], axis=1),
         jnp.concatenate([zero, wk.T], axis=1)], axis=0).astype(jnp.bfloat16)
    pe_cat = jnp.concatenate([pe_r, pe_r], axis=-1)                     # [T, HW, 2C]
    qk_spk = qk_stage(x_cat, w_blk, pe_cat, num_t=t_, nb=nb)            # [T, NB, 2C] bf16
    qk_spk = qk_spk.reshape(t_, b_, hw, 2 * c)

    # --- linear_v (+bias) + PE fused into the Hamming attention kernel.
    v_in = v.reshape(t_, b_, hw, d).astype(jnp.bfloat16)
    pe_bias = pe_r + bv.reshape(1, 1, c)                                # [T, HW, C]
    v_att, score = hamming_attention(v_in, wv.T.astype(jnp.bfloat16),
                                     pe_bias, qk_spk, n_head=n_head)
    # v_att already in concat()'d layout [T, B, HW, head*c_v]  (no transpose needed)

    # --- bn_v + sn_v + linear_out + bn_out + sn_out, one fused call.
    out = out_stage(v_att.reshape(n, c), wo.T.astype(jnp.bfloat16),
                    bo.reshape(1, -1), num_t=t_, nb=nb)
    return out.reshape(t_, b_, h_, w_, wo.shape[0]), score


if __name__ == "__main__":
    T, B, H, W = 4, 2, 8, 8
    d_model, d_hidden, n_head = 32, 64, 2

    key = jax.random.PRNGKey(0)
    kq, kk, kv, kpe, kwq, kwk, kwv, kbv, kwo, kbo = jax.random.split(key, 10)

    q = jax.random.normal(kq, (T, B, H, W, d_model), jnp.float32)
    k = jax.random.normal(kk, (T, B, H, W, d_model), jnp.float32)
    v = jax.random.normal(kv, (T, B, H, W, d_model), jnp.float32)
    pe = jax.random.normal(kpe, (T, 1, H, W, d_hidden), jnp.float32)

    # kaiming_normal_(mode='fan_out', nonlinearity='relu'): std = sqrt(2 / out_features)
    std_h = math.sqrt(2.0 / d_hidden)
    wq = jax.random.normal(kwq, (d_hidden, d_model), jnp.float32) * std_h
    wk = jax.random.normal(kwk, (d_hidden, d_model), jnp.float32) * std_h
    wv = jax.random.normal(kwv, (d_hidden, d_model), jnp.float32) * std_h
    bv = jax.random.uniform(kbv, (d_hidden,), jnp.float32,
                            -1.0 / math.sqrt(d_model), 1.0 / math.sqrt(d_model))
    std_o = math.sqrt(2.0 / d_model)
    wo = jax.random.normal(kwo, (d_model, d_hidden), jnp.float32) * std_o
    bo = jax.random.uniform(kbo, (d_model,), jnp.float32,
                            -1.0 / math.sqrt(d_hidden), 1.0 / math.sqrt(d_hidden))

    mha = jax.jit(functools.partial(multi_head_attention, n_head=n_head))
    out, score = mha(q, k, v, pe, wq, wk, wv, bv, wo, bo)
    jax.block_until_ready((out, score))
    assert out.shape == (T, B, H, W, d_model)
    assert score.shape == (B, n_head, T * H * W, T * H * W)
    print("KERNEL_OK")
</pallas_src>

<mosaic_0001>
module attributes {stable_mosaic.version = 11 : i64} {
  func.func @_qk_stage_kernel(%arg0: i32, %arg1: memref<512x64xbf16, #tpu.memory_space<vmem>>, %arg2: memref<64x128xbf16, #tpu.memory_space<vmem>>, %arg3: memref<4x64x128xf32, #tpu.memory_space<vmem>>, %arg4: memref<4x128x128xbf16, #tpu.memory_space<vmem>>, %arg5: memref<4x128x128xf32, #tpu.memory_space<vmem>>) attributes {dimension_semantics = [#tpu.dimension_semantics<arbitrary>], iteration_bounds = array<i64: 1>, scalar_prefetch = 0 : i64, scratch_operands = 1 : i64, tpu.core_type = #tpu.core_type<tc>, window_params = [{pipeline_mode = #tpu.pipeline_mode<synchronous>, transform_indices = @transform_0, window_bounds = array<i64: 512, 64>}, {pipeline_mode = #tpu.pipeline_mode<synchronous>, transform_indices = @transform_1, window_bounds = array<i64: 64, 128>}, {pipeline_mode = #tpu.pipeline_mode<synchronous>, transform_indices = @transform_2, window_bounds = array<i64: 4, 64, 128>}, {pipeline_mode = #tpu.pipeline_mode<synchronous>, transform_indices = @transform_3, window_bounds = array<i64: 4, 128, 128>}]} {
    %c0 = arith.constant 0 : index
    %c0_0 = arith.constant 0 : index
    %0 = vector.load %arg1[%c0, %c0_0] : memref<512x64xbf16, #tpu.memory_space<vmem>>, vector<512x64xbf16>
    %c0_1 = arith.constant 0 : index
    %c0_2 = arith.constant 0 : index
    %1 = vector.load %arg2[%c0_1, %c0_2] : memref<64x128xbf16, #tpu.memory_space<vmem>>, vector<64x128xbf16>
    %cst = arith.constant dense<0.000000e+00> : vector<512x128xf32>
    %2 = tpu.matmul %0, %1, %cst {dimension_numbers = #tpu.dot_dimension_numbers<[1], [0], [0], [1], [0, 0, 1, 1], [], []>} : vector<512x64xbf16>, vector<64x128xbf16>, vector<512x128xf32> -> vector<512x128xf32>
    %3 = vector.shape_cast %2 : vector<512x128xf32> to vector<4x2x64x128xf32>
    %c0_3 = arith.constant 0 : index
    %c0_4 = arith.constant 0 : index
    %c0_5 = arith.constant 0 : index
    %4 = vector.load %arg3[%c0_3, %c0_4, %c0_5] : memref<4x64x128xf32, #tpu.memory_space<vmem>>, vector<4x64x128xf32>
    %5 = vector.shape_cast %4 : vector<4x64x128xf32> to vector<4x1x64x128xf32>
    %6 = vector.broadcast %5 : vector<4x1x64x128xf32> to vector<4x2x64x128xf32>
    %7 = arith.addf %3, %6 : vector<4x2x64x128xf32>
    %8 = vector.shape_cast %7 : vector<4x2x64x128xf32> to vector<512x128xf32>
    %cst_6 = arith.constant dense<0.000000e+00> : vector<128xf32>
    %9 = vector.multi_reduction <add>, %8, %cst_6 [0] : vector<512x128xf32> to vector<128xf32>
    %10 = vector.shape_cast %9 : vector<128xf32> to vector<1x128xf32>
    %cst_7 = arith.constant 0.001953125 : f32
    %11 = vector.broadcast %cst_7 : f32 to vector<1x128xf32>
    %12 = arith.mulf %10, %11 : vector<1x128xf32>
    %13 = arith.mulf %8, %8 : vector<512x128xf32>
    %cst_8 = arith.constant dense<0.000000e+00> : vector<128xf32>
    %14 = vector.multi_reduction <add>, %13, %cst_8 [0] : vector<512x128xf32> to vector<128xf32>
    %15 = vector.shape_cast %14 : vector<128xf32> to vector<1x128xf32>
    %cst_9 = arith.constant 0.001953125 : f32
    %16 = vector.broadcast %cst_9 : f32 to vector<1x128xf32>
    %17 = arith.mulf %15, %16 : vector<1x128xf32>
    %18 = arith.mulf %12, %12 : vector<1x128xf32>
    %19 = arith.subf %17, %18 : vector<1x128xf32>
    %cst_10 = arith.constant 0.000000e+00 : f32
    %20 = vector.broadcast %cst_10 : f32 to vector<1x128xf32>
    %21 = arith.maximumf %19, %20 : vector<1x128xf32>
    %cst_11 = arith.constant 9.99999974E-6 : f32
    %22 = vector.broadcast %cst_11 : f32 to vector<1x128xf32>
    %23 = arith.addf %21, %22 : vector<1x128xf32>
    %24 = math.rsqrt %23 : vector<1x128xf32>
    %cst_12 = arith.constant 0.000000e+00 : f32
    %25 = vector.broadcast %cst_12 : f32 to vector<1x128xf32>
    %26 = arith.subf %25, %12 : vector<1x128xf32>
    %27 = arith.mulf %26, %24 : vector<1x128xf32>
    %28 = vector.broadcast %24 : vector<1x128xf32> to vector<512x128xf32>
    %29 = arith.mulf %8, %28 : vector<512x128xf32>
    %30 = vector.broadcast %27 : vector<1x128xf32> to vector<512x128xf32>
    %31 = arith.addf %29, %30 : vector<512x128xf32>
    %32 = vector.shape_cast %31 : vector<512x128xf32> to vector<4x128x128xf32>
    %c0_13 = arith.constant 0 : index
    %c0_14 = arith.constant 0 : index
    %c0_15 = arith.constant 0 : index
    %33 = vector.load %arg5[%c0_13, %c0_14, %c0_15] : memref<4x128x128xf32, #tpu.memory_space<vmem>>, vector<4x128x128xf32>
    tpu.vector_store %arg5[%c0_13, %c0_14, %c0_15], %32 {strides = array<i32>} : memref<4x128x128xf32, #tpu.memory_space<vmem>>, vector<4x128x128xf32>,
    %cst_16 = arith.constant 0.000000e+00 : f32
    %34 = vector.broadcast %cst_16 : f32 to vector<128x128xf32>
    %c0_17 = arith.constant 0 : index
    %c0_18 = arith.constant 0 : index
    %c0_19 = arith.constant 0 : index
    %35 = vector.load %arg5[%c0_17, %c0_18, %c0_19] : memref<4x128x128xf32, #tpu.memory_space<vmem>>, vector<1x128x128xf32>
    %36 = vector.shape_cast %35 : vector<1x128x128xf32> to vector<128x128xf32>
    %37 = arith.addf %34, %36 : vector<128x128xf32>
    %cst_20 = arith.constant 5.000000e-01 : f32
    %38 = vector.broadcast %cst_20 : f32 to vector<128x128xf32>
    %39 = arith.mulf %38, %37 : vector<128x128xf32>
    %cst_21 = arith.constant 1.000000e+00 : f32
    %40 = vector.broadcast %cst_21 : f32 to vector<128x128xf32>
    %41 = arith.cmpf oge, %39, %40 : vector<128x128xf32>
    %42 = arith.extui %41 : vector<128x128xi1> to vector<128x128xi32>
    %43 = arith.sitofp %42 : vector<128x128xi32> to vector<128x128xf32>
    %cst_22 = arith.constant 1.000000e+00 : f32
    %44 = vector.broadcast %cst_22 : f32 to vector<128x128xf32>
    %45 = arith.mulf %43, %44 : vector<128x128xf32>
    %46 = arith.subf %39, %45 : vector<128x128xf32>
    %47 = arith.truncf %43 : vector<128x128xf32> to vector<128x128xbf16>
    %c0_23 = arith.constant 0 : index
    %c0_24 = arith.constant 0 : index
    %c0_25 = arith.constant 0 : index
    %48 = vector.load %arg4[%c0_23, %c0_24, %c0_25] : memref<4x128x128xbf16, #tpu.memory_space<vmem>>, vector<1x128x128xbf16>
    %49 = vector.shape_cast %48 : vector<1x128x128xbf16> to vector<128x128xbf16>
    %50 = vector.shape_cast %47 : vector<128x128xbf16> to vector<1x128x128xbf16>
    tpu.vector_store %arg4[%c0_23, %c0_24, %c0_25], %50 {strides = array<i32>} : memref<4x128x128xbf16, #tpu.memory_space<vmem>>, vector<1x128x128xbf16>,
    %c1 = arith.constant 1 : index
    %c0_26 = arith.constant 0 : index
    %c0_27 = arith.constant 0 : index
    %51 = vector.load %arg5[%c1, %c0_26, %c0_27] : memref<4x128x128xf32, #tpu.memory_space<vmem>>, vector<1x128x128xf32>
    %52 = vector.shape_cast %51 : vector<1x128x128xf32> to vector<128x128xf32>
    %53 = arith.addf %46, %52 : vector<128x128xf32>
    %cst_28 = arith.constant 5.000000e-01 : f32
    %54 = vector.broadcast %cst_28 : f32 to vector<128x128xf32>
    %55 = arith.mulf %54, %53 : vector<128x128xf32>
    %cst_29 = arith.constant 1.000000e+00 : f32
    %56 = vector.broadcast %cst_29 : f32 to vector<128x128xf32>
    %57 = arith.cmpf oge, %55, %56 : vector<128x128xf32>
    %58 = arith.extui %57 : vector<128x128xi1> to vector<128x128xi32>
    %59 = arith.sitofp %58 : vector<128x128xi32> to vector<128x128xf32>
    %cst_30 = arith.constant 1.000000e+00 : f32
    %60 = vector.broadcast %cst_30 : f32 to vector<128x128xf32>
    %61 = arith.mulf %59, %60 : vector<128x128xf32>
    %62 = arith.subf %55, %61 : vector<128x128xf32>
    %63 = arith.truncf %59 : vector<128x128xf32> to vector<128x128xbf16>
    %c1_31 = arith.constant 1 : index
    %c0_32 = arith.constant 0 : index
    %c0_33 = arith.constant 0 : index
    %64 = vector.load %arg4[%c1_31, %c0_32, %c0_33] : memref<4x128x128xbf16, #tpu.memory_space<vmem>>, vector<1x128x128xbf16>
    %65 = vector.shape_cast %64 : vector<1x128x128xbf16> to vector<128x128xbf16>
    %66 = vector.shape_cast %63 : vector<128x128xbf16> to vector<1x128x128xbf16>
    tpu.vector_store %arg4[%c1_31, %c0_32, %c0_33], %66 {strides = array<i32>} : memref<4x128x128xbf16, #tpu.memory_space<vmem>>, vector<1x128x128xbf16>,
    %c2 = arith.constant 2 : index
    %c0_34 = arith.constant 0 : index
    %c0_35 = arith.constant 0 : index
    %67 = vector.load %arg5[%c2, %c0_34, %c0_35] : memref<4x128x128xf32, #tpu.memory_space<vmem>>, vector<1x128x128xf32>
    %68 = vector.shape_cast %67 : vector<1x128x128xf32> to vector<128x128xf32>
    %69 = arith.addf %62, %68 : vector<128x128xf32>
    %cst_36 = arith.constant 5.000000e-01 : f32
    %70 = vector.broadcast %cst_36 : f32 to vector<128x128xf32>
    %71 = arith.mulf %70, %69 : vector<128x128xf32>
    %cst_37 = arith.constant 1.000000e+00 : f32
    %72 = vector.broadcast %cst_37 : f32 to vector<128x128xf32>
    %73 = arith.cmpf oge, %71, %72 : vector<128x128xf32>
    %74 = arith.extui %73 : vector<128x128xi1> to vector<128x128xi32>
    %75 = arith.sitofp %74 : vector<128x128xi32> to vector<128x128xf32>
    %cst_38 = arith.constant 1.000000e+00 : f32
    %76 = vector.broadcast %cst_38 : f32 to vector<128x128xf32>
    %77 = arith.mulf %75, %76 : vector<128x128xf32>
    %78 = arith.subf %71, %77 : vector<128x128xf32>
    %79 = arith.truncf %75 : vector<128x128xf32> to vector<128x128xbf16>
    %c2_39 = arith.constant 2 : index
    %c0_40 = arith.constant 0 : index
    %c0_41 = arith.constant 0 : index
    %80 = vector.load %arg4[%c2_39, %c0_40, %c0_41] : memref<4x128x128xbf16, #tpu.memory_space<vmem>>, vector<1x128x128xbf16>
    %81 = vector.shape_cast %80 : vector<1x128x128xbf16> to vector<128x128xbf16>
    %82 = vector.shape_cast %79 : vector<128x128xbf16> to vector<1x128x128xbf16>
    tpu.vector_store %arg4[%c2_39, %c0_40, %c0_41], %82 {strides = array<i32>} : memref<4x128x128xbf16, #tpu.memory_space<vmem>>, vector<1x128x128xbf16>,
    %c3 = arith.constant 3 : index
    %c0_42 = arith.constant 0 : index
    %c0_43 = arith.constant 0 : index
    %83 = vector.load %arg5[%c3, %c0_42, %c0_43] : memref<4x128x128xf32, #tpu.memory_space<vmem>>, vector<1x128x128xf32>
    %84 = vector.shape_cast %83 : vector<1x128x128xf32> to vector<128x128xf32>
    %85 = arith.addf %78, %84 : vector<128x128xf32>
    %cst_44 = arith.constant 5.000000e-01 : f32
    %86 = vector.broadcast %cst_44 : f32 to vector<128x128xf32>
    %87 = arith.mulf %86, %85 : vector<128x128xf32>
    %cst_45 = arith.constant 1.000000e+00 : f32
    %88 = vector.broadcast %cst_45 : f32 to vector<128x128xf32>
    %89 = arith.cmpf oge, %87, %88 : vector<128x128xf32>
    %90 = arith.extui %89 : vector<128x128xi1> to vector<128x128xi32>
    %91 = arith.sitofp %90 : vector<128x128xi32> to vector<128x128xf32>
    %92 = arith.truncf %91 : vector<128x128xf32> to vector<128x128xbf16>
    %c3_46 = arith.constant 3 : index
    %c0_47 = arith.constant 0 : index
    %c0_48 = arith.constant 0 : index
    %93 = vector.load %arg4[%c3_46, %c0_47, %c0_48] : memref<4x128x128xbf16, #tpu.memory_space<vmem>>, vector<1x128x128xbf16>
    %94 = vector.shape_cast %93 : vector<1x128x128xbf16> to vector<128x128xbf16>
    %95 = vector.shape_cast %92 : vector<128x128xbf16> to vector<1x128x128xbf16>
    tpu.vector_store %arg4[%c3_46, %c0_47, %c0_48], %95 {strides = array<i32>} : memref<4x128x128xbf16, #tpu.memory_space<vmem>>, vector<1x128x128xbf16>,
    return
  }
  func.func @transform_0(%arg0: i32) -> (i32, i32) {
    %c0_i32 = arith.constant 0 : i32
    %c0_i32_0 = arith.constant 0 : i32
    %c0_i32_1 = arith.constant 0 : i32
    return %c0_i32, %c0_i32_0 : i32, i32
  }
  func.func @transform_1(%arg0: i32) -> (i32, i32) {
    %c0_i32 = arith.constant 0 : i32
    %c0_i32_0 = arith.constant 0 : i32
    %c0_i32_1 = arith.constant 0 : i32
    return %c0_i32, %c0_i32_0 : i32, i32
  }
  func.func @transform_2(%arg0: i32) -> (i32, i32, i32) {
    %c0_i32 = arith.constant 0 : i32
    %c0_i32_0 = arith.constant 0 : i32
    %c0_i32_1 = arith.constant 0 : i32
    %c0_i32_2 = arith.constant 0 : i32
    return %c0_i32, %c0_i32_0, %c0_i32_1 : i32, i32, i32
  }
  func.func @transform_3(%arg0: i32) -> (i32, i32, i32) {
    %c0_i32 = arith.constant 0 : i32
    %c0_i32_0 = arith.constant 0 : i32
    %c0_i32_1 = arith.constant 0 : i32
    %c0_i32_2 = arith.constant 0 : i32
    return %c0_i32, %c0_i32_0, %c0_i32_1 : i32, i32, i32
  }
}

module attributes {stable_mosaic.version = 11 : i64} {
  func.func @_attn_kernel(%arg0: i32, %arg1: memref<4x1x64x32xbf16, #tpu.memory_space<vmem>>, %arg2: memref<32x64xbf16, #tpu.memory_space<vmem>>, %arg3: memref<4x64x64xf32, #tpu.memory_space<vmem>>, %arg4: memref<4x1x64x128xbf16, #tpu.memory_space<vmem>>, %arg5: memref<4x1x64x64xf32, #tpu.memory_space<vmem>>, %arg6: memref<1x2x256x256xf32, #tpu.memory_space<vmem>>) attributes {dimension_semantics = [#tpu.dimension_semantics<parallel>], iteration_bounds = array<i64: 2>, scalar_prefetch = 0 : i64, scratch_operands = 0 : i64, tpu.core_type = #tpu.core_type<tc>, window_params = [{transform_indices = @transform_0, window_bounds = array<i64: 4, 1, 64, 32>}, {pipeline_mode = #tpu.pipeline_mode<synchronous>, transform_indices = @transform_1, window_bounds = array<i64: 32, 64>}, {pipeline_mode = #tpu.pipeline_mode<synchronous>, transform_indices = @transform_2, window_bounds = array<i64: 4, 64, 64>}, {transform_indices = @transform_3, window_bounds = array<i64: 4, 1, 64, 128>}, {transform_indices = @transform_4, window_bounds = array<i64: 4, 1, 64, 64>}, {transform_indices = @transform_5, window_bounds = array<i64: 1, 2, 256, 256>}]} {
    %c0 = arith.constant 0 : index
    %c0_0 = arith.constant 0 : index
    %c0_1 = arith.constant 0 : index
    %c0_2 = arith.constant 0 : index
    %0 = vector.load %arg1[%c0, %c0_0, %c0_1, %c0_2] : memref<4x1x64x32xbf16, #tpu.memory_space<vmem>>, vector<4x1x64x32xbf16>
    %1 = vector.shape_cast %0 : vector<4x1x64x32xbf16> to vector<256x32xbf16>
    %c0_3 = arith.constant 0 : index
    %c0_4 = arith.constant 0 : index
    %2 = vector.load %arg2[%c0_3, %c0_4] : memref<32x64xbf16, #tpu.memory_space<vmem>>, vector<32x64xbf16>
    %cst = arith.constant dense<0.000000e+00> : vector<256x64xf32>
    %3 = tpu.matmul %1, %2, %cst {dimension_numbers = #tpu.dot_dimension_numbers<[1], [0], [0], [1], [0, 0, 1, 1], [], []>} : vector<256x32xbf16>, vector<32x64xbf16>, vector<256x64xf32> -> vector<256x64xf32>
    %c0_5 = arith.constant 0 : index
    %c0_6 = arith.constant 0 : index
    %c0_7 = arith.constant 0 : index
    %4 = vector.load %arg3[%c0_5, %c0_6, %c0_7] : memref<4x64x64xf32, #tpu.memory_space<vmem>>, vector<4x64x64xf32>
    %5 = vector.shape_cast %4 : vector<4x64x64xf32> to vector<256x64xf32>
    %6 = arith.addf %3, %5 : vector<256x64xf32>
    %7 = arith.truncf %6 : vector<256x64xf32> to vector<256x64xbf16>
    %c0_8 = arith.constant 0 : index
    %c0_9 = arith.constant 0 : index
    %c0_10 = arith.constant 0 : index
    %c0_11 = arith.constant 0 : index
    %8 = vector.load %arg4[%c0_8, %c0_9, %c0_10, %c0_11] : memref<4x1x64x128xbf16, #tpu.memory_space<vmem>>, vector<4x1x64x128xbf16>
    %9 = vector.shape_cast %8 : vector<4x1x64x128xbf16> to vector<256x128xbf16>
    %10 = arith.extf %9 : vector<256x128xbf16> to vector<256x128xf32>
    %cst_12 = arith.constant 2.000000e+00 : f32
    %11 = vector.broadcast %cst_12 : f32 to vector<256x128xf32>
    %12 = arith.mulf %10, %11 : vector<256x128xf32>
    %cst_13 = arith.constant 1.000000e+00 : f32
    %13 = vector.broadcast %cst_13 : f32 to vector<256x128xf32>
    %14 = arith.subf %12, %13 : vector<256x128xf32>
    %15 = arith.truncf %14 : vector<256x128xf32> to vector<256x128xbf16>
    %16 = vector.extract_strided_slice %15 {offsets = [0, 0], sizes = [256, 32], strides = [1, 1]} : vector<256x128xbf16> to vector<256x32xbf16>
    %17 = vector.extract_strided_slice %15 {offsets = [0, 64], sizes = [256, 32], strides = [1, 1]} : vector<256x128xbf16> to vector<256x32xbf16>
    %cst_14 = arith.constant dense<0.000000e+00> : vector<256x256xf32>
    %18 = tpu.matmul %16, %17, %cst_14 {dimension_numbers = #tpu.dot_dimension_numbers<[1], [1], [0], [0], [0, 0, 1, 0], [], []>} : vector<256x32xbf16>, vector<256x32xbf16>, vector<256x256xf32> -> vector<256x256xf32>
    %cst_15 = arith.constant 1.562500e-02 : f32
    %19 = vector.broadcast %cst_15 : f32 to vector<256x256xf32>
    %20 = arith.mulf %18, %19 : vector<256x256xf32>
    %cst_16 = arith.constant 5.000000e-01 : f32
    %21 = vector.broadcast %cst_16 : f32 to vector<256x256xf32>
    %22 = arith.addf %21, %20 : vector<256x256xf32>
    %23 = math.exp %22 : vector<256x256xf32>
    %cst_17 = arith.constant dense<0.000000e+00> : vector<256xf32>
    %24 = vector.multi_reduction <add>, %23, %cst_17 [1] : vector<256x256xf32> to vector<256xf32>
    %25 = vector.shape_cast %24 : vector<256xf32> to vector<256x1xf32>
    %26 = tpu.reciprocal %25 : vector<256x1xf32> -> vector<256x1xf32>
    %27 = vector.broadcast %26 : vector<256x1xf32> to vector<256x256xf32>
    %28 = arith.mulf %23, %27 : vector<256x256xf32>
    %c0_18 = arith.constant 0 : index
    %c0_19 = arith.constant 0 : index
    %c0_20 = arith.constant 0 : index
    %c0_21 = arith.constant 0 : index
    %29 = vector.load %arg6[%c0_18, %c0_19, %c0_20, %c0_21] : memref<1x2x256x256xf32, #tpu.memory_space<vmem>>, vector<1x1x256x256xf32>
    %30 = vector.shape_cast %29 : vector<1x1x256x256xf32> to vector<256x256xf32>
    %31 = vector.shape_cast %28 : vector<256x256xf32> to vector<1x1x256x256xf32>
    tpu.vector_store %arg6[%c0_18, %c0_19, %c0_20, %c0_21], %31 {strides = array<i32>} : memref<1x2x256x256xf32, #tpu.memory_space<vmem>>, vector<1x1x256x256xf32>,
    %32 = arith.truncf %28 : vector<256x256xf32> to vector<256x256xbf16>
    %33 = vector.extract_strided_slice %7 {offsets = [0, 0], sizes = [256, 32], strides = [1, 1]} : vector<256x64xbf16> to vector<256x32xbf16>
    %cst_22 = arith.constant dense<0.000000e+00> : vector<256x32xf32>
    %34 = tpu.matmul %32, %33, %cst_22 {dimension_numbers = #tpu.dot_dimension_numbers<[1], [0], [0], [1], [0, 0, 1, 1], [], []>} : vector<256x256xbf16>, vector<256x32xbf16>, vector<256x32xf32> -> vector<256x32xf32>
    %35 = vector.extract_strided_slice %15 {offsets = [0, 32], sizes = [256, 32], strides = [1, 1]} : vector<256x128xbf16> to vector<256x32xbf16>
    %36 = vector.extract_strided_slice %15 {offsets = [0, 96], sizes = [256, 32], strides = [1, 1]} : vector<256x128xbf16> to vector<256x32xbf16>
    %cst_23 = arith.constant dense<0.000000e+00> : vector<256x256xf32>
    %37 = tpu.matmul %35, %36, %cst_23 {dimension_numbers = #tpu.dot_dimension_numbers<[1], [1], [0], [0], [0, 0, 1, 0], [], []>} : vector<256x32xbf16>, vector<256x32xbf16>, vector<256x256xf32> -> vector<256x256xf32>
    %cst_24 = arith.constant 1.562500e-02 : f32
    %38 = vector.broadcast %cst_24 : f32 to vector<256x256xf32>
    %39 = arith.mulf %37, %38 : vector<256x256xf32>
    %cst_25 = arith.constant 5.000000e-01 : f32
    %40 = vector.broadcast %cst_25 : f32 to vector<256x256xf32>
    %41 = arith.addf %40, %39 : vector<256x256xf32>
    %42 = math.exp %41 : vector<256x256xf32>
    %cst_26 = arith.constant dense<0.000000e+00> : vector<256xf32>
    %43 = vector.multi_reduction <add>, %42, %cst_26 [1] : vector<256x256xf32> to vector<256xf32>
    %44 = vector.shape_cast %43 : vector<256xf32> to vector<256x1xf32>
    %45 = tpu.reciprocal %44 : vector<256x1xf32> -> vector<256x1xf32>
    %46 = vector.broadcast %45 : vector<256x1xf32> to vector<256x256xf32>
    %47 = arith.mulf %42, %46 : vector<256x256xf32>
    %c0_27 = arith.constant 0 : index
    %c1 = arith.constant 1 : index
    %c0_28 = arith.constant 0 : index
    %c0_29 = arith.constant 0 : index
    %48 = vector.load %arg6[%c0_27, %c1, %c0_28, %c0_29] : memref<1x2x256x256xf32, #tpu.memory_space<vmem>>, vector<1x1x256x256xf32>
    %49 = vector.shape_cast %48 : vector<1x1x256x256xf32> to vector<256x256xf32>
    %50 = vector.shape_cast %47 : vector<256x256xf32> to vector<1x1x256x256xf32>
    tpu.vector_store %arg6[%c0_27, %c1, %c0_28, %c0_29], %50 {strides = array<i32>} : memref<1x2x256x256xf32, #tpu.memory_space<vmem>>, vector<1x1x256x256xf32>,
    %51 = arith.truncf %47 : vector<256x256xf32> to vector<256x256xbf16>
    %52 = vector.extract_strided_slice %7 {offsets = [0, 32], sizes = [256, 32], strides = [1, 1]} : vector<256x64xbf16> to vector<256x32xbf16>
    %cst_30 = arith.constant dense<0.000000e+00> : vector<256x32xf32>
    %53 = tpu.matmul %51, %52, %cst_30 {dimension_numbers = #tpu.dot_dimension_numbers<[1], [0], [0], [1], [0, 0, 1, 1], [], []>} : vector<256x256xbf16>, vector<256x32xbf16>, vector<256x32xf32> -> vector<256x32xf32>
    %54 = tpu.concatenate %34, %53 in 1 : vector<256x32xf32>, vector<256x32xf32> -> vector<256x64xf32>
    %55 = vector.shape_cast %54 : vector<256x64xf32> to vector<4x1x64x64xf32>
    %c0_31 = arith.constant 0 : index
    %c0_32 = arith.constant 0 : index
    %c0_33 = arith.constant 0 : index
    %c0_34 = arith.constant 0 : index
    %56 = vector.load %arg5[%c0_31, %c0_32, %c0_33, %c0_34] : memref<4x1x64x64xf32, #tpu.memory_space<vmem>>, vector<4x1x64x64xf32>
    tpu.vector_store %arg5[%c0_31, %c0_32, %c0_33, %c0_34], %55 {strides = array<i32>} : memref<4x1x64x64xf32, #tpu.memory_space<vmem>>, vector<4x1x64x64xf32>,
    return
  }
  func.func @transform_0(%arg0: i32) -> (i32, i32, i32, i32) {
    %c0_i32 = arith.constant 0 : i32
    %c0_i32_0 = arith.constant 0 : i32
    %c0_i32_1 = arith.constant 0 : i32
    %c0_i32_2 = arith.constant 0 : i32
    return %c0_i32, %arg0, %c0_i32_0, %c0_i32_1 : i32, i32, i32, i32
  }
  func.func @transform_1(%arg0: i32) -> (i32, i32) {
    %c0_i32 = arith.constant 0 : i32
    %c0_i32_0 = arith.constant 0 : i32
    %c0_i32_1 = arith.constant 0 : i32
    return %c0_i32, %c0_i32_0 : i32, i32
  }
  func.func @transform_2(%arg0: i32) -> (i32, i32, i32) {
    %c0_i32 = arith.constant 0 : i32
    %c0_i32_0 = arith.constant 0 : i32
    %c0_i32_1 = arith.constant 0 : i32
    %c0_i32_2 = arith.constant 0 : i32
    return %c0_i32, %c0_i32_0, %c0_i32_1 : i32, i32, i32
  }
  func.func @transform_3(%arg0: i32) -> (i32, i32, i32, i32) {
    %c0_i32 = arith.constant 0 : i32
    %c0_i32_0 = arith.constant 0 : i32
    %c0_i32_1 = arith.constant 0 : i32
    %c0_i32_2 = arith.constant 0 : i32
    return %c0_i32, %arg0, %c0_i32_0, %c0_i32_1 : i32, i32, i32, i32
  }
  func.func @transform_4(%arg0: i32) -> (i32, i32, i32, i32) {
    %c0_i32 = arith.constant 0 : i32
    %c0_i32_0 = arith.constant 0 : i32
    %c0_i32_1 = arith.constant 0 : i32
    %c0_i32_2 = arith.constant 0 : i32
    return %c0_i32, %arg0, %c0_i32_0, %c0_i32_1 : i32, i32, i32, i32
  }
  func.func @transform_5(%arg0: i32) -> (i32, i32, i32, i32) {
    %c0_i32 = arith.constant 0 : i32
    %c0_i32_0 = arith.constant 0 : i32
    %c0_i32_1 = arith.constant 0 : i32
    %c0_i32_2 = arith.constant 0 : i32
    return %arg0, %c0_i32, %c0_i32_0, %c0_i32_1 : i32, i32, i32, i32
  }
}

module attributes {stable_mosaic.version = 11 : i64} {
  func.func @_out_stage_kernel(%arg0: i32, %arg1: memref<512x64xf32, #tpu.memory_space<vmem>>, %arg2: memref<64x32xbf16, #tpu.memory_space<vmem>>, %arg3: memref<1x32xf32, #tpu.memory_space<vmem>>, %arg4: memref<4x128x32xf32, #tpu.memory_space<vmem>>, %arg5: memref<4x128x64xf32, #tpu.memory_space<vmem>>, %arg6: memref<4x128x64xbf16, #tpu.memory_space<vmem>>, %arg7: memref<4x128x32xf32, #tpu.memory_space<vmem>>) attributes {dimension_semantics = [#tpu.dimension_semantics<arbitrary>], iteration_bounds = array<i64: 1>, scalar_prefetch = 0 : i64, scratch_operands = 3 : i64, tpu.core_type = #tpu.core_type<tc>, window_params = [{pipeline_mode = #tpu.pipeline_mode<synchronous>, transform_indices = @transform_0, window_bounds = array<i64: 512, 64>}, {pipeline_mode = #tpu.pipeline_mode<synchronous>, transform_indices = @transform_1, window_bounds = array<i64: 64, 32>}, {pipeline_mode = #tpu.pipeline_mode<synchronous>, transform_indices = @transform_2, window_bounds = array<i64: 1, 32>}, {pipeline_mode = #tpu.pipeline_mode<synchronous>, transform_indices = @transform_3, window_bounds = array<i64: 4, 128, 32>}]} {
    %c0 = arith.constant 0 : index
    %c0_0 = arith.constant 0 : index
    %0 = vector.load %arg1[%c0, %c0_0] : memref<512x64xf32, #tpu.memory_space<vmem>>, vector<512x64xf32>
    %cst = arith.constant dense<0.000000e+00> : vector<64xf32>
    %1 = vector.multi_reduction <add>, %0, %cst [0] : vector<512x64xf32> to vector<64xf32>
    %2 = vector.shape_cast %1 : vector<64xf32> to vector<1x64xf32>
    %cst_1 = arith.constant 0.001953125 : f32
    %3 = vector.broadcast %cst_1 : f32 to vector<1x64xf32>
    %4 = arith.mulf %2, %3 : vector<1x64xf32>
    %5 = arith.mulf %0, %0 : vector<512x64xf32>
    %cst_2 = arith.constant dense<0.000000e+00> : vector<64xf32>
    %6 = vector.multi_reduction <add>, %5, %cst_2 [0] : vector<512x64xf32> to vector<64xf32>
    %7 = vector.shape_cast %6 : vector<64xf32> to vector<1x64xf32>
    %cst_3 = arith.constant 0.001953125 : f32
    %8 = vector.broadcast %cst_3 : f32 to vector<1x64xf32>
    %9 = arith.mulf %7, %8 : vector<1x64xf32>
    %10 = arith.mulf %4, %4 : vector<1x64xf32>
    %11 = arith.subf %9, %10 : vector<1x64xf32>
    %cst_4 = arith.constant 0.000000e+00 : f32
    %12 = vector.broadcast %cst_4 : f32 to vector<1x64xf32>
    %13 = arith.maximumf %11, %12 : vector<1x64xf32>
    %cst_5 = arith.constant 9.99999974E-6 : f32
    %14 = vector.broadcast %cst_5 : f32 to vector<1x64xf32>
    %15 = arith.addf %13, %14 : vector<1x64xf32>
    %16 = math.rsqrt %15 : vector<1x64xf32>
    %cst_6 = arith.constant 0.000000e+00 : f32
    %17 = vector.broadcast %cst_6 : f32 to vector<1x64xf32>
    %18 = arith.subf %17, %4 : vector<1x64xf32>
    %19 = arith.mulf %18, %16 : vector<1x64xf32>
    %20 = vector.broadcast %16 : vector<1x64xf32> to vector<512x64xf32>
    %21 = arith.mulf %0, %20 : vector<512x64xf32>
    %22 = vector.broadcast %19 : vector<1x64xf32> to vector<512x64xf32>
    %23 = arith.addf %21, %22 : vector<512x64xf32>
    %24 = vector.shape_cast %23 : vector<512x64xf32> to vector<4x128x64xf32>
    %c0_7 = arith.constant 0 : index
    %c0_8 = arith.constant 0 : index
    %c0_9 = arith.constant 0 : index
    %25 = vector.load %arg5[%c0_7, %c0_8, %c0_9] : memref<4x128x64xf32, #tpu.memory_space<vmem>>, vector<4x128x64xf32>
    tpu.vector_store %arg5[%c0_7, %c0_8, %c0_9], %24 {strides = array<i32>} : memref<4x128x64xf32, #tpu.memory_space<vmem>>, vector<4x128x64xf32>,
    %cst_10 = arith.constant 0.000000e+00 : f32
    %26 = vector.broadcast %cst_10 : f32 to vector<128x64xf32>
    %c0_11 = arith.constant 0 : index
    %c0_12 = arith.constant 0 : index
    %c0_13 = arith.constant 0 : index
    %27 = vector.load %arg5[%c0_11, %c0_12, %c0_13] : memref<4x128x64xf32, #tpu.memory_space<vmem>>, vector<1x128x64xf32>
    %28 = vector.shape_cast %27 : vector<1x128x64xf32> to vector<128x64xf32>
    %29 = arith.addf %26, %28 : vector<128x64xf32>
    %cst_14 = arith.constant 5.000000e-01 : f32
    %30 = vector.broadcast %cst_14 : f32 to vector<128x64xf32>
    %31 = arith.mulf %30, %29 : vector<128x64xf32>
    %cst_15 = arith.constant 1.000000e+00 : f32
    %32 = vector.broadcast %cst_15 : f32 to vector<128x64xf32>
    %33 = arith.cmpf oge, %31, %32 : vector<128x64xf32>
    %34 = arith.extui %33 : vector<128x64xi1> to vector<128x64xi32>
    %35 = arith.sitofp %34 : vector<128x64xi32> to vector<128x64xf32>
    %cst_16 = arith.constant 1.000000e+00 : f32
    %36 = vector.broadcast %cst_16 : f32 to vector<128x64xf32>
    %37 = arith.mulf %35, %36 : vector<128x64xf32>
    %38 = arith.subf %31, %37 : vector<128x64xf32>
    %39 = arith.truncf %35 : vector<128x64xf32> to vector<128x64xbf16>
    %c0_17 = arith.constant 0 : index
    %c0_18 = arith.constant 0 : index
    %c0_19 = arith.constant 0 : index
    %40 = vector.load %arg6[%c0_17, %c0_18, %c0_19] : memref<4x128x64xbf16, #tpu.memory_space<vmem>>, vector<1x128x64xbf16>
    %41 = vector.shape_cast %40 : vector<1x128x64xbf16> to vector<128x64xbf16>
    %42 = vector.shape_cast %39 : vector<128x64xbf16> to vector<1x128x64xbf16>
    tpu.vector_store %arg6[%c0_17, %c0_18, %c0_19], %42 {strides = array<i32>} : memref<4x128x64xbf16, #tpu.memory_space<vmem>>, vector<1x128x64xbf16>,
    %c1 = arith.constant 1 : index
    %c0_20 = arith.constant 0 : index
    %c0_21 = arith.constant 0 : index
    %43 = vector.load %arg5[%c1, %c0_20, %c0_21] : memref<4x128x64xf32, #tpu.memory_space<vmem>>, vector<1x128x64xf32>
    %44 = vector.shape_cast %43 : vector<1x128x64xf32> to vector<128x64xf32>
    %45 = arith.addf %38, %44 : vector<128x64xf32>
    %cst_22 = arith.constant 5.000000e-01 : f32
    %46 = vector.broadcast %cst_22 : f32 to vector<128x64xf32>
    %47 = arith.mulf %46, %45 : vector<128x64xf32>
    %cst_23 = arith.constant 1.000000e+00 : f32
    %48 = vector.broadcast %cst_23 : f32 to vector<128x64xf32>
    %49 = arith.cmpf oge, %47, %48 : vector<128x64xf32>
    %50 = arith.extui %49 : vector<128x64xi1> to vector<128x64xi32>
    %51 = arith.sitofp %50 : vector<128x64xi32> to vector<128x64xf32>
    %cst_24 = arith.constant 1.000000e+00 : f32
    %52 = vector.broadcast %cst_24 : f32 to vector<128x64xf32>
    %53 = arith.mulf %51, %52 : vector<128x64xf32>
    %54 = arith.subf %47, %53 : vector<128x64xf32>
    %55 = arith.truncf %51 : vector<128x64xf32> to vector<128x64xbf16>
    %c1_25 = arith.constant 1 : index
    %c0_26 = arith.constant 0 : index
    %c0_27 = arith.constant 0 : index
    %56 = vector.load %arg6[%c1_25, %c0_26, %c0_27] : memref<4x128x64xbf16, #tpu.memory_space<vmem>>, vector<1x128x64xbf16>
    %57 = vector.shape_cast %56 : vector<1x128x64xbf16> to vector<128x64xbf16>
    %58 = vector.shape_cast %55 : vector<128x64xbf16> to vector<1x128x64xbf16>
    tpu.vector_store %arg6[%c1_25, %c0_26, %c0_27], %58 {strides = array<i32>} : memref<4x128x64xbf16, #tpu.memory_space<vmem>>, vector<1x128x64xbf16>,
    %c2 = arith.constant 2 : index
    %c0_28 = arith.constant 0 : index
    %c0_29 = arith.constant 0 : index
    %59 = vector.load %arg5[%c2, %c0_28, %c0_29] : memref<4x128x64xf32, #tpu.memory_space<vmem>>, vector<1x128x64xf32>
    %60 = vector.shape_cast %59 : vector<1x128x64xf32> to vector<128x64xf32>
    %61 = arith.addf %54, %60 : vector<128x64xf32>
    %cst_30 = arith.constant 5.000000e-01 : f32
    %62 = vector.broadcast %cst_30 : f32 to vector<128x64xf32>
    %63 = arith.mulf %62, %61 : vector<128x64xf32>
    %cst_31 = arith.constant 1.000000e+00 : f32
    %64 = vector.broadcast %cst_31 : f32 to vector<128x64xf32>
    %65 = arith.cmpf oge, %63, %64 : vector<128x64xf32>
    %66 = arith.extui %65 : vector<128x64xi1> to vector<128x64xi32>
    %67 = arith.sitofp %66 : vector<128x64xi32> to vector<128x64xf32>
    %cst_32 = arith.constant 1.000000e+00 : f32
    %68 = vector.broadcast %cst_32 : f32 to vector<128x64xf32>
    %69 = arith.mulf %67, %68 : vector<128x64xf32>
    %70 = arith.subf %63, %69 : vector<128x64xf32>
    %71 = arith.truncf %67 : vector<128x64xf32> to vector<128x64xbf16>
    %c2_33 = arith.constant 2 : index
    %c0_34 = arith.constant 0 : index
    %c0_35 = arith.constant 0 : index
    %72 = vector.load %arg6[%c2_33, %c0_34, %c0_35] : memref<4x128x64xbf16, #tpu.memory_space<vmem>>, vector<1x128x64xbf16>
    %73 = vector.shape_cast %72 : vector<1x128x64xbf16> to vector<128x64xbf16>
    %74 = vector.shape_cast %71 : vector<128x64xbf16> to vector<1x128x64xbf16>
    tpu.vector_store %arg6[%c2_33, %c0_34, %c0_35], %74 {strides = array<i32>} : memref<4x128x64xbf16, #tpu.memory_space<vmem>>, vector<1x128x64xbf16>,
    %c3 = arith.constant 3 : index
    %c0_36 = arith.constant 0 : index
    %c0_37 = arith.constant 0 : index
    %75 = vector.load %arg5[%c3, %c0_36, %c0_37] : memref<4x128x64xf32, #tpu.memory_space<vmem>>, vector<1x128x64xf32>
    %76 = vector.shape_cast %75 : vector<1x128x64xf32> to vector<128x64xf32>
    %77 = arith.addf %70, %76 : vector<128x64xf32>
    %cst_38 = arith.constant 5.000000e-01 : f32
    %78 = vector.broadcast %cst_38 : f32 to vector<128x64xf32>
    %79 = arith.mulf %78, %77 : vector<128x64xf32>
    %cst_39 = arith.constant 1.000000e+00 : f32
    %80 = vector.broadcast %cst_39 : f32 to vector<128x64xf32>
    %81 = arith.cmpf oge, %79, %80 : vector<128x64xf32>
    %82 = arith.extui %81 : vector<128x64xi1> to vector<128x64xi32>
    %83 = arith.sitofp %82 : vector<128x64xi32> to vector<128x64xf32>
    %84 = arith.truncf %83 : vector<128x64xf32> to vector<128x64xbf16>
    %c3_40 = arith.constant 3 : index
    %c0_41 = arith.constant 0 : index
    %c0_42 = arith.constant 0 : index
    %85 = vector.load %arg6[%c3_40, %c0_41, %c0_42] : memref<4x128x64xbf16, #tpu.memory_space<vmem>>, vector<1x128x64xbf16>
    %86 = vector.shape_cast %85 : vector<1x128x64xbf16> to vector<128x64xbf16>
    %87 = vector.shape_cast %84 : vector<128x64xbf16> to vector<1x128x64xbf16>
    tpu.vector_store %arg6[%c3_40, %c0_41, %c0_42], %87 {strides = array<i32>} : memref<4x128x64xbf16, #tpu.memory_space<vmem>>, vector<1x128x64xbf16>,
    %c0_43 = arith.constant 0 : index
    %c0_44 = arith.constant 0 : index
    %c0_45 = arith.constant 0 : index
    %88 = vector.load %arg6[%c0_43, %c0_44, %c0_45] : memref<4x128x64xbf16, #tpu.memory_space<vmem>>, vector<4x128x64xbf16>
    %89 = vector.shape_cast %88 : vector<4x128x64xbf16> to vector<512x64xbf16>
    %c0_46 = arith.constant 0 : index
    %c0_47 = arith.constant 0 : index
    %90 = vector.load %arg2[%c0_46, %c0_47] : memref<64x32xbf16, #tpu.memory_space<vmem>>, vector<64x32xbf16>
    %cst_48 = arith.constant dense<0.000000e+00> : vector<512x32xf32>
    %91 = tpu.matmul %89, %90, %cst_48 {dimension_numbers = #tpu.dot_dimension_numbers<[1], [0], [0], [1], [0, 0, 1, 1], [], []>} : vector<512x64xbf16>, vector<64x32xbf16>, vector<512x32xf32> -> vector<512x32xf32>
    %c0_49 = arith.constant 0 : index
    %c0_50 = arith.constant 0 : index
    %92 = vector.load %arg3[%c0_49, %c0_50] : memref<1x32xf32, #tpu.memory_space<vmem>>, vector<1x32xf32>
    %93 = vector.broadcast %92 : vector<1x32xf32> to vector<512x32xf32>
    %94 = arith.addf %91, %93 : vector<512x32xf32>
    %cst_51 = arith.constant dense<0.000000e+00> : vector<32xf32>
    %95 = vector.multi_reduction <add>, %94, %cst_51 [0] : vector<512x32xf32> to vector<32xf32>
    %96 = vector.shape_cast %95 : vector<32xf32> to vector<1x32xf32>
    %cst_52 = arith.constant 0.001953125 : f32
    %97 = vector.broadcast %cst_52 : f32 to vector<1x32xf32>
    %98 = arith.mulf %96, %97 : vector<1x32xf32>
    %99 = arith.mulf %94, %94 : vector<512x32xf32>
    %cst_53 = arith.constant dense<0.000000e+00> : vector<32xf32>
    %100 = vector.multi_reduction <add>, %99, %cst_53 [0] : vector<512x32xf32> to vector<32xf32>
    %101 = vector.shape_cast %100 : vector<32xf32> to vector<1x32xf32>
    %cst_54 = arith.constant 0.001953125 : f32
    %102 = vector.broadcast %cst_54 : f32 to vector<1x32xf32>
    %103 = arith.mulf %101, %102 : vector<1x32xf32>
    %104 = arith.mulf %98, %98 : vector<1x32xf32>
    %105 = arith.subf %103, %104 : vector<1x32xf32>
    %cst_55 = arith.constant 0.000000e+00 : f32
    %106 = vector.broadcast %cst_55 : f32 to vector<1x32xf32>
    %107 = arith.maximumf %105, %106 : vector<1x32xf32>
    %cst_56 = arith.constant 9.99999974E-6 : f32
    %108 = vector.broadcast %cst_56 : f32 to vector<1x32xf32>
    %109 = arith.addf %107, %108 : vector<1x32xf32>
    %110 = math.rsqrt %109 : vector<1x32xf32>
    %cst_57 = arith.constant 0.000000e+00 : f32
    %111 = vector.broadcast %cst_57 : f32 to vector<1x32xf32>
    %112 = arith.subf %111, %98 : vector<1x32xf32>
    %113 = arith.mulf %112, %110 : vector<1x32xf32>
    %114 = vector.broadcast %110 : vector<1x32xf32> to vector<512x32xf32>
    %115 = arith.mulf %94, %114 : vector<512x32xf32>
    %116 = vector.broadcast %113 : vector<1x32xf32> to vector<512x32xf32>
    %117 = arith.addf %115, %116 : vector<512x32xf32>
    %118 = vector.shape_cast %117 : vector<512x32xf32> to vector<4x128x32xf32>
    %c0_58 = arith.constant 0 : index
    %c0_59 = arith.constant 0 : index
    %c0_60 = arith.constant 0 : index
    %119 = vector.load %arg7[%c0_58, %c0_59, %c0_60] : memref<4x128x32xf32, #tpu.memory_space<vmem>>, vector<4x128x32xf32>
    tpu.vector_store %arg7[%c0_58, %c0_59, %c0_60], %118 {strides = array<i32>} : memref<4x128x32xf32, #tpu.memory_space<vmem>>, vector<4x128x32xf32>,
    %cst_61 = arith.constant 0.000000e+00 : f32
    %120 = vector.broadcast %cst_61 : f32 to vector<128x32xf32>
    %c0_62 = arith.constant 0 : index
    %c0_63 = arith.constant 0 : index
    %c0_64 = arith.constant 0 : index
    %121 = vector.load %arg7[%c0_62, %c0_63, %c0_64] : memref<4x128x32xf32, #tpu.memory_space<vmem>>, vector<1x128x32xf32>
    %122 = vector.shape_cast %121 : vector<1x128x32xf32> to vector<128x32xf32>
    %123 = arith.addf %120, %122 : vector<128x32xf32>
    %cst_65 = arith.constant 5.000000e-01 : f32
    %124 = vector.broadcast %cst_65 : f32 to vector<128x32xf32>
    %125 = arith.mulf %124, %123 : vector<128x32xf32>
    %cst_66 = arith.constant 1.000000e+00 : f32
    %126 = vector.broadcast %cst_66 : f32 to vector<128x32xf32>
    %127 = arith.cmpf oge, %125, %126 : vector<128x32xf32>
    %128 = arith.extui %127 : vector<128x32xi1> to vector<128x32xi32>
    %129 = arith.sitofp %128 : vector<128x32xi32> to vector<128x32xf32>
    %cst_67 = arith.constant 1.000000e+00 : f32
    %130 = vector.broadcast %cst_67 : f32 to vector<128x32xf32>
    %131 = arith.mulf %129, %130 : vector<128x32xf32>
    %132 = arith.subf %125, %131 : vector<128x32xf32>
    %c0_68 = arith.constant 0 : index
    %c0_69 = arith.constant 0 : index
    %c0_70 = arith.constant 0 : index
    %133 = vector.load %arg4[%c0_68, %c0_69, %c0_70] : memref<4x128x32xf32, #tpu.memory_space<vmem>>, vector<1x128x32xf32>
    %134 = vector.shape_cast %133 : vector<1x128x32xf32> to vector<128x32xf32>
    %135 = vector.shape_cast %129 : vector<128x32xf32> to vector<1x128x32xf32>
    tpu.vector_store %arg4[%c0_68, %c0_69, %c0_70], %135 {strides = array<i32>} : memref<4x128x32xf32, #tpu.memory_space<vmem>>, vector<1x128x32xf32>,
    %c1_71 = arith.constant 1 : index
    %c0_72 = arith.constant 0 : index
    %c0_73 = arith.constant 0 : index
    %136 = vector.load %arg7[%c1_71, %c0_72, %c0_73] : memref<4x128x32xf32, #tpu.memory_space<vmem>>, vector<1x128x32xf32>
    %137 = vector.shape_cast %136 : vector<1x128x32xf32> to vector<128x32xf32>
    %138 = arith.addf %132, %137 : vector<128x32xf32>
    %cst_74 = arith.constant 5.000000e-01 : f32
    %139 = vector.broadcast %cst_74 : f32 to vector<128x32xf32>
    %140 = arith.mulf %139, %138 : vector<128x32xf32>
    %cst_75 = arith.constant 1.000000e+00 : f32
    %141 = vector.broadcast %cst_75 : f32 to vector<128x32xf32>
    %142 = arith.cmpf oge, %140, %141 : vector<128x32xf32>
    %143 = arith.extui %142 : vector<128x32xi1> to vector<128x32xi32>
    %144 = arith.sitofp %143 : vector<128x32xi32> to vector<128x32xf32>
    %cst_76 = arith.constant 1.000000e+00 : f32
    %145 = vector.broadcast %cst_76 : f32 to vector<128x32xf32>
    %146 = arith.mulf %144, %145 : vector<128x32xf32>
    %147 = arith.subf %140, %146 : vector<128x32xf32>
    %c1_77 = arith.constant 1 : index
    %c0_78 = arith.constant 0 : index
    %c0_79 = arith.constant 0 : index
    %148 = vector.load %arg4[%c1_77, %c0_78, %c0_79] : memref<4x128x32xf32, #tpu.memory_space<vmem>>, vector<1x128x32xf32>
    %149 = vector.shape_cast %148 : vector<1x128x32xf32> to vector<128x32xf32>
    %150 = vector.shape_cast %144 : vector<128x32xf32> to vector<1x128x32xf32>
    tpu.vector_store %arg4[%c1_77, %c0_78, %c0_79], %150 {strides = array<i32>} : memref<4x128x32xf32, #tpu.memory_space<vmem>>, vector<1x128x32xf32>,
    %c2_80 = arith.constant 2 : index
    %c0_81 = arith.constant 0 : index
    %c0_82 = arith.constant 0 : index
    %151 = vector.load %arg7[%c2_80, %c0_81, %c0_82] : memref<4x128x32xf32, #tpu.memory_space<vmem>>, vector<1x128x32xf32>
    %152 = vector.shape_cast %151 : vector<1x128x32xf32> to vector<128x32xf32>
    %153 = arith.addf %147, %152 : vector<128x32xf32>
    %cst_83 = arith.constant 5.000000e-01 : f32
    %154 = vector.broadcast %cst_83 : f32 to vector<128x32xf32>
    %155 = arith.mulf %154, %153 : vector<128x32xf32>
    %cst_84 = arith.constant 1.000000e+00 : f32
    %156 = vector.broadcast %cst_84 : f32 to vector<128x32xf32>
    %157 = arith.cmpf oge, %155, %156 : vector<128x32xf32>
    %158 = arith.extui %157 : vector<128x32xi1> to vector<128x32xi32>
    %159 = arith.sitofp %158 : vector<128x32xi32> to vector<128x32xf32>
    %cst_85 = arith.constant 1.000000e+00 : f32
    %160 = vector.broadcast %cst_85 : f32 to vector<128x32xf32>
    %161 = arith.mulf %159, %160 : vector<128x32xf32>
    %162 = arith.subf %155, %161 : vector<128x32xf32>
    %c2_86 = arith.constant 2 : index
    %c0_87 = arith.constant 0 : index
    %c0_88 = arith.constant 0 : index
    %163 = vector.load %arg4[%c2_86, %c0_87, %c0_88] : memref<4x128x32xf32, #tpu.memory_space<vmem>>, vector<1x128x32xf32>
    %164 = vector.shape_cast %163 : vector<1x128x32xf32> to vector<128x32xf32>
    %165 = vector.shape_cast %159 : vector<128x32xf32> to vector<1x128x32xf32>
    tpu.vector_store %arg4[%c2_86, %c0_87, %c0_88], %165 {strides = array<i32>} : memref<4x128x32xf32, #tpu.memory_space<vmem>>, vector<1x128x32xf32>,
    %c3_89 = arith.constant 3 : index
    %c0_90 = arith.constant 0 : index
    %c0_91 = arith.constant 0 : index
    %166 = vector.load %arg7[%c3_89, %c0_90, %c0_91] : memref<4x128x32xf32, #tpu.memory_space<vmem>>, vector<1x128x32xf32>
    %167 = vector.shape_cast %166 : vector<1x128x32xf32> to vector<128x32xf32>
    %168 = arith.addf %162, %167 : vector<128x32xf32>
    %cst_92 = arith.constant 5.000000e-01 : f32
    %169 = vector.broadcast %cst_92 : f32 to vector<128x32xf32>
    %170 = arith.mulf %169, %168 : vector<128x32xf32>
    %cst_93 = arith.constant 1.000000e+00 : f32
    %171 = vector.broadcast %cst_93 : f32 to vector<128x32xf32>
    %172 = arith.cmpf oge, %170, %171 : vector<128x32xf32>
    %173 = arith.extui %172 : vector<128x32xi1> to vector<128x32xi32>
    %174 = arith.sitofp %173 : vector<128x32xi32> to vector<128x32xf32>
    %c3_94 = arith.constant 3 : index
    %c0_95 = arith.constant 0 : index
    %c0_96 = arith.constant 0 : index
    %175 = vector.load %arg4[%c3_94, %c0_95, %c0_96] : memref<4x128x32xf32, #tpu.memory_space<vmem>>, vector<1x128x32xf32>
    %176 = vector.shape_cast %175 : vector<1x128x32xf32> to vector<128x32xf32>
    %177 = vector.shape_cast %174 : vector<128x32xf32> to vector<1x128x32xf32>
    tpu.vector_store %arg4[%c3_94, %c0_95, %c0_96], %177 {strides = array<i32>} : memref<4x128x32xf32, #tpu.memory_space<vmem>>, vector<1x128x32xf32>,
    return
  }
  func.func @transform_0(%arg0: i32) -> (i32, i32) {
    %c0_i32 = arith.constant 0 : i32
    %c0_i32_0 = arith.constant 0 : i32
    %c0_i32_1 = arith.constant 0 : i32
    return %c0_i32, %c0_i32_0 : i32, i32
  }
  func.func @transform_1(%arg0: i32) -> (i32, i32) {
    %c0_i32 = arith.constant 0 : i32
    %c0_i32_0 = arith.constant 0 : i32
    %c0_i32_1 = arith.constant 0 : i32
    return %c0_i32, %c0_i32_0 : i32, i32
  }
  func.func @transform_2(%arg0: i32) -> (i32, i32) {
    %c0_i32 = arith.constant 0 : i32
    %c0_i32_0 = arith.constant 0 : i32
    %c0_i32_1 = arith.constant 0 : i32
    return %c0_i32, %c0_i32_0 : i32, i32
  }
  func.func @transform_3(%arg0: i32) -> (i32, i32, i32) {
    %c0_i32 = arith.constant 0 : i32
    %c0_i32_0 = arith.constant 0 : i32
    %c0_i32_1 = arith.constant 0 : i32
    %c0_i32_2 = arith.constant 0 : i32
    return %c0_i32, %c0_i32_0, %c0_i32_1 : i32, i32, i32
  }
}

</mosaic_0001>

<llo_original>
// kernel: multi_head_attention.3
$region0: #{multi_head_attention.3}
  #allocation0 [shape = 'u32[]', space=smem, size = 0x4, offset = 0x4, fixed_abs, tag = 'smem constant byte address 0x4 - core index']
  #allocation1 [shape = 'u32[72,128]{1,0:T(1,128)}', space=vmem, size = 0x9000, scoped, tag = 'internal scratch']
  #allocation2 [shape = 'f32[4,128,128]{2,1,0:T(8,128)}', space=vmem, size = 0x40000, scoped, tag = 'scratch operand']
  %s0 = inlined_call_operand.vmem [shape: bf16[512,64], index: 0, kind: input, shape index: {}]
  %s1 = inlined_call_operand.vmem [shape: bf16[64,128], index: 1, kind: input, shape index: {}]
  %s2 = inlined_call_operand.vmem [shape: f32[4,64,128], index: 2, kind: input, shape index: {}]
  %s3 = inlined_call_operand.vmem [shape: bf16[4,128,128], index: 3, kind: output, shape index: {}]
  %s4 = sld [smem:[#allocation0]]
  $region22: #{multi_head_attention.3} parent=0
    _
  %s6 = ssub.s32 1, %s4
  %s7 = scalar_select 0, %s6, %s4
  // Predicated region
  $region2: #{multi_head_attention.3} parent=0 // pred_check
    _
  $region3: #{multi_head_attention.3} parent=0 // pred_check_branch
    %9 = sbr.rel (0) target = $region5
  $region4: #{multi_head_attention.3} parent=0 // pred_region
    _
  $region5: #{multi_head_attention.3} parent=0 // pred_fallthru
    _
  // Predicated region
  $region6: #{multi_head_attention.3} parent=0 // pred_check
    _
  $region7: #{multi_head_attention.3} parent=0 // pred_check_branch
    %11 = sbr.rel (0) target = $region9
  $region8: #{multi_head_attention.3} parent=0 // pred_region
    _
  $region9: #{multi_head_attention.3} parent=0 // pred_fallthru
    _
  // Predicated region
  $region10: #{multi_head_attention.3} parent=0 // pred_check
    _
  $region11: #{multi_head_attention.3} parent=0 // pred_check_branch
    %13 = sbr.rel (0) target = $region13
  $region12: #{multi_head_attention.3} parent=0 // pred_region
    _
  $region13: #{multi_head_attention.3} parent=0 // pred_fallthru
    _
  %v15 = vld [vmem:[%s0] sm:$0xf]
  %v16 = vld [vmem:[%s0 + $0x4] sm:$0xf]
  %v17 = vld [vmem:[%s0 + $0x8] sm:$0xf]
  %v18 = vld [vmem:[%s0 + $0xc] sm:$0xf]
  %v19 = vld [vmem:[%s0 + $0x10] sm:$0xf]
  %v20 = vld [vmem:[%s0 + $0x14] sm:$0xf]
  %v21 = vld [vmem:[%s0 + $0x18] sm:$0xf]
  %v22 = vld [vmem:[%s0 + $0x1c] sm:$0xf]
  %v23 = vld [vmem:[%s0 + $0x20] sm:$0xf]
  %v24 = vld [vmem:[%s0 + $0x24] sm:$0xf]
  %v25 = vld [vmem:[%s0 + $0x28] sm:$0xf]
  %v26 = vld [vmem:[%s0 + $0x2c] sm:$0xf]
  %v27 = vld [vmem:[%s0 + $0x30] sm:$0xf]
  %v28 = vld [vmem:[%s0 + $0x34] sm:$0xf]
  %v29 = vld [vmem:[%s0 + $0x38] sm:$0xf]
  %v30 = vld [vmem:[%s0 + $0x3c] sm:$0xf]
  %v31 = vld [vmem:[%s0 + $0x40] sm:$0xf]
  %v32 = vld [vmem:[%s0 + $0x44] sm:$0xf]
  %v33 = vld [vmem:[%s0 + $0x48] sm:$0xf]
  %v34 = vld [vmem:[%s0 + $0x4c] sm:$0xf]
  %v35 = vld [vmem:[%s0 + $0x50] sm:$0xf]
  %v36 = vld [vmem:[%s0 + $0x54] sm:$0xf]
  %v37 = vld [vmem:[%s0 + $0x58] sm:$0xf]
  %v38 = vld [vmem:[%s0 + $0x5c] sm:$0xf]
  %v39 = vld [vmem:[%s0 + $0x60] sm:$0xf]
  %v40 = vld [vmem:[%s0 + $0x64] sm:$0xf]
  %v41 = vld [vmem:[%s0 + $0x68] sm:$0xf]
  %v42 = vld [vmem:[%s0 + $0x6c] sm:$0xf]
  %v43 = vld [vmem:[%s0 + $0x70] sm:$0xf]
  %v44 = vld [vmem:[%s0 + $0x74] sm:$0xf]
  %v45 = vld [vmem:[%s0 + $0x78] sm:$0xf]
  %v46 = vld [vmem:[%s0 + $0x7c] sm:$0xf]
  %v47 = vld [vmem:[%s0 + $0x80] sm:$0xf]
  %v48 = vld [vmem:[%s0 + $0x84] sm:$0xf]
  %v49 = vld [vmem:[%s0 + $0x88] sm:$0xf]
  %v50 = vld [vmem:[%s0 + $0x8c] sm:$0xf]
  %v51 = vld [vmem:[%s0 + $0x90] sm:$0xf]
  %v52 = vld [vmem:[%s0 + $0x94] sm:$0xf]
  %v53 = vld [vmem:[%s0 + $0x98] sm:$0xf]
  %v54 = vld [vmem:[%s0 + $0x9c] sm:$0xf]
  %v55 = vld [vmem:[%s0 + $0xa0] sm:$0xf]
  %v56 = vld [vmem:[%s0 + $0xa4] sm:$0xf]
  %v57 = vld [vmem:[%s0 + $0xa8] sm:$0xf]
  %v58 = vld [vmem:[%s0 + $0xac] sm:$0xf]
  %v59 = vld [vmem:[%s0 + $0xb0] sm:$0xf]
  %v60 = vld [vmem:[%s0 + $0xb4] sm:$0xf]
  %v61 = vld [vmem:[%s0 + $0xb8] sm:$0xf]
  %v62 = vld [vmem:[%s0 + $0xbc] sm:$0xf]
  %v63 = vld [vmem:[%s0 + $0xc0] sm:$0xf]
  %v64 = vld [vmem:[%s0 + $0xc4] sm:$0xf]
  %v65 = vld [vmem:[%s0 + $0xc8] sm:$0xf]
  %v66 = vld [vmem:[%s0 + $0xcc] sm:$0xf]
  %v67 = vld [vmem:[%s0 + $0xd0] sm:$0xf]
  %v68 = vld [vmem:[%s0 + $0xd4] sm:$0xf]
  %v69 = vld [vmem:[%s0 + $0xd8] sm:$0xf]
  %v70 = vld [vmem:[%s0 + $0xdc] sm:$0xf]
  %v71 = vld [vmem:[%s0 + $0xe0] sm:$0xf]
  %v72 = vld [vmem:[%s0 + $0xe4] sm:$0xf]
  %v73 = vld [vmem:[%s0 + $0xe8] sm:$0xf]
  %v74 = vld [vmem:[%s0 + $0xec] sm:$0xf]
  %v75 = vld [vmem:[%s0 + $0xf0] sm:$0xf]
  %v76 = vld [vmem:[%s0 + $0xf4] sm:$0xf]
  %v77 = vld [vmem:[%s0 + $0xf8] sm:$0xf]
  %v78 = vld [vmem:[%s0 + $0xfc] sm:$0xf]
  %v79 = vld [vmem:[%s1] sm:$0xf]
  %v80 = vld [vmem:[%s1 + $0x4] sm:$0xf]
  %v81 = vld [vmem:[%s1 + $0x8] sm:$0xf]
  %v82 = vld [vmem:[%s1 + $0xc] sm:$0xf]
  %v83 = vld [vmem:[%s1 + $0x10] sm:$0xf]
  %v84 = vld [vmem:[%s1 + $0x14] sm:$0xf]
  %v85 = vld [vmem:[%s1 + $0x18] sm:$0xf]
  %v86 = vld [vmem:[%s1 + $0x1c] sm:$0xf]
  %v151 = vunpack.c.l.b16 %v15
  %v152 = vunpack.c.l.b16 %v16
  %v153 = vunpack.c.l.b16 %v17
  %v154 = vunpack.c.l.b16 %v18
  %v155 = vunpack.c.l.b16 %v19
  %v156 = vunpack.c.l.b16 %v20
  %v157 = vunpack.c.l.b16 %v21
  %v158 = vunpack.c.l.b16 %v22
  %v159 = vunpack.c.l.b16 %v23
  %v160 = vunpack.c.l.b16 %v24
  %v161 = vunpack.c.l.b16 %v25
  %v162 = vunpack.c.l.b16 %v26
  %v163 = vunpack.c.l.b16 %v27
  %v164 = vunpack.c.l.b16 %v28
  %v165 = vunpack.c.l.b16 %v29
  %v166 = vunpack.c.l.b16 %v30
  %v167 = vunpack.c.l.b16 %v31
  %v168 = vunpack.c.l.b16 %v32
  %v169 = vunpack.c.l.b16 %v33
  %v170 = vunpack.c.l.b16 %v34
  %v171 = vunpack.c.l.b16 %v35
  %v172 = vunpack.c.l.b16 %v36
  %v173 = vunpack.c.l.b16 %v37
  %v174 = vunpack.c.l.b16 %v38
  %v175 = vunpack.c.l.b16 %v39
  %v176 = vunpack.c.l.b16 %v40
  %v177 = vunpack.c.l.b16 %v41
  %v178 = vunpack.c.l.b16 %v42
  %v179 = vunpack.c.l.b16 %v43
  %v180 = vunpack.c.l.b16 %v44
  %v181 = vunpack.c.l.b16 %v45
  %v182 = vunpack.c.l.b16 %v46
  %v183 = vunpack.c.l.b16 %v47
  %v184 = vunpack.c.l.b16 %v48
  %v185 = vunpack.c.l.b16 %v49
  %v186 = vunpack.c.l.b16 %v50
  %v187 = vunpack.c.l.b16 %v51
  %v188 = vunpack.c.l.b16 %v52
  %v189 = vunpack.c.l.b16 %v53
  %v190 = vunpack.c.l.b16 %v54
  %v191 = vunpack.c.l.b16 %v55
  %v192 = vunpack.c.l.b16 %v56
  %v193 = vunpack.c.l.b16 %v57
  %v194 = vunpack.c.l.b16 %v58
  %v195 = vunpack.c.l.b16 %v59
  %v196 = vunpack.c.l.b16 %v60
  %v197 = vunpack.c.l.b16 %v61
  %v198 = vunpack.c.l.b16 %v62
  %v199 = vunpack.c.l.b16 %v63
  %v200 = vunpack.c.l.b16 %v64
  %v201 = vunpack.c.l.b16 %v65
  %v202 = vunpack.c.l.b16 %v66
  %v203 = vunpack.c.l.b16 %v67
  %v204 = vunpack.c.l.b16 %v68
  %v205 = vunpack.c.l.b16 %v69
  %v206 = vunpack.c.l.b16 %v70
  %v207 = vunpack.c.l.b16 %v71
  %v208 = vunpack.c.l.b16 %v72
  %v209 = vunpack.c.l.b16 %v73
  %v210 = vunpack.c.l.b16 %v74
  %v211 = vunpack.c.l.b16 %v75
  %v212 = vunpack.c.l.b16 %v76
  %v213 = vunpack.c.l.b16 %v77
  %v214 = vunpack.c.l.b16 %v78
  %v215 = vpack.c.b16 %v152, %v151
  %v216 = vpack.c.b16 %v154, %v153
  %v217 = vpack.c.b16 %v156, %v155
  %v218 = vpack.c.b16 %v158, %v157
  %v219 = vpack.c.b16 %v160, %v159
  %v220 = vpack.c.b16 %v162, %v161
  %v221 = vpack.c.b16 %v164, %v163
  %v222 = vpack.c.b16 %v166, %v165
  %v223 = vpack.c.b16 %v168, %v167
  %v224 = vpack.c.b16 %v170, %v169
  %v225 = vpack.c.b16 %v172, %v171
  %v226 = vpack.c.b16 %v174, %v173
  %v227 = vpack.c.b16 %v176, %v175
  %v228 = vpack.c.b16 %v178, %v177
  %v229 = vpack.c.b16 %v180, %v179
  %v230 = vpack.c.b16 %v182, %v181
  %v231 = vpack.c.b16 %v184, %v183
  %v232 = vpack.c.b16 %v186, %v185
  %v233 = vpack.c.b16 %v188, %v187
  %v234 = vpack.c.b16 %v190, %v189
  %v235 = vpack.c.b16 %v192, %v191
  %v236 = vpack.c.b16 %v194, %v193
  %v237 = vpack.c.b16 %v196, %v195
  %v238 = vpack.c.b16 %v198, %v197
  %v239 = vpack.c.b16 %v200, %v199
  %v240 = vpack.c.b16 %v202, %v201
  %v241 = vpack.c.b16 %v204, %v203
  %v242 = vpack.c.b16 %v206, %v205
  %v243 = vpack.c.b16 %v208, %v207
  %v244 = vpack.c.b16 %v210, %v209
  %v245 = vpack.c.b16 %v212, %v211
  %v246 = vpack.c.b16 %v214, %v213
  %v255 = vunpack.c.l.b16 %v79
  %v256 = vunpack.c.l.b16 %v80
  %v257 = vunpack.c.l.b16 %v81
  %v258 = vunpack.c.l.b16 %v82
  %v259 = vunpack.c.l.b16 %v83
  %v260 = vunpack.c.l.b16 %v84
  %v261 = vunpack.c.l.b16 %v85
  %v262 = vunpack.c.l.b16 %v86
  %v263 = vpack.c.b16 %v256, %v255
  %v264 = vpack.c.b16 %v258, %v257
  %v265 = vpack.c.b16 %v260, %v259
  %v266 = vpack.c.b16 %v262, %v261
  %vm271 = vcmask 523264
  %v273 = vsel %vm271, %v215, 0
  %v276 = vsel %vm271, %v216, 0
  %v279 = vsel %vm271, %v217, 0
  %v282 = vsel %vm271, %v218, 0
  %v285 = vsel %vm271, %v219, 0
  %v288 = vsel %vm271, %v220, 0
  %v291 = vsel %vm271, %v221, 0
  %v294 = vsel %vm271, %v222, 0
  %v297 = vsel %vm271, %v223, 0
  %v300 = vsel %vm271, %v224, 0
  %v303 = vsel %vm271, %v225, 0
  %v306 = vsel %vm271, %v226, 0
  %v309 = vsel %vm271, %v227, 0
  %v312 = vsel %vm271, %v228, 0
  %v315 = vsel %vm271, %v229, 0
  %v318 = vsel %vm271, %v230, 0
  %v321 = vsel %vm271, %v231, 0
  %v324 = vsel %vm271, %v232, 0
  %v327 = vsel %vm271, %v233, 0
  %v330 = vsel %vm271, %v234, 0
  %v333 = vsel %vm271, %v235, 0
  %v336 = vsel %vm271, %v236, 0
  %v339 = vsel %vm271, %v237, 0
  %v342 = vsel %vm271, %v238, 0
  %v345 = vsel %vm271, %v239, 0
  %v348 = vsel %vm271, %v240, 0
  %v351 = vsel %vm271, %v241, 0
  %v354 = vsel %vm271, %v242, 0
  %v357 = vsel %vm271, %v243, 0
  %v360 = vsel %vm271, %v244, 0
  %v363 = vsel %vm271, %v245, 0
  %v366 = vsel %vm271, %v246, 0
  %368 = vmatpush.bf16.msra.mxu0 0
  %369 = vmatpush.bf16.msra.mxu0 0
  %370 = vmatpush.bf16.msra.mxu0 0
  %371 = vmatpush.bf16.msra.mxu0 0
  %372 = vmatpush.bf16.msra.mxu0 %v266
  %373 = vmatpush.bf16.msra.mxu0 %v265
  %374 = vmatpush.bf16.msra.mxu0 %v264
  %375 = vmatpush.bf16.msra.mxu0 %v263
  %376 = vmatmul.bf16.gmra.mxu0 %v273
  %v377 = vpop.f32.mrf.mxu0
  %v378 = vadd.f32 0.0, %v377
  %v379 = vpop.f32.mrf.mxu0
  %v380 = vadd.f32 0.0, %v379
  %381 = vmatmul.bf16.gmra.mxu0 %v276
  %v382 = vpop.f32.mrf.mxu0
  %v383 = vadd.f32 0.0, %v382
  %v384 = vpop.f32.mrf.mxu0
  %v385 = vadd.f32 0.0, %v384
  %386 = vmatmul.bf16.gmra.mxu0 %v279
  %v387 = vpop.f32.mrf.mxu0
  %v388 = vadd.f32 0.0, %v387
  %v389 = vpop.f32.mrf.mxu0
  %v390 = vadd.f32 0.0, %v389
  %391 = vmatmul.bf16.gmra.mxu0 %v282
  %v392 = vpop.f32.mrf.mxu0
  %v393 = vadd.f32 0.0, %v392
  %v394 = vpop.f32.mrf.mxu0
  %v395 = vadd.f32 0.0, %v394
  %396 = vmatmul.bf16.gmra.mxu0 %v285
  %v397 = vpop.f32.mrf.mxu0
  %v398 = vadd.f32 0.0, %v397
  %v399 = vpop.f32.mrf.mxu0
  %v400 = vadd.f32 0.0, %v399
  %401 = vmatmul.bf16.gmra.mxu0 %v288
  %v402 = vpop.f32.mrf.mxu0
  %v403 = vadd.f32 0.0, %v402
  %v404 = vpop.f32.mrf.mxu0
  %v405 = vadd.f32 0.0, %v404
  %406 = vmatmul.bf16.gmra.mxu0 %v291
  %v407 = vpop.f32.mrf.mxu0
  %v408 = vadd.f32 0.0, %v407
  %v409 = vpop.f32.mrf.mxu0
  %v410 = vadd.f32 0.0, %v409
  %411 = vmatmul.bf16.gmra.mxu0 %v294
  %v412 = vpop.f32.mrf.mxu0
  %v413 = vadd.f32 0.0, %v412
  %v414 = vpop.f32.mrf.mxu0
  %v415 = vadd.f32 0.0, %v414
  %416 = vmatmul.bf16.gmra.mxu0 %v297
  %v417 = vpop.f32.mrf.mxu0
  %v418 = vadd.f32 0.0, %v417
  %v419 = vpop.f32.mrf.mxu0
  %v420 = vadd.f32 0.0, %v419
  %421 = vmatmul.bf16.gmra.mxu0 %v300
  %v422 = vpop.f32.mrf.mxu0
  %v423 = vadd.f32 0.0, %v422
  %v424 = vpop.f32.mrf.mxu0
  %v425 = vadd.f32 0.0, %v424
  %426 = vmatmul.bf16.gmra.mxu0 %v303
  %v427 = vpop.f32.mrf.mxu0
  %v428 = vadd.f32 0.0, %v427
  %v429 = vpop.f32.mrf.mxu0
  %v430 = vadd.f32 0.0, %v429
  %431 = vmatmul.bf16.gmra.mxu0 %v306
  %v432 = vpop.f32.mrf.mxu0
  %v433 = vadd.f32 0.0, %v432
  %v434 = vpop.f32.mrf.mxu0
  %v435 = vadd.f32 0.0, %v434
  %436 = vmatmul.bf16.gmra.mxu0 %v309
  %v437 = vpop.f32.mrf.mxu0
  %v438 = vadd.f32 0.0, %v437
  %v439 = vpop.f32.mrf.mxu0
  %v440 = vadd.f32 0.0, %v439
  %441 = vmatmul.bf16.gmra.mxu0 %v312
  %v442 = vpop.f32.mrf.mxu0
  %v443 = vadd.f32 0.0, %v442
  %v444 = vpop.f32.mrf.mxu0
  %v445 = vadd.f32 0.0, %v444
  %446 = vmatmul.bf16.gmra.mxu0 %v315
  %v447 = vpop.f32.mrf.mxu0
  %v448 = vadd.f32 0.0, %v447
  %v449 = vpop.f32.mrf.mxu0
  %v450 = vadd.f32 0.0, %v449
  %451 = vmatmul.bf16.gmra.mxu0 %v318
  %v452 = vpop.f32.mrf.mxu0
  %v453 = vadd.f32 0.0, %v452
  %v454 = vpop.f32.mrf.mxu0
  %v455 = vadd.f32 0.0, %v454
  %456 = vmatmul.bf16.gmra.mxu0 %v321
  %v457 = vpop.f32.mrf.mxu0
  %v458 = vadd.f32 0.0, %v457
  %v459 = vpop.f32.mrf.mxu0
  %v460 = vadd.f32 0.0, %v459
  %461 = vmatmul.bf16.gmra.mxu0 %v324
  %v462 = vpop.f32.mrf.mxu0
  %v463 = vadd.f32 0.0, %v462
  %v464 = vpop.f32.mrf.mxu0
  %v465 = vadd.f32 0.0, %v464
  %466 = vmatmul.bf16.gmra.mxu0 %v327
  %v467 = vpop.f32.mrf.mxu0
  %v468 = vadd.f32 0.0, %v467
  %v469 = vpop.f32.mrf.mxu0
  %v470 = vadd.f32 0.0, %v469
  %471 = vmatmul.bf16.gmra.mxu0 %v330
  %v472 = vpop.f32.mrf.mxu0
  %v473 = vadd.f32 0.0, %v472
  %v474 = vpop.f32.mrf.mxu0
  %v475 = vadd.f32 0.0, %v474
  %476 = vmatmul.bf16.gmra.mxu0 %v333
  %v477 = vpop.f32.mrf.mxu0
  %v478 = vadd.f32 0.0, %v477
  %v479 = vpop.f32.mrf.mxu0
  %v480 = vadd.f32 0.0, %v479
  %481 = vmatmul.bf16.gmra.mxu0 %v336
  %v482 = vpop.f32.mrf.mxu0
  %v483 = vadd.f32 0.0, %v482
  %v484 = vpop.f32.mrf.mxu0
  %v485 = vadd.f32 0.0, %v484
  %486 = vmatmul.bf16.gmra.mxu0 %v339
  %v487 = vpop.f32.mrf.mxu0
  %v488 = vadd.f32 0.0, %v487
  %v489 = vpop.f32.mrf.mxu0
  %v490 = vadd.f32 0.0, %v489
  %491 = vmatmul.bf16.gmra.mxu0 %v342
  %v492 = vpop.f32.mrf.mxu0
  %v493 = vadd.f32 0.0, %v492
  %v494 = vpop.f32.mrf.mxu0
  %v495 = vadd.f32 0.0, %v494
  %496 = vmatmul.bf16.gmra.mxu0 %v345
  %v497 = vpop.f32.mrf.mxu0
  %v498 = vadd.f32 0.0, %v497
  %v499 = vpop.f32.mrf.mxu0
  %v500 = vadd.f32 0.0, %v499
  %501 = vmatmul.bf16.gmra.mxu0 %v348
  %v502 = vpop.f32.mrf.mxu0
  %v503 = vadd.f32 0.0, %v502
  %v504 = vpop.f32.mrf.mxu0
  %v505 = vadd.f32 0.0, %v504
  %506 = vmatmul.bf16.gmra.mxu0 %v351
  %v507 = vpop.f32.mrf.mxu0
  %v508 = vadd.f32 0.0, %v507
  %v509 = vpop.f32.mrf.mxu0
  %v510 = vadd.f32 0.0, %v509
  %511 = vmatmul.bf16.gmra.mxu0 %v354
  %v512 = vpop.f32.mrf.mxu0
  %v513 = vadd.f32 0.0, %v512
  %v514 = vpop.f32.mrf.mxu0
  %v515 = vadd.f32 0.0, %v514
  %516 = vmatmul.bf16.gmra.mxu0 %v357
  %v517 = vpop.f32.mrf.mxu0
  %v518 = vadd.f32 0.0, %v517
  %v519 = vpop.f32.mrf.mxu0
  %v520 = vadd.f32 0.0, %v519
  %521 = vmatmul.bf16.gmra.mxu0 %v360
  %v522 = vpop.f32.mrf.mxu0
  %v523 = vadd.f32 0.0, %v522
  %v524 = vpop.f32.mrf.mxu0
  %v525 = vadd.f32 0.0, %v524
  %526 = vmatmul.bf16.gmra.mxu0 %v363
  %v527 = vpop.f32.mrf.mxu0
  %v528 = vadd.f32 0.0, %v527
  %v529 = vpop.f32.mrf.mxu0
  %v530 = vadd.f32 0.0, %v529
  %531 = vmatmul.bf16.gmra.mxu0 %v366
  %v532 = vpop.f32.mrf.mxu0
  %v533 = vadd.f32 0.0, %v532
  %v534 = vpop.f32.mrf.mxu0
  %v535 = vadd.f32 0.0, %v534
  %536 = vdwg.mxu0
  %v537 = vld [vmem:[%s2] sm:$0xff]
  %v538 = vld [vmem:[%s2 + $0x8] sm:$0xff]
  %v539 = vld [vmem:[%s2 + $0x10] sm:$0xff]
  %v540 = vld [vmem:[%s2 + $0x18] sm:$0xff]
  %v541 = vld [vmem:[%s2 + $0x20] sm:$0xff]
  %v542 = vld [vmem:[%s2 + $0x28] sm:$0xff]
  %v543 = vld [vmem:[%s2 + $0x30] sm:$0xff]
  %v544 = vld [vmem:[%s2 + $0x38] sm:$0xff]
  %v545 = vld [vmem:[%s2 + $0x40] sm:$0xff]
  %v546 = vld [vmem:[%s2 + $0x48] sm:$0xff]
  %v547 = vld [vmem:[%s2 + $0x50] sm:$0xff]
  %v548 = vld [vmem:[%s2 + $0x58] sm:$0xff]
  %v549 = vld [vmem:[%s2 + $0x60] sm:$0xff]
  %v550 = vld [vmem:[%s2 + $0x68] sm:$0xff]
  %v551 = vld [vmem:[%s2 + $0x70] sm:$0xff]
  %v552 = vld [vmem:[%s2 + $0x78] sm:$0xff]
  %v553 = vld [vmem:[%s2 + $0x80] sm:$0xff]
  %v554 = vld [vmem:[%s2 + $0x88] sm:$0xff]
  %v555 = vld [vmem:[%s2 + $0x90] sm:$0xff]
  %v556 = vld [vmem:[%s2 + $0x98] sm:$0xff]
  %v557 = vld [vmem:[%s2 + $0xa0] sm:$0xff]
  %v558 = vld [vmem:[%s2 + $0xa8] sm:$0xff]
  %v559 = vld [vmem:[%s2 + $0xb0] sm:$0xff]
  %v560 = vld [vmem:[%s2 + $0xb8] sm:$0xff]
  %v561 = vld [vmem:[%s2 + $0xc0] sm:$0xff]
  %v562 = vld [vmem:[%s2 + $0xc8] sm:$0xff]
  %v563 = vld [vmem:[%s2 + $0xd0] sm:$0xff]
  %v564 = vld [vmem:[%s2 + $0xd8] sm:$0xff]
  %v565 = vld [vmem:[%s2 + $0xe0] sm:$0xff]
  %v566 = vld [vmem:[%s2 + $0xe8] sm:$0xff]
  %v567 = vld [vmem:[%s2 + $0xf0] sm:$0xff]
  %v568 = vld [vmem:[%s2 + $0xf8] sm:$0xff]
  %v569 = vadd.f32 %v378, %v537
  %v570 = vadd.f32 %v380, %v538
  %v571 = vadd.f32 %v383, %v539
  %v572 = vadd.f32 %v385, %v540
  %v573 = vadd.f32 %v388, %v541
  %v574 = vadd.f32 %v390, %v542
  %v575 = vadd.f32 %v393, %v543
  %v576 = vadd.f32 %v395, %v544
  %v577 = vadd.f32 %v398, %v537
  %v578 = vadd.f32 %v400, %v538
  %v579 = vadd.f32 %v403, %v539
  %v580 = vadd.f32 %v405, %v540
  %v581 = vadd.f32 %v408, %v541
  %v582 = vadd.f32 %v410, %v542
  %v583 = vadd.f32 %v413, %v543
  %v584 = vadd.f32 %v415, %v544
  %v585 = vadd.f32 %v418, %v545
  %v586 = vadd.f32 %v420, %v546
  %v587 = vadd.f32 %v423, %v547
  %v588 = vadd.f32 %v425, %v548
  %v589 = vadd.f32 %v428, %v549
  %v590 = vadd.f32 %v430, %v550
  %v591 = vadd.f32 %v433, %v551
  %v592 = vadd.f32 %v435, %v552
  %v593 = vadd.f32 %v438, %v545
  %v594 = vadd.f32 %v440, %v546
  %v595 = vadd.f32 %v443, %v547
  %v596 = vadd.f32 %v445, %v548
  %v597 = vadd.f32 %v448, %v549
  %v598 = vadd.f32 %v450, %v550
  %v599 = vadd.f32 %v453, %v551
  %v600 = vadd.f32 %v455, %v552
  %v601 = vadd.f32 %v458, %v553
  %v602 = vadd.f32 %v460, %v554
  %v603 = vadd.f32 %v463, %v555
  %v604 = vadd.f32 %v465, %v556
  %v605 = vadd.f32 %v468, %v557
  %v606 = vadd.f32 %v470, %v558
  %v607 = vadd.f32 %v473, %v559
  %v608 = vadd.f32 %v475, %v560
  %v609 = vadd.f32 %v478, %v553
  %v610 = vadd.f32 %v480, %v554
  %v611 = vadd.f32 %v483, %v555
  %v612 = vadd.f32 %v485, %v556
  %v613 = vadd.f32 %v488, %v557
  %v614 = vadd.f32 %v490, %v558
  %v615 = vadd.f32 %v493, %v559
  %v616 = vadd.f32 %v495, %v560
  %v617 = vadd.f32 %v498, %v561
  %v618 = vadd.f32 %v500, %v562
  %v619 = vadd.f32 %v503, %v563
  %v620 = vadd.f32 %v505, %v564
  %v621 = vadd.f32 %v508, %v565
  %v622 = vadd.f32 %v510, %v566
  %v623 = vadd.f32 %v513, %v567
  %v624 = vadd.f32 %v515, %v568
  %v625 = vadd.f32 %v518, %v561
  %v626 = vadd.f32 %v520, %v562
  %v627 = vadd.f32 %v523, %v563
  %v628 = vadd.f32 %v525, %v564
  %v629 = vadd.f32 %v528, %v565
  %v630 = vadd.f32 %v530, %v566
  %v631 = vadd.f32 %v533, %v567
  %v632 = vadd.f32 %v535, %v568
  %v633 = vadd.f32 %v569, %v570
  %v634 = vadd.f32 %v633, %v571
  %v635 = vadd.f32 %v634, %v572
  %v636 = vadd.f32 %v635, %v573
  %v637 = vadd.f32 %v636, %v574
  %v638 = vadd.f32 %v637, %v575
  %v639 = vadd.f32 %v638, %v576
  %v640 = vadd.f32 %v639, %v577
  %v641 = vadd.f32 %v640, %v578
  %v642 = vadd.f32 %v641, %v579
  %v643 = vadd.f32 %v642, %v580
  %v644 = vadd.f32 %v643, %v581
  %v645 = vadd.f32 %v644, %v582
  %v646 = vadd.f32 %v645, %v583
  %v647 = vadd.f32 %v646, %v584
  %v648 = vadd.f32 %v647, %v585
  %v649 = vadd.f32 %v648, %v586
  %v650 = vadd.f32 %v649, %v587
  %v651 = vadd.f32 %v650, %v588
  %v652 = vadd.f32 %v651, %v589
  %v653 = vadd.f32 %v652, %v590
  %v654 = vadd.f32 %v653, %v591
  %v655 = vadd.f32 %v654, %v592
  %v656 = vadd.f32 %v655, %v593
  %v657 = vadd.f32 %v656, %v594
  %v658 = vadd.f32 %v657, %v595
  %v659 = vadd.f32 %v658, %v596
  %v660 = vadd.f32 %v659, %v597
  %v661 = vadd.f32 %v660, %v598
  %v662 = vadd.f32 %v661, %v599
  %v663 = vadd.f32 %v662, %v600
  %v664 = vadd.f32 %v663, %v601
  %v665 = vadd.f32 %v664, %v602
  %v666 = vadd.f32 %v665, %v603
  %v667 = vadd.f32 %v666, %v604
  %v668 = vadd.f32 %v667, %v605
  %v669 = vadd.f32 %v668, %v606
  %v670 = vadd.f32 %v669, %v607
  %v671 = vadd.f32 %v670, %v608
  %v672 = vadd.f32 %v671, %v609
  %v673 = vadd.f32 %v672, %v610
  %v674 = vadd.f32 %v673, %v611
  %v675 = vadd.f32 %v674, %v612
  %v676 = vadd.f32 %v675, %v613
  %v677 = vadd.f32 %v676, %v614
  %v678 = vadd.f32 %v677, %v615
  %v679 = vadd.f32 %v678, %v616
  %v680 = vadd.f32 %v679, %v617
  %v681 = vadd.f32 %v680, %v618
  %v682 = vadd.f32 %v681, %v619
  %v683 = vadd.f32 %v682, %v620
  %v684 = vadd.f32 %v683, %v621
  %v685 = vadd.f32 %v684, %v622
  %v686 = vadd.f32 %v685, %v623
  %v687 = vadd.f32 %v686, %v624
  %v688 = vadd.f32 %v687, %v625
  %v689 = vadd.f32 %v688, %v626
  %v690 = vadd.f32 %v689, %v627
  %v691 = vadd.f32 %v690, %v628
  %v692 = vadd.f32 %v691, %v629
  %v693 = vadd.f32 %v692, %v630
  %v694 = vadd.f32 %v693, %v631
  %v695 = vadd.f32 %v694, %v632
  %v696 = vrot.slane %v695, 4
  %v697 = vadd.f32 %v695, %v696
  %v698 = vrot.slane %v697, 2
  %v699 = vadd.f32 %v697, %v698
  %v700 = vrot.slane %v699, 1
  %v701 = vadd.f32 %v699, %v700
  %v702 = vmul.f32 %v701, 0.001953125
  %v703 = vmul.f32 %v569, %v569
  %v704 = vmul.f32 %v570, %v570
  %v705 = vmul.f32 %v571, %v571
  %v706 = vmul.f32 %v572, %v572
  %v707 = vmul.f32 %v573, %v573
  %v708 = vmul.f32 %v574, %v574
  %v709 = vmul.f32 %v575, %v575
  %v710 = vmul.f32 %v576, %v576
  %v711 = vmul.f32 %v577, %v577
  %v712 = vmul.f32 %v578, %v578
  %v713 = vmul.f32 %v579, %v579
  %v714 = vmul.f32 %v580, %v580
  %v715 = vmul.f32 %v581, %v581
  %v716 = vmul.f32 %v582, %v582
  %v717 = vmul.f32 %v583, %v583
  %v718 = vmul.f32 %v584, %v584
  %v719 = vmul.f32 %v585, %v585
  %v720 = vmul.f32 %v586, %v586
  %v721 = vmul.f32 %v587, %v587
  %v722 = vmul.f32 %v588, %v588
  %v723 = vmul.f32 %v589, %v589
  %v724 = vmul.f32 %v590, %v590
  %v725 = vmul.f32 %v591, %v591
  %v726 = vmul.f32 %v592, %v592
  %v727 = vmul.f32 %v593, %v593
  %v728 = vmul.f32 %v594, %v594
  %v729 = vmul.f32 %v595, %v595
  %v730 = vmul.f32 %v596, %v596
  %v731 = vmul.f32 %v597, %v597
  %v732 = vmul.f32 %v598, %v598
  %v733 = vmul.f32 %v599, %v599
  %v734 = vmul.f32 %v600, %v600
  %v735 = vmul.f32 %v601, %v601
  %v736 = vmul.f32 %v602, %v602
  %v737 = vmul.f32 %v603, %v603
  %v738 = vmul.f32 %v604, %v604
  %v739 = vmul.f32 %v605, %v605
  %v740 = vmul.f32 %v606, %v606
  %v741 = vmul.f32 %v607, %v607
  %v742 = vmul.f32 %v608, %v608
  %v743 = vmul.f32 %v609, %v609
  %v744 = vmul.f32 %v610, %v610
  %v745 = vmul.f32 %v611, %v611
  %v746 = vmul.f32 %v612, %v612
  %v747 = vmul.f32 %v613, %v613
  %v748 = vmul.f32 %v614, %v614
  %v749 = vmul.f32 %v615, %v615
  %v750 = vmul.f32 %v616, %v616
  %v751 = vmul.f32 %v617, %v617
  %v752 = vmul.f32 %v618, %v618
  %v753 = vmul.f32 %v619, %v619
  %v754 = vmul.f32 %v620, %v620
  %v755 = vmul.f32 %v621, %v621
  %v756 = vmul.f32 %v622, %v622
  %v757 = vmul.f32 %v623, %v623
  %v758 = vmul.f32 %v624, %v624
  %v759 = vmul.f32 %v625, %v625
  %v760 = vmul.f32 %v626, %v626
  %v761 = vmul.f32 %v627, %v627
  %v762 = vmul.f32 %v628, %v628
  %v763 = vmul.f32 %v629, %v629
  %v764 = vmul.f32 %v630, %v630
  %v765 = vmul.f32 %v631, %v631
  %v766 = vmul.f32 %v632, %v632
  %v767 = vadd.f32 %v703, %v704
  %v768 = vadd.f32 %v767, %v705
  %v769 = vadd.f32 %v768, %v706
  %v770 = vadd.f32 %v769, %v707
  %v771 = vadd.f32 %v770, %v708
  %v772 = vadd.f32 %v771, %v709
  %v773 = vadd.f32 %v772, %v710
  %v774 = vadd.f32 %v773, %v711
  %v775 = vadd.f32 %v774, %v712
  %v776 = vadd.f32 %v775, %v713
  %v777 = vadd.f32 %v776, %v714
  %v778 = vadd.f32 %v777, %v715
  %v779 = vadd.f32 %v778, %v716
  %v780 = vadd.f32 %v779, %v717
  %v781 = vadd.f32 %v780, %v718
  %v782 = vadd.f32 %v781, %v719
  %v783 = vadd.f32 %v782, %v720
  %v784 = vadd.f32 %v783, %v721
  %v785 = vadd.f32 %v784, %v722
  %v786 = vadd.f32 %v785, %v723
  %v787 = vadd.f32 %v786, %v724
  %v788 = vadd.f32 %v787, %v725
  %v789 = vadd.f32 %v788, %v726
  %v790 = vadd.f32 %v789, %v727
  %v791 = vadd.f32 %v790, %v728
  %v792 = vadd.f32 %v791, %v729
  %v793 = vadd.f32 %v792, %v730
  %v794 = vadd.f32 %v793, %v731
  %v795 = vadd.f32 %v794, %v732
  %v796 = vadd.f32 %v795, %v733
  %v797 = vadd.f32 %v796, %v734
  %v798 = vadd.f32 %v797, %v735
  %v799 = vadd.f32 %v798, %v736
  %v800 = vadd.f32 %v799, %v737
  %v801 = vadd.f32 %v800, %v738
  %v802 = vadd.f32 %v801, %v739
  %v803 = vadd.f32 %v802, %v740
  %v804 = vadd.f32 %v803, %v741
  %v805 = vadd.f32 %v804, %v742
  %v806 = vadd.f32 %v805, %v743
  %v807 = vadd.f32 %v806, %v744
  %v808 = vadd.f32 %v807, %v745
  %v809 = vadd.f32 %v808, %v746
  %v810 = vadd.f32 %v809, %v747
  %v811 = vadd.f32 %v810, %v748
  %v812 = vadd.f32 %v811, %v749
  %v813 = vadd.f32 %v812, %v750
  %v814 = vadd.f32 %v813, %v751
  %v815 = vadd.f32 %v814, %v752
  %v816 = vadd.f32 %v815, %v753
  %v817 = vadd.f32 %v816, %v754
  %v818 = vadd.f32 %v817, %v755
  %v819 = vadd.f32 %v818, %v756
  %v820 = vadd.f32 %v819, %v757
  %v821 = vadd.f32 %v820, %v758
  %v822 = vadd.f32 %v821, %v759
  %v823 = vadd.f32 %v822, %v760
  %v824 = vadd.f32 %v823, %v761
  %v825 = vadd.f32 %v824, %v762
  %v826 = vadd.f32 %v825, %v763
  %v827 = vadd.f32 %v826, %v764
  %v828 = vadd.f32 %v827, %v765
  %v829 = vadd.f32 %v828, %v766
  %v830 = vrot.slane %v829, 4
  %v831 = vadd.f32 %v829, %v830
  %v832 = vrot.slane %v831, 2
  %v833 = vadd.f32 %v831, %v832
  %v834 = vrot.slane %v833, 1
  %v835 = vadd.f32 %v833, %v834
  %v836 = vmul.f32 %v835, 0.001953125
  %v837 = vmul.f32 %v702, %v702
  %v838 = vsub.f32 %v836, %v837
  %v839 = vmax.f32 %v838, 0.0
  %v840 = vadd.f32 %v839, 1e-05
  %v841 = vrsqrt.pop %v840
  %v842 = vmul.f32 %v841, %v840
  %v843 = vmul.f32 %v842, %v841
  %v844 = vmul.f32 0.5, %v843
  %v845 = vsub.f32 1.5, %v844
  %v846 = vmul.f32 %v841, %v845
  %vm847 = vweird.f32 %v840
  %vm848 = vweird.f32 %v841
  %vm849 = vmor %vm847, %vm848
  %v850 = vsel %vm849, %v841, %v846
  %v851 = vsub.f32 0.0, %v702
  %v852 = vmul.f32 %v851, %v850
  %v853 = vmul.f32 %v569, %v850
  %v854 = vmul.f32 %v570, %v850
  %v855 = vmul.f32 %v571, %v850
  %v856 = vmul.f32 %v572, %v850
  %v857 = vmul.f32 %v573, %v850
  %v858 = vmul.f32 %v574, %v850
  %v859 = vmul.f32 %v575, %v850
  %v860 = vmul.f32 %v576, %v850
  %v861 = vmul.f32 %v577, %v850
  %v862 = vmul.f32 %v578, %v850
  %v863 = vmul.f32 %v579, %v850
  %v864 = vmul.f32 %v580, %v850
  %v865 = vmul.f32 %v581, %v850
  %v866 = vmul.f32 %v582, %v850
  %v867 = vmul.f32 %v583, %v850
  %v868 = vmul.f32 %v584, %v850
  %v869 = vmul.f32 %v585, %v850
  %v870 = vmul.f32 %v586, %v850
  %v871 = vmul.f32 %v587, %v850
  %v872 = vmul.f32 %v588, %v850
  %v873 = vmul.f32 %v589, %v850
  %v874 = vmul.f32 %v590, %v850
  %v875 = vmul.f32 %v591, %v850
  %v876 = vmul.f32 %v592, %v850
  %v877 = vmul.f32 %v593, %v850
  %v878 = vmul.f32 %v594, %v850
  %v879 = vmul.f32 %v595, %v850
  %v880 = vmul.f32 %v596, %v850
  %v881 = vmul.f32 %v597, %v850
  %v882 = vmul.f32 %v598, %v850
  %v883 = vmul.f32 %v599, %v850
  %v884 = vmul.f32 %v600, %v850
  %v885 = vmul.f32 %v601, %v850
  %v886 = vmul.f32 %v602, %v850
  %v887 = vmul.f32 %v603, %v850
  %v888 = vmul.f32 %v604, %v850
  %v889 = vmul.f32 %v605, %v850
  %v890 = vmul.f32 %v606, %v850
  %v891 = vmul.f32 %v607, %v850
  %v892 = vmul.f32 %v608, %v850
  %v893 = vmul.f32 %v609, %v850
  %v894 = vmul.f32 %v610, %v850
  %v895 = vmul.f32 %v611, %v850
  %v896 = vmul.f32 %v612, %v850
  %v897 = vmul.f32 %v613, %v850
  %v898 = vmul.f32 %v614, %v850
  %v899 = vmul.f32 %v615, %v850
  %v900 = vmul.f32 %v616, %v850
  %v901 = vmul.f32 %v617, %v850
  %v902 = vmul.f32 %v618, %v850
  %v903 = vmul.f32 %v619, %v850
  %v904 = vmul.f32 %v620, %v850
  %v905 = vmul.f32 %v621, %v850
  %v906 = vmul.f32 %v622, %v850
  %v907 = vmul.f32 %v623, %v850
  %v908 = vmul.f32 %v624, %v850
  %v909 = vmul.f32 %v625, %v850
  %v910 = vmul.f32 %v626, %v850
  %v911 = vmul.f32 %v627, %v850
  %v912 = vmul.f32 %v628, %v850
  %v913 = vmul.f32 %v629, %v850
  %v914 = vmul.f32 %v630, %v850
  %v915 = vmul.f32 %v631, %v850
  %v916 = vmul.f32 %v632, %v850
  %v917 = vadd.f32 %v853, %v852
  %v918 = vadd.f32 %v854, %v852
  %v919 = vadd.f32 %v855, %v852
  %v920 = vadd.f32 %v856, %v852
  %v921 = vadd.f32 %v857, %v852
  %v922 = vadd.f32 %v858, %v852
  %v923 = vadd.f32 %v859, %v852
  %v924 = vadd.f32 %v860, %v852
  %v925 = vadd.f32 %v861, %v852
  %v926 = vadd.f32 %v862, %v852
  %v927 = vadd.f32 %v863, %v852
  %v928 = vadd.f32 %v864, %v852
  %v929 = vadd.f32 %v865, %v852
  %v930 = vadd.f32 %v866, %v852
  %v931 = vadd.f32 %v867, %v852
  %v932 = vadd.f32 %v868, %v852
  %v933 = vadd.f32 %v869, %v852
  %v934 = vadd.f32 %v870, %v852
  %v935 = vadd.f32 %v871, %v852
  %v936 = vadd.f32 %v872, %v852
  %v937 = vadd.f32 %v873, %v852
  %v938 = vadd.f32 %v874, %v852
  %v939 = vadd.f32 %v875, %v852
  %v940 = vadd.f32 %v876, %v852
  %v941 = vadd.f32 %v877, %v852
  %v942 = vadd.f32 %v878, %v852
  %v943 = vadd.f32 %v879, %v852
  %v944 = vadd.f32 %v880, %v852
  %v945 = vadd.f32 %v881, %v852
  %v946 = vadd.f32 %v882, %v852
  %v947 = vadd.f32 %v883, %v852
  %v948 = vadd.f32 %v884, %v852
  %v949 = vadd.f32 %v885, %v852
  %v950 = vadd.f32 %v886, %v852
  %v951 = vadd.f32 %v887, %v852
  %v952 = vadd.f32 %v888, %v852
  %v953 = vadd.f32 %v889, %v852
  %v954 = vadd.f32 %v890, %v852
  %v955 = vadd.f32 %v891, %v852
  %v956 = vadd.f32 %v892, %v852
  %v957 = vadd.f32 %v893, %v852
  %v958 = vadd.f32 %v894, %v852
  %v959 = vadd.f32 %v895, %v852
  %v960 = vadd.f32 %v896, %v852
  %v961 = vadd.f32 %v897, %v852
  %v962 = vadd.f32 %v898, %v852
  %v963 = vadd.f32 %v899, %v852
  %v964 = vadd.f32 %v900, %v852
  %v965 = vadd.f32 %v901, %v852
  %v966 = vadd.f32 %v902, %v852
  %v967 = vadd.f32 %v903, %v852
  %v968 = vadd.f32 %v904, %v852
  %v969 = vadd.f32 %v905, %v852
  %v970 = vadd.f32 %v906, %v852
  %v971 = vadd.f32 %v907, %v852
  %v972 = vadd.f32 %v908, %v852
  %v973 = vadd.f32 %v909, %v852
  %v974 = vadd.f32 %v910, %v852
  %v975 = vadd.f32 %v911, %v852
  %v976 = vadd.f32 %v912, %v852
  %v977 = vadd.f32 %v913, %v852
  %v978 = vadd.f32 %v914, %v852
  %v979 = vadd.f32 %v915, %v852
  %v980 = vadd.f32 %v916, %v852
  %981 = vst [vmem:[#allocation2] sm:$0xff] %v917
  %982 = vst [vmem:[#allocation2 + $0x8] sm:$0xff] %v918
  %983 = vst [vmem:[#allocation2 + $0x10] sm:$0xff] %v919
  %984 = vst [vmem:[#allocation2 + $0x18] sm:$0xff] %v920
  %985 = vst [vmem:[#allocation2 + $0x20] sm:$0xff] %v921
  %986 = vst [vmem:[#allocation2 + $0x28] sm:$0xff] %v922
  %987 = vst [vmem:[#allocation2 + $0x30] sm:$0xff] %v923
  %988 = vst [vmem:[#allocation2 + $0x38] sm:$0xff] %v924
  %989 = vst [vmem:[#allocation2 + $0x40] sm:$0xff] %v925
  %990 = vst [vmem:[#allocation2 + $0x48] sm:$0xff] %v926
  %991 = vst [vmem:[#allocation2 + $0x50] sm:$0xff] %v927
  %992 = vst [vmem:[#allocation2 + $0x58] sm:$0xff] %v928
  %993 = vst [vmem:[#allocation2 + $0x60] sm:$0xff] %v929
  %994 = vst [vmem:[#allocation2 + $0x68] sm:$0xff] %v930
  %995 = vst [vmem:[#allocation2 + $0x70] sm:$0xff] %v931
  %996 = vst [vmem:[#allocation2 + $0x78] sm:$0xff] %v932
  %997 = vst [vmem:[#allocation2 + $0x80] sm:$0xff] %v933
  %998 = vst [vmem:[#allocation2 + $0x88] sm:$0xff] %v934
  %999 = vst [vmem:[#allocation2 + $0x90] sm:$0xff] %v935
  %1000 = vst [vmem:[#allocation2 + $0x98] sm:$0xff] %v936
  %1001 = vst [vmem:[#allocation2 + $0xa0] sm:$0xff] %v937
  %1002 = vst [vmem:[#allocation2 + $0xa8] sm:$0xff] %v938
  %1003 = vst [vmem:[#allocation2 + $0xb0] sm:$0xff] %v939
  %1004 = vst [vmem:[#allocation2 + $0xb8] sm:$0xff] %v940
  %1005 = vst [vmem:[#allocation2 + $0xc0] sm:$0xff] %v941
  %1006 = vst [vmem:[#allocation2 + $0xc8] sm:$0xff] %v942
  %1007 = vst [vmem:[#allocation2 + $0xd0] sm:$0xff] %v943
  %1008 = vst [vmem:[#allocation2 + $0xd8] sm:$0xff] %v944
  %1009 = vst [vmem:[#allocation2 + $0xe0] sm:$0xff] %v945
  %1010 = vst [vmem:[#allocation2 + $0xe8] sm:$0xff] %v946
  %1011 = vst [vmem:[#allocation2 + $0xf0] sm:$0xff] %v947
  %1012 = vst [vmem:[#allocation2 + $0xf8] sm:$0xff] %v948
  %1013 = vst [vmem:[#allocation2 + $0x100] sm:$0xff] %v949
  %1014 = vst [vmem:[#allocation2 + $0x108] sm:$0xff] %v950
  %1015 = vst [vmem:[#allocation2 + $0x110] sm:$0xff] %v951
  %1016 = vst [vmem:[#allocation2 + $0x118] sm:$0xff] %v952
  %1017 = vst [vmem:[#allocation2 + $0x120] sm:$0xff] %v953
  %1018 = vst [vmem:[#allocation2 + $0x128] sm:$0xff] %v954
  %1019 = vst [vmem:[#allocation2 + $0x130] sm:$0xff] %v955
  %1020 = vst [vmem:[#allocation2 + $0x138] sm:$0xff] %v956
  %1021 = vst [vmem:[#allocation2 + $0x140] sm:$0xff] %v957
  %1022 = vst [vmem:[#allocation2 + $0x148] sm:$0xff] %v958
  %1023 = vst [vmem:[#allocation2 + $0x150] sm:$0xff] %v959
  %1024 = vst [vmem:[#allocation2 + $0x158] sm:$0xff] %v960
  %1025 = vst [vmem:[#allocation2 + $0x160] sm:$0xff] %v961
  %1026 = vst [vmem:[#allocation2 + $0x168] sm:$0xff] %v962
  %1027 = vst [vmem:[#allocation2 + $0x170] sm:$0xff] %v963
  %1028 = vst [vmem:[#allocation2 + $0x178] sm:$0xff] %v964
  %1029 = vst [vmem:[#allocation2 + $0x180] sm:$0xff] %v965
  %1030 = vst [vmem:[#allocation2 + $0x188] sm:$0xff] %v966
  %1031 = vst [vmem:[#allocation2 + $0x190] sm:$0xff] %v967
  %1032 = vst [vmem:[#allocation2 + $0x198] sm:$0xff] %v968
  %1033 = vst [vmem:[#allocation2 + $0x1a0] sm:$0xff] %v969
  %1034 = vst [vmem:[#allocation2 + $0x1a8] sm:$0xff] %v970
  %1035 = vst [vmem:[#allocation2 + $0x1b0] sm:$0xff] %v971
  %1036 = vst [vmem:[#allocation2 + $0x1b8] sm:$0xff] %v972
  %1037 = vst [vmem:[#allocation2 + $0x1c0] sm:$0xff] %v973
  %1038 = vst [vmem:[#allocation2 + $0x1c8] sm:$0xff] %v974
  %1039 = vst [vmem:[#allocation2 + $0x1d0] sm:$0xff] %v975
  %1040 = vst [vmem:[#allocation2 + $0x1d8] sm:$0xff] %v976
  %1041 = vst [vmem:[#allocation2 + $0x1e0] sm:$0xff] %v977
  %1042 = vst [vmem:[#allocation2 + $0x1e8] sm:$0xff] %v978
  %1043 = vst [vmem:[#allocation2 + $0x1f0] sm:$0xff] %v979
  %1044 = vst [vmem:[#allocation2 + $0x1f8] sm:$0xff] %v980
  %v1045 = vld [vmem:[#allocation2] sm:$0xff]
  %v1046 = vld [vmem:[#allocation2 + $0x8] sm:$0xff]
  %v1047 = vld [vmem:[#allocation2 + $0x10] sm:$0xff]
  %v1048 = vld [vmem:[#allocation2 + $0x18] sm:$0xff]
  %v1049 = vld [vmem:[#allocation2 + $0x20] sm:$0xff]
  %v1050 = vld [vmem:[#allocation2 + $0x28] sm:$0xff]
  %v1051 = vld [vmem:[#allocation2 + $0x30] sm:$0xff]
  %v1052 = vld [vmem:[#allocation2 + $0x38] sm:$0xff]
  %v1053 = vld [vmem:[#allocation2 + $0x40] sm:$0xff]
  %v1054 = vld [vmem:[#allocation2 + $0x48] sm:$0xff]
  %v1055 = vld [vmem:[#allocation2 + $0x50] sm:$0xff]
  %v1056 = vld [vmem:[#allocation2 + $0x58] sm:$0xff]
  %v1057 = vld [vmem:[#allocation2 + $0x60] sm:$0xff]
  %v1058 = vld [vmem:[#allocation2 + $0x68] sm:$0xff]
  %v1059 = vld [vmem:[#allocation2 + $0x70] sm:$0xff]
  %v1060 = vld [vmem:[#allocation2 + $0x78] sm:$0xff]
  %v1061 = vadd.f32 %v1045, 0.0
  %v1062 = vadd.f32 %v1046, 0.0
  %v1063 = vadd.f32 %v1047, 0.0
  %v1064 = vadd.f32 %v1048, 0.0
  %v1065 = vadd.f32 %v1049, 0.0
  %v1066 = vadd.f32 %v1050, 0.0
  %v1067 = vadd.f32 %v1051, 0.0
  %v1068 = vadd.f32 %v1052, 0.0
  %v1069 = vadd.f32 %v1053, 0.0
  %v1070 = vadd.f32 %v1054, 0.0
  %v1071 = vadd.f32 %v1055, 0.0
  %v1072 = vadd.f32 %v1056, 0.0
  %v1073 = vadd.f32 %v1057, 0.0
  %v1074 = vadd.f32 %v1058, 0.0
  %v1075 = vadd.f32 %v1059, 0.0
  %v1076 = vadd.f32 %v1060, 0.0
  %v1077 = vmul.f32 %v1061, 0.5
  %v1078 = vmul.f32 %v1062, 0.5
  %v1079 = vmul.f32 %v1063, 0.5
  %v1080 = vmul.f32 %v1064, 0.5
  %v1081 = vmul.f32 %v1065, 0.5
  %v1082 = vmul.f32 %v1066, 0.5
  %v1083 = vmul.f32 %v1067, 0.5
  %v1084 = vmul.f32 %v1068, 0.5
  %v1085 = vmul.f32 %v1069, 0.5
  %v1086 = vmul.f32 %v1070, 0.5
  %v1087 = vmul.f32 %v1071, 0.5
  %v1088 = vmul.f32 %v1072, 0.5
  %v1089 = vmul.f32 %v1073, 0.5
  %v1090 = vmul.f32 %v1074, 0.5
  %v1091 = vmul.f32 %v1075, 0.5
  %v1092 = vmul.f32 %v1076, 0.5
  %vm1093 = vcmp.ge.f32.partialorder %v1077, 1.0
  %vm1094 = vcmp.ge.f32.partialorder %v1078, 1.0
  %vm1095 = vcmp.ge.f32.partialorder %v1079, 1.0
  %vm1096 = vcmp.ge.f32.partialorder %v1080, 1.0
  %vm1097 = vcmp.ge.f32.partialorder %v1081, 1.0
  %vm1098 = vcmp.ge.f32.partialorder %v1082, 1.0
  %vm1099 = vcmp.ge.f32.partialorder %v1083, 1.0
  %vm1100 = vcmp.ge.f32.partialorder %v1084, 1.0
  %vm1101 = vcmp.ge.f32.partialorder %v1085, 1.0
  %vm1102 = vcmp.ge.f32.partialorder %v1086, 1.0
  %vm1103 = vcmp.ge.f32.partialorder %v1087, 1.0
  %vm1104 = vcmp.ge.f32.partialorder %v1088, 1.0
  %vm1105 = vcmp.ge.f32.partialorder %v1089, 1.0
  %vm1106 = vcmp.ge.f32.partialorder %v1090, 1.0
  %vm1107 = vcmp.ge.f32.partialorder %v1091, 1.0
  %vm1108 = vcmp.ge.f32.partialorder %v1092, 1.0
  %v1109 = vsel %vm1093, 1, 0
  %v1110 = vsel %vm1094, 1, 0
  %v1111 = vsel %vm1095, 1, 0
  %v1112 = vsel %vm1096, 1, 0
  %v1113 = vsel %vm1097, 1, 0
  %v1114 = vsel %vm1098, 1, 0
  %v1115 = vsel %vm1099, 1, 0
  %v1116 = vsel %vm1100, 1, 0
  %v1117 = vsel %vm1101, 1, 0
  %v1118 = vsel %vm1102, 1, 0
  %v1119 = vsel %vm1103, 1, 0
  %v1120 = vsel %vm1104, 1, 0
  %v1121 = vsel %vm1105, 1, 0
  %v1122 = vsel %vm1106, 1, 0
  %v1123 = vsel %vm1107, 1, 0
  %v1124 = vsel %vm1108, 1, 0
  %v1125 = vcvt.s32.f32 %v1109
  %v1126 = vcvt.s32.f32 %v1110
  %v1127 = vcvt.s32.f32 %v1111
  %v1128 = vcvt.s32.f32 %v1112
  %v1129 = vcvt.s32.f32 %v1113
  %v1130 = vcvt.s32.f32 %v1114
  %v1131 = vcvt.s32.f32 %v1115
  %v1132 = vcvt.s32.f32 %v1116
  %v1133 = vcvt.s32.f32 %v1117
  %v1134 = vcvt.s32.f32 %v1118
  %v1135 = vcvt.s32.f32 %v1119
  %v1136 = vcvt.s32.f32 %v1120
  %v1137 = vcvt.s32.f32 %v1121
  %v1138 = vcvt.s32.f32 %v1122
  %v1139 = vcvt.s32.f32 %v1123
  %v1140 = vcvt.s32.f32 %v1124
  %v1141 = vsub.f32 %v1077, %v1125
  %v1142 = vsub.f32 %v1078, %v1126
  %v1143 = vsub.f32 %v1079, %v1127
  %v1144 = vsub.f32 %v1080, %v1128
  %v1145 = vsub.f32 %v1081, %v1129
  %v1146 = vsub.f32 %v1082, %v1130
  %v1147 = vsub.f32 %v1083, %v1131
  %v1148 = vsub.f32 %v1084, %v1132
  %v1149 = vsub.f32 %v1085, %v1133
  %v1150 = vsub.f32 %v1086, %v1134
  %v1151 = vsub.f32 %v1087, %v1135
  %v1152 = vsub.f32 %v1088, %v1136
  %v1153 = vsub.f32 %v1089, %v1137
  %v1154 = vsub.f32 %v1090, %v1138
  %v1155 = vsub.f32 %v1091, %v1139
  %v1156 = vsub.f32 %v1092, %v1140
  %v1157 = vpack.c.bf16 %v1125, %v1125
  %v1158 = vpack.c.bf16 %v1126, %v1126
  %v1159 = vpack.c.bf16 %v1127, %v1127
  %v1160 = vpack.c.bf16 %v1128, %v1128
  %v1161 = vpack.c.bf16 %v1129, %v1129
  %v1162 = vpack.c.bf16 %v1130, %v1130
  %v1163 = vpack.c.bf16 %v1131, %v1131
  %v1164 = vpack.c.bf16 %v1132, %v1132
  %v1165 = vpack.c.bf16 %v1133, %v1133
  %v1166 = vpack.c.bf16 %v1134, %v1134
  %v1167 = vpack.c.bf16 %v1135, %v1135
  %v1168 = vpack.c.bf16 %v1136, %v1136
  %v1169 = vpack.c.bf16 %v1137, %v1137
  %v1170 = vpack.c.bf16 %v1138, %v1138
  %v1171 = vpack.c.bf16 %v1139, %v1139
  %v1172 = vpack.c.bf16 %v1140, %v1140
  %1173 = vst [vmem:[%s3] sm:$0xf] %v1157
  %1174 = vst [vmem:[%s3 + $0x4] sm:$0xf] %v1158
  %1175 = vst [vmem:[%s3 + $0x8] sm:$0xf] %v1159
  %1176 = vst [vmem:[%s3 + $0xc] sm:$0xf] %v1160
  %1177 = vst [vmem:[%s3 + $0x10] sm:$0xf] %v1161
  %1178 = vst [vmem:[%s3 + $0x14] sm:$0xf] %v1162
  %1179 = vst [vmem:[%s3 + $0x18] sm:$0xf] %v1163
  %1180 = vst [vmem:[%s3 + $0x1c] sm:$0xf] %v1164
  %1181 = vst [vmem:[%s3 + $0x20] sm:$0xf] %v1165
  %1182 = vst [vmem:[%s3 + $0x24] sm:$0xf] %v1166
  %1183 = vst [vmem:[%s3 + $0x28] sm:$0xf] %v1167
  %1184 = vst [vmem:[%s3 + $0x2c] sm:$0xf] %v1168
  %1185 = vst [vmem:[%s3 + $0x30] sm:$0xf] %v1169
  %1186 = vst [vmem:[%s3 + $0x34] sm:$0xf] %v1170
  %1187 = vst [vmem:[%s3 + $0x38] sm:$0xf] %v1171
  %1188 = vst [vmem:[%s3 + $0x3c] sm:$0xf] %v1172
  %s1189 = scalar_lea.vmem [#allocation2], 128
  %v1190 = vld [vmem:[%s1189] sm:$0xff]
  %v1191 = vld [vmem:[%s1189 + $0x8] sm:$0xff]
  %v1192 = vld [vmem:[%s1189 + $0x10] sm:$0xff]
  %v1193 = vld [vmem:[%s1189 + $0x18] sm:$0xff]
  %v1194 = vld [vmem:[%s1189 + $0x20] sm:$0xff]
  %v1195 = vld [vmem:[%s1189 + $0x28] sm:$0xff]
  %v1196 = vld [vmem:[%s1189 + $0x30] sm:$0xff]
  %v1197 = vld [vmem:[%s1189 + $0x38] sm:$0xff]
  %v1198 = vld [vmem:[%s1189 + $0x40] sm:$0xff]
  %v1199 = vld [vmem:[%s1189 + $0x48] sm:$0xff]
  %v1200 = vld [vmem:[%s1189 + $0x50] sm:$0xff]
  %v1201 = vld [vmem:[%s1189 + $0x58] sm:$0xff]
  %v1202 = vld [vmem:[%s1189 + $0x60] sm:$0xff]
  %v1203 = vld [vmem:[%s1189 + $0x68] sm:$0xff]
  %v1204 = vld [vmem:[%s1189 + $0x70] sm:$0xff]
  %v1205 = vld [vmem:[%s1189 + $0x78] sm:$0xff]
  %v1206 = vadd.f32 %v1141, %v1190
  %v1207 = vadd.f32 %v1142, %v1191
  %v1208 = vadd.f32 %v1143, %v1192
  %v1209 = vadd.f32 %v1144, %v1193
  %v1210 = vadd.f32 %v1145, %v1194
  %v1211 = vadd.f32 %v1146, %v1195
  %v1212 = vadd.f32 %v1147, %v1196
  %v1213 = vadd.f32 %v1148, %v1197
  %v1214 = vadd.f32 %v1149, %v1198
  %v1215 = vadd.f32 %v1150, %v1199
  %v1216 = vadd.f32 %v1151, %v1200
  %v1217 = vadd.f32 %v1152, %v1201
  %v1218 = vadd.f32 %v1153, %v1202
  %v1219 = vadd.f32 %v1154, %v1203
  %v1220 = vadd.f32 %v1155, %v1204
  %v1221 = vadd.f32 %v1156, %v1205
  %v1222 = vmul.f32 %v1206, 0.5
  %v1223 = vmul.f32 %v1207, 0.5
  %v1224 = vmul.f32 %v1208, 0.5
  %v1225 = vmul.f32 %v1209, 0.5
  %v1226 = vmul.f32 %v1210, 0.5
  %v1227 = vmul.f32 %v1211, 0.5
  %v1228 = vmul.f32 %v1212, 0.5
  %v1229 = vmul.f32 %v1213, 0.5
  %v1230 = vmul.f32 %v1214, 0.5
  %v1231 = vmul.f32 %v1215, 0.5
  %v1232 = vmul.f32 %v1216, 0.5
  %v1233 = vmul.f32 %v1217, 0.5
  %v1234 = vmul.f32 %v1218, 0.5
  %v1235 = vmul.f32 %v1219, 0.5
  %v1236 = vmul.f32 %v1220, 0.5
  %v1237 = vmul.f32 %v1221, 0.5
  %vm1238 = vcmp.ge.f32.partialorder %v1222, 1.0
  %vm1239 = vcmp.ge.f32.partialorder %v1223, 1.0
  %vm1240 = vcmp.ge.f32.partialorder %v1224, 1.0
  %vm1241 = vcmp.ge.f32.partialorder %v1225, 1.0
  %vm1242 = vcmp.ge.f32.partialorder %v1226, 1.0
  %vm1243 = vcmp.ge.f32.partialorder %v1227, 1.0
  %vm1244 = vcmp.ge.f32.partialorder %v1228, 1.0
  %vm1245 = vcmp.ge.f32.partialorder %v1229, 1.0
  %vm1246 = vcmp.ge.f32.partialorder %v1230, 1.0
  %vm1247 = vcmp.ge.f32.partialorder %v1231, 1.0
  %vm1248 = vcmp.ge.f32.partialorder %v1232, 1.0
  %vm1249 = vcmp.ge.f32.partialorder %v1233, 1.0
  %vm1250 = vcmp.ge.f32.partialorder %v1234, 1.0
  %vm1251 = vcmp.ge.f32.partialorder %v1235, 1.0
  %vm1252 = vcmp.ge.f32.partialorder %v1236, 1.0
  %vm1253 = vcmp.ge.f32.partialorder %v1237, 1.0
  %v1254 = vsel %vm1238, 1, 0
  %v1255 = vsel %vm1239, 1, 0
  %v1256 = vsel %vm1240, 1, 0
  %v1257 = vsel %vm1241, 1, 0
  %v1258 = vsel %vm1242, 1, 0
  %v1259 = vsel %vm1243, 1, 0
  %v1260 = vsel %vm1244, 1, 0
  %v1261 = vsel %vm1245, 1, 0
  %v1262 = vsel %vm1246, 1, 0
  %v1263 = vsel %vm1247, 1, 0
  %v1264 = vsel %vm1248, 1, 0
  %v1265 = vsel %vm1249, 1, 0
  %v1266 = vsel %vm1250, 1, 0
  %v1267 = vsel %vm1251, 1, 0
  %v1268 = vsel %vm1252, 1, 0
  %v1269 = vsel %vm1253, 1, 0
  %v1270 = vcvt.s32.f32 %v1254
  %v1271 = vcvt.s32.f32 %v1255
  %v1272 = vcvt.s32.f32 %v1256
  %v1273 = vcvt.s32.f32 %v1257
  %v1274 = vcvt.s32.f32 %v1258
  %v1275 = vcvt.s32.f32 %v1259
  %v1276 = vcvt.s32.f32 %v1260
  %v1277 = vcvt.s32.f32 %v1261
  %v1278 = vcvt.s32.f32 %v1262
  %v1279 = vcvt.s32.f32 %v1263
  %v1280 = vcvt.s32.f32 %v1264
  %v1281 = vcvt.s32.f32 %v1265
  %v1282 = vcvt.s32.f32 %v1266
  %v1283 = vcvt.s32.f32 %v1267
  %v1284 = vcvt.s32.f32 %v1268
  %v1285 = vcvt.s32.f32 %v1269
  %v1286 = vsub.f32 %v1222, %v1270
  %v1287 = vsub.f32 %v1223, %v1271
  %v1288 = vsub.f32 %v1224, %v1272
  %v1289 = vsub.f32 %v1225, %v1273
  %v1290 = vsub.f32 %v1226, %v1274
  %v1291 = vsub.f32 %v1227, %v1275
  %v1292 = vsub.f32 %v1228, %v1276
  %v1293 = vsub.f32 %v1229, %v1277
  %v1294 = vsub.f32 %v1230, %v1278
  %v1295 = vsub.f32 %v1231, %v1279
  %v1296 = vsub.f32 %v1232, %v1280
  %v1297 = vsub.f32 %v1233, %v1281
  %v1298 = vsub.f32 %v1234, %v1282
  %v1299 = vsub.f32 %v1235, %v1283
  %v1300 = vsub.f32 %v1236, %v1284
  %v1301 = vsub.f32 %v1237, %v1285
  %v1302 = vpack.c.bf16 %v1270, %v1270
  %v1303 = vpack.c.bf16 %v1271, %v1271
  %v1304 = vpack.c.bf16 %v1272, %v1272
  %v1305 = vpack.c.bf16 %v1273, %v1273
  %v1306 = vpack.c.bf16 %v1274, %v1274
  %v1307 = vpack.c.bf16 %v1275, %v1275
  %v1308 = vpack.c.bf16 %v1276, %v1276
  %v1309 = vpack.c.bf16 %v1277, %v1277
  %v1310 = vpack.c.bf16 %v1278, %v1278
  %v1311 = vpack.c.bf16 %v1279, %v1279
  %v1312 = vpack.c.bf16 %v1280, %v1280
  %v1313 = vpack.c.bf16 %v1281, %v1281
  %v1314 = vpack.c.bf16 %v1282, %v1282
  %v1315 = vpack.c.bf16 %v1283, %v1283
  %v1316 = vpack.c.bf16 %v1284, %v1284
  %v1317 = vpack.c.bf16 %v1285, %v1285
  %s1318 = scalar_lea.vmem %s3, 64
  %1319 = vst [vmem:[%s1318] sm:$0xf] %v1302
  %1320 = vst [vmem:[%s1318 + $0x4] sm:$0xf] %v1303
  %1321 = vst [vmem:[%s1318 + $0x8] sm:$0xf] %v1304
  %1322 = vst [vmem:[%s1318 + $0xc] sm:$0xf] %v1305
  %1323 = vst [vmem:[%s1318 + $0x10] sm:$0xf] %v1306
  %1324 = vst [vmem:[%s1318 + $0x14] sm:$0xf] %v1307
  %1325 = vst [vmem:[%s1318 + $0x18] sm:$0xf] %v1308
  %1326 = vst [vmem:[%s1318 + $0x1c] sm:$0xf] %v1309
  %1327 = vst [vmem:[%s1318 + $0x20] sm:$0xf] %v1310
  %1328 = vst [vmem:[%s1318 + $0x24] sm:$0xf] %v1311
  %1329 = vst [vmem:[%s1318 + $0x28] sm:$0xf] %v1312
  %1330 = vst [vmem:[%s1318 + $0x2c] sm:$0xf] %v1313
  %1331 = vst [vmem:[%s1318 + $0x30] sm:$0xf] %v1314
  %1332 = vst [vmem:[%s1318 + $0x34] sm:$0xf] %v1315
  %1333 = vst [vmem:[%s1318 + $0x38] sm:$0xf] %v1316
  %1334 = vst [vmem:[%s1318 + $0x3c] sm:$0xf] %v1317
  %s1335 = scalar_lea.vmem [#allocation2], 256
  %v1336 = vld [vmem:[%s1335] sm:$0xff]
  %v1337 = vld [vmem:[%s1335 + $0x8] sm:$0xff]
  %v1338 = vld [vmem:[%s1335 + $0x10] sm:$0xff]
  %v1339 = vld [vmem:[%s1335 + $0x18] sm:$0xff]
  %v1340 = vld [vmem:[%s1335 + $0x20] sm:$0xff]
  %v1341 = vld [vmem:[%s1335 + $0x28] sm:$0xff]
  %v1342 = vld [vmem:[%s1335 + $0x30] sm:$0xff]
  %v1343 = vld [vmem:[%s1335 + $0x38] sm:$0xff]
  %v1344 = vld [vmem:[%s1335 + $0x40] sm:$0xff]
  %v1345 = vld [vmem:[%s1335 + $0x48] sm:$0xff]
  %v1346 = vld [vmem:[%s1335 + $0x50] sm:$0xff]
  %v1347 = vld [vmem:[%s1335 + $0x58] sm:$0xff]
  %v1348 = vld [vmem:[%s1335 + $0x60] sm:$0xff]
  %v1349 = vld [vmem:[%s1335 + $0x68] sm:$0xff]
  %v1350 = vld [vmem:[%s1335 + $0x70] sm:$0xff]
  %v1351 = vld [vmem:[%s1335 + $0x78] sm:$0xff]
  %v1352 = vadd.f32 %v1286, %v1336
  %v1353 = vadd.f32 %v1287, %v1337
  %v1354 = vadd.f32 %v1288, %v1338
  %v1355 = vadd.f32 %v1289, %v1339
  %v1356 = vadd.f32 %v1290, %v1340
  %v1357 = vadd.f32 %v1291, %v1341
  %v1358 = vadd.f32 %v1292, %v1342
  %v1359 = vadd.f32 %v1293, %v1343
  %v1360 = vadd.f32 %v1294, %v1344
  %v1361 = vadd.f32 %v1295, %v1345
  %v1362 = vadd.f32 %v1296, %v1346
  %v1363 = vadd.f32 %v1297, %v1347
  %v1364 = vadd.f32 %v1298, %v1348
  %v1365 = vadd.f32 %v1299, %v1349
  %v1366 = vadd.f32 %v1300, %v1350
  %v1367 = vadd.f32 %v1301, %v1351
  %v1368 = vmul.f32 %v1352, 0.5
  %v1369 = vmul.f32 %v1353, 0.5
  %v1370 = vmul.f32 %v1354, 0.5
  %v1371 = vmul.f32 %v1355, 0.5
  %v1372 = vmul.f32 %v1356, 0.5
  %v1373 = vmul.f32 %v1357, 0.5
  %v1374 = vmul.f32 %v1358, 0.5
  %v1375 = vmul.f32 %v1359, 0.5
  %v1376 = vmul.f32 %v1360, 0.5
  %v1377 = vmul.f32 %v1361, 0.5
  %v1378 = vmul.f32 %v1362, 0.5
  %v1379 = vmul.f32 %v1363, 0.5
  %v1380 = vmul.f32 %v1364, 0.5
  %v1381 = vmul.f32 %v1365, 0.5
  %v1382 = vmul.f32 %v1366, 0.5
  %v1383 = vmul.f32 %v1367, 0.5
  %vm1384 = vcmp.ge.f32.partialorder %v1368, 1.0
  %vm1385 = vcmp.ge.f32.partialorder %v1369, 1.0
  %vm1386 = vcmp.ge.f32.partialorder %v1370, 1.0
  %vm1387 = vcmp.ge.f32.partialorder %v1371, 1.0
  %vm1388 = vcmp.ge.f32.partialorder %v1372, 1.0
  %vm1389 = vcmp.ge.f32.partialorder %v1373, 1.0
  %vm1390 = vcmp.ge.f32.partialorder %v1374, 1.0
  %vm1391 = vcmp.ge.f32.partialorder %v1375, 1.0
  %vm1392 = vcmp.ge.f32.partialorder %v1376, 1.0
  %vm1393 = vcmp.ge.f32.partialorder %v1377, 1.0
  %vm1394 = vcmp.ge.f32.partialorder %v1378, 1.0
  %vm1395 = vcmp.ge.f32.partialorder %v1379, 1.0
  %vm1396 = vcmp.ge.f32.partialorder %v1380, 1.0
  %vm1397 = vcmp.ge.f32.partialorder %v1381, 1.0
  %vm1398 = vcmp.ge.f32.partialorder %v1382, 1.0
  %vm1399 = vcmp.ge.f32.partialorder %v1383, 1.0
  %v1400 = vsel %vm1384, 1, 0
  %v1401 = vsel %vm1385, 1, 0
  %v1402 = vsel %vm1386, 1, 0
  %v1403 = vsel %vm1387, 1, 0
  %v1404 = vsel %vm1388, 1, 0
  %v1405 = vsel %vm1389, 1, 0
  %v1406 = vsel %vm1390, 1, 0
  %v1407 = vsel %vm1391, 1, 0
  %v1408 = vsel %vm1392, 1, 0
  %v1409 = vsel %vm1393, 1, 0
  %v1410 = vsel %vm1394, 1, 0
  %v1411 = vsel %vm1395, 1, 0
  %v1412 = vsel %vm1396, 1, 0
  %v1413 = vsel %vm1397, 1, 0
  %v1414 = vsel %vm1398, 1, 0
  %v1415 = vsel %vm1399, 1, 0
  %v1416 = vcvt.s32.f32 %v1400
  %v1417 = vcvt.s32.f32 %v1401
  %v1418 = vcvt.s32.f32 %v1402
  %v1419 = vcvt.s32.f32 %v1403
  %v1420 = vcvt.s32.f32 %v1404
  %v1421 = vcvt.s32.f32 %v1405
  %v1422 = vcvt.s32.f32 %v1406
  %v1423 = vcvt.s32.f32 %v1407
  %v1424 = vcvt.s32.f32 %v1408
  %v1425 = vcvt.s32.f32 %v1409
  %v1426 = vcvt.s32.f32 %v1410
  %v1427 = vcvt.s32.f32 %v1411
  %v1428 = vcvt.s32.f32 %v1412
  %v1429 = vcvt.s32.f32 %v1413
  %v1430 = vcvt.s32.f32 %v1414
  %v1431 = vcvt.s32.f32 %v1415
  %v1432 = vsub.f32 %v1368, %v1416
  %v1433 = vsub.f32 %v1369, %v1417
  %v1434 = vsub.f32 %v1370, %v1418
  %v1435 = vsub.f32 %v1371, %v1419
  %v1436 = vsub.f32 %v1372, %v1420
  %v1437 = vsub.f32 %v1373, %v1421
  %v1438 = vsub.f32 %v1374, %v1422
  %v1439 = vsub.f32 %v1375, %v1423
  %v1440 = vsub.f32 %v1376, %v1424
  %v1441 = vsub.f32 %v1377, %v1425
  %v1442 = vsub.f32 %v1378, %v1426
  %v1443 = vsub.f32 %v1379, %v1427
  %v1444 = vsub.f32 %v1380, %v1428
  %v1445 = vsub.f32 %v1381, %v1429
  %v1446 = vsub.f32 %v1382, %v1430
  %v1447 = vsub.f32 %v1383, %v1431
  %v1448 = vpack.c.bf16 %v1416, %v1416
  %v1449 = vpack.c.bf16 %v1417, %v1417
  %v1450 = vpack.c.bf16 %v1418, %v1418
  %v1451 = vpack.c.bf16 %v1419, %v1419
  %v1452 = vpack.c.bf16 %v1420, %v1420
  %v1453 = vpack.c.bf16 %v1421, %v1421
  %v1454 = vpack.c.bf16 %v1422, %v1422
  %v1455 = vpack.c.bf16 %v1423, %v1423
  %v1456 = vpack.c.bf16 %v1424, %v1424
  %v1457 = vpack.c.bf16 %v1425, %v1425
  %v1458 = vpack.c.bf16 %v1426, %v1426
  %v1459 = vpack.c.bf16 %v1427, %v1427
  %v1460 = vpack.c.bf16 %v1428, %v1428
  %v1461 = vpack.c.bf16 %v1429, %v1429
  %v1462 = vpack.c.bf16 %v1430, %v1430
  %v1463 = vpack.c.bf16 %v1431, %v1431
  %s1464 = scalar_lea.vmem %s3, 128
  %1465 = vst [vmem:[%s1464] sm:$0xf] %v1448
  %1466 = vst [vmem:[%s1464 + $0x4] sm:$0xf] %v1449
  %1467 = vst [vmem:[%s1464 + $0x8] sm:$0xf] %v1450
  %1468 = vst [vmem:[%s1464 + $0xc] sm:$0xf] %v1451
  %1469 = vst [vmem:[%s1464 + $0x10] sm:$0xf] %v1452
  %1470 = vst [vmem:[%s1464 + $0x14] sm:$0xf] %v1453
  %1471 = vst [vmem:[%s1464 + $0x18] sm:$0xf] %v1454
  %1472 = vst [vmem:[%s1464 + $0x1c] sm:$0xf] %v1455
  %1473 = vst [vmem:[%s1464 + $0x20] sm:$0xf] %v1456
  %1474 = vst [vmem:[%s1464 + $0x24] sm:$0xf] %v1457
  %1475 = vst [vmem:[%s1464 + $0x28] sm:$0xf] %v1458
  %1476 = vst [vmem:[%s1464 + $0x2c] sm:$0xf] %v1459
  %1477 = vst [vmem:[%s1464 + $0x30] sm:$0xf] %v1460
  %1478 = vst [vmem:[%s1464 + $0x34] sm:$0xf] %v1461
  %1479 = vst [vmem:[%s1464 + $0x38] sm:$0xf] %v1462
  %1480 = vst [vmem:[%s1464 + $0x3c] sm:$0xf] %v1463
  %s1481 = scalar_lea.vmem [#allocation2], 384
  %v1482 = vld [vmem:[%s1481] sm:$0xff]
  %v1483 = vld [vmem:[%s1481 + $0x8] sm:$0xff]
  %v1484 = vld [vmem:[%s1481 + $0x10] sm:$0xff]
  %v1485 = vld [vmem:[%s1481 + $0x18] sm:$0xff]
  %v1486 = vld [vmem:[%s1481 + $0x20] sm:$0xff]
  %v1487 = vld [vmem:[%s1481 + $0x28] sm:$0xff]
  %v1488 = vld [vmem:[%s1481 + $0x30] sm:$0xff]
  %v1489 = vld [vmem:[%s1481 + $0x38] sm:$0xff]
  %v1490 = vld [vmem:[%s1481 + $0x40] sm:$0xff]
  %v1491 = vld [vmem:[%s1481 + $0x48] sm:$0xff]
  %v1492 = vld [vmem:[%s1481 + $0x50] sm:$0xff]
  %v1493 = vld [vmem:[%s1481 + $0x58] sm:$0xff]
  %v1494 = vld [vmem:[%s1481 + $0x60] sm:$0xff]
  %v1495 = vld [vmem:[%s1481 + $0x68] sm:$0xff]
  %v1496 = vld [vmem:[%s1481 + $0x70] sm:$0xff]
  %v1497 = vld [vmem:[%s1481 + $0x78] sm:$0xff]
  %v1498 = vadd.f32 %v1432, %v1482
  %v1499 = vadd.f32 %v1433, %v1483
  %v1500 = vadd.f32 %v1434, %v1484
  %v1501 = vadd.f32 %v1435, %v1485
  %v1502 = vadd.f32 %v1436, %v1486
  %v1503 = vadd.f32 %v1437, %v1487
  %v1504 = vadd.f32 %v1438, %v1488
  %v1505 = vadd.f32 %v1439, %v1489
  %v1506 = vadd.f32 %v1440, %v1490
  %v1507 = vadd.f32 %v1441, %v1491
  %v1508 = vadd.f32 %v1442, %v1492
  %v1509 = vadd.f32 %v1443, %v1493
  %v1510 = vadd.f32 %v1444, %v1494
  %v1511 = vadd.f32 %v1445, %v1495
  %v1512 = vadd.f32 %v1446, %v1496
  %v1513 = vadd.f32 %v1447, %v1497
  %v1514 = vmul.f32 %v1498, 0.5
  %v1515 = vmul.f32 %v1499, 0.5
  %v1516 = vmul.f32 %v1500, 0.5
  %v1517 = vmul.f32 %v1501, 0.5
  %v1518 = vmul.f32 %v1502, 0.5
  %v1519 = vmul.f32 %v1503, 0.5
  %v1520 = vmul.f32 %v1504, 0.5
  %v1521 = vmul.f32 %v1505, 0.5
  %v1522 = vmul.f32 %v1506, 0.5
  %v1523 = vmul.f32 %v1507, 0.5
  %v1524 = vmul.f32 %v1508, 0.5
  %v1525 = vmul.f32 %v1509, 0.5
  %v1526 = vmul.f32 %v1510, 0.5
  %v1527 = vmul.f32 %v1511, 0.5
  %v1528 = vmul.f32 %v1512, 0.5
  %v1529 = vmul.f32 %v1513, 0.5
  %vm1530 = vcmp.ge.f32.partialorder %v1514, 1.0
  %vm1531 = vcmp.ge.f32.partialorder %v1515, 1.0
  %vm1532 = vcmp.ge.f32.partialorder %v1516, 1.0
  %vm1533 = vcmp.ge.f32.partialorder %v1517, 1.0
  %vm1534 = vcmp.ge.f32.partialorder %v1518, 1.0
  %vm1535 = vcmp.ge.f32.partialorder %v1519, 1.0
  %vm1536 = vcmp.ge.f32.partialorder %v1520, 1.0
  %vm1537 = vcmp.ge.f32.partialorder %v1521, 1.0
  %vm1538 = vcmp.ge.f32.partialorder %v1522, 1.0
  %vm1539 = vcmp.ge.f32.partialorder %v1523, 1.0
  %vm1540 = vcmp.ge.f32.partialorder %v1524, 1.0
  %vm1541 = vcmp.ge.f32.partialorder %v1525, 1.0
  %vm1542 = vcmp.ge.f32.partialorder %v1526, 1.0
  %vm1543 = vcmp.ge.f32.partialorder %v1527, 1.0
  %vm1544 = vcmp.ge.f32.partialorder %v1528, 1.0
  %vm1545 = vcmp.ge.f32.partialorder %v1529, 1.0
  %v1546 = vsel %vm1530, 1, 0
  %v1547 = vsel %vm1531, 1, 0
  %v1548 = vsel %vm1532, 1, 0
  %v1549 = vsel %vm1533, 1, 0
  %v1550 = vsel %vm1534, 1, 0
  %v1551 = vsel %vm1535, 1, 0
  %v1552 = vsel %vm1536, 1, 0
  %v1553 = vsel %vm1537, 1, 0
  %v1554 = vsel %vm1538, 1, 0
  %v1555 = vsel %vm1539, 1, 0
  %v1556 = vsel %vm1540, 1, 0
  %v1557 = vsel %vm1541, 1, 0
  %v1558 = vsel %vm1542, 1, 0
  %v1559 = vsel %vm1543, 1, 0
  %v1560 = vsel %vm1544, 1, 0
  %v1561 = vsel %vm1545, 1, 0
  %v1562 = vcvt.s32.f32 %v1546
  %v1563 = vcvt.s32.f32 %v1547
  %v1564 = vcvt.s32.f32 %v1548
  %v1565 = vcvt.s32.f32 %v1549
  %v1566 = vcvt.s32.f32 %v1550
  %v1567 = vcvt.s32.f32 %v1551
  %v1568 = vcvt.s32.f32 %v1552
  %v1569 = vcvt.s32.f32 %v1553
  %v1570 = vcvt.s32.f32 %v1554
  %v1571 = vcvt.s32.f32 %v1555
  %v1572 = vcvt.s32.f32 %v1556
  %v1573 = vcvt.s32.f32 %v1557
  %v1574 = vcvt.s32.f32 %v1558
  %v1575 = vcvt.s32.f32 %v1559
  %v1576 = vcvt.s32.f32 %v1560
  %v1577 = vcvt.s32.f32 %v1561
  %v1578 = vpack.c.bf16 %v1562, %v1562
  %v1579 = vpack.c.bf16 %v1563, %v1563
  %v1580 = vpack.c.bf16 %v1564, %v1564
  %v1581 = vpack.c.bf16 %v1565, %v1565
  %v1582 = vpack.c.bf16 %v1566, %v1566
  %v1583 = vpack.c.bf16 %v1567, %v1567
  %v1584 = vpack.c.bf16 %v1568, %v1568
  %v1585 = vpack.c.bf16 %v1569, %v1569
  %v1586 = vpack.c.bf16 %v1570, %v1570
  %v1587 = vpack.c.bf16 %v1571, %v1571
  %v1588 = vpack.c.bf16 %v1572, %v1572
  %v1589 = vpack.c.bf16 %v1573, %v1573
  %v1590 = vpack.c.bf16 %v1574, %v1574
  %v1591 = vpack.c.bf16 %v1575, %v1575
  %v1592 = vpack.c.bf16 %v1576, %v1576
  %v1593 = vpack.c.bf16 %v1577, %v1577
  %s1594 = scalar_lea.vmem %s3, 192
  %1595 = vst [vmem:[%s1594] sm:$0xf] %v1578
  %1596 = vst [vmem:[%s1594 + $0x4] sm:$0xf] %v1579
  %1597 = vst [vmem:[%s1594 + $0x8] sm:$0xf] %v1580
  %1598 = vst [vmem:[%s1594 + $0xc] sm:$0xf] %v1581
  %1599 = vst [vmem:[%s1594 + $0x10] sm:$0xf] %v1582
  %1600 = vst [vmem:[%s1594 + $0x14] sm:$0xf] %v1583
  %1601 = vst [vmem:[%s1594 + $0x18] sm:$0xf] %v1584
  %1602 = vst [vmem:[%s1594 + $0x1c] sm:$0xf] %v1585
  %1603 = vst [vmem:[%s1594 + $0x20] sm:$0xf] %v1586
  %1604 = vst [vmem:[%s1594 + $0x24] sm:$0xf] %v1587
  %1605 = vst [vmem:[%s1594 + $0x28] sm:$0xf] %v1588
  %1606 = vst [vmem:[%s1594 + $0x2c] sm:$0xf] %v1589
  %1607 = vst [vmem:[%s1594 + $0x30] sm:$0xf] %v1590
  %1608 = vst [vmem:[%s1594 + $0x34] sm:$0xf] %v1591
  %1609 = vst [vmem:[%s1594 + $0x38] sm:$0xf] %v1592
  %1610 = vst [vmem:[%s1594 + $0x3c] sm:$0xf] %v1593
  // Predicated region
  $region14: #{multi_head_attention.3} parent=0 // pred_check
    _
  $region15: #{multi_head_attention.3} parent=0 // pred_check_branch
    %1612 = sbr.rel (0) target = $region17
  $region16: #{multi_head_attention.3} parent=0 // pred_region
    _
  $region17: #{multi_head_attention.3} parent=0 // pred_fallthru
    _
  // Predicated region
  $region18: #{multi_head_attention.3} parent=0 // pred_check
    _
  $region19: #{multi_head_attention.3} parent=0 // pred_check_branch
    %1614 = sbr.rel (0) target = $region21
  $region20: #{multi_head_attention.3} parent=0 // pred_region
    _
  $region21: #{multi_head_attention.3} parent=0 // pred_fallthru
    _

// kernel: multi_head_attention.4
$region0: #{multi_head_attention.4}
  #allocation0 [shape = 'u32[]', space=smem, size = 0x4, offset = 0x4, fixed_abs, tag = 'smem constant byte address 0x4 - core index']
  #allocation1 [shape = 'u32[72,128]{1,0:T(1,128)}', space=vmem, size = 0x9000, scoped, tag = 'internal scratch']
  %s0 = inlined_call_operand.vmem [shape: bf16[4,2,64,32], index: 0, kind: input, shape index: {}]
  %s1 = inlined_call_operand.vmem [shape: bf16[32,64], index: 1, kind: input, shape index: {}]
  %s2 = inlined_call_operand.vmem [shape: f32[4,64,64], index: 2, kind: input, shape index: {}]
  %s3 = inlined_call_operand.vmem [shape: bf16[4,2,64,128], index: 3, kind: input, shape index: {}]
  %s4 = inlined_call_operand.vmem [shape: f32[4,2,64,64], index: 4, kind: output, shape index: {0}]
  %s5 = inlined_call_operand.hbm [shape: f32[2,2,256,256], index: 5, kind: output, shape index: {1}]
  %6 = xla_tuple %s4, %s5
  %s7 = sld [smem:[#allocation0]]
  $region173: #{multi_head_attention.4} parent=0
    _
  %s9 = ssub.s32 1, %s7
  %s10 = scalar_select 0, %s9, %s7
  $region1: #{multi_head_attention.4} parent=0
    #allocation2 [shape = 'u8[131072]{0}', space=vmem, size = 0x20000, scoped, tag = 'input window, operand 0']
    #allocation3 [shape = 'u8[131072]{0}', space=vmem, size = 0x20000, scoped, tag = 'input window, operand 3']
    #allocation4 [shape = 'u8[262144]{0}', space=vmem, size = 0x40000, scoped, tag = 'output window, operand 0']
    #allocation5 [shape = 'u8[1048576]{0}', space=vmem, size = 0x100000, scoped, tag = 'output window, operand 1']
    #allocation6 [shape = 's32[2]{0}', space=sflag, size = 0x8, scoped, tag = 'scoped memory for multi_head_attention.4']
    %11 = vsyncpa [#allocation6], 0
    %s12 = scalar_lea.sflag [#allocation6], 1
    %13 = vsyncpa %s12, 0
    loop: start=0, step=1, limit=4
    $region2: #{multi_head_attention.4} parent=1 // loop_pre_header
      _
    $region3: #{multi_head_attention.4} parent=1 // loop_header
      %s15 = sphi 0, %s19
      %p16 = scmp.ge.s32.totalorder %s15, 4
      %s25 = sphi 0, %s27
      %s28 = sphi 0, %s25
      %s29 = sphi 0, %s28
      %s45 = sphi 0, %s29
      %s49 = sphi 0, %s49
      %s51 = sphi 0, %s49
      %s52 = sphi 0, %s51
      %s66 = sphi 0, %s52
      %s70 = sphi 0, %s70
      %s72 = sphi 0, %s70
      %s73 = sphi 0, %s72
      %s87 = sphi 0, %s73
      %s93 = sphi 0, %s95
      %s96 = sphi 0, %s93
      %s97 = sphi 0, %s96
      %s113 = sphi 0, %s97
      %s119 = sphi 0, %s121
      %s122 = sphi 0, %s119
      %s123 = sphi 0, %s122
      %s139 = sphi 0, %s123
      %s145 = sphi 0, %s147
      %s148 = sphi 0, %s145
      %s149 = sphi 0, %s148
      %s165 = sphi 0, %s149
    $region4: #{multi_head_attention.4} parent=1 // loop_header_branch
      %18 = sbr.rel (%p16) target = $region8
    $region5: #{multi_head_attention.4} parent=1 // loop_body
      %s20 = ssub.s32 %s15, 1
      %s21 = ssub.s32 %s15, 2
      %s22 = sadd.s32 %s15, 1
      %s23 = ssub.s32 %s15, %s22
      %p24 = scmp.eq.s32.totalorder %s23, 0
      %s26 = sadd.s32 %s25, 1
      %s27 = scalar_select %p24, %s25, %s26
      %p30 = pneg %p24
      %p31 = scmp.eq.s32.totalorder %s15, 1
      %p32 = por %p30, %p31
      %p33 = scmp.ne.s32.totalorder %s25, %s28
      %p34 = scmp.eq.s32.totalorder %s15, 0
      %p35 = por %p33, %p34
      %p36 = scmp.ne.s32.totalorder %s25, %s28
      %p37 = scmp.eq.s32.totalorder %s20, 1
      %p38 = por %p36, %p37
      %p39 = scmp.ne.s32.totalorder %s28, %s29
      %p40 = scmp.eq.s32.totalorder %s20, 0
      %p41 = por %p39, %p40
      %p42 = scmp.ne.s32.totalorder %s28, %s29
      %p43 = scmp.eq.s32.totalorder %s21, 1
      %p44 = por %p42, %p43
      %p46 = scmp.ne.s32.totalorder %s29, %s45
      %p47 = scmp.eq.s32.totalorder %s21, 0
      %p48 = por %p46, %p47
      %s50 = sadd.s32 %s49, 1
      %p53 = scmp.eq.s32.totalorder %s15, 1
      %p54 = scmp.ne.s32.totalorder %s49, %s51
      %p55 = scmp.eq.s32.totalorder %s15, 0
      %p56 = por %p54, %p55
      %p57 = scmp.ne.s32.totalorder %s49, %s51
      %p58 = scmp.eq.s32.totalorder %s20, 1
      %p59 = por %p57, %p58
      %p60 = scmp.ne.s32.totalorder %s51, %s52
      %p61 = scmp.eq.s32.totalorder %s20, 0
      %p62 = por %p60, %p61
      %p63 = scmp.ne.s32.totalorder %s51, %s52
      %p64 = scmp.eq.s32.totalorder %s21, 1
      %p65 = por %p63, %p64
      %p67 = scmp.ne.s32.totalorder %s52, %s66
      %p68 = scmp.eq.s32.totalorder %s21, 0
      %p69 = por %p67, %p68
      %s71 = sadd.s32 %s70, 1
      %p74 = scmp.eq.s32.totalorder %s15, 1
      %p75 = scmp.ne.s32.totalorder %s70, %s72
      %p76 = scmp.eq.s32.totalorder %s15, 0
      %p77 = por %p75, %p76
      %p78 = scmp.ne.s32.totalorder %s70, %s72
      %p79 = scmp.eq.s32.totalorder %s20, 1
      %p80 = por %p78, %p79
      %p81 = scmp.ne.s32.totalorder %s72, %s73
      %p82 = scmp.eq.s32.totalorder %s20, 0
      %p83 = por %p81, %p82
      %p84 = scmp.ne.s32.totalorder %s72, %s73
      %p85 = scmp.eq.s32.totalorder %s21, 1
      %p86 = por %p84, %p85
      %p88 = scmp.ne.s32.totalorder %s73, %s87
      %p89 = scmp.eq.s32.totalorder %s21, 0
      %p90 = por %p88, %p89
      %s91 = ssub.s32 %s15, %s22
      %p92 = scmp.eq.s32.totalorder %s91, 0
      %s94 = sadd.s32 %s93, 1
      %s95 = scalar_select %p92, %s93, %s94
      %p98 = pneg %p92
      %p99 = scmp.eq.s32.totalorder %s15, 1
      %p100 = por %p98, %p99
      %p101 = scmp.ne.s32.totalorder %s93, %s96
      %p102 = scmp.eq.s32.totalorder %s15, 0
      %p103 = por %p101, %p102
      %p104 = scmp.ne.s32.totalorder %s93, %s96
      %p105 = scmp.eq.s32.totalorder %s20, 1
      %p106 = por %p104, %p105
      %p107 = scmp.ne.s32.totalorder %s96, %s97
      %p108 = scmp.eq.s32.totalorder %s20, 0
      %p109 = por %p107, %p108
      %p110 = scmp.ne.s32.totalorder %s96, %s97
      %p111 = scmp.eq.s32.totalorder %s21, 1
      %p112 = por %p110, %p111
      %p114 = scmp.ne.s32.totalorder %s97, %s113
      %p115 = scmp.eq.s32.totalorder %s21, 0
      %p116 = por %p114, %p115
      %s117 = ssub.s32 %s15, %s22
      %p118 = scmp.eq.s32.totalorder %s117, 0
      %s120 = sadd.s32 %s119, 1
      %s121 = scalar_select %p118, %s119, %s120
      %p124 = pneg %p118
      %p125 = scmp.eq.s32.totalorder %s15, 1
      %p126 = por %p124, %p125
      %p127 = scmp.ne.s32.totalorder %s119, %s122
      %p128 = scmp.eq.s32.totalorder %s15, 0
      %p129 = por %p127, %p128
      %p130 = scmp.ne.s32.totalorder %s119, %s122
      %p131 = scmp.eq.s32.totalorder %s20, 1
      %p132 = por %p130, %p131
      %p133 = scmp.ne.s32.totalorder %s122, %s123
      %p134 = scmp.eq.s32.totalorder %s20, 0
      %p135 = por %p133, %p134
      %p136 = scmp.ne.s32.totalorder %s122, %s123
      %p137 = scmp.eq.s32.totalorder %s21, 1
      %p138 = por %p136, %p137
      %p140 = scmp.ne.s32.totalorder %s123, %s139
      %p141 = scmp.eq.s32.totalorder %s21, 0
      %p142 = por %p140, %p141
      %s143 = ssub.s32 %s15, %s22
      %p144 = scmp.eq.s32.totalorder %s143, 0
      %s146 = sadd.s32 %s145, 1
      %s147 = scalar_select %p144, %s145, %s146
      %p150 = pneg %p144
      %p151 = scmp.eq.s32.totalorder %s15, 1
      %p152 = por %p150, %p151
      %p153 = scmp.ne.s32.totalorder %s145, %s148
      %p154 = scmp.eq.s32.totalorder %s15, 0
      %p155 = por %p153, %p154
      %p156 = scmp.ne.s32.totalorder %s145, %s148
      %p157 = scmp.eq.s32.totalorder %s20, 1
      %p158 = por %p156, %p157
      %p159 = scmp.ne.s32.totalorder %s148, %s149
      %p160 = scmp.eq.s32.totalorder %s20, 0
      %p161 = por %p159, %p160
      %p162 = scmp.ne.s32.totalorder %s148, %s149
      %p163 = scmp.eq.s32.totalorder %s21, 1
      %p164 = por %p162, %p163
      %p166 = scmp.ne.s32.totalorder %s149, %s165
      %p167 = scmp.eq.s32.totalorder %s21, 0
      %p168 = por %p166, %p167
      %p169 = scmp.le.s32.totalorder 1, %s15
      %p170 = scmp.lt.s32.totalorder %s15, 3
      %p171 = pnand %p169, %p170
      %p172 = pneg %p171
      // Predicated region
      $region9: #{multi_head_attention.4} parent=5 // pred_check
        _
      $region10: #{multi_head_attention.4} parent=5 // pred_check_branch
        %174 = sbr.rel (%p171) target = $region12
      $region11: #{multi_head_attention.4} parent=5 // pred_region
        %s175 = ssub.s32 %s15, 1
        // Predicated region
        $region13: #{multi_head_attention.4} parent=11 // pred_check
          %p176 = pneg %p62
        $region14: #{multi_head_attention.4} parent=11 // pred_check_branch
          %178 = sbr.rel (%p176) target = $region16
        $region15: #{multi_head_attention.4} parent=11 // pred_region
          _
        $region16: #{multi_head_attention.4} parent=11 // pred_fallthru
          _
        // Predicated region
        $region17: #{multi_head_attention.4} parent=11 // pred_check
          %p179 = pneg %p83
        $region18: #{multi_head_attention.4} parent=11 // pred_check_branch
          %181 = sbr.rel (%p179) target = $region20
        $region19: #{multi_head_attention.4} parent=11 // pred_region
          _
        $region20: #{multi_head_attention.4} parent=11 // pred_fallthru
          _
      $region12: #{multi_head_attention.4} parent=5 // pred_fallthru
        _
      %p182 = scmp.lt.s32.totalorder %s15, 2
      // Predicated region
      $region21: #{multi_head_attention.4} parent=5 // pred_check
        %p183 = pneg %p182
      $region22: #{multi_head_attention.4} parent=5 // pred_check_branch
        %185 = sbr.rel (%p183) target = $region24
      $region23: #{multi_head_attention.4} parent=5 // pred_region
        // Predicated region
        $region25: #{multi_head_attention.4} parent=23 // pred_check
          %p186 = pneg %p35
        $region26: #{multi_head_attention.4} parent=23 // pred_check_branch
          %188 = sbr.rel (%p186) target = $region28
        $region27: #{multi_head_attention.4} parent=23 // pred_region
          %s189 = sand.u32 %s25, 1
          %s190 = sand.u32 %s25, 1
          %s191 = smul.addr %s190, 128
          %s192 = scalar_lea.vmem [#allocation2], %s191
          %s193 = smul.addr %s15, 8
          %s194 = smul.addr %s193, 4
          %s195 = scalar_lea.vmem %s0, %s194
          // Predicated region
          $region29: #{multi_head_attention.4} parent=27 // pred_check
            _
          $region30: #{multi_head_attention.4} parent=27 // pred_check_branch
            %197 = sbr.rel (0) target = $region32
          $region31: #{multi_head_attention.4} parent=27 // pred_region
            // Predicated region
            $region33: #{multi_head_attention.4} parent=31 // pred_check
              _
            $region34: #{multi_head_attention.4} parent=31 // pred_check_branch
              %199 = sbr.rel target = $region36
            $region35: #{multi_head_attention.4} parent=31 // pred_region
              // Predicated region
              $region48: #{multi_head_attention.4} parent=35 // pred_check
                _
              $region49: #{multi_head_attention.4} parent=35 // pred_check_branch
                %277 = sbr.rel (0) target = $region51
              $region50: #{multi_head_attention.4} parent=35 // pred_region
                loop: start=0, step=1, limit=1
                $region52: #{multi_head_attention.4} parent=50 // loop_pre_header
                  _
                $region53: #{multi_head_attention.4} parent=50 // loop_header
                  %s279 = sphi 0, %s283
                  %p280 = scmp.ge.s32.totalorder %s279, 1
                  %s284 = sphi %s195, %s195
                  %s285 = sphi %s192, %s192
                $region54: #{multi_head_attention.4} parent=50 // loop_header_branch
                  %282 = sbr.rel (%p280) target = $region58
                $region55: #{multi_head_attention.4} parent=50 // loop_body
                  _
                $region56: #{multi_head_attention.4} parent=50 // loop_footer
                  %s283 = sadd.s32 1, %s279
                $region57: #{multi_head_attention.4} parent=50 // loop_footer_branch
                  %278 = sbr.rel target = $region53
                $region58: #{multi_head_attention.4} parent=50 // loop_exit
                  _
                %s287 = ssub.s32 16, 1
                loop: start=0, step=1, limit=1
                $region59: #{multi_head_attention.4} parent=50 // loop_pre_header
                  _
                $region60: #{multi_head_attention.4} parent=50 // loop_header
                  %s289 = sphi 0, %s293
                  %p290 = scmp.ge.s32.totalorder %s289, 1
                  %s294 = sphi %s195, %s195
                  %s295 = sphi %s192, %s192
                $region61: #{multi_head_attention.4} parent=50 // loop_header_branch
                  %292 = sbr.rel (%p290) target = $region65
                $region62: #{multi_head_attention.4} parent=50 // loop_body
                  %v296 = vld [vmem:[%s294] sm:%s287]
                  %297 = vst [vmem:[%s295] sm:%s287] %v296
                  %v298 = vld [vmem:[%s294 + $0x4] sm:%s287]
                  %299 = vst [vmem:[%s295 + $0x4] sm:%s287] %v298
                  %v300 = vld [vmem:[%s294 + $0x8] sm:%s287]
                  %301 = vst [vmem:[%s295 + $0x8] sm:%s287] %v300
                  %v302 = vld [vmem:[%s294 + $0xc] sm:%s287]
                  %303 = vst [vmem:[%s295 + $0xc] sm:%s287] %v302
                  %v304 = vld [vmem:[%s294 + $0x10] sm:%s287]
                  %305 = vst [vmem:[%s295 + $0x10] sm:%s287] %v304
                  %v306 = vld [vmem:[%s294 + $0x14] sm:%s287]
                  %307 = vst [vmem:[%s295 + $0x14] sm:%s287] %v306
                  %v308 = vld [vmem:[%s294 + $0x18] sm:%s287]
                  %309 = vst [vmem:[%s295 + $0x18] sm:%s287] %v308
                  %v310 = vld [vmem:[%s294 + $0x1c] sm:%s287]
                  %311 = vst [vmem:[%s295 + $0x1c] sm:%s287] %v310
                  %v312 = vld [vmem:[%s294 + $0x40] sm:%s287]
                  %313 = vst [vmem:[%s295 + $0x20] sm:%s287] %v312
                  %v314 = vld [vmem:[%s294 + $0x44] sm:%s287]
                  %315 = vst [vmem:[%s295 + $0x24] sm:%s287] %v314
                  %v316 = vld [vmem:[%s294 + $0x48] sm:%s287]
                  %317 = vst [vmem:[%s295 + $0x28] sm:%s287] %v316
                  %v318 = vld [vmem:[%s294 + $0x4c] sm:%s287]
                  %319 = vst [vmem:[%s295 + $0x2c] sm:%s287] %v318
                  %v320 = vld [vmem:[%s294 + $0x50] sm:%s287]
                  %321 = vst [vmem:[%s295 + $0x30] sm:%s287] %v320
                  %v322 = vld [vmem:[%s294 + $0x54] sm:%s287]
                  %323 = vst [vmem:[%s295 + $0x34] sm:%s287] %v322
                  %v324 = vld [vmem:[%s294 + $0x58] sm:%s287]
                  %325 = vst [vmem:[%s295 + $0x38] sm:%s287] %v324
                  %v326 = vld [vmem:[%s294 + $0x5c] sm:%s287]
                  %327 = vst [vmem:[%s295 + $0x3c] sm:%s287] %v326
                  %v328 = vld [vmem:[%s294 + $0x80] sm:%s287]
                  %329 = vst [vmem:[%s295 + $0x40] sm:%s287] %v328
                  %v330 = vld [vmem:[%s294 + $0x84] sm:%s287]
                  %331 = vst [vmem:[%s295 + $0x44] sm:%s287] %v330
                  %v332 = vld [vmem:[%s294 + $0x88] sm:%s287]
                  %333 = vst [vmem:[%s295 + $0x48] sm:%s287] %v332
                  %v334 = vld [vmem:[%s294 + $0x8c] sm:%s287]
                  %335 = vst [vmem:[%s295 + $0x4c] sm:%s287] %v334
                  %v336 = vld [vmem:[%s294 + $0x90] sm:%s287]
                  %337 = vst [vmem:[%s295 + $0x50] sm:%s287] %v336
                  %v338 = vld [vmem:[%s294 + $0x94] sm:%s287]
                  %339 = vst [vmem:[%s295 + $0x54] sm:%s287] %v338
                  %v340 = vld [vmem:[%s294 + $0x98] sm:%s287]
                  %341 = vst [vmem:[%s295 + $0x58] sm:%s287] %v340
                  %v342 = vld [vmem:[%s294 + $0x9c] sm:%s287]
                  %343 = vst [vmem:[%s295 + $0x5c] sm:%s287] %v342
                  %v344 = vld [vmem:[%s294 + $0xc0] sm:%s287]
                  %345 = vst [vmem:[%s295 + $0x60] sm:%s287] %v344
                  %v346 = vld [vmem:[%s294 + $0xc4] sm:%s287]
                  %347 = vst [vmem:[%s295 + $0x64] sm:%s287] %v346
                  %v348 = vld [vmem:[%s294 + $0xc8] sm:%s287]
                  %349 = vst [vmem:[%s295 + $0x68] sm:%s287] %v348
                  %v350 = vld [vmem:[%s294 + $0xcc] sm:%s287]
                  %351 = vst [vmem:[%s295 + $0x6c] sm:%s287] %v350
                  %v352 = vld [vmem:[%s294 + $0xd0] sm:%s287]
                  %353 = vst [vmem:[%s295 + $0x70] sm:%s287] %v352
                  %v354 = vld [vmem:[%s294 + $0xd4] sm:%s287]
                  %355 = vst [vmem:[%s295 + $0x74] sm:%s287] %v354
                  %v356 = vld [vmem:[%s294 + $0xd8] sm:%s287]
                  %357 = vst [vmem:[%s295 + $0x78] sm:%s287] %v356
                  %v358 = vld [vmem:[%s294 + $0xdc] sm:%s287]
                  %359 = vst [vmem:[%s295 + $0x7c] sm:%s287] %v358
                $region63: #{multi_head_attention.4} parent=50 // loop_footer
                  %s293 = sadd.s32 1, %s289
                $region64: #{multi_head_attention.4} parent=50 // loop_footer_branch
                  %288 = sbr.rel target = $region60
                $region65: #{multi_head_attention.4} parent=50 // loop_exit
                  _
              $region51: #{multi_head_attention.4} parent=35 // pred_fallthru
                _
            $region36: #{multi_head_attention.4} parent=31 // pred_fallthru
              _
            // Predicated region
            $region37: #{multi_head_attention.4} parent=31 // pred_check
              _
            $region38: #{multi_head_attention.4} parent=31 // pred_check_branch
              %201 = sbr.rel (0) target = $region40
            $region39: #{multi_head_attention.4} parent=31 // pred_region
              %s203 = ssub.s32 16, 1
              loop: start=0, step=1, limit=1
              $region41: #{multi_head_attention.4} parent=39 // loop_pre_header
                _
              $region42: #{multi_head_attention.4} parent=39 // loop_header
                %s205 = sphi 0, %s209
                %p206 = scmp.ge.s32.totalorder %s205, 1
                %s210 = sphi %s195, %s195
                %s211 = sphi %s192, %s192
              $region43: #{multi_head_attention.4} parent=39 // loop_header_branch
                %208 = sbr.rel (%p206) target = $region47
              $region44: #{multi_head_attention.4} parent=39 // loop_body
                %v212 = vld [vmem:[%s210] sm:%s203]
                %213 = vst [vmem:[%s211] sm:%s203] %v212
                %v214 = vld [vmem:[%s210 + $0x4] sm:%s203]
                %215 = vst [vmem:[%s211 + $0x4] sm:%s203] %v214
                %v216 = vld [vmem:[%s210 + $0x8] sm:%s203]
                %217 = vst [vmem:[%s211 + $0x8] sm:%s203] %v216
                %v218 = vld [vmem:[%s210 + $0xc] sm:%s203]
                %219 = vst [vmem:[%s211 + $0xc] sm:%s203] %v218
                %v220 = vld [vmem:[%s210 + $0x10] sm:%s203]
                %221 = vst [vmem:[%s211 + $0x10] sm:%s203] %v220
                %v222 = vld [vmem:[%s210 + $0x14] sm:%s203]
                %223 = vst [vmem:[%s211 + $0x14] sm:%s203] %v222
                %v224 = vld [vmem:[%s210 + $0x18] sm:%s203]
                %225 = vst [vmem:[%s211 + $0x18] sm:%s203] %v224
                %v226 = vld [vmem:[%s210 + $0x1c] sm:%s203]
                %227 = vst [vmem:[%s211 + $0x1c] sm:%s203] %v226
                %v228 = vld [vmem:[%s210 + $0x40] sm:%s203]
                %229 = vst [vmem:[%s211 + $0x20] sm:%s203] %v228
                %v230 = vld [vmem:[%s210 + $0x44] sm:%s203]
                %231 = vst [vmem:[%s211 + $0x24] sm:%s203] %v230
                %v232 = vld [vmem:[%s210 + $0x48] sm:%s203]
                %233 = vst [vmem:[%s211 + $0x28] sm:%s203] %v232
                %v234 = vld [vmem:[%s210 + $0x4c] sm:%s203]
                %235 = vst [vmem:[%s211 + $0x2c] sm:%s203] %v234
                %v236 = vld [vmem:[%s210 + $0x50] sm:%s203]
                %237 = vst [vmem:[%s211 + $0x30] sm:%s203] %v236
                %v238 = vld [vmem:[%s210 + $0x54] sm:%s203]
                %239 = vst [vmem:[%s211 + $0x34] sm:%s203] %v238
                %v240 = vld [vmem:[%s210 + $0x58] sm:%s203]
                %241 = vst [vmem:[%s211 + $0x38] sm:%s203] %v240
                %v242 = vld [vmem:[%s210 + $0x5c] sm:%s203]
                %243 = vst [vmem:[%s211 + $0x3c] sm:%s203] %v242
                %v244 = vld [vmem:[%s210 + $0x80] sm:%s203]
                %245 = vst [vmem:[%s211 + $0x40] sm:%s203] %v244
                %v246 = vld [vmem:[%s210 + $0x84] sm:%s203]
                %247 = vst [vmem:[%s211 + $0x44] sm:%s203] %v246
                %v248 = vld [vmem:[%s210 + $0x88] sm:%s203]
                %249 = vst [vmem:[%s211 + $0x48] sm:%s203] %v248
                %v250 = vld [vmem:[%s210 + $0x8c] sm:%s203]
                %251 = vst [vmem:[%s211 + $0x4c] sm:%s203] %v250
                %v252 = vld [vmem:[%s210 + $0x90] sm:%s203]
                %253 = vst [vmem:[%s211 + $0x50] sm:%s203] %v252
                %v254 = vld [vmem:[%s210 + $0x94] sm:%s203]
                %255 = vst [vmem:[%s211 + $0x54] sm:%s203] %v254
                %v256 = vld [vmem:[%s210 + $0x98] sm:%s203]
                %257 = vst [vmem:[%s211 + $0x58] sm:%s203] %v256
                %v258 = vld [vmem:[%s210 + $0x9c] sm:%s203]
                %259 = vst [vmem:[%s211 + $0x5c] sm:%s203] %v258
                %v260 = vld [vmem:[%s210 + $0xc0] sm:%s203]
                %261 = vst [vmem:[%s211 + $0x60] sm:%s203] %v260
                %v262 = vld [vmem:[%s210 + $0xc4] sm:%s203]
                %263 = vst [vmem:[%s211 + $0x64] sm:%s203] %v262
                %v264 = vld [vmem:[%s210 + $0xc8] sm:%s203]
                %265 = vst [vmem:[%s211 + $0x68] sm:%s203] %v264
                %v266 = vld [vmem:[%s210 + $0xcc] sm:%s203]
                %267 = vst [vmem:[%s211 + $0x6c] sm:%s203] %v266
                %v268 = vld [vmem:[%s210 + $0xd0] sm:%s203]
                %269 = vst [vmem:[%s211 + $0x70] sm:%s203] %v268
                %v270 = vld [vmem:[%s210 + $0xd4] sm:%s203]
                %271 = vst [vmem:[%s211 + $0x74] sm:%s203] %v270
                %v272 = vld [vmem:[%s210 + $0xd8] sm:%s203]
                %273 = vst [vmem:[%s211 + $0x78] sm:%s203] %v272
                %v274 = vld [vmem:[%s210 + $0xdc] sm:%s203]
                %275 = vst [vmem:[%s211 + $0x7c] sm:%s203] %v274
              $region45: #{multi_head_attention.4} parent=39 // loop_footer
                %s209 = sadd.s32 1, %s205
              $region46: #{multi_head_attention.4} parent=39 // loop_footer_branch
                %204 = sbr.rel target = $region42
              $region47: #{multi_head_attention.4} parent=39 // loop_exit
                _
            $region40: #{multi_head_attention.4} parent=31 // pred_fallthru
              _
          $region32: #{multi_head_attention.4} parent=27 // pred_fallthru
            _
          %360 = vnop
        $region28: #{multi_head_attention.4} parent=23 // pred_fallthru
          _
        // Predicated region
        $region66: #{multi_head_attention.4} parent=23 // pred_check
          %p361 = pneg %p103
        $region67: #{multi_head_attention.4} parent=23 // pred_check_branch
          %363 = sbr.rel (%p361) target = $region69
        $region68: #{multi_head_attention.4} parent=23 // pred_region
          %s364 = sand.u32 %s93, 1
          %s365 = sand.u32 %s93, 1
          %s366 = smul.addr %s365, 128
          %s367 = scalar_lea.vmem [#allocation3], %s366
          %s368 = smul.addr %s15, 8
          %s369 = smul.addr %s368, 4
          %s370 = scalar_lea.vmem %s3, %s369
          // Predicated region
          $region70: #{multi_head_attention.4} parent=68 // pred_check
            _
          $region71: #{multi_head_attention.4} parent=68 // pred_check_branch
            %372 = sbr.rel (0) target = $region73
          $region72: #{multi_head_attention.4} parent=68 // pred_region
            // Predicated region
            $region74: #{multi_head_attention.4} parent=72 // pred_check
              _
            $region75: #{multi_head_attention.4} parent=72 // pred_check_branch
              %374 = sbr.rel target = $region77
            $region76: #{multi_head_attention.4} parent=72 // pred_region
              // Predicated region
              $region89: #{multi_head_attention.4} parent=76 // pred_check
                _
              $region90: #{multi_head_attention.4} parent=76 // pred_check_branch
                %452 = sbr.rel (0) target = $region92
              $region91: #{multi_head_attention.4} parent=76 // pred_region
                loop: start=0, step=1, limit=1
                $region93: #{multi_head_attention.4} parent=91 // loop_pre_header
                  _
                $region94: #{multi_head_attention.4} parent=91 // loop_header
                  %s454 = sphi 0, %s458
                  %p455 = scmp.ge.s32.totalorder %s454, 1
                  %s459 = sphi %s370, %s370
                  %s460 = sphi %s367, %s367
                $region95: #{multi_head_attention.4} parent=91 // loop_header_branch
                  %457 = sbr.rel (%p455) target = $region99
                $region96: #{multi_head_attention.4} parent=91 // loop_body
                  _
                $region97: #{multi_head_attention.4} parent=91 // loop_footer
                  %s458 = sadd.s32 1, %s454
                $region98: #{multi_head_attention.4} parent=91 // loop_footer_branch
                  %453 = sbr.rel target = $region94
                $region99: #{multi_head_attention.4} parent=91 // loop_exit
                  _
                %s462 = ssub.s32 16, 1
                loop: start=0, step=1, limit=1
                $region100: #{multi_head_attention.4} parent=91 // loop_pre_header
                  _
                $region101: #{multi_head_attention.4} parent=91 // loop_header
                  %s464 = sphi 0, %s468
                  %p465 = scmp.ge.s32.totalorder %s464, 1
                  %s469 = sphi %s370, %s370
                  %s470 = sphi %s367, %s367
                $region102: #{multi_head_attention.4} parent=91 // loop_header_branch
                  %467 = sbr.rel (%p465) target = $region106
                $region103: #{multi_head_attention.4} parent=91 // loop_body
                  %v471 = vld [vmem:[%s469] sm:%s462]
                  %472 = vst [vmem:[%s470] sm:%s462] %v471
                  %v473 = vld [vmem:[%s469 + $0x4] sm:%s462]
                  %474 = vst [vmem:[%s470 + $0x4] sm:%s462] %v473
                  %v475 = vld [vmem:[%s469 + $0x8] sm:%s462]
                  %476 = vst [vmem:[%s470 + $0x8] sm:%s462] %v475
                  %v477 = vld [vmem:[%s469 + $0xc] sm:%s462]
                  %478 = vst [vmem:[%s470 + $0xc] sm:%s462] %v477
                  %v479 = vld [vmem:[%s469 + $0x10] sm:%s462]
                  %480 = vst [vmem:[%s470 + $0x10] sm:%s462] %v479
                  %v481 = vld [vmem:[%s469 + $0x14] sm:%s462]
                  %482 = vst [vmem:[%s470 + $0x14] sm:%s462] %v481
                  %v483 = vld [vmem:[%s469 + $0x18] sm:%s462]
                  %484 = vst [vmem:[%s470 + $0x18] sm:%s462] %v483
                  %v485 = vld [vmem:[%s469 + $0x1c] sm:%s462]
                  %486 = vst [vmem:[%s470 + $0x1c] sm:%s462] %v485
                  %v487 = vld [vmem:[%s469 + $0x40] sm:%s462]
                  %488 = vst [vmem:[%s470 + $0x20] sm:%s462] %v487
                  %v489 = vld [vmem:[%s469 + $0x44] sm:%s462]
                  %490 = vst [vmem:[%s470 + $0x24] sm:%s462] %v489
                  %v491 = vld [vmem:[%s469 + $0x48] sm:%s462]
                  %492 = vst [vmem:[%s470 + $0x28] sm:%s462] %v491
                  %v493 = vld [vmem:[%s469 + $0x4c] sm:%s462]
                  %494 = vst [vmem:[%s470 + $0x2c] sm:%s462] %v493
                  %v495 = vld [vmem:[%s469 + $0x50] sm:%s462]
                  %496 = vst [vmem:[%s470 + $0x30] sm:%s462] %v495
                  %v497 = vld [vmem:[%s469 + $0x54] sm:%s462]
                  %498 = vst [vmem:[%s470 + $0x34] sm:%s462] %v497
                  %v499 = vld [vmem:[%s469 + $0x58] sm:%s462]
                  %500 = vst [vmem:[%s470 + $0x38] sm:%s462] %v499
                  %v501 = vld [vmem:[%s469 + $0x5c] sm:%s462]
                  %502 = vst [vmem:[%s470 + $0x3c] sm:%s462] %v501
                  %v503 = vld [vmem:[%s469 + $0x80] sm:%s462]
                  %504 = vst [vmem:[%s470 + $0x40] sm:%s462] %v503
                  %v505 = vld [vmem:[%s469 + $0x84] sm:%s462]
                  %506 = vst [vmem:[%s470 + $0x44] sm:%s462] %v505
                  %v507 = vld [vmem:[%s469 + $0x88] sm:%s462]
                  %508 = vst [vmem:[%s470 + $0x48] sm:%s462] %v507
                  %v509 = vld [vmem:[%s469 + $0x8c] sm:%s462]
                  %510 = vst [vmem:[%s470 + $0x4c] sm:%s462] %v509
                  %v511 = vld [vmem:[%s469 + $0x90] sm:%s462]
                  %512 = vst [vmem:[%s470 + $0x50] sm:%s462] %v511
                  %v513 = vld [vmem:[%s469 + $0x94] sm:%s462]
                  %514 = vst [vmem:[%s470 + $0x54] sm:%s462] %v513
                  %v515 = vld [vmem:[%s469 + $0x98] sm:%s462]
                  %516 = vst [vmem:[%s470 + $0x58] sm:%s462] %v515
                  %v517 = vld [vmem:[%s469 + $0x9c] sm:%s462]
                  %518 = vst [vmem:[%s470 + $0x5c] sm:%s462] %v517
                  %v519 = vld [vmem:[%s469 + $0xc0] sm:%s462]
                  %520 = vst [vmem:[%s470 + $0x60] sm:%s462] %v519
                  %v521 = vld [vmem:[%s469 + $0xc4] sm:%s462]
                  %522 = vst [vmem:[%s470 + $0x64] sm:%s462] %v521
                  %v523 = vld [vmem:[%s469 + $0xc8] sm:%s462]
                  %524 = vst [vmem:[%s470 + $0x68] sm:%s462] %v523
                  %v525 = vld [vmem:[%s469 + $0xcc] sm:%s462]
                  %526 = vst [vmem:[%s470 + $0x6c] sm:%s462] %v525
                  %v527 = vld [vmem:[%s469 + $0xd0] sm:%s462]
                  %528 = vst [vmem:[%s470 + $0x70] sm:%s462] %v527
                  %v529 = vld [vmem:[%s469 + $0xd4] sm:%s462]
                  %530 = vst [vmem:[%s470 + $0x74] sm:%s462] %v529
                  %v531 = vld [vmem:[%s469 + $0xd8] sm:%s462]
                  %532 = vst [vmem:[%s470 + $0x78] sm:%s462] %v531
                  %v533 = vld [vmem:[%s469 + $0xdc] sm:%s462]
                  %534 = vst [vmem:[%s470 + $0x7c] sm:%s462] %v533
                $region104: #{multi_head_attention.4} parent=91 // loop_footer
                  %s468 = sadd.s32 1, %s464
                $region105: #{multi_head_attention.4} parent=91 // loop_footer_branch
                  %463 = sbr.rel target = $region101
                $region106: #{multi_head_attention.4} parent=91 // loop_exit
                  _
              $region92: #{multi_head_attention.4} parent=76 // pred_fallthru
                _
            $region77: #{multi_head_attention.4} parent=72 // pred_fallthru
              _
            // Predicated region
            $region78: #{multi_head_attention.4} parent=72 // pred_check
              _
            $region79: #{multi_head_attention.4} parent=72 // pred_check_branch
              %376 = sbr.rel (0) target = $region81
            $region80: #{multi_head_attention.4} parent=72 // pred_region
              %s378 = ssub.s32 16, 1
              loop: start=0, step=1, limit=1
              $region82: #{multi_head_attention.4} parent=80 // loop_pre_header
                _
              $region83: #{multi_head_attention.4} parent=80 // loop_header
                %s380 = sphi 0, %s384
                %p381 = scmp.ge.s32.totalorder %s380, 1
                %s385 = sphi %s370, %s370
                %s386 = sphi %s367, %s367
              $region84: #{multi_head_attention.4} parent=80 // loop_header_branch
                %383 = sbr.rel (%p381) target = $region88
              $region85: #{multi_head_attention.4} parent=80 // loop_body
                %v387 = vld [vmem:[%s385] sm:%s378]
                %388 = vst [vmem:[%s386] sm:%s378] %v387
                %v389 = vld [vmem:[%s385 + $0x4] sm:%s378]
                %390 = vst [vmem:[%s386 + $0x4] sm:%s378] %v389
                %v391 = vld [vmem:[%s385 + $0x8] sm:%s378]
                %392 = vst [vmem:[%s386 + $0x8] sm:%s378] %v391
                %v393 = vld [vmem:[%s385 + $0xc] sm:%s378]
                %394 = vst [vmem:[%s386 + $0xc] sm:%s378] %v393
                %v395 = vld [vmem:[%s385 + $0x10] sm:%s378]
                %396 = vst [vmem:[%s386 + $0x10] sm:%s378] %v395
                %v397 = vld [vmem:[%s385 + $0x14] sm:%s378]
                %398 = vst [vmem:[%s386 + $0x14] sm:%s378] %v397
                %v399 = vld [vmem:[%s385 + $0x18] sm:%s378]
                %400 = vst [vmem:[%s386 + $0x18] sm:%s378] %v399
                %v401 = vld [vmem:[%s385 + $0x1c] sm:%s378]
                %402 = vst [vmem:[%s386 + $0x1c] sm:%s378] %v401
                %v403 = vld [vmem:[%s385 + $0x40] sm:%s378]
                %404 = vst [vmem:[%s386 + $0x20] sm:%s378] %v403
                %v405 = vld [vmem:[%s385 + $0x44] sm:%s378]
                %406 = vst [vmem:[%s386 + $0x24] sm:%s378] %v405
                %v407 = vld [vmem:[%s385 + $0x48] sm:%s378]
                %408 = vst [vmem:[%s386 + $0x28] sm:%s378] %v407
                %v409 = vld [vmem:[%s385 + $0x4c] sm:%s378]
                %410 = vst [vmem:[%s386 + $0x2c] sm:%s378] %v409
                %v411 = vld [vmem:[%s385 + $0x50] sm:%s378]
                %412 = vst [vmem:[%s386 + $0x30] sm:%s378] %v411
                %v413 = vld [vmem:[%s385 + $0x54] sm:%s378]
                %414 = vst [vmem:[%s386 + $0x34] sm:%s378] %v413
                %v415 = vld [vmem:[%s385 + $0x58] sm:%s378]
                %416 = vst [vmem:[%s386 + $0x38] sm:%s378] %v415
                %v417 = vld [vmem:[%s385 + $0x5c] sm:%s378]
                %418 = vst [vmem:[%s386 + $0x3c] sm:%s378] %v417
                %v419 = vld [vmem:[%s385 + $0x80] sm:%s378]
                %420 = vst [vmem:[%s386 + $0x40] sm:%s378] %v419
                %v421 = vld [vmem:[%s385 + $0x84] sm:%s378]
                %422 = vst [vmem:[%s386 + $0x44] sm:%s378] %v421
                %v423 = vld [vmem:[%s385 + $0x88] sm:%s378]
                %424 = vst [vmem:[%s386 + $0x48] sm:%s378] %v423
                %v425 = vld [vmem:[%s385 + $0x8c] sm:%s378]
                %426 = vst [vmem:[%s386 + $0x4c] sm:%s378] %v425
                %v427 = vld [vmem:[%s385 + $0x90] sm:%s378]
                %428 = vst [vmem:[%s386 + $0x50] sm:%s378] %v427
                %v429 = vld [vmem:[%s385 + $0x94] sm:%s378]
                %430 = vst [vmem:[%s386 + $0x54] sm:%s378] %v429
                %v431 = vld [vmem:[%s385 + $0x98] sm:%s378]
                %432 = vst [vmem:[%s386 + $0x58] sm:%s378] %v431
                %v433 = vld [vmem:[%s385 + $0x9c] sm:%s378]
                %434 = vst [vmem:[%s386 + $0x5c] sm:%s378] %v433
                %v435 = vld [vmem:[%s385 + $0xc0] sm:%s378]
                %436 = vst [vmem:[%s386 + $0x60] sm:%s378] %v435
                %v437 = vld [vmem:[%s385 + $0xc4] sm:%s378]
                %438 = vst [vmem:[%s386 + $0x64] sm:%s378] %v437
                %v439 = vld [vmem:[%s385 + $0xc8] sm:%s378]
                %440 = vst [vmem:[%s386 + $0x68] sm:%s378] %v439
                %v441 = vld [vmem:[%s385 + $0xcc] sm:%s378]
                %442 = vst [vmem:[%s386 + $0x6c] sm:%s378] %v441
                %v443 = vld [vmem:[%s385 + $0xd0] sm:%s378]
                %444 = vst [vmem:[%s386 + $0x70] sm:%s378] %v443
                %v445 = vld [vmem:[%s385 + $0xd4] sm:%s378]
                %446 = vst [vmem:[%s386 + $0x74] sm:%s378] %v445
                %v447 = vld [vmem:[%s385 + $0xd8] sm:%s378]
                %448 = vst [vmem:[%s386 + $0x78] sm:%s378] %v447
                %v449 = vld [vmem:[%s385 + $0xdc] sm:%s378]
                %450 = vst [vmem:[%s386 + $0x7c] sm:%s378] %v449
              $region86: #{multi_head_attention.4} parent=80 // loop_footer
                %s384 = sadd.s32 1, %s380
              $region87: #{multi_head_attention.4} parent=80 // loop_footer_branch
                %379 = sbr.rel target = $region83
              $region88: #{multi_head_attention.4} parent=80 // loop_exit
                _
            $region81: #{multi_head_attention.4} parent=72 // pred_fallthru
              _
          $region73: #{multi_head_attention.4} parent=68 // pred_fallthru
            _
          %535 = vnop
        $region69: #{multi_head_attention.4} parent=23 // pred_fallthru
          _
      $region24: #{multi_head_attention.4} parent=5 // pred_fallthru
        _
      %p536 = scmp.le.s32.totalorder 1, %s15
      %p537 = scmp.lt.s32.totalorder %s15, 3
      %p538 = pnand %p536, %p537
      %p539 = pneg %p538
      // Predicated region
      $region107: #{multi_head_attention.4} parent=5 // pred_check
        _
      $region108: #{multi_head_attention.4} parent=5 // pred_check_branch
        %541 = sbr.rel (%p538) target = $region110
      $region109: #{multi_head_attention.4} parent=5 // pred_region
        %s542 = ssub.s32 %s15, 1
        %s543 = sand.u32 %s28, 1
        %s544 = sand.u32 %s28, 1
        %s545 = smul.addr %s544, 128
        %s546 = scalar_lea.vmem [#allocation2], %s545
        // Predicated region
        $region111: #{multi_head_attention.4} parent=109 // pred_check
          %p547 = pneg %p41
        $region112: #{multi_head_attention.4} parent=109 // pred_check_branch
          %549 = sbr.rel (%p547) target = $region114
        $region113: #{multi_head_attention.4} parent=109 // pred_region
          _
        $region114: #{multi_head_attention.4} parent=109 // pred_fallthru
          _
        %s550 = sand.u32 %s96, 1
        %s551 = sand.u32 %s96, 1
        %s552 = smul.addr %s551, 128
        %s553 = scalar_lea.vmem [#allocation3], %s552
        // Predicated region
        $region115: #{multi_head_attention.4} parent=109 // pred_check
          %p554 = pneg %p109
        $region116: #{multi_head_attention.4} parent=109 // pred_check_branch
          %556 = sbr.rel (%p554) target = $region118
        $region117: #{multi_head_attention.4} parent=109 // pred_region
          _
        $region118: #{multi_head_attention.4} parent=109 // pred_fallthru
          _
        %s557 = sand.u32 %s28, 1
        %s558 = sand.u32 %s28, 1
        %s559 = smul.addr %s558, 128
        %s560 = scalar_lea.vmem [#allocation2], %s559
        %p561 = pneg %p41
        %p562 = pneg %p38
        %p563 = pneg %p62
        %p564 = pneg %p59
        %p565 = pneg %p83
        %p566 = pneg %p80
        %s567 = sand.u32 %s96, 1
        %s568 = sand.u32 %s96, 1
        %s569 = smul.addr %s568, 128
        %s570 = scalar_lea.vmem [#allocation3], %s569
        %p571 = pneg %p109
        %p572 = pneg %p106
        %p573 = pneg %p135
        %p574 = pneg %p132
        %s575 = sand.u32 %s122, 1
        %s576 = sand.u32 %s122, 1
        %s577 = smul.addr %s576, 256
        %s578 = scalar_lea.vmem [#allocation4], %s577
        %p579 = pneg %p161
        %p580 = pneg %p158
        %s581 = sand.u32 %s148, 1
        %s582 = scalar_lea.sflag [#allocation6], %s581
        %s583 = sand.u32 %s148, 1
        %s584 = smul.addr %s583, 1024
        %s585 = scalar_lea.vmem [#allocation5], %s584
        %v587 = vld [vmem:[%s546] sm:$0xf]
        %v588 = vld [vmem:[%s546 + $0x4] sm:$0xf]
        %v589 = vld [vmem:[%s546 + $0x8] sm:$0xf]
        %v590 = vld [vmem:[%s546 + $0xc] sm:$0xf]
        %v591 = vld [vmem:[%s546 + $0x10] sm:$0xf]
        %v592 = vld [vmem:[%s546 + $0x14] sm:$0xf]
        %v593 = vld [vmem:[%s546 + $0x18] sm:$0xf]
        %v594 = vld [vmem:[%s546 + $0x1c] sm:$0xf]
        %v595 = vld [vmem:[%s546 + $0x20] sm:$0xf]
        %v596 = vld [vmem:[%s546 + $0x24] sm:$0xf]
        %v597 = vld [vmem:[%s546 + $0x28] sm:$0xf]
        %v598 = vld [vmem:[%s546 + $0x2c] sm:$0xf]
        %v599 = vld [vmem:[%s546 + $0x30] sm:$0xf]
        %v600 = vld [vmem:[%s546 + $0x34] sm:$0xf]
        %v601 = vld [vmem:[%s546 + $0x38] sm:$0xf]
        %v602 = vld [vmem:[%s546 + $0x3c] sm:$0xf]
        %v603 = vld [vmem:[%s546 + $0x40] sm:$0xf]
        %v604 = vld [vmem:[%s546 + $0x44] sm:$0xf]
        %v605 = vld [vmem:[%s546 + $0x48] sm:$0xf]
        %v606 = vld [vmem:[%s546 + $0x4c] sm:$0xf]
        %v607 = vld [vmem:[%s546 + $0x50] sm:$0xf]
        %v608 = vld [vmem:[%s546 + $0x54] sm:$0xf]
        %v609 = vld [vmem:[%s546 + $0x58] sm:$0xf]
        %v610 = vld [vmem:[%s546 + $0x5c] sm:$0xf]
        %v611 = vld [vmem:[%s546 + $0x60] sm:$0xf]
        %v612 = vld [vmem:[%s546 + $0x64] sm:$0xf]
        %v613 = vld [vmem:[%s546 + $0x68] sm:$0xf]
        %v614 = vld [vmem:[%s546 + $0x6c] sm:$0xf]
        %v615 = vld [vmem:[%s546 + $0x70] sm:$0xf]
        %v616 = vld [vmem:[%s546 + $0x74] sm:$0xf]
        %v617 = vld [vmem:[%s546 + $0x78] sm:$0xf]
        %v618 = vld [vmem:[%s546 + $0x7c] sm:$0xf]
        %v619 = vld [vmem:[%s1] sm:$0xf]
        %v620 = vld [vmem:[%s1 + $0x4] sm:$0xf]
        %v621 = vld [vmem:[%s1 + $0x8] sm:$0xf]
        %v622 = vld [vmem:[%s1 + $0xc] sm:$0xf]
        %v623 = vld [vmem:[%s2] sm:$0xff]
        %v624 = vld [vmem:[%s2 + $0x8] sm:$0xff]
        %v625 = vld [vmem:[%s2 + $0x10] sm:$0xff]
        %v626 = vld [vmem:[%s2 + $0x18] sm:$0xff]
        %v627 = vld [vmem:[%s2 + $0x20] sm:$0xff]
        %v628 = vld [vmem:[%s2 + $0x28] sm:$0xff]
        %v629 = vld [vmem:[%s2 + $0x30] sm:$0xff]
        %v630 = vld [vmem:[%s2 + $0x38] sm:$0xff]
        %v631 = vld [vmem:[%s2 + $0x40] sm:$0xff]
        %v632 = vld [vmem:[%s2 + $0x48] sm:$0xff]
        %v633 = vld [vmem:[%s2 + $0x50] sm:$0xff]
        %v634 = vld [vmem:[%s2 + $0x58] sm:$0xff]
        %v635 = vld [vmem:[%s2 + $0x60] sm:$0xff]
        %v636 = vld [vmem:[%s2 + $0x68] sm:$0xff]
        %v637 = vld [vmem:[%s2 + $0x70] sm:$0xff]
        %v638 = vld [vmem:[%s2 + $0x78] sm:$0xff]
        %v639 = vld [vmem:[%s2 + $0x80] sm:$0xff]
        %v640 = vld [vmem:[%s2 + $0x88] sm:$0xff]
        %v641 = vld [vmem:[%s2 + $0x90] sm:$0xff]
        %v642 = vld [vmem:[%s2 + $0x98] sm:$0xff]
        %v643 = vld [vmem:[%s2 + $0xa0] sm:$0xff]
        %v644 = vld [vmem:[%s2 + $0xa8] sm:$0xff]
        %v645 = vld [vmem:[%s2 + $0xb0] sm:$0xff]
        %v646 = vld [vmem:[%s2 + $0xb8] sm:$0xff]
        %v647 = vld [vmem:[%s2 + $0xc0] sm:$0xff]
        %v648 = vld [vmem:[%s2 + $0xc8] sm:$0xff]
        %v649 = vld [vmem:[%s2 + $0xd0] sm:$0xff]
        %v650 = vld [vmem:[%s2 + $0xd8] sm:$0xff]
        %v651 = vld [vmem:[%s2 + $0xe0] sm:$0xff]
        %v652 = vld [vmem:[%s2 + $0xe8] sm:$0xff]
        %v653 = vld [vmem:[%s2 + $0xf0] sm:$0xff]
        %v654 = vld [vmem:[%s2 + $0xf8] sm:$0xff]
        %v687 = vunpack.c.l.b16 %v587
        %v688 = vunpack.c.l.b16 %v588
        %v689 = vunpack.c.l.b16 %v589
        %v690 = vunpack.c.l.b16 %v590
        %v691 = vunpack.c.l.b16 %v591
        %v692 = vunpack.c.l.b16 %v592
        %v693 = vunpack.c.l.b16 %v593
        %v694 = vunpack.c.l.b16 %v594
        %v695 = vunpack.c.l.b16 %v595
        %v696 = vunpack.c.l.b16 %v596
        %v697 = vunpack.c.l.b16 %v597
        %v698 = vunpack.c.l.b16 %v598
        %v699 = vunpack.c.l.b16 %v599
        %v700 = vunpack.c.l.b16 %v600
        %v701 = vunpack.c.l.b16 %v601
        %v702 = vunpack.c.l.b16 %v602
        %v703 = vunpack.c.l.b16 %v603
        %v704 = vunpack.c.l.b16 %v604
        %v705 = vunpack.c.l.b16 %v605
        %v706 = vunpack.c.l.b16 %v606
        %v707 = vunpack.c.l.b16 %v607
        %v708 = vunpack.c.l.b16 %v608
        %v709 = vunpack.c.l.b16 %v609
        %v710 = vunpack.c.l.b16 %v610
        %v711 = vunpack.c.l.b16 %v611
        %v712 = vunpack.c.l.b16 %v612
        %v713 = vunpack.c.l.b16 %v613
        %v714 = vunpack.c.l.b16 %v614
        %v715 = vunpack.c.l.b16 %v615
        %v716 = vunpack.c.l.b16 %v616
        %v717 = vunpack.c.l.b16 %v617
        %v718 = vunpack.c.l.b16 %v618
        %v719 = vpack.c.b16 %v688, %v687
        %v720 = vpack.c.b16 %v690, %v689
        %v721 = vpack.c.b16 %v692, %v691
        %v722 = vpack.c.b16 %v694, %v693
        %v723 = vpack.c.b16 %v696, %v695
        %v724 = vpack.c.b16 %v698, %v697
        %v725 = vpack.c.b16 %v700, %v699
        %v726 = vpack.c.b16 %v702, %v701
        %v727 = vpack.c.b16 %v704, %v703
        %v728 = vpack.c.b16 %v706, %v705
        %v729 = vpack.c.b16 %v708, %v707
        %v730 = vpack.c.b16 %v710, %v709
        %v731 = vpack.c.b16 %v712, %v711
        %v732 = vpack.c.b16 %v714, %v713
        %v733 = vpack.c.b16 %v716, %v715
        %v734 = vpack.c.b16 %v718, %v717
        %v739 = vunpack.c.l.b16 %v619
        %v740 = vunpack.c.l.b16 %v620
        %v741 = vunpack.c.l.b16 %v621
        %v742 = vunpack.c.l.b16 %v622
        %v743 = vpack.c.b16 %v740, %v739
        %v744 = vpack.c.b16 %v742, %v741
        %vm747 = vcmask 261120
        %v749 = vsel %vm747, %v719, 0
        %v752 = vsel %vm747, %v720, 0
        %v755 = vsel %vm747, %v721, 0
        %v758 = vsel %vm747, %v722, 0
        %v761 = vsel %vm747, %v723, 0
        %v764 = vsel %vm747, %v724, 0
        %v767 = vsel %vm747, %v725, 0
        %v770 = vsel %vm747, %v726, 0
        %v773 = vsel %vm747, %v727, 0
        %v776 = vsel %vm747, %v728, 0
        %v779 = vsel %vm747, %v729, 0
        %v782 = vsel %vm747, %v730, 0
        %v785 = vsel %vm747, %v731, 0
        %v788 = vsel %vm747, %v732, 0
        %v791 = vsel %vm747, %v733, 0
        %v794 = vsel %vm747, %v734, 0
        %796 = vmatpush.bf16.msra.mxu0 0
        %797 = vmatpush.bf16.msra.mxu0 0
        %798 = vmatpush.bf16.msra.mxu0 0
        %799 = vmatpush.bf16.msra.mxu0 0
        %800 = vmatpush.bf16.msra.mxu0 0
        %801 = vmatpush.bf16.msra.mxu0 0
        %802 = vmatpush.bf16.msra.mxu0 %v744
        %803 = vmatpush.bf16.msra.mxu0 %v743
        %804 = vmatmul.bf16.gmra.mxu0 %v749
        %v805 = vpop.f32.mrf.mxu0
        %v806 = vadd.f32 %v623, %v805
        %v807 = vpop.f32.mrf.mxu0
        %v808 = vadd.f32 %v624, %v807
        %809 = vmatmul.bf16.gmra.mxu0 %v752
        %v810 = vpop.f32.mrf.mxu0
        %v811 = vadd.f32 %v625, %v810
        %v812 = vpop.f32.mrf.mxu0
        %v813 = vadd.f32 %v626, %v812
        %814 = vmatmul.bf16.gmra.mxu0 %v755
        %v815 = vpop.f32.mrf.mxu0
        %v816 = vadd.f32 %v627, %v815
        %v817 = vpop.f32.mrf.mxu0
        %v818 = vadd.f32 %v628, %v817
        %819 = vmatmul.bf16.gmra.mxu0 %v758
        %v820 = vpop.f32.mrf.mxu0
        %v821 = vadd.f32 %v629, %v820
        %v822 = vpop.f32.mrf.mxu0
        %v823 = vadd.f32 %v630, %v822
        %824 = vmatmul.bf16.gmra.mxu0 %v761
        %v825 = vpop.f32.mrf.mxu0
        %v826 = vadd.f32 %v631, %v825
        %v827 = vpop.f32.mrf.mxu0
        %v828 = vadd.f32 %v632, %v827
        %829 = vmatmul.bf16.gmra.mxu0 %v764
        %v830 = vpop.f32.mrf.mxu0
        %v831 = vadd.f32 %v633, %v830
        %v832 = vpop.f32.mrf.mxu0
        %v833 = vadd.f32 %v634, %v832
        %834 = vmatmul.bf16.gmra.mxu0 %v767
        %v835 = vpop.f32.mrf.mxu0
        %v836 = vadd.f32 %v635, %v835
        %v837 = vpop.f32.mrf.mxu0
        %v838 = vadd.f32 %v636, %v837
        %839 = vmatmul.bf16.gmra.mxu0 %v770
        %v840 = vpop.f32.mrf.mxu0
        %v841 = vadd.f32 %v637, %v840
        %v842 = vpop.f32.mrf.mxu0
        %v843 = vadd.f32 %v638, %v842
        %844 = vmatmul.bf16.gmra.mxu0 %v773
        %v845 = vpop.f32.mrf.mxu0
        %v846 = vadd.f32 %v639, %v845
        %v847 = vpop.f32.mrf.mxu0
        %v848 = vadd.f32 %v640, %v847
        %849 = vmatmul.bf16.gmra.mxu0 %v776
        %v850 = vpop.f32.mrf.mxu0
        %v851 = vadd.f32 %v641, %v850
        %v852 = vpop.f32.mrf.mxu0
        %v853 = vadd.f32 %v642, %v852
        %854 = vmatmul.bf16.gmra.mxu0 %v779
        %v855 = vpop.f32.mrf.mxu0
        %v856 = vadd.f32 %v643, %v855
        %v857 = vpop.f32.mrf.mxu0
        %v858 = vadd.f32 %v644, %v857
        %859 = vmatmul.bf16.gmra.mxu0 %v782
        %v860 = vpop.f32.mrf.mxu0
        %v861 = vadd.f32 %v645, %v860
        %v862 = vpop.f32.mrf.mxu0
        %v863 = vadd.f32 %v646, %v862
        %864 = vmatmul.bf16.gmra.mxu0 %v785
        %v865 = vpop.f32.mrf.mxu0
        %v866 = vadd.f32 %v647, %v865
        %v867 = vpop.f32.mrf.mxu0
        %v868 = vadd.f32 %v648, %v867
        %869 = vmatmul.bf16.gmra.mxu0 %v788
        %v870 = vpop.f32.mrf.mxu0
        %v871 = vadd.f32 %v649, %v870
        %v872 = vpop.f32.mrf.mxu0
        %v873 = vadd.f32 %v650, %v872
        %874 = vmatmul.bf16.gmra.mxu0 %v791
        %v875 = vpop.f32.mrf.mxu0
        %v876 = vadd.f32 %v651, %v875
        %v877 = vpop.f32.mrf.mxu0
        %v878 = vadd.f32 %v652, %v877
        %879 = vmatmul.bf16.gmra.mxu0 %v794
        %v880 = vpop.f32.mrf.mxu0
        %v881 = vadd.f32 %v653, %v880
        %v882 = vpop.f32.mrf.mxu0
        %v883 = vadd.f32 %v654, %v882
        %884 = vdwg.mxu0
        %v885 = vpack.c.bf16 %v806, %v806
        %v886 = vpack.c.bf16 %v808, %v808
        %v887 = vpack.c.bf16 %v811, %v811
        %v888 = vpack.c.bf16 %v813, %v813
        %v889 = vpack.c.bf16 %v816, %v816
        %v890 = vpack.c.bf16 %v818, %v818
        %v891 = vpack.c.bf16 %v821, %v821
        %v892 = vpack.c.bf16 %v823, %v823
        %v893 = vpack.c.bf16 %v826, %v826
        %v894 = vpack.c.bf16 %v828, %v828
        %v895 = vpack.c.bf16 %v831, %v831
        %v896 = vpack.c.bf16 %v833, %v833
        %v897 = vpack.c.bf16 %v836, %v836
        %v898 = vpack.c.bf16 %v838, %v838
        %v899 = vpack.c.bf16 %v841, %v841
        %v900 = vpack.c.bf16 %v843, %v843
        %v901 = vpack.c.bf16 %v846, %v846
        %v902 = vpack.c.bf16 %v848, %v848
        %v903 = vpack.c.bf16 %v851, %v851
        %v904 = vpack.c.bf16 %v853, %v853
        %v905 = vpack.c.bf16 %v856, %v856
        %v906 = vpack.c.bf16 %v858, %v858
        %v907 = vpack.c.bf16 %v861, %v861
        %v908 = vpack.c.bf16 %v863, %v863
        %v909 = vpack.c.bf16 %v866, %v866
        %v910 = vpack.c.bf16 %v868, %v868
        %v911 = vpack.c.bf16 %v871, %v871
        %v912 = vpack.c.bf16 %v873, %v873
        %v913 = vpack.c.bf16 %v876, %v876
        %v914 = vpack.c.bf16 %v878, %v878
        %v915 = vpack.c.bf16 %v881, %v881
        %v916 = vpack.c.bf16 %v883, %v883
        %v917 = vld [vmem:[%s553] sm:$0xf]
        %v918 = vld [vmem:[%s553 + $0x4] sm:$0xf]
        %v919 = vld [vmem:[%s553 + $0x8] sm:$0xf]
        %v920 = vld [vmem:[%s553 + $0xc] sm:$0xf]
        %v921 = vld [vmem:[%s553 + $0x10] sm:$0xf]
        %v922 = vld [vmem:[%s553 + $0x14] sm:$0xf]
        %v923 = vld [vmem:[%s553 + $0x18] sm:$0xf]
        %v924 = vld [vmem:[%s553 + $0x1c] sm:$0xf]
        %v925 = vld [vmem:[%s553 + $0x20] sm:$0xf]
        %v926 = vld [vmem:[%s553 + $0x24] sm:$0xf]
        %v927 = vld [vmem:[%s553 + $0x28] sm:$0xf]
        %v928 = vld [vmem:[%s553 + $0x2c] sm:$0xf]
        %v929 = vld [vmem:[%s553 + $0x30] sm:$0xf]
        %v930 = vld [vmem:[%s553 + $0x34] sm:$0xf]
        %v931 = vld [vmem:[%s553 + $0x38] sm:$0xf]
        %v932 = vld [vmem:[%s553 + $0x3c] sm:$0xf]
        %v933 = vld [vmem:[%s553 + $0x40] sm:$0xf]
        %v934 = vld [vmem:[%s553 + $0x44] sm:$0xf]
        %v935 = vld [vmem:[%s553 + $0x48] sm:$0xf]
        %v936 = vld [vmem:[%s553 + $0x4c] sm:$0xf]
        %v937 = vld [vmem:[%s553 + $0x50] sm:$0xf]
        %v938 = vld [vmem:[%s553 + $0x54] sm:$0xf]
        %v939 = vld [vmem:[%s553 + $0x58] sm:$0xf]
        %v940 = vld [vmem:[%s553 + $0x5c] sm:$0xf]
        %v941 = vld [vmem:[%s553 + $0x60] sm:$0xf]
        %v942 = vld [vmem:[%s553 + $0x64] sm:$0xf]
        %v943 = vld [vmem:[%s553 + $0x68] sm:$0xf]
        %v944 = vld [vmem:[%s553 + $0x6c] sm:$0xf]
        %v945 = vld [vmem:[%s553 + $0x70] sm:$0xf]
        %v946 = vld [vmem:[%s553 + $0x74] sm:$0xf]
        %v947 = vld [vmem:[%s553 + $0x78] sm:$0xf]
        %v948 = vld [vmem:[%s553 + $0x7c] sm:$0xf]
        %v949 = vunpack.c.l.bf16 %v917
        %v950 = vunpack.c.l.bf16 %v918
        %v951 = vunpack.c.l.bf16 %v919
        %v952 = vunpack.c.l.bf16 %v920
        %v953 = vunpack.c.l.bf16 %v921
        %v954 = vunpack.c.l.bf16 %v922
        %v955 = vunpack.c.l.bf16 %v923
        %v956 = vunpack.c.l.bf16 %v924
        %v957 = vunpack.c.l.bf16 %v925
        %v958 = vunpack.c.l.bf16 %v926
        %v959 = vunpack.c.l.bf16 %v927
        %v960 = vunpack.c.l.bf16 %v928
        %v961 = vunpack.c.l.bf16 %v929
        %v962 = vunpack.c.l.bf16 %v930
        %v963 = vunpack.c.l.bf16 %v931
        %v964 = vunpack.c.l.bf16 %v932
        %v965 = vunpack.c.l.bf16 %v933
        %v966 = vunpack.c.l.bf16 %v934
        %v967 = vunpack.c.l.bf16 %v935
        %v968 = vunpack.c.l.bf16 %v936
        %v969 = vunpack.c.l.bf16 %v937
        %v970 = vunpack.c.l.bf16 %v938
        %v971 = vunpack.c.l.bf16 %v939
        %v972 = vunpack.c.l.bf16 %v940
        %v973 = vunpack.c.l.bf16 %v941
        %v974 = vunpack.c.l.bf16 %v942
        %v975 = vunpack.c.l.bf16 %v943
        %v976 = vunpack.c.l.bf16 %v944
        %v977 = vunpack.c.l.bf16 %v945
        %v978 = vunpack.c.l.bf16 %v946
        %v979 = vunpack.c.l.bf16 %v947
        %v980 = vunpack.c.l.bf16 %v948
        %v981 = vmul.f32 %v949, 2.0
        %v982 = vmul.f32 %v950, 2.0
        %v983 = vmul.f32 %v951, 2.0
        %v984 = vmul.f32 %v952, 2.0
        %v985 = vmul.f32 %v953, 2.0
        %v986 = vmul.f32 %v954, 2.0
        %v987 = vmul.f32 %v955, 2.0
        %v988 = vmul.f32 %v956, 2.0
        %v989 = vmul.f32 %v957, 2.0
        %v990 = vmul.f32 %v958, 2.0
        %v991 = vmul.f32 %v959, 2.0
        %v992 = vmul.f32 %v960, 2.0
        %v993 = vmul.f32 %v961, 2.0
        %v994 = vmul.f32 %v962, 2.0
        %v995 = vmul.f32 %v963, 2.0
        %v996 = vmul.f32 %v964, 2.0
        %v997 = vmul.f32 %v965, 2.0
        %v998 = vmul.f32 %v966, 2.0
        %v999 = vmul.f32 %v967, 2.0
        %v1000 = vmul.f32 %v968, 2.0
        %v1001 = vmul.f32 %v969, 2.0
        %v1002 = vmul.f32 %v970, 2.0
        %v1003 = vmul.f32 %v971, 2.0
        %v1004 = vmul.f32 %v972, 2.0
        %v1005 = vmul.f32 %v973, 2.0
        %v1006 = vmul.f32 %v974, 2.0
        %v1007 = vmul.f32 %v975, 2.0
        %v1008 = vmul.f32 %v976, 2.0
        %v1009 = vmul.f32 %v977, 2.0
        %v1010 = vmul.f32 %v978, 2.0
        %v1011 = vmul.f32 %v979, 2.0
        %v1012 = vmul.f32 %v980, 2.0
        %v1013 = vsub.f32 %v981, 1.0
        %v1014 = vsub.f32 %v982, 1.0
        %v1015 = vsub.f32 %v983, 1.0
        %v1016 = vsub.f32 %v984, 1.0
        %v1017 = vsub.f32 %v985, 1.0
        %v1018 = vsub.f32 %v986, 1.0
        %v1019 = vsub.f32 %v987, 1.0
        %v1020 = vsub.f32 %v988, 1.0
        %v1021 = vsub.f32 %v989, 1.0
        %v1022 = vsub.f32 %v990, 1.0
        %v1023 = vsub.f32 %v991, 1.0
        %v1024 = vsub.f32 %v992, 1.0
        %v1025 = vsub.f32 %v993, 1.0
        %v1026 = vsub.f32 %v994, 1.0
        %v1027 = vsub.f32 %v995, 1.0
        %v1028 = vsub.f32 %v996, 1.0
        %v1029 = vsub.f32 %v997, 1.0
        %v1030 = vsub.f32 %v998, 1.0
        %v1031 = vsub.f32 %v999, 1.0
        %v1032 = vsub.f32 %v1000, 1.0
        %v1033 = vsub.f32 %v1001, 1.0
        %v1034 = vsub.f32 %v1002, 1.0
        %v1035 = vsub.f32 %v1003, 1.0
        %v1036 = vsub.f32 %v1004, 1.0
        %v1037 = vsub.f32 %v1005, 1.0
        %v1038 = vsub.f32 %v1006, 1.0
        %v1039 = vsub.f32 %v1007, 1.0
        %v1040 = vsub.f32 %v1008, 1.0
        %v1041 = vsub.f32 %v1009, 1.0
        %v1042 = vsub.f32 %v1010, 1.0
        %v1043 = vsub.f32 %v1011, 1.0
        %v1044 = vsub.f32 %v1012, 1.0
        %v1045 = vpack.c.bf16 %v1013, %v1013
        %v1046 = vpack.c.bf16 %v1014, %v1014
        %v1047 = vpack.c.bf16 %v1015, %v1015
        %v1048 = vpack.c.bf16 %v1016, %v1016
        %v1049 = vpack.c.bf16 %v1017, %v1017
        %v1050 = vpack.c.bf16 %v1018, %v1018
        %v1051 = vpack.c.bf16 %v1019, %v1019
        %v1052 = vpack.c.bf16 %v1020, %v1020
        %v1053 = vpack.c.bf16 %v1021, %v1021
        %v1054 = vpack.c.bf16 %v1022, %v1022
        %v1055 = vpack.c.bf16 %v1023, %v1023
        %v1056 = vpack.c.bf16 %v1024, %v1024
        %v1057 = vpack.c.bf16 %v1025, %v1025
        %v1058 = vpack.c.bf16 %v1026, %v1026
        %v1059 = vpack.c.bf16 %v1027, %v1027
        %v1060 = vpack.c.bf16 %v1028, %v1028
        %v1061 = vpack.c.bf16 %v1029, %v1029
        %v1062 = vpack.c.bf16 %v1030, %v1030
        %v1063 = vpack.c.bf16 %v1031, %v1031
        %v1064 = vpack.c.bf16 %v1032, %v1032
        %v1065 = vpack.c.bf16 %v1033, %v1033
        %v1066 = vpack.c.bf16 %v1034, %v1034
        %v1067 = vpack.c.bf16 %v1035, %v1035
        %v1068 = vpack.c.bf16 %v1036, %v1036
        %v1069 = vpack.c.bf16 %v1037, %v1037
        %v1070 = vpack.c.bf16 %v1038, %v1038
        %v1071 = vpack.c.bf16 %v1039, %v1039
        %v1072 = vpack.c.bf16 %v1040, %v1040
        %v1073 = vpack.c.bf16 %v1041, %v1041
        %v1074 = vpack.c.bf16 %v1042, %v1042
        %v1075 = vpack.c.bf16 %v1043, %v1043
        %v1076 = vpack.c.bf16 %v1044, %v1044
        %v1109 = vunpack.c.l.b16 %v1045
        %v1110 = vunpack.c.l.b16 %v1046
        %v1111 = vunpack.c.l.b16 %v1047
        %v1112 = vunpack.c.l.b16 %v1048
        %v1113 = vunpack.c.l.b16 %v1049
        %v1114 = vunpack.c.l.b16 %v1050
        %v1115 = vunpack.c.l.b16 %v1051
        %v1116 = vunpack.c.l.b16 %v1052
        %v1117 = vunpack.c.l.b16 %v1053
        %v1118 = vunpack.c.l.b16 %v1054
        %v1119 = vunpack.c.l.b16 %v1055
        %v1120 = vunpack.c.l.b16 %v1056
        %v1121 = vunpack.c.l.b16 %v1057
        %v1122 = vunpack.c.l.b16 %v1058
        %v1123 = vunpack.c.l.b16 %v1059
        %v1124 = vunpack.c.l.b16 %v1060
        %v1125 = vunpack.c.l.b16 %v1061
        %v1126 = vunpack.c.l.b16 %v1062
        %v1127 = vunpack.c.l.b16 %v1063
        %v1128 = vunpack.c.l.b16 %v1064
        %v1129 = vunpack.c.l.b16 %v1065
        %v1130 = vunpack.c.l.b16 %v1066
        %v1131 = vunpack.c.l.b16 %v1067
        %v1132 = vunpack.c.l.b16 %v1068
        %v1133 = vunpack.c.l.b16 %v1069
        %v1134 = vunpack.c.l.b16 %v1070
        %v1135 = vunpack.c.l.b16 %v1071
        %v1136 = vunpack.c.l.b16 %v1072
        %v1137 = vunpack.c.l.b16 %v1073
        %v1138 = vunpack.c.l.b16 %v1074
        %v1139 = vunpack.c.l.b16 %v1075
        %v1140 = vunpack.c.l.b16 %v1076
        %v1141 = vpack.c.b16 %v1110, %v1109
        %v1142 = vpack.c.b16 %v1112, %v1111
        %v1143 = vpack.c.b16 %v1114, %v1113
        %v1144 = vpack.c.b16 %v1116, %v1115
        %v1145 = vpack.c.b16 %v1118, %v1117
        %v1146 = vpack.c.b16 %v1120, %v1119
        %v1147 = vpack.c.b16 %v1122, %v1121
        %v1148 = vpack.c.b16 %v1124, %v1123
        %v1149 = vpack.c.b16 %v1126, %v1125
        %v1150 = vpack.c.b16 %v1128, %v1127
        %v1151 = vpack.c.b16 %v1130, %v1129
        %v1152 = vpack.c.b16 %v1132, %v1131
        %v1153 = vpack.c.b16 %v1134, %v1133
        %v1154 = vpack.c.b16 %v1136, %v1135
        %v1155 = vpack.c.b16 %v1138, %v1137
        %v1156 = vpack.c.b16 %v1140, %v1139
        %1157 = vrot.lane.b32.xlu0 %v1141, 64
        %v1158 = vpop.permute.xlu0 %1157
        %1159 = vrot.lane.b32.xlu0 %v1142, 64
        %v1160 = vpop.permute.xlu0 %1159
        %1161 = vrot.lane.b32.xlu0 %v1143, 64
        %v1162 = vpop.permute.xlu0 %1161
        %1163 = vrot.lane.b32.xlu0 %v1144, 64
        %v1164 = vpop.permute.xlu0 %1163
        %1165 = vrot.lane.b32.xlu0 %v1145, 64
        %v1166 = vpop.permute.xlu0 %1165
        %1167 = vrot.lane.b32.xlu0 %v1146, 64
        %v1168 = vpop.permute.xlu0 %1167
        %1169 = vrot.lane.b32.xlu0 %v1147, 64
        %v1170 = vpop.permute.xlu0 %1169
        %1171 = vrot.lane.b32.xlu0 %v1148, 64
        %v1172 = vpop.permute.xlu0 %1171
        %1173 = vrot.lane.b32.xlu0 %v1149, 64
        %v1174 = vpop.permute.xlu0 %1173
        %1175 = vrot.lane.b32.xlu0 %v1150, 64
        %v1176 = vpop.permute.xlu0 %1175
        %1177 = vrot.lane.b32.xlu0 %v1151, 64
        %v1178 = vpop.permute.xlu0 %1177
        %1179 = vrot.lane.b32.xlu0 %v1152, 64
        %v1180 = vpop.permute.xlu0 %1179
        %1181 = vrot.lane.b32.xlu0 %v1153, 64
        %v1182 = vpop.permute.xlu0 %1181
        %1183 = vrot.lane.b32.xlu0 %v1154, 64
        %v1184 = vpop.permute.xlu0 %1183
        %1185 = vrot.lane.b32.xlu0 %v1155, 64
        %v1186 = vpop.permute.xlu0 %1185
        %1187 = vrot.lane.b32.xlu0 %v1156, 64
        %v1188 = vpop.permute.xlu0 %1187
        %v1190 = vsel %vm747, %v1141, 0
        %v1193 = vsel %vm747, %v1142, 0
        %v1196 = vsel %vm747, %v1143, 0
        %v1199 = vsel %vm747, %v1144, 0
        %v1202 = vsel %vm747, %v1145, 0
        %v1205 = vsel %vm747, %v1146, 0
        %v1208 = vsel %vm747, %v1147, 0
        %v1211 = vsel %vm747, %v1148, 0
        %v1214 = vsel %vm747, %v1149, 0
        %v1217 = vsel %vm747, %v1150, 0
        %v1220 = vsel %vm747, %v1151, 0
        %v1223 = vsel %vm747, %v1152, 0
        %v1226 = vsel %vm747, %v1153, 0
        %v1229 = vsel %vm747, %v1154, 0
        %v1232 = vsel %vm747, %v1155, 0
        %v1235 = vsel %vm747, %v1156, 0
        %v1238 = vsel %vm747, %v1158, 0
        %v1241 = vsel %vm747, %v1160, 0
        %v1244 = vsel %vm747, %v1162, 0
        %v1247 = vsel %vm747, %v1164, 0
        %v1250 = vsel %vm747, %v1166, 0
        %v1253 = vsel %vm747, %v1168, 0
        %v1256 = vsel %vm747, %v1170, 0
        %v1259 = vsel %vm747, %v1172, 0
        %v1262 = vsel %vm747, %v1174, 0
        %v1265 = vsel %vm747, %v1176, 0
        %v1268 = vsel %vm747, %v1178, 0
        %v1271 = vsel %vm747, %v1180, 0
        %v1274 = vsel %vm747, %v1182, 0
        %v1277 = vsel %vm747, %v1184, 0
        %v1280 = vsel %vm747, %v1186, 0
        %v1283 = vsel %vm747, %v1188, 0
        %1285 = vmatpush.bf16.xpose.msra.mxu0 %v1259
        %1286 = vmatpush.bf16.xpose.msra.mxu0 %v1256
        %1287 = vmatpush.bf16.xpose.msra.mxu0 %v1253
        %1288 = vmatpush.bf16.xpose.msra.mxu0 %v1250
        %1289 = vmatpush.bf16.xpose.msra.mxu0 %v1247
        %1290 = vmatpush.bf16.xpose.msra.mxu0 %v1244
        %1291 = vmatpush.bf16.xpose.msra.mxu0 %v1241
        %1292 = vmatpush.bf16.xpose.msra.mxu0 %v1238
        %1293 = vmatmul.bf16.gmra.mxu0 %v1190
        %v1294 = vpop.f32.mrf.mxu0
        %v1295 = vadd.f32 0.0, %v1294
        %v1296 = vpop.f32.mrf.mxu0
        %v1297 = vadd.f32 0.0, %v1296
        %1298 = vmatmul.bf16.gmra.mxu0 %v1193
        %v1299 = vpop.f32.mrf.mxu0
        %v1300 = vadd.f32 0.0, %v1299
        %v1301 = vpop.f32.mrf.mxu0
        %v1302 = vadd.f32 0.0, %v1301
        %1303 = vmatmul.bf16.gmra.mxu0 %v1196
        %v1304 = vpop.f32.mrf.mxu0
        %v1305 = vadd.f32 0.0, %v1304
        %v1306 = vpop.f32.mrf.mxu0
        %v1307 = vadd.f32 0.0, %v1306
        %1308 = vmatmul.bf16.gmra.mxu0 %v1199
        %v1309 = vpop.f32.mrf.mxu0
        %v1310 = vadd.f32 0.0, %v1309
        %v1311 = vpop.f32.mrf.mxu0
        %v1312 = vadd.f32 0.0, %v1311
        %1313 = vmatmul.bf16.gmra.mxu0 %v1202
        %v1314 = vpop.f32.mrf.mxu0
        %v1315 = vadd.f32 0.0, %v1314
        %v1316 = vpop.f32.mrf.mxu0
        %v1317 = vadd.f32 0.0, %v1316
        %1318 = vmatmul.bf16.gmra.mxu0 %v1205
        %v1319 = vpop.f32.mrf.mxu0
        %v1320 = vadd.f32 0.0, %v1319
        %v1321 = vpop.f32.mrf.mxu0
        %v1322 = vadd.f32 0.0, %v1321
        %1323 = vmatmul.bf16.gmra.mxu0 %v1208
        %v1324 = vpop.f32.mrf.mxu0
        %v1325 = vadd.f32 0.0, %v1324
        %v1326 = vpop.f32.mrf.mxu0
        %v1327 = vadd.f32 0.0, %v1326
        %1328 = vmatmul.bf16.gmra.mxu0 %v1211
        %v1329 = vpop.f32.mrf.mxu0
        %v1330 = vadd.f32 0.0, %v1329
        %v1331 = vpop.f32.mrf.mxu0
        %v1332 = vadd.f32 0.0, %v1331
        %1333 = vmatmul.bf16.gmra.mxu0 %v1214
        %v1334 = vpop.f32.mrf.mxu0
        %v1335 = vadd.f32 0.0, %v1334
        %v1336 = vpop.f32.mrf.mxu0
        %v1337 = vadd.f32 0.0, %v1336
        %1338 = vmatmul.bf16.gmra.mxu0 %v1217
        %v1339 = vpop.f32.mrf.mxu0
        %v1340 = vadd.f32 0.0, %v1339
        %v1341 = vpop.f32.mrf.mxu0
        %v1342 = vadd.f32 0.0, %v1341
        %1343 = vmatmul.bf16.gmra.mxu0 %v1220
        %v1344 = vpop.f32.mrf.mxu0
        %v1345 = vadd.f32 0.0, %v1344
        %v1346 = vpop.f32.mrf.mxu0
        %v1347 = vadd.f32 0.0, %v1346
        %1348 = vmatmul.bf16.gmra.mxu0 %v1223
        %v1349 = vpop.f32.mrf.mxu0
        %v1350 = vadd.f32 0.0, %v1349
        %v1351 = vpop.f32.mrf.mxu0
        %v1352 = vadd.f32 0.0, %v1351
        %1353 = vmatmul.bf16.gmra.mxu0 %v1226
        %v1354 = vpop.f32.mrf.mxu0
        %v1355 = vadd.f32 0.0, %v1354
        %v1356 = vpop.f32.mrf.mxu0
        %v1357 = vadd.f32 0.0, %v1356
        %1358 = vmatmul.bf16.gmra.mxu0 %v1229
        %v1359 = vpop.f32.mrf.mxu0
        %v1360 = vadd.f32 0.0, %v1359
        %v1361 = vpop.f32.mrf.mxu0
        %v1362 = vadd.f32 0.0, %v1361
        %1363 = vmatmul.bf16.gmra.mxu0 %v1232
        %v1364 = vpop.f32.mrf.mxu0
        %v1365 = vadd.f32 0.0, %v1364
        %v1366 = vpop.f32.mrf.mxu0
        %v1367 = vadd.f32 0.0, %v1366
        %1368 = vmatmul.bf16.gmra.mxu0 %v1235
        %v1369 = vpop.f32.mrf.mxu0
        %v1370 = vadd.f32 0.0, %v1369
        %v1371 = vpop.f32.mrf.mxu0
        %v1372 = vadd.f32 0.0, %v1371
        %1373 = vdwg.mxu0
        %1374 = vmatpush.bf16.xpose.msra.mxu0 %v1283
        %1375 = vmatpush.bf16.xpose.msra.mxu0 %v1280
        %1376 = vmatpush.bf16.xpose.msra.mxu0 %v1277
        %1377 = vmatpush.bf16.xpose.msra.mxu0 %v1274
        %1378 = vmatpush.bf16.xpose.msra.mxu0 %v1271
        %1379 = vmatpush.bf16.xpose.msra.mxu0 %v1268
        %1380 = vmatpush.bf16.xpose.msra.mxu0 %v1265
        %1381 = vmatpush.bf16.xpose.msra.mxu0 %v1262
        %1382 = vmatmul.bf16.gmra.mxu0 %v1190
        %v1383 = vpop.f32.mrf.mxu0
        %v1384 = vadd.f32 0.0, %v1383
        %v1385 = vpop.f32.mrf.mxu0
        %v1386 = vadd.f32 0.0, %v1385
        %1387 = vmatmul.bf16.gmra.mxu0 %v1193
        %v1388 = vpop.f32.mrf.mxu0
        %v1389 = vadd.f32 0.0, %v1388
        %v1390 = vpop.f32.mrf.mxu0
        %v1391 = vadd.f32 0.0, %v1390
        %1392 = vmatmul.bf16.gmra.mxu0 %v1196
        %v1393 = vpop.f32.mrf.mxu0
        %v1394 = vadd.f32 0.0, %v1393
        %v1395 = vpop.f32.mrf.mxu0
        %v1396 = vadd.f32 0.0, %v1395
        %1397 = vmatmul.bf16.gmra.mxu0 %v1199
        %v1398 = vpop.f32.mrf.mxu0
        %v1399 = vadd.f32 0.0, %v1398
        %v1400 = vpop.f32.mrf.mxu0
        %v1401 = vadd.f32 0.0, %v1400
        %1402 = vmatmul.bf16.gmra.mxu0 %v1202
        %v1403 = vpop.f32.mrf.mxu0
        %v1404 = vadd.f32 0.0, %v1403
        %v1405 = vpop.f32.mrf.mxu0
        %v1406 = vadd.f32 0.0, %v1405
        %1407 = vmatmul.bf16.gmra.mxu0 %v1205
        %v1408 = vpop.f32.mrf.mxu0
        %v1409 = vadd.f32 0.0, %v1408
        %v1410 = vpop.f32.mrf.mxu0
        %v1411 = vadd.f32 0.0, %v1410
        %1412 = vmatmul.bf16.gmra.mxu0 %v1208
        %v1413 = vpop.f32.mrf.mxu0
        %v1414 = vadd.f32 0.0, %v1413
        %v1415 = vpop.f32.mrf.mxu0
        %v1416 = vadd.f32 0.0, %v1415
        %1417 = vmatmul.bf16.gmra.mxu0 %v1211
        %v1418 = vpop.f32.mrf.mxu0
        %v1419 = vadd.f32 0.0, %v1418
        %v1420 = vpop.f32.mrf.mxu0
        %v1421 = vadd.f32 0.0, %v1420
        %1422 = vmatmul.bf16.gmra.mxu0 %v1214
        %v1423 = vpop.f32.mrf.mxu0
        %v1424 = vadd.f32 0.0, %v1423
        %v1425 = vpop.f32.mrf.mxu0
        %v1426 = vadd.f32 0.0, %v1425
        %1427 = vmatmul.bf16.gmra.mxu0 %v1217
        %v1428 = vpop.f32.mrf.mxu0
        %v1429 = vadd.f32 0.0, %v1428
        %v1430 = vpop.f32.mrf.mxu0
        %v1431 = vadd.f32 0.0, %v1430
        %1432 = vmatmul.bf16.gmra.mxu0 %v1220
        %v1433 = vpop.f32.mrf.mxu0
        %v1434 = vadd.f32 0.0, %v1433
        %v1435 = vpop.f32.mrf.mxu0
        %v1436 = vadd.f32 0.0, %v1435
        %1437 = vmatmul.bf16.gmra.mxu0 %v1223
        %v1438 = vpop.f32.mrf.mxu0
        %v1439 = vadd.f32 0.0, %v1438
        %v1440 = vpop.f32.mrf.mxu0
        %v1441 = vadd.f32 0.0, %v1440
        %1442 = vmatmul.bf16.gmra.mxu0 %v1226
        %v1443 = vpop.f32.mrf.mxu0
        %v1444 = vadd.f32 0.0, %v1443
        %v1445 = vpop.f32.mrf.mxu0
        %v1446 = vadd.f32 0.0, %v1445
        %1447 = vmatmul.bf16.gmra.mxu0 %v1229
        %v1448 = vpop.f32.mrf.mxu0
        %v1449 = vadd.f32 0.0, %v1448
        %v1450 = vpop.f32.mrf.mxu0
        %v1451 = vadd.f32 0.0, %v1450
        %1452 = vmatmul.bf16.gmra.mxu0 %v1232
        %v1453 = vpop.f32.mrf.mxu0
        %v1454 = vadd.f32 0.0, %v1453
        %v1455 = vpop.f32.mrf.mxu0
        %v1456 = vadd.f32 0.0, %v1455
        %1457 = vmatmul.bf16.gmra.mxu0 %v1235
        %v1458 = vpop.f32.mrf.mxu0
        %v1459 = vadd.f32 0.0, %v1458
        %v1460 = vpop.f32.mrf.mxu0
        %v1461 = vadd.f32 0.0, %v1460
        %1462 = vdwg.mxu0
        %v1463 = vmul.f32 %v1295, 0.015625
        %v1464 = vmul.f32 %v1384, 0.015625
        %v1465 = vmul.f32 %v1297, 0.015625
        %v1466 = vmul.f32 %v1386, 0.015625
        %v1467 = vmul.f32 %v1300, 0.015625
        %v1468 = vmul.f32 %v1389, 0.015625
        %v1469 = vmul.f32 %v1302, 0.015625
        %v1470 = vmul.f32 %v1391, 0.015625
        %v1471 = vmul.f32 %v1305, 0.015625
        %v1472 = vmul.f32 %v1394, 0.015625
        %v1473 = vmul.f32 %v1307, 0.015625
        %v1474 = vmul.f32 %v1396, 0.015625
        %v1475 = vmul.f32 %v1310, 0.015625
        %v1476 = vmul.f32 %v1399, 0.015625
        %v1477 = vmul.f32 %v1312, 0.015625
        %v1478 = vmul.f32 %v1401, 0.015625
        %v1479 = vmul.f32 %v1315, 0.015625
        %v1480 = vmul.f32 %v1404, 0.015625
        %v1481 = vmul.f32 %v1317, 0.015625
        %v1482 = vmul.f32 %v1406, 0.015625
        %v1483 = vmul.f32 %v1320, 0.015625
        %v1484 = vmul.f32 %v1409, 0.015625
        %v1485 = vmul.f32 %v1322, 0.015625
        %v1486 = vmul.f32 %v1411, 0.015625
        %v1487 = vmul.f32 %v1325, 0.015625
        %v1488 = vmul.f32 %v1414, 0.015625
        %v1489 = vmul.f32 %v1327, 0.015625
        %v1490 = vmul.f32 %v1416, 0.015625
        %v1491 = vmul.f32 %v1330, 0.015625
        %v1492 = vmul.f32 %v1419, 0.015625
        %v1493 = vmul.f32 %v1332, 0.015625
        %v1494 = vmul.f32 %v1421, 0.015625
        %v1495 = vmul.f32 %v1335, 0.015625
        %v1496 = vmul.f32 %v1424, 0.015625
        %v1497 = vmul.f32 %v1337, 0.015625
        %v1498 = vmul.f32 %v1426, 0.015625
        %v1499 = vmul.f32 %v1340, 0.015625
        %v1500 = vmul.f32 %v1429, 0.015625
        %v1501 = vmul.f32 %v1342, 0.015625
        %v1502 = vmul.f32 %v1431, 0.015625
        %v1503 = vmul.f32 %v1345, 0.015625
        %v1504 = vmul.f32 %v1434, 0.015625
        %v1505 = vmul.f32 %v1347, 0.015625
        %v1506 = vmul.f32 %v1436, 0.015625
        %v1507 = vmul.f32 %v1350, 0.015625
        %v1508 = vmul.f32 %v1439, 0.015625
        %v1509 = vmul.f32 %v1352, 0.015625
        %v1510 = vmul.f32 %v1441, 0.015625
        %v1511 = vmul.f32 %v1355, 0.015625
        %v1512 = vmul.f32 %v1444, 0.015625
        %v1513 = vmul.f32 %v1357, 0.015625
        %v1514 = vmul.f32 %v1446, 0.015625
        %v1515 = vmul.f32 %v1360, 0.015625
        %v1516 = vmul.f32 %v1449, 0.015625
        %v1517 = vmul.f32 %v1362, 0.015625
        %v1518 = vmul.f32 %v1451, 0.015625
        %v1519 = vmul.f32 %v1365, 0.015625
        %v1520 = vmul.f32 %v1454, 0.015625
        %v1521 = vmul.f32 %v1367, 0.015625
        %v1522 = vmul.f32 %v1456, 0.015625
        %v1523 = vmul.f32 %v1370, 0.015625
        %v1524 = vmul.f32 %v1459, 0.015625
        %v1525 = vmul.f32 %v1372, 0.015625
        %v1526 = vmul.f32 %v1461, 0.015625
        %v1527 = vadd.f32 %v1463, 0.5
        %v1528 = vadd.f32 %v1464, 0.5
        %v1529 = vadd.f32 %v1465, 0.5
        %v1530 = vadd.f32 %v1466, 0.5
        %v1531 = vadd.f32 %v1467, 0.5
        %v1532 = vadd.f32 %v1468, 0.5
        %v1533 = vadd.f32 %v1469, 0.5
        %v1534 = vadd.f32 %v1470, 0.5
        %v1535 = vadd.f32 %v1471, 0.5
        %v1536 = vadd.f32 %v1472, 0.5
        %v1537 = vadd.f32 %v1473, 0.5
        %v1538 = vadd.f32 %v1474, 0.5
        %v1539 = vadd.f32 %v1475, 0.5
        %v1540 = vadd.f32 %v1476, 0.5
        %v1541 = vadd.f32 %v1477, 0.5
        %v1542 = vadd.f32 %v1478, 0.5
        %v1543 = vadd.f32 %v1479, 0.5
        %v1544 = vadd.f32 %v1480, 0.5
        %v1545 = vadd.f32 %v1481, 0.5
        %v1546 = vadd.f32 %v1482, 0.5
        %v1547 = vadd.f32 %v1483, 0.5
        %v1548 = vadd.f32 %v1484, 0.5
        %v1549 = vadd.f32 %v1485, 0.5
        %v1550 = vadd.f32 %v1486, 0.5
        %v1551 = vadd.f32 %v1487, 0.5
        %v1552 = vadd.f32 %v1488, 0.5
        %v1553 = vadd.f32 %v1489, 0.5
        %v1554 = vadd.f32 %v1490, 0.5
        %v1555 = vadd.f32 %v1491, 0.5
        %v1556 = vadd.f32 %v1492, 0.5
        %v1557 = vadd.f32 %v1493, 0.5
        %v1558 = vadd.f32 %v1494, 0.5
        %v1559 = vadd.f32 %v1495, 0.5
        %v1560 = vadd.f32 %v1496, 0.5
        %v1561 = vadd.f32 %v1497, 0.5
        %v1562 = vadd.f32 %v1498, 0.5
        %v1563 = vadd.f32 %v1499, 0.5
        %v1564 = vadd.f32 %v1500, 0.5
        %v1565 = vadd.f32 %v1501, 0.5
        %v1566 = vadd.f32 %v1502, 0.5
        %v1567 = vadd.f32 %v1503, 0.5
        %v1568 = vadd.f32 %v1504, 0.5
        %v1569 = vadd.f32 %v1505, 0.5
        %v1570 = vadd.f32 %v1506, 0.5
        %v1571 = vadd.f32 %v1507, 0.5
        %v1572 = vadd.f32 %v1508, 0.5
        %v1573 = vadd.f32 %v1509, 0.5
        %v1574 = vadd.f32 %v1510, 0.5
        %v1575 = vadd.f32 %v1511, 0.5
        %v1576 = vadd.f32 %v1512, 0.5
        %v1577 = vadd.f32 %v1513, 0.5
        %v1578 = vadd.f32 %v1514, 0.5
        %v1579 = vadd.f32 %v1515, 0.5
        %v1580 = vadd.f32 %v1516, 0.5
        %v1581 = vadd.f32 %v1517, 0.5
        %v1582 = vadd.f32 %v1518, 0.5
        %v1583 = vadd.f32 %v1519, 0.5
        %v1584 = vadd.f32 %v1520, 0.5
        %v1585 = vadd.f32 %v1521, 0.5
        %v1586 = vadd.f32 %v1522, 0.5
        %v1587 = vadd.f32 %v1523, 0.5
        %v1588 = vadd.f32 %v1524, 0.5
        %v1589 = vadd.f32 %v1525, 0.5
        %v1590 = vadd.f32 %v1526, 0.5
        %v1591 = vmul.f32 %v1527, 1.442695
        %v1592 = vpow.pop %v1591
        %v1593 = vmul.f32 %v1528, 1.442695
        %v1594 = vpow.pop %v1593
        %v1595 = vmul.f32 %v1529, 1.442695
        %v1596 = vpow.pop %v1595
        %v1597 = vmul.f32 %v1530, 1.442695
        %v1598 = vpow.pop %v1597
        %v1599 = vmul.f32 %v1531, 1.442695
        %v1600 = vpow.pop %v1599
        %v1601 = vmul.f32 %v1532, 1.442695
        %v1602 = vpow.pop %v1601
        %v1603 = vmul.f32 %v1533, 1.442695
        %v1604 = vpow.pop %v1603
        %v1605 = vmul.f32 %v1534, 1.442695
        %v1606 = vpow.pop %v1605
        %v1607 = vmul.f32 %v1535, 1.442695
        %v1608 = vpow.pop %v1607
        %v1609 = vmul.f32 %v1536, 1.442695
        %v1610 = vpow.pop %v1609
        %v1611 = vmul.f32 %v1537, 1.442695
        %v1612 = vpow.pop %v1611
        %v1613 = vmul.f32 %v1538, 1.442695
        %v1614 = vpow.pop %v1613
        %v1615 = vmul.f32 %v1539, 1.442695
        %v1616 = vpow.pop %v1615
        %v1617 = vmul.f32 %v1540, 1.442695
        %v1618 = vpow.pop %v1617
        %v1619 = vmul.f32 %v1541, 1.442695
        %v1620 = vpow.pop %v1619
        %v1621 = vmul.f32 %v1542, 1.442695
        %v1622 = vpow.pop %v1621
        %v1623 = vmul.f32 %v1543, 1.442695
        %v1624 = vpow.pop %v1623
        %v1625 = vmul.f32 %v1544, 1.442695
        %v1626 = vpow.pop %v1625
        %v1627 = vmul.f32 %v1545, 1.442695
        %v1628 = vpow.pop %v1627
        %v1629 = vmul.f32 %v1546, 1.442695
        %v1630 = vpow.pop %v1629
        %v1631 = vmul.f32 %v1547, 1.442695
        %v1632 = vpow.pop %v1631
        %v1633 = vmul.f32 %v1548, 1.442695
        %v1634 = vpow.pop %v1633
        %v1635 = vmul.f32 %v1549, 1.442695
        %v1636 = vpow.pop %v1635
        %v1637 = vmul.f32 %v1550, 1.442695
        %v1638 = vpow.pop %v1637
        %v1639 = vmul.f32 %v1551, 1.442695
        %v1640 = vpow.pop %v1639
        %v1641 = vmul.f32 %v1552, 1.442695
        %v1642 = vpow.pop %v1641
        %v1643 = vmul.f32 %v1553, 1.442695
        %v1644 = vpow.pop %v1643
        %v1645 = vmul.f32 %v1554, 1.442695
        %v1646 = vpow.pop %v1645
        %v1647 = vmul.f32 %v1555, 1.442695
        %v1648 = vpow.pop %v1647
        %v1649 = vmul.f32 %v1556, 1.442695
        %v1650 = vpow.pop %v1649
        %v1651 = vmul.f32 %v1557, 1.442695
        %v1652 = vpow.pop %v1651
        %v1653 = vmul.f32 %v1558, 1.442695
        %v1654 = vpow.pop %v1653
        %v1655 = vmul.f32 %v1559, 1.442695
        %v1656 = vpow.pop %v1655
        %v1657 = vmul.f32 %v1560, 1.442695
        %v1658 = vpow.pop %v1657
        %v1659 = vmul.f32 %v1561, 1.442695
        %v1660 = vpow.pop %v1659
        %v1661 = vmul.f32 %v1562, 1.442695
        %v1662 = vpow.pop %v1661
        %v1663 = vmul.f32 %v1563, 1.442695
        %v1664 = vpow.pop %v1663
        %v1665 = vmul.f32 %v1564, 1.442695
        %v1666 = vpow.pop %v1665
        %v1667 = vmul.f32 %v1565, 1.442695
        %v1668 = vpow.pop %v1667
        %v1669 = vmul.f32 %v1566, 1.442695
        %v1670 = vpow.pop %v1669
        %v1671 = vmul.f32 %v1567, 1.442695
        %v1672 = vpow.pop %v1671
        %v1673 = vmul.f32 %v1568, 1.442695
        %v1674 = vpow.pop %v1673
        %v1675 = vmul.f32 %v1569, 1.442695
        %v1676 = vpow.pop %v1675
        %v1677 = vmul.f32 %v1570, 1.442695
        %v1678 = vpow.pop %v1677
        %v1679 = vmul.f32 %v1571, 1.442695
        %v1680 = vpow.pop %v1679
        %v1681 = vmul.f32 %v1572, 1.442695
        %v1682 = vpow.pop %v1681
        %v1683 = vmul.f32 %v1573, 1.442695
        %v1684 = vpow.pop %v1683
        %v1685 = vmul.f32 %v1574, 1.442695
        %v1686 = vpow.pop %v1685
        %v1687 = vmul.f32 %v1575, 1.442695
        %v1688 = vpow.pop %v1687
        %v1689 = vmul.f32 %v1576, 1.442695
        %v1690 = vpow.pop %v1689
        %v1691 = vmul.f32 %v1577, 1.442695
        %v1692 = vpow.pop %v1691
        %v1693 = vmul.f32 %v1578, 1.442695
        %v1694 = vpow.pop %v1693
        %v1695 = vmul.f32 %v1579, 1.442695
        %v1696 = vpow.pop %v1695
        %v1697 = vmul.f32 %v1580, 1.442695
        %v1698 = vpow.pop %v1697
        %v1699 = vmul.f32 %v1581, 1.442695
        %v1700 = vpow.pop %v1699
        %v1701 = vmul.f32 %v1582, 1.442695
        %v1702 = vpow.pop %v1701
        %v1703 = vmul.f32 %v1583, 1.442695
        %v1704 = vpow.pop %v1703
        %v1705 = vmul.f32 %v1584, 1.442695
        %v1706 = vpow.pop %v1705
        %v1707 = vmul.f32 %v1585, 1.442695
        %v1708 = vpow.pop %v1707
        %v1709 = vmul.f32 %v1586, 1.442695
        %v1710 = vpow.pop %v1709
        %v1711 = vmul.f32 %v1587, 1.442695
        %v1712 = vpow.pop %v1711
        %v1713 = vmul.f32 %v1588, 1.442695
        %v1714 = vpow.pop %v1713
        %v1715 = vmul.f32 %v1589, 1.442695
        %v1716 = vpow.pop %v1715
        %v1717 = vmul.f32 %v1590, 1.442695
        %v1718 = vpow.pop %v1717
        %v1719 = vadd.f32 %v1592, %v1594
        %1720 = vadd.xlane.f32.xlu0 %v1719
        %v1721 = vpop.xlane.xlu0 %1720
        %v1722 = vadd.f32 %v1596, %v1598
        %1723 = vadd.xlane.f32.xlu0 %v1722
        %v1724 = vpop.xlane.xlu0 %1723
        %v1725 = vadd.f32 %v1600, %v1602
        %1726 = vadd.xlane.f32.xlu0 %v1725
        %v1727 = vpop.xlane.xlu0 %1726
        %v1728 = vadd.f32 %v1604, %v1606
        %1729 = vadd.xlane.f32.xlu0 %v1728
        %v1730 = vpop.xlane.xlu0 %1729
        %v1731 = vadd.f32 %v1608, %v1610
        %1732 = vadd.xlane.f32.xlu0 %v1731
        %v1733 = vpop.xlane.xlu0 %1732
        %v1734 = vadd.f32 %v1612, %v1614
        %1735 = vadd.xlane.f32.xlu0 %v1734
        %v1736 = vpop.xlane.xlu0 %1735
        %v1737 = vadd.f32 %v1616, %v1618
        %1738 = vadd.xlane.f32.xlu0 %v1737
        %v1739 = vpop.xlane.xlu0 %1738
        %v1740 = vadd.f32 %v1620, %v1622
        %1741 = vadd.xlane.f32.xlu0 %v1740
        %v1742 = vpop.xlane.xlu0 %1741
        %v1743 = vadd.f32 %v1624, %v1626
        %1744 = vadd.xlane.f32.xlu0 %v1743
        %v1745 = vpop.xlane.xlu0 %1744
        %v1746 = vadd.f32 %v1628, %v1630
        %1747 = vadd.xlane.f32.xlu0 %v1746
        %v1748 = vpop.xlane.xlu0 %1747
        %v1749 = vadd.f32 %v1632, %v1634
        %1750 = vadd.xlane.f32.xlu0 %v1749
        %v1751 = vpop.xlane.xlu0 %1750
        %v1752 = vadd.f32 %v1636, %v1638
        %1753 = vadd.xlane.f32.xlu0 %v1752
        %v1754 = vpop.xlane.xlu0 %1753
        %v1755 = vadd.f32 %v1640, %v1642
        %1756 = vadd.xlane.f32.xlu0 %v1755
        %v1757 = vpop.xlane.xlu0 %1756
        %v1758 = vadd.f32 %v1644, %v1646
        %1759 = vadd.xlane.f32.xlu0 %v1758
        %v1760 = vpop.xlane.xlu0 %1759
        %v1761 = vadd.f32 %v1648, %v1650
        %1762 = vadd.xlane.f32.xlu0 %v1761
        %v1763 = vpop.xlane.xlu0 %1762
        %v1764 = vadd.f32 %v1652, %v1654
        %1765 = vadd.xlane.f32.xlu0 %v1764
        %v1766 = vpop.xlane.xlu0 %1765
        %v1767 = vadd.f32 %v1656, %v1658
        %1768 = vadd.xlane.f32.xlu0 %v1767
        %v1769 = vpop.xlane.xlu0 %1768
        %v1770 = vadd.f32 %v1660, %v1662
        %1771 = vadd.xlane.f32.xlu0 %v1770
        %v1772 = vpop.xlane.xlu0 %1771
        %v1773 = vadd.f32 %v1664, %v1666
        %1774 = vadd.xlane.f32.xlu0 %v1773
        %v1775 = vpop.xlane.xlu0 %1774
        %v1776 = vadd.f32 %v1668, %v1670
        %1777 = vadd.xlane.f32.xlu0 %v1776
        %v1778 = vpop.xlane.xlu0 %1777
        %v1779 = vadd.f32 %v1672, %v1674
        %1780 = vadd.xlane.f32.xlu0 %v1779
        %v1781 = vpop.xlane.xlu0 %1780
        %v1782 = vadd.f32 %v1676, %v1678
        %1783 = vadd.xlane.f32.xlu0 %v1782
        %v1784 = vpop.xlane.xlu0 %1783
        %v1785 = vadd.f32 %v1680, %v1682
        %1786 = vadd.xlane.f32.xlu0 %v1785
        %v1787 = vpop.xlane.xlu0 %1786
        %v1788 = vadd.f32 %v1684, %v1686
        %1789 = vadd.xlane.f32.xlu0 %v1788
        %v1790 = vpop.xlane.xlu0 %1789
        %v1791 = vadd.f32 %v1688, %v1690
        %1792 = vadd.xlane.f32.xlu0 %v1791
        %v1793 = vpop.xlane.xlu0 %1792
        %v1794 = vadd.f32 %v1692, %v1694
        %1795 = vadd.xlane.f32.xlu0 %v1794
        %v1796 = vpop.xlane.xlu0 %1795
        %v1797 = vadd.f32 %v1696, %v1698
        %1798 = vadd.xlane.f32.xlu0 %v1797
        %v1799 = vpop.xlane.xlu0 %1798
        %v1800 = vadd.f32 %v1700, %v1702
        %1801 = vadd.xlane.f32.xlu0 %v1800
        %v1802 = vpop.xlane.xlu0 %1801
        %v1803 = vadd.f32 %v1704, %v1706
        %1804 = vadd.xlane.f32.xlu0 %v1803
        %v1805 = vpop.xlane.xlu0 %1804
        %v1806 = vadd.f32 %v1708, %v1710
        %1807 = vadd.xlane.f32.xlu0 %v1806
        %v1808 = vpop.xlane.xlu0 %1807
        %v1809 = vadd.f32 %v1712, %v1714
        %1810 = vadd.xlane.f32.xlu0 %v1809
        %v1811 = vpop.xlane.xlu0 %1810
        %v1812 = vadd.f32 %v1716, %v1718
        %1813 = vadd.xlane.f32.xlu0 %v1812
        %v1814 = vpop.xlane.xlu0 %1813
        %v1815 = vrcp.pop %v1721
        %v1816 = vmul.f32 %v1721, %v1815
        %v1817 = vsub.f32 1.0, %v1816
        %v1818 = vmul.f32 %v1815, %v1817
        %v1819 = vadd.f32 %v1815, %v1818
        %vm1820 = vweird.f32 %v1721
        %vm1821 = vweird.f32 %v1815
        %vm1822 = vmor %vm1820, %vm1821
        %v1823 = vsel %vm1822, %v1815, %v1819
        %v1824 = vand.u32 2147483647, %v1721
        %vm1825 = vcmp.eq.f32.partialorder %v1824, 8.507059e+37
        %v1826 = vand.u32 %v1721, 2147483648
        %v1827 = vor.u32 1.1754944e-38, %v1826
        %v1828 = vsel %vm1825, %v1827, %v1823
        %v1829 = vrcp.pop %v1724
        %v1830 = vmul.f32 %v1724, %v1829
        %v1831 = vsub.f32 1.0, %v1830
        %v1832 = vmul.f32 %v1829, %v1831
        %v1833 = vadd.f32 %v1829, %v1832
        %vm1834 = vweird.f32 %v1724
        %vm1835 = vweird.f32 %v1829
        %vm1836 = vmor %vm1834, %vm1835
        %v1837 = vsel %vm1836, %v1829, %v1833
        %v1838 = vand.u32 2147483647, %v1724
        %vm1839 = vcmp.eq.f32.partialorder %v1838, 8.507059e+37
        %v1840 = vand.u32 %v1724, 2147483648
        %v1841 = vor.u32 1.1754944e-38, %v1840
        %v1842 = vsel %vm1839, %v1841, %v1837
        %v1843 = vrcp.pop %v1727
        %v1844 = vmul.f32 %v1727, %v1843
        %v1845 = vsub.f32 1.0, %v1844
        %v1846 = vmul.f32 %v1843, %v1845
        %v1847 = vadd.f32 %v1843, %v1846
        %vm1848 = vweird.f32 %v1727
        %vm1849 = vweird.f32 %v1843
        %vm1850 = vmor %vm1848, %vm1849
        %v1851 = vsel %vm1850, %v1843, %v1847
        %v1852 = vand.u32 2147483647, %v1727
        %vm1853 = vcmp.eq.f32.partialorder %v1852, 8.507059e+37
        %v1854 = vand.u32 %v1727, 2147483648
        %v1855 = vor.u32 1.1754944e-38, %v1854
        %v1856 = vsel %vm1853, %v1855, %v1851
        %v1857 = vrcp.pop %v1730
        %v1858 = vmul.f32 %v1730, %v1857
        %v1859 = vsub.f32 1.0, %v1858
        %v1860 = vmul.f32 %v1857, %v1859
        %v1861 = vadd.f32 %v1857, %v1860
        %vm1862 = vweird.f32 %v1730
        %vm1863 = vweird.f32 %v1857
        %vm1864 = vmor %vm1862, %vm1863
        %v1865 = vsel %vm1864, %v1857, %v1861
        %v1866 = vand.u32 2147483647, %v1730
        %vm1867 = vcmp.eq.f32.partialorder %v1866, 8.507059e+37
        %v1868 = vand.u32 %v1730, 2147483648
        %v1869 = vor.u32 1.1754944e-38, %v1868
        %v1870 = vsel %vm1867, %v1869, %v1865
        %v1871 = vrcp.pop %v1733
        %v1872 = vmul.f32 %v1733, %v1871
        %v1873 = vsub.f32 1.0, %v1872
        %v1874 = vmul.f32 %v1871, %v1873
        %v1875 = vadd.f32 %v1871, %v1874
        %vm1876 = vweird.f32 %v1733
        %vm1877 = vweird.f32 %v1871
        %vm1878 = vmor %vm1876, %vm1877
        %v1879 = vsel %vm1878, %v1871, %v1875
        %v1880 = vand.u32 2147483647, %v1733
        %vm1881 = vcmp.eq.f32.partialorder %v1880, 8.507059e+37
        %v1882 = vand.u32 %v1733, 2147483648
        %v1883 = vor.u32 1.1754944e-38, %v1882
        %v1884 = vsel %vm1881, %v1883, %v1879
        %v1885 = vrcp.pop %v1736
        %v1886 = vmul.f32 %v1736, %v1885
        %v1887 = vsub.f32 1.0, %v1886
        %v1888 = vmul.f32 %v1885, %v1887
        %v1889 = vadd.f32 %v1885, %v1888
        %vm1890 = vweird.f32 %v1736
        %vm1891 = vweird.f32 %v1885
        %vm1892 = vmor %vm1890, %vm1891
        %v1893 = vsel %vm1892, %v1885, %v1889
        %v1894 = vand.u32 2147483647, %v1736
        %vm1895 = vcmp.eq.f32.partialorder %v1894, 8.507059e+37
        %v1896 = vand.u32 %v1736, 2147483648
        %v1897 = vor.u32 1.1754944e-38, %v1896
        %v1898 = vsel %vm1895, %v1897, %v1893
        %v1899 = vrcp.pop %v1739
        %v1900 = vmul.f32 %v1739, %v1899
        %v1901 = vsub.f32 1.0, %v1900
        %v1902 = vmul.f32 %v1899, %v1901
        %v1903 = vadd.f32 %v1899, %v1902
        %vm1904 = vweird.f32 %v1739
        %vm1905 = vweird.f32 %v1899
        %vm1906 = vmor %vm1904, %vm1905
        %v1907 = vsel %vm1906, %v1899, %v1903
        %v1908 = vand.u32 2147483647, %v1739
        %vm1909 = vcmp.eq.f32.partialorder %v1908, 8.507059e+37
        %v1910 = vand.u32 %v1739, 2147483648
        %v1911 = vor.u32 1.1754944e-38, %v1910
        %v1912 = vsel %vm1909, %v1911, %v1907
        %v1913 = vrcp.pop %v1742
        %v1914 = vmul.f32 %v1742, %v1913
        %v1915 = vsub.f32 1.0, %v1914
        %v1916 = vmul.f32 %v1913, %v1915
        %v1917 = vadd.f32 %v1913, %v1916
        %vm1918 = vweird.f32 %v1742
        %vm1919 = vweird.f32 %v1913
        %vm1920 = vmor %vm1918, %vm1919
        %v1921 = vsel %vm1920, %v1913, %v1917
        %v1922 = vand.u32 2147483647, %v1742
        %vm1923 = vcmp.eq.f32.partialorder %v1922, 8.507059e+37
        %v1924 = vand.u32 %v1742, 2147483648
        %v1925 = vor.u32 1.1754944e-38, %v1924
        %v1926 = vsel %vm1923, %v1925, %v1921
        %v1927 = vrcp.pop %v1745
        %v1928 = vmul.f32 %v1745, %v1927
        %v1929 = vsub.f32 1.0, %v1928
        %v1930 = vmul.f32 %v1927, %v1929
        %v1931 = vadd.f32 %v1927, %v1930
        %vm1932 = vweird.f32 %v1745
        %vm1933 = vweird.f32 %v1927
        %vm1934 = vmor %vm1932, %vm1933
        %v1935 = vsel %vm1934, %v1927, %v1931
        %v1936 = vand.u32 2147483647, %v1745
        %vm1937 = vcmp.eq.f32.partialorder %v1936, 8.507059e+37
        %v1938 = vand.u32 %v1745, 2147483648
        %v1939 = vor.u32 1.1754944e-38, %v1938
        %v1940 = vsel %vm1937, %v1939, %v1935
        %v1941 = vrcp.pop %v1748
        %v1942 = vmul.f32 %v1748, %v1941
        %v1943 = vsub.f32 1.0, %v1942
        %v1944 = vmul.f32 %v1941, %v1943
        %v1945 = vadd.f32 %v1941, %v1944
        %vm1946 = vweird.f32 %v1748
        %vm1947 = vweird.f32 %v1941
        %vm1948 = vmor %vm1946, %vm1947
        %v1949 = vsel %vm1948, %v1941, %v1945
        %v1950 = vand.u32 2147483647, %v1748
        %vm1951 = vcmp.eq.f32.partialorder %v1950, 8.507059e+37
        %v1952 = vand.u32 %v1748, 2147483648
        %v1953 = vor.u32 1.1754944e-38, %v1952
        %v1954 = vsel %vm1951, %v1953, %v1949
        %v1955 = vrcp.pop %v1751
        %v1956 = vmul.f32 %v1751, %v1955
        %v1957 = vsub.f32 1.0, %v1956
        %v1958 = vmul.f32 %v1955, %v1957
        %v1959 = vadd.f32 %v1955, %v1958
        %vm1960 = vweird.f32 %v1751
        %vm1961 = vweird.f32 %v1955
        %vm1962 = vmor %vm1960, %vm1961
        %v1963 = vsel %vm1962, %v1955, %v1959
        %v1964 = vand.u32 2147483647, %v1751
        %vm1965 = vcmp.eq.f32.partialorder %v1964, 8.507059e+37
        %v1966 = vand.u32 %v1751, 2147483648
        %v1967 = vor.u32 1.1754944e-38, %v1966
        %v1968 = vsel %vm1965, %v1967, %v1963
        %v1969 = vrcp.pop %v1754
        %v1970 = vmul.f32 %v1754, %v1969
        %v1971 = vsub.f32 1.0, %v1970
        %v1972 = vmul.f32 %v1969, %v1971
        %v1973 = vadd.f32 %v1969, %v1972
        %vm1974 = vweird.f32 %v1754
        %vm1975 = vweird.f32 %v1969
        %vm1976 = vmor %vm1974, %vm1975
        %v1977 = vsel %vm1976, %v1969, %v1973
        %v1978 = vand.u32 2147483647, %v1754
        %vm1979 = vcmp.eq.f32.partialorder %v1978, 8.507059e+37
        %v1980 = vand.u32 %v1754, 2147483648
        %v1981 = vor.u32 1.1754944e-38, %v1980
        %v1982 = vsel %vm1979, %v1981, %v1977
        %v1983 = vrcp.pop %v1757
        %v1984 = vmul.f32 %v1757, %v1983
        %v1985 = vsub.f32 1.0, %v1984
        %v1986 = vmul.f32 %v1983, %v1985
        %v1987 = vadd.f32 %v1983, %v1986
        %vm1988 = vweird.f32 %v1757
        %vm1989 = vweird.f32 %v1983
        %vm1990 = vmor %vm1988, %vm1989
        %v1991 = vsel %vm1990, %v1983, %v1987
        %v1992 = vand.u32 2147483647, %v1757
        %vm1993 = vcmp.eq.f32.partialorder %v1992, 8.507059e+37
        %v1994 = vand.u32 %v1757, 2147483648
        %v1995 = vor.u32 1.1754944e-38, %v1994
        %v1996 = vsel %vm1993, %v1995, %v1991
        %v1997 = vrcp.pop %v1760
        %v1998 = vmul.f32 %v1760, %v1997
        %v1999 = vsub.f32 1.0, %v1998
        %v2000 = vmul.f32 %v1997, %v1999
        %v2001 = vadd.f32 %v1997, %v2000
        %vm2002 = vweird.f32 %v1760
        %vm2003 = vweird.f32 %v1997
        %vm2004 = vmor %vm2002, %vm2003
        %v2005 = vsel %vm2004, %v1997, %v2001
        %v2006 = vand.u32 2147483647, %v1760
        %vm2007 = vcmp.eq.f32.partialorder %v2006, 8.507059e+37
        %v2008 = vand.u32 %v1760, 2147483648
        %v2009 = vor.u32 1.1754944e-38, %v2008
        %v2010 = vsel %vm2007, %v2009, %v2005
        %v2011 = vrcp.pop %v1763
        %v2012 = vmul.f32 %v1763, %v2011
        %v2013 = vsub.f32 1.0, %v2012
        %v2014 = vmul.f32 %v2011, %v2013
        %v2015 = vadd.f32 %v2011, %v2014
        %vm2016 = vweird.f32 %v1763
        %vm2017 = vweird.f32 %v2011
        %vm2018 = vmor %vm2016, %vm2017
        %v2019 = vsel %vm2018, %v2011, %v2015
        %v2020 = vand.u32 2147483647, %v1763
        %vm2021 = vcmp.eq.f32.partialorder %v2020, 8.507059e+37
        %v2022 = vand.u32 %v1763, 2147483648
        %v2023 = vor.u32 1.1754944e-38, %v2022
        %v2024 = vsel %vm2021, %v2023, %v2019
        %v2025 = vrcp.pop %v1766
        %v2026 = vmul.f32 %v1766, %v2025
        %v2027 = vsub.f32 1.0, %v2026
        %v2028 = vmul.f32 %v2025, %v2027
        %v2029 = vadd.f32 %v2025, %v2028
        %vm2030 = vweird.f32 %v1766
        %vm2031 = vweird.f32 %v2025
        %vm2032 = vmor %vm2030, %vm2031
        %v2033 = vsel %vm2032, %v2025, %v2029
        %v2034 = vand.u32 2147483647, %v1766
        %vm2035 = vcmp.eq.f32.partialorder %v2034, 8.507059e+37
        %v2036 = vand.u32 %v1766, 2147483648
        %v2037 = vor.u32 1.1754944e-38, %v2036
        %v2038 = vsel %vm2035, %v2037, %v2033
        %v2039 = vrcp.pop %v1769
        %v2040 = vmul.f32 %v1769, %v2039
        %v2041 = vsub.f32 1.0, %v2040
        %v2042 = vmul.f32 %v2039, %v2041
        %v2043 = vadd.f32 %v2039, %v2042
        %vm2044 = vweird.f32 %v1769
        %vm2045 = vweird.f32 %v2039
        %vm2046 = vmor %vm2044, %vm2045
        %v2047 = vsel %vm2046, %v2039, %v2043
        %v2048 = vand.u32 2147483647, %v1769
        %vm2049 = vcmp.eq.f32.partialorder %v2048, 8.507059e+37
        %v2050 = vand.u32 %v1769, 2147483648
        %v2051 = vor.u32 1.1754944e-38, %v2050
        %v2052 = vsel %vm2049, %v2051, %v2047
        %v2053 = vrcp.pop %v1772
        %v2054 = vmul.f32 %v1772, %v2053
        %v2055 = vsub.f32 1.0, %v2054
        %v2056 = vmul.f32 %v2053, %v2055
        %v2057 = vadd.f32 %v2053, %v2056
        %vm2058 = vweird.f32 %v1772
        %vm2059 = vweird.f32 %v2053
        %vm2060 = vmor %vm2058, %vm2059
        %v2061 = vsel %vm2060, %v2053, %v2057
        %v2062 = vand.u32 2147483647, %v1772
        %vm2063 = vcmp.eq.f32.partialorder %v2062, 8.507059e+37
        %v2064 = vand.u32 %v1772, 2147483648
        %v2065 = vor.u32 1.1754944e-38, %v2064
        %v2066 = vsel %vm2063, %v2065, %v2061
        %v2067 = vrcp.pop %v1775
        %v2068 = vmul.f32 %v1775, %v2067
        %v2069 = vsub.f32 1.0, %v2068
        %v2070 = vmul.f32 %v2067, %v2069
        %v2071 = vadd.f32 %v2067, %v2070
        %vm2072 = vweird.f32 %v1775
        %vm2073 = vweird.f32 %v2067
        %vm2074 = vmor %vm2072, %vm2073
        %v2075 = vsel %vm2074, %v2067, %v2071
        %v2076 = vand.u32 2147483647, %v1775
        %vm2077 = vcmp.eq.f32.partialorder %v2076, 8.507059e+37
        %v2078 = vand.u32 %v1775, 2147483648
        %v2079 = vor.u32 1.1754944e-38, %v2078
        %v2080 = vsel %vm2077, %v2079, %v2075
        %v2081 = vrcp.pop %v1778
        %v2082 = vmul.f32 %v1778, %v2081
        %v2083 = vsub.f32 1.0, %v2082
        %v2084 = vmul.f32 %v2081, %v2083
        %v2085 = vadd.f32 %v2081, %v2084
        %vm2086 = vweird.f32 %v1778
        %vm2087 = vweird.f32 %v2081
        %vm2088 = vmor %vm2086, %vm2087
        %v2089 = vsel %vm2088, %v2081, %v2085
        %v2090 = vand.u32 2147483647, %v1778
        %vm2091 = vcmp.eq.f32.partialorder %v2090, 8.507059e+37
        %v2092 = vand.u32 %v1778, 2147483648
        %v2093 = vor.u32 1.1754944e-38, %v2092
        %v2094 = vsel %vm2091, %v2093, %v2089
        %v2095 = vrcp.pop %v1781
        %v2096 = vmul.f32 %v1781, %v2095
        %v2097 = vsub.f32 1.0, %v2096
        %v2098 = vmul.f32 %v2095, %v2097
        %v2099 = vadd.f32 %v2095, %v2098
        %vm2100 = vweird.f32 %v1781
        %vm2101 = vweird.f32 %v2095
        %vm2102 = vmor %vm2100, %vm2101
        %v2103 = vsel %vm2102, %v2095, %v2099
        %v2104 = vand.u32 2147483647, %v1781
        %vm2105 = vcmp.eq.f32.partialorder %v2104, 8.507059e+37
        %v2106 = vand.u32 %v1781, 2147483648
        %v2107 = vor.u32 1.1754944e-38, %v2106
        %v2108 = vsel %vm2105, %v2107, %v2103
        %v2109 = vrcp.pop %v1784
        %v2110 = vmul.f32 %v1784, %v2109
        %v2111 = vsub.f32 1.0, %v2110
        %v2112 = vmul.f32 %v2109, %v2111
        %v2113 = vadd.f32 %v2109, %v2112
        %vm2114 = vweird.f32 %v1784
        %vm2115 = vweird.f32 %v2109
        %vm2116 = vmor %vm2114, %vm2115
        %v2117 = vsel %vm2116, %v2109, %v2113
        %v2118 = vand.u32 2147483647, %v1784
        %vm2119 = vcmp.eq.f32.partialorder %v2118, 8.507059e+37
        %v2120 = vand.u32 %v1784, 2147483648
        %v2121 = vor.u32 1.1754944e-38, %v2120
        %v2122 = vsel %vm2119, %v2121, %v2117
        %v2123 = vrcp.pop %v1787
        %v2124 = vmul.f32 %v1787, %v2123
        %v2125 = vsub.f32 1.0, %v2124
        %v2126 = vmul.f32 %v2123, %v2125
        %v2127 = vadd.f32 %v2123, %v2126
        %vm2128 = vweird.f32 %v1787
        %vm2129 = vweird.f32 %v2123
        %vm2130 = vmor %vm2128, %vm2129
        %v2131 = vsel %vm2130, %v2123, %v2127
        %v2132 = vand.u32 2147483647, %v1787
        %vm2133 = vcmp.eq.f32.partialorder %v2132, 8.507059e+37
        %v2134 = vand.u32 %v1787, 2147483648
        %v2135 = vor.u32 1.1754944e-38, %v2134
        %v2136 = vsel %vm2133, %v2135, %v2131
        %v2137 = vrcp.pop %v1790
        %v2138 = vmul.f32 %v1790, %v2137
        %v2139 = vsub.f32 1.0, %v2138
        %v2140 = vmul.f32 %v2137, %v2139
        %v2141 = vadd.f32 %v2137, %v2140
        %vm2142 = vweird.f32 %v1790
        %vm2143 = vweird.f32 %v2137
        %vm2144 = vmor %vm2142, %vm2143
        %v2145 = vsel %vm2144, %v2137, %v2141
        %v2146 = vand.u32 2147483647, %v1790
        %vm2147 = vcmp.eq.f32.partialorder %v2146, 8.507059e+37
        %v2148 = vand.u32 %v1790, 2147483648
        %v2149 = vor.u32 1.1754944e-38, %v2148
        %v2150 = vsel %vm2147, %v2149, %v2145
        %v2151 = vrcp.pop %v1793
        %v2152 = vmul.f32 %v1793, %v2151
        %v2153 = vsub.f32 1.0, %v2152
        %v2154 = vmul.f32 %v2151, %v2153
        %v2155 = vadd.f32 %v2151, %v2154
        %vm2156 = vweird.f32 %v1793
        %vm2157 = vweird.f32 %v2151
        %vm2158 = vmor %vm2156, %vm2157
        %v2159 = vsel %vm2158, %v2151, %v2155
        %v2160 = vand.u32 2147483647, %v1793
        %vm2161 = vcmp.eq.f32.partialorder %v2160, 8.507059e+37
        %v2162 = vand.u32 %v1793, 2147483648
        %v2163 = vor.u32 1.1754944e-38, %v2162
        %v2164 = vsel %vm2161, %v2163, %v2159
        %v2165 = vrcp.pop %v1796
        %v2166 = vmul.f32 %v1796, %v2165
        %v2167 = vsub.f32 1.0, %v2166
        %v2168 = vmul.f32 %v2165, %v2167
        %v2169 = vadd.f32 %v2165, %v2168
        %vm2170 = vweird.f32 %v1796
        %vm2171 = vweird.f32 %v2165
        %vm2172 = vmor %vm2170, %vm2171
        %v2173 = vsel %vm2172, %v2165, %v2169
        %v2174 = vand.u32 2147483647, %v1796
        %vm2175 = vcmp.eq.f32.partialorder %v2174, 8.507059e+37
        %v2176 = vand.u32 %v1796, 2147483648
        %v2177 = vor.u32 1.1754944e-38, %v2176
        %v2178 = vsel %vm2175, %v2177, %v2173
        %v2179 = vrcp.pop %v1799
        %v2180 = vmul.f32 %v1799, %v2179
        %v2181 = vsub.f32 1.0, %v2180
        %v2182 = vmul.f32 %v2179, %v2181
        %v2183 = vadd.f32 %v2179, %v2182
        %vm2184 = vweird.f32 %v1799
        %vm2185 = vweird.f32 %v2179
        %vm2186 = vmor %vm2184, %vm2185
        %v2187 = vsel %vm2186, %v2179, %v2183
        %v2188 = vand.u32 2147483647, %v1799
        %vm2189 = vcmp.eq.f32.partialorder %v2188, 8.507059e+37
        %v2190 = vand.u32 %v1799, 2147483648
        %v2191 = vor.u32 1.1754944e-38, %v2190
        %v2192 = vsel %vm2189, %v2191, %v2187
        %v2193 = vrcp.pop %v1802
        %v2194 = vmul.f32 %v1802, %v2193
        %v2195 = vsub.f32 1.0, %v2194
        %v2196 = vmul.f32 %v2193, %v2195
        %v2197 = vadd.f32 %v2193, %v2196
        %vm2198 = vweird.f32 %v1802
        %vm2199 = vweird.f32 %v2193
        %vm2200 = vmor %vm2198, %vm2199
        %v2201 = vsel %vm2200, %v2193, %v2197
        %v2202 = vand.u32 2147483647, %v1802
        %vm2203 = vcmp.eq.f32.partialorder %v2202, 8.507059e+37
        %v2204 = vand.u32 %v1802, 2147483648
        %v2205 = vor.u32 1.1754944e-38, %v2204
        %v2206 = vsel %vm2203, %v2205, %v2201
        %v2207 = vrcp.pop %v1805
        %v2208 = vmul.f32 %v1805, %v2207
        %v2209 = vsub.f32 1.0, %v2208
        %v2210 = vmul.f32 %v2207, %v2209
        %v2211 = vadd.f32 %v2207, %v2210
        %vm2212 = vweird.f32 %v1805
        %vm2213 = vweird.f32 %v2207
        %vm2214 = vmor %vm2212, %vm2213
        %v2215 = vsel %vm2214, %v2207, %v2211
        %v2216 = vand.u32 2147483647, %v1805
        %vm2217 = vcmp.eq.f32.partialorder %v2216, 8.507059e+37
        %v2218 = vand.u32 %v1805, 2147483648
        %v2219 = vor.u32 1.1754944e-38, %v2218
        %v2220 = vsel %vm2217, %v2219, %v2215
        %v2221 = vrcp.pop %v1808
        %v2222 = vmul.f32 %v1808, %v2221
        %v2223 = vsub.f32 1.0, %v2222
        %v2224 = vmul.f32 %v2221, %v2223
        %v2225 = vadd.f32 %v2221, %v2224
        %vm2226 = vweird.f32 %v1808
        %vm2227 = vweird.f32 %v2221
        %vm2228 = vmor %vm2226, %vm2227
        %v2229 = vsel %vm2228, %v2221, %v2225
        %v2230 = vand.u32 2147483647, %v1808
        %vm2231 = vcmp.eq.f32.partialorder %v2230, 8.507059e+37
        %v2232 = vand.u32 %v1808, 2147483648
        %v2233 = vor.u32 1.1754944e-38, %v2232
        %v2234 = vsel %vm2231, %v2233, %v2229
        %v2235 = vrcp.pop %v1811
        %v2236 = vmul.f32 %v1811, %v2235
        %v2237 = vsub.f32 1.0, %v2236
        %v2238 = vmul.f32 %v2235, %v2237
        %v2239 = vadd.f32 %v2235, %v2238
        %vm2240 = vweird.f32 %v1811
        %vm2241 = vweird.f32 %v2235
        %vm2242 = vmor %vm2240, %vm2241
        %v2243 = vsel %vm2242, %v2235, %v2239
        %v2244 = vand.u32 2147483647, %v1811
        %vm2245 = vcmp.eq.f32.partialorder %v2244, 8.507059e+37
        %v2246 = vand.u32 %v1811, 2147483648
        %v2247 = vor.u32 1.1754944e-38, %v2246
        %v2248 = vsel %vm2245, %v2247, %v2243
        %v2249 = vrcp.pop %v1814
        %v2250 = vmul.f32 %v1814, %v2249
        %v2251 = vsub.f32 1.0, %v2250
        %v2252 = vmul.f32 %v2249, %v2251
        %v2253 = vadd.f32 %v2249, %v2252
        %vm2254 = vweird.f32 %v1814
        %vm2255 = vweird.f32 %v2249
        %vm2256 = vmor %vm2254, %vm2255
        %v2257 = vsel %vm2256, %v2249, %v2253
        %v2258 = vand.u32 2147483647, %v1814
        %vm2259 = vcmp.eq.f32.partialorder %v2258, 8.507059e+37
        %v2260 = vand.u32 %v1814, 2147483648
        %v2261 = vor.u32 1.1754944e-38, %v2260
        %v2262 = vsel %vm2259, %v2261, %v2257
        %v2263 = vmul.f32 %v1592, %v1828
        %v2264 = vmul.f32 %v1594, %v1828
        %v2265 = vmul.f32 %v1596, %v1842
        %v2266 = vmul.f32 %v1598, %v1842
        %v2267 = vmul.f32 %v1600, %v1856
        %v2268 = vmul.f32 %v1602, %v1856
        %v2269 = vmul.f32 %v1604, %v1870
        %v2270 = vmul.f32 %v1606, %v1870
        %v2271 = vmul.f32 %v1608, %v1884
        %v2272 = vmul.f32 %v1610, %v1884
        %v2273 = vmul.f32 %v1612, %v1898
        %v2274 = vmul.f32 %v1614, %v1898
        %v2275 = vmul.f32 %v1616, %v1912
        %v2276 = vmul.f32 %v1618, %v1912
        %v2277 = vmul.f32 %v1620, %v1926
        %v2278 = vmul.f32 %v1622, %v1926
        %v2279 = vmul.f32 %v1624, %v1940
        %v2280 = vmul.f32 %v1626, %v1940
        %v2281 = vmul.f32 %v1628, %v1954
        %v2282 = vmul.f32 %v1630, %v1954
        %v2283 = vmul.f32 %v1632, %v1968
        %v2284 = vmul.f32 %v1634, %v1968
        %v2285 = vmul.f32 %v1636, %v1982
        %v2286 = vmul.f32 %v1638, %v1982
        %v2287 = vmul.f32 %v1640, %v1996
        %v2288 = vmul.f32 %v1642, %v1996
        %v2289 = vmul.f32 %v1644, %v2010
        %v2290 = vmul.f32 %v1646, %v2010
        %v2291 = vmul.f32 %v1648, %v2024
        %v2292 = vmul.f32 %v1650, %v2024
        %v2293 = vmul.f32 %v1652, %v2038
        %v2294 = vmul.f32 %v1654, %v2038
        %v2295 = vmul.f32 %v1656, %v2052
        %v2296 = vmul.f32 %v1658, %v2052
        %v2297 = vmul.f32 %v1660, %v2066
        %v2298 = vmul.f32 %v1662, %v2066
        %v2299 = vmul.f32 %v1664, %v2080
        %v2300 = vmul.f32 %v1666, %v2080
        %v2301 = vmul.f32 %v1668, %v2094
        %v2302 = vmul.f32 %v1670, %v2094
        %v2303 = vmul.f32 %v1672, %v2108
        %v2304 = vmul.f32 %v1674, %v2108
        %v2305 = vmul.f32 %v1676, %v2122
        %v2306 = vmul.f32 %v1678, %v2122
        %v2307 = vmul.f32 %v1680, %v2136
        %v2308 = vmul.f32 %v1682, %v2136
        %v2309 = vmul.f32 %v1684, %v2150
        %v2310 = vmul.f32 %v1686, %v2150
        %v2311 = vmul.f32 %v1688, %v2164
        %v2312 = vmul.f32 %v1690, %v2164
        %v2313 = vmul.f32 %v1692, %v2178
        %v2314 = vmul.f32 %v1694, %v2178
        %v2315 = vmul.f32 %v1696, %v2192
        %v2316 = vmul.f32 %v1698, %v2192
        %v2317 = vmul.f32 %v1700, %v2206
        %v2318 = vmul.f32 %v1702, %v2206
        %v2319 = vmul.f32 %v1704, %v2220
        %v2320 = vmul.f32 %v1706, %v2220
        %v2321 = vmul.f32 %v1708, %v2234
        %v2322 = vmul.f32 %v1710, %v2234
        %v2323 = vmul.f32 %v1712, %v2248
        %v2324 = vmul.f32 %v1714, %v2248
        %v2325 = vmul.f32 %v1716, %v2262
        %v2326 = vmul.f32 %v1718, %v2262
        %2327 = vst [vmem:[%s585] sm:$0xff] %v2263
        %2328 = vst [vmem:[%s585 + $0x8] sm:$0xff] %v2264
        %2329 = vst [vmem:[%s585 + $0x10] sm:$0xff] %v2265
        %2330 = vst [vmem:[%s585 + $0x18] sm:$0xff] %v2266
        %2331 = vst [vmem:[%s585 + $0x20] sm:$0xff] %v2267
        %2332 = vst [vmem:[%s585 + $0x28] sm:$0xff] %v2268
        %2333 = vst [vmem:[%s585 + $0x30] sm:$0xff] %v2269
        %2334 = vst [vmem:[%s585 + $0x38] sm:$0xff] %v2270
        %2335 = vst [vmem:[%s585 + $0x40] sm:$0xff] %v2271
        %2336 = vst [vmem:[%s585 + $0x48] sm:$0xff] %v2272
        %2337 = vst [vmem:[%s585 + $0x50] sm:$0xff] %v2273
        %2338 = vst [vmem:[%s585 + $0x58] sm:$0xff] %v2274
        %2339 = vst [vmem:[%s585 + $0x60] sm:$0xff] %v2275
        %2340 = vst [vmem:[%s585 + $0x68] sm:$0xff] %v2276
        %2341 = vst [vmem:[%s585 + $0x70] sm:$0xff] %v2277
        %2342 = vst [vmem:[%s585 + $0x78] sm:$0xff] %v2278
        %2343 = vst [vmem:[%s585 + $0x80] sm:$0xff] %v2279
        %2344 = vst [vmem:[%s585 + $0x88] sm:$0xff] %v2280
        %2345 = vst [vmem:[%s585 + $0x90] sm:$0xff] %v2281
        %2346 = vst [vmem:[%s585 + $0x98] sm:$0xff] %v2282
        %2347 = vst [vmem:[%s585 + $0xa0] sm:$0xff] %v2283
        %2348 = vst [vmem:[%s585 + $0xa8] sm:$0xff] %v2284
        %2349 = vst [vmem:[%s585 + $0xb0] sm:$0xff] %v2285
        %2350 = vst [vmem:[%s585 + $0xb8] sm:$0xff] %v2286
        %2351 = vst [vmem:[%s585 + $0xc0] sm:$0xff] %v2287
        %2352 = vst [vmem:[%s585 + $0xc8] sm:$0xff] %v2288
        %2353 = vst [vmem:[%s585 + $0xd0] sm:$0xff] %v2289
        %2354 = vst [vmem:[%s585 + $0xd8] sm:$0xff] %v2290
        %2355 = vst [vmem:[%s585 + $0xe0] sm:$0xff] %v2291
        %2356 = vst [vmem:[%s585 + $0xe8] sm:$0xff] %v2292
        %2357 = vst [vmem:[%s585 + $0xf0] sm:$0xff] %v2293
        %2358 = vst [vmem:[%s585 + $0xf8] sm:$0xff] %v2294
        %2359 = vst [vmem:[%s585 + $0x100] sm:$0xff] %v2295
        %2360 = vst [vmem:[%s585 + $0x108] sm:$0xff] %v2296
        %2361 = vst [vmem:[%s585 + $0x110] sm:$0xff] %v2297
        %2362 = vst [vmem:[%s585 + $0x118] sm:$0xff] %v2298
        %2363 = vst [vmem:[%s585 + $0x120] sm:$0xff] %v2299
        %2364 = vst [vmem:[%s585 + $0x128] sm:$0xff] %v2300
        %2365 = vst [vmem:[%s585 + $0x130] sm:$0xff] %v2301
        %2366 = vst [vmem:[%s585 + $0x138] sm:$0xff] %v2302
        %2367 = vst [vmem:[%s585 + $0x140] sm:$0xff] %v2303
        %2368 = vst [vmem:[%s585 + $0x148] sm:$0xff] %v2304
        %2369 = vst [vmem:[%s585 + $0x150] sm:$0xff] %v2305
        %2370 = vst [vmem:[%s585 + $0x158] sm:$0xff] %v2306
        %2371 = vst [vmem:[%s585 + $0x160] sm:$0xff] %v2307
        %2372 = vst [vmem:[%s585 + $0x168] sm:$0xff] %v2308
        %2373 = vst [vmem:[%s585 + $0x170] sm:$0xff] %v2309
        %2374 = vst [vmem:[%s585 + $0x178] sm:$0xff] %v2310
        %2375 = vst [vmem:[%s585 + $0x180] sm:$0xff] %v2311
        %2376 = vst [vmem:[%s585 + $0x188] sm:$0xff] %v2312
        %2377 = vst [vmem:[%s585 + $0x190] sm:$0xff] %v2313
        %2378 = vst [vmem:[%s585 + $0x198] sm:$0xff] %v2314
        %2379 = vst [vmem:[%s585 + $0x1a0] sm:$0xff] %v2315
        %2380 = vst [vmem:[%s585 + $0x1a8] sm:$0xff] %v2316
        %2381 = vst [vmem:[%s585 + $0x1b0] sm:$0xff] %v2317
        %2382 = vst [vmem:[%s585 + $0x1b8] sm:$0xff] %v2318
        %2383 = vst [vmem:[%s585 + $0x1c0] sm:$0xff] %v2319
        %2384 = vst [vmem:[%s585 + $0x1c8] sm:$0xff] %v2320
        %2385 = vst [vmem:[%s585 + $0x1d0] sm:$0xff] %v2321
        %2386 = vst [vmem:[%s585 + $0x1d8] sm:$0xff] %v2322
        %2387 = vst [vmem:[%s585 + $0x1e0] sm:$0xff] %v2323
        %2388 = vst [vmem:[%s585 + $0x1e8] sm:$0xff] %v2324
        %2389 = vst [vmem:[%s585 + $0x1f0] sm:$0xff] %v2325
        %2390 = vst [vmem:[%s585 + $0x1f8] sm:$0xff] %v2326
        %v2391 = vpack.c.bf16 %v2265, %v2263
        %v2392 = vpack.c.bf16 %v2266, %v2264
        %v2393 = vpack.c.bf16 %v2269, %v2267
        %v2394 = vpack.c.bf16 %v2270, %v2268
        %v2395 = vpack.c.bf16 %v2273, %v2271
        %v2396 = vpack.c.bf16 %v2274, %v2272
        %v2397 = vpack.c.bf16 %v2277, %v2275
        %v2398 = vpack.c.bf16 %v2278, %v2276
        %v2399 = vpack.c.bf16 %v2281, %v2279
        %v2400 = vpack.c.bf16 %v2282, %v2280
        %v2401 = vpack.c.bf16 %v2285, %v2283
        %v2402 = vpack.c.bf16 %v2286, %v2284
        %v2403 = vpack.c.bf16 %v2289, %v2287
        %v2404 = vpack.c.bf16 %v2290, %v2288
        %v2405 = vpack.c.bf16 %v2293, %v2291
        %v2406 = vpack.c.bf16 %v2294, %v2292
        %v2407 = vpack.c.bf16 %v2297, %v2295
        %v2408 = vpack.c.bf16 %v2298, %v2296
        %v2409 = vpack.c.bf16 %v2301, %v2299
        %v2410 = vpack.c.bf16 %v2302, %v2300
        %v2411 = vpack.c.bf16 %v2305, %v2303
        %v2412 = vpack.c.bf16 %v2306, %v2304
        %v2413 = vpack.c.bf16 %v2309, %v2307
        %v2414 = vpack.c.bf16 %v2310, %v2308
        %v2415 = vpack.c.bf16 %v2313, %v2311
        %v2416 = vpack.c.bf16 %v2314, %v2312
        %v2417 = vpack.c.bf16 %v2317, %v2315
        %v2418 = vpack.c.bf16 %v2318, %v2316
        %v2419 = vpack.c.bf16 %v2321, %v2319
        %v2420 = vpack.c.bf16 %v2322, %v2320
        %v2421 = vpack.c.bf16 %v2325, %v2323
        %v2422 = vpack.c.bf16 %v2326, %v2324
        %v2455 = vunpack.c.l.b16 %v885
        %v2456 = vunpack.c.l.b16 %v886
        %v2457 = vunpack.c.l.b16 %v887
        %v2458 = vunpack.c.l.b16 %v888
        %v2459 = vunpack.c.l.b16 %v889
        %v2460 = vunpack.c.l.b16 %v890
        %v2461 = vunpack.c.l.b16 %v891
        %v2462 = vunpack.c.l.b16 %v892
        %v2463 = vunpack.c.l.b16 %v893
        %v2464 = vunpack.c.l.b16 %v894
        %v2465 = vunpack.c.l.b16 %v895
        %v2466 = vunpack.c.l.b16 %v896
        %v2467 = vunpack.c.l.b16 %v897
        %v2468 = vunpack.c.l.b16 %v898
        %v2469 = vunpack.c.l.b16 %v899
        %v2470 = vunpack.c.l.b16 %v900
        %v2471 = vunpack.c.l.b16 %v901
        %v2472 = vunpack.c.l.b16 %v902
        %v2473 = vunpack.c.l.b16 %v903
        %v2474 = vunpack.c.l.b16 %v904
        %v2475 = vunpack.c.l.b16 %v905
        %v2476 = vunpack.c.l.b16 %v906
        %v2477 = vunpack.c.l.b16 %v907
        %v2478 = vunpack.c.l.b16 %v908
        %v2479 = vunpack.c.l.b16 %v909
        %v2480 = vunpack.c.l.b16 %v910
        %v2481 = vunpack.c.l.b16 %v911
        %v2482 = vunpack.c.l.b16 %v912
        %v2483 = vunpack.c.l.b16 %v913
        %v2484 = vunpack.c.l.b16 %v914
        %v2485 = vunpack.c.l.b16 %v915
        %v2486 = vunpack.c.l.b16 %v916
        %v2487 = vpack.c.b16 %v2456, %v2455
        %v2488 = vpack.c.b16 %v2458, %v2457
        %v2489 = vpack.c.b16 %v2460, %v2459
        %v2490 = vpack.c.b16 %v2462, %v2461
        %v2491 = vpack.c.b16 %v2464, %v2463
        %v2492 = vpack.c.b16 %v2466, %v2465
        %v2493 = vpack.c.b16 %v2468, %v2467
        %v2494 = vpack.c.b16 %v2470, %v2469
        %v2495 = vpack.c.b16 %v2472, %v2471
        %v2496 = vpack.c.b16 %v2474, %v2473
        %v2497 = vpack.c.b16 %v2476, %v2475
        %v2498 = vpack.c.b16 %v2478, %v2477
        %v2499 = vpack.c.b16 %v2480, %v2479
        %v2500 = vpack.c.b16 %v2482, %v2481
        %v2501 = vpack.c.b16 %v2484, %v2483
        %v2502 = vpack.c.b16 %v2486, %v2485
        %2519 = vmatpush.bf16.msra.mxu0 %v2494
        %2520 = vmatpush.bf16.msra.mxu0 %v2493
        %2521 = vmatpush.bf16.msra.mxu0 %v2492
        %2522 = vmatpush.bf16.msra.mxu0 %v2491
        %2523 = vmatpush.bf16.msra.mxu0 %v2490
        %2524 = vmatpush.bf16.msra.mxu0 %v2489
        %2525 = vmatpush.bf16.msra.mxu0 %v2488
        %2526 = vmatpush.bf16.msra.mxu0 %v2487
        %2527 = vmatmul.bf16.gmra.mxu0 %v2391
        %v2528 = vpop.f32.mrf.mxu0
        %v2529 = vadd.f32 0.0, %v2528
        %v2530 = vpop.f32.mrf.mxu0
        %v2531 = vadd.f32 0.0, %v2530
        %2532 = vmatmul.bf16.gmra.mxu0 %v2393
        %v2533 = vpop.f32.mrf.mxu0
        %v2534 = vadd.f32 0.0, %v2533
        %v2535 = vpop.f32.mrf.mxu0
        %v2536 = vadd.f32 0.0, %v2535
        %2537 = vmatmul.bf16.gmra.mxu0 %v2395
        %v2538 = vpop.f32.mrf.mxu0
        %v2539 = vadd.f32 0.0, %v2538
        %v2540 = vpop.f32.mrf.mxu0
        %v2541 = vadd.f32 0.0, %v2540
        %2542 = vmatmul.bf16.gmra.mxu0 %v2397
        %v2543 = vpop.f32.mrf.mxu0
        %v2544 = vadd.f32 0.0, %v2543
        %v2545 = vpop.f32.mrf.mxu0
        %v2546 = vadd.f32 0.0, %v2545
        %2547 = vmatmul.bf16.gmra.mxu0 %v2399
        %v2548 = vpop.f32.mrf.mxu0
        %v2549 = vadd.f32 0.0, %v2548
        %v2550 = vpop.f32.mrf.mxu0
        %v2551 = vadd.f32 0.0, %v2550
        %2552 = vmatmul.bf16.gmra.mxu0 %v2401
        %v2553 = vpop.f32.mrf.mxu0
        %v2554 = vadd.f32 0.0, %v2553
        %v2555 = vpop.f32.mrf.mxu0
        %v2556 = vadd.f32 0.0, %v2555
        %2557 = vmatmul.bf16.gmra.mxu0 %v2403
        %v2558 = vpop.f32.mrf.mxu0
        %v2559 = vadd.f32 0.0, %v2558
        %v2560 = vpop.f32.mrf.mxu0
        %v2561 = vadd.f32 0.0, %v2560
        %2562 = vmatmul.bf16.gmra.mxu0 %v2405
        %v2563 = vpop.f32.mrf.mxu0
        %v2564 = vadd.f32 0.0, %v2563
        %v2565 = vpop.f32.mrf.mxu0
        %v2566 = vadd.f32 0.0, %v2565
        %2567 = vmatmul.bf16.gmra.mxu0 %v2407
        %v2568 = vpop.f32.mrf.mxu0
        %v2569 = vadd.f32 0.0, %v2568
        %v2570 = vpop.f32.mrf.mxu0
        %v2571 = vadd.f32 0.0, %v2570
        %2572 = vmatmul.bf16.gmra.mxu0 %v2409
        %v2573 = vpop.f32.mrf.mxu0
        %v2574 = vadd.f32 0.0, %v2573
        %v2575 = vpop.f32.mrf.mxu0
        %v2576 = vadd.f32 0.0, %v2575
        %2577 = vmatmul.bf16.gmra.mxu0 %v2411
        %v2578 = vpop.f32.mrf.mxu0
        %v2579 = vadd.f32 0.0, %v2578
        %v2580 = vpop.f32.mrf.mxu0
        %v2581 = vadd.f32 0.0, %v2580
        %2582 = vmatmul.bf16.gmra.mxu0 %v2413
        %v2583 = vpop.f32.mrf.mxu0
        %v2584 = vadd.f32 0.0, %v2583
        %v2585 = vpop.f32.mrf.mxu0
        %v2586 = vadd.f32 0.0, %v2585
        %2587 = vmatmul.bf16.gmra.mxu0 %v2415
        %v2588 = vpop.f32.mrf.mxu0
        %v2589 = vadd.f32 0.0, %v2588
        %v2590 = vpop.f32.mrf.mxu0
        %v2591 = vadd.f32 0.0, %v2590
        %2592 = vmatmul.bf16.gmra.mxu0 %v2417
        %v2593 = vpop.f32.mrf.mxu0
        %v2594 = vadd.f32 0.0, %v2593
        %v2595 = vpop.f32.mrf.mxu0
        %v2596 = vadd.f32 0.0, %v2595
        %2597 = vmatmul.bf16.gmra.mxu0 %v2419
        %v2598 = vpop.f32.mrf.mxu0
        %v2599 = vadd.f32 0.0, %v2598
        %v2600 = vpop.f32.mrf.mxu0
        %v2601 = vadd.f32 0.0, %v2600
        %2602 = vmatmul.bf16.gmra.mxu0 %v2421
        %v2603 = vpop.f32.mrf.mxu0
        %v2604 = vadd.f32 0.0, %v2603
        %v2605 = vpop.f32.mrf.mxu0
        %v2606 = vadd.f32 0.0, %v2605
        %2607 = vdwg.mxu0
        %2608 = vmatpush.bf16.msra.mxu0 %v2502
        %2609 = vmatpush.bf16.msra.mxu0 %v2501
        %2610 = vmatpush.bf16.msra.mxu0 %v2500
        %2611 = vmatpush.bf16.msra.mxu0 %v2499
        %2612 = vmatpush.bf16.msra.mxu0 %v2498
        %2613 = vmatpush.bf16.msra.mxu0 %v2497
        %2614 = vmatpush.bf16.msra.mxu0 %v2496
        %2615 = vmatpush.bf16.msra.mxu0 %v2495
        %2616 = vmatmul.bf16.gmra.mxu0 %v2392
        %v2617 = vpop.f32.mrf.mxu0
        %v2618 = vadd.f32 %v2529, %v2617
        %v2619 = vpop.f32.mrf.mxu0
        %v2620 = vadd.f32 %v2531, %v2619
        %2621 = vmatmul.bf16.gmra.mxu0 %v2394
        %v2622 = vpop.f32.mrf.mxu0
        %v2623 = vadd.f32 %v2534, %v2622
        %v2624 = vpop.f32.mrf.mxu0
        %v2625 = vadd.f32 %v2536, %v2624
        %2626 = vmatmul.bf16.gmra.mxu0 %v2396
        %v2627 = vpop.f32.mrf.mxu0
        %v2628 = vadd.f32 %v2539, %v2627
        %v2629 = vpop.f32.mrf.mxu0
        %v2630 = vadd.f32 %v2541, %v2629
        %2631 = vmatmul.bf16.gmra.mxu0 %v2398
        %v2632 = vpop.f32.mrf.mxu0
        %v2633 = vadd.f32 %v2544, %v2632
        %v2634 = vpop.f32.mrf.mxu0
        %v2635 = vadd.f32 %v2546, %v2634
        %2636 = vmatmul.bf16.gmra.mxu0 %v2400
        %v2637 = vpop.f32.mrf.mxu0
        %v2638 = vadd.f32 %v2549, %v2637
        %v2639 = vpop.f32.mrf.mxu0
        %v2640 = vadd.f32 %v2551, %v2639
        %2641 = vmatmul.bf16.gmra.mxu0 %v2402
        %v2642 = vpop.f32.mrf.mxu0
        %v2643 = vadd.f32 %v2554, %v2642
        %v2644 = vpop.f32.mrf.mxu0
        %v2645 = vadd.f32 %v2556, %v2644
        %2646 = vmatmul.bf16.gmra.mxu0 %v2404
        %v2647 = vpop.f32.mrf.mxu0
        %v2648 = vadd.f32 %v2559, %v2647
        %v2649 = vpop.f32.mrf.mxu0
        %v2650 = vadd.f32 %v2561, %v2649
        %2651 = vmatmul.bf16.gmra.mxu0 %v2406
        %v2652 = vpop.f32.mrf.mxu0
        %v2653 = vadd.f32 %v2564, %v2652
        %v2654 = vpop.f32.mrf.mxu0
        %v2655 = vadd.f32 %v2566, %v2654
        %2656 = vmatmul.bf16.gmra.mxu0 %v2408
        %v2657 = vpop.f32.mrf.mxu0
        %v2658 = vadd.f32 %v2569, %v2657
        %v2659 = vpop.f32.mrf.mxu0
        %v2660 = vadd.f32 %v2571, %v2659
        %2661 = vmatmul.bf16.gmra.mxu0 %v2410
        %v2662 = vpop.f32.mrf.mxu0
        %v2663 = vadd.f32 %v2574, %v2662
        %v2664 = vpop.f32.mrf.mxu0
        %v2665 = vadd.f32 %v2576, %v2664
        %2666 = vmatmul.bf16.gmra.mxu0 %v2412
        %v2667 = vpop.f32.mrf.mxu0
        %v2668 = vadd.f32 %v2579, %v2667
        %v2669 = vpop.f32.mrf.mxu0
        %v2670 = vadd.f32 %v2581, %v2669
        %2671 = vmatmul.bf16.gmra.mxu0 %v2414
        %v2672 = vpop.f32.mrf.mxu0
        %v2673 = vadd.f32 %v2584, %v2672
        %v2674 = vpop.f32.mrf.mxu0
        %v2675 = vadd.f32 %v2586, %v2674
        %2676 = vmatmul.bf16.gmra.mxu0 %v2416
        %v2677 = vpop.f32.mrf.mxu0
        %v2678 = vadd.f32 %v2589, %v2677
        %v2679 = vpop.f32.mrf.mxu0
        %v2680 = vadd.f32 %v2591, %v2679
        %2681 = vmatmul.bf16.gmra.mxu0 %v2418
        %v2682 = vpop.f32.mrf.mxu0
        %v2683 = vadd.f32 %v2594, %v2682
        %v2684 = vpop.f32.mrf.mxu0
        %v2685 = vadd.f32 %v2596, %v2684
        %2686 = vmatmul.bf16.gmra.mxu0 %v2420
        %v2687 = vpop.f32.mrf.mxu0
        %v2688 = vadd.f32 %v2599, %v2687
        %v2689 = vpop.f32.mrf.mxu0
        %v2690 = vadd.f32 %v2601, %v2689
        %2691 = vmatmul.bf16.gmra.mxu0 %v2422
        %v2692 = vpop.f32.mrf.mxu0
        %v2693 = vadd.f32 %v2604, %v2692
        %v2694 = vpop.f32.mrf.mxu0
        %v2695 = vadd.f32 %v2606, %v2694
        %2696 = vdwg.mxu0
        %2697 = vrot.lane.b32.xlu0 %v1141, 96
        %v2698 = vpop.permute.xlu0 %2697
        %2699 = vrot.lane.b32.xlu0 %v1142, 96
        %v2700 = vpop.permute.xlu0 %2699
        %2701 = vrot.lane.b32.xlu0 %v1143, 96
        %v2702 = vpop.permute.xlu0 %2701
        %2703 = vrot.lane.b32.xlu0 %v1144, 96
        %v2704 = vpop.permute.xlu0 %2703
        %2705 = vrot.lane.b32.xlu0 %v1145, 96
        %v2706 = vpop.permute.xlu0 %2705
        %2707 = vrot.lane.b32.xlu0 %v1146, 96
        %v2708 = vpop.permute.xlu0 %2707
        %2709 = vrot.lane.b32.xlu0 %v1147, 96
        %v2710 = vpop.permute.xlu0 %2709
        %2711 = vrot.lane.b32.xlu0 %v1148, 96
        %v2712 = vpop.permute.xlu0 %2711
        %2713 = vrot.lane.b32.xlu0 %v1149, 96
        %v2714 = vpop.permute.xlu0 %2713
        %2715 = vrot.lane.b32.xlu0 %v1150, 96
        %v2716 = vpop.permute.xlu0 %2715
        %2717 = vrot.lane.b32.xlu0 %v1151, 96
        %v2718 = vpop.permute.xlu0 %2717
        %2719 = vrot.lane.b32.xlu0 %v1152, 96
        %v2720 = vpop.permute.xlu0 %2719
        %2721 = vrot.lane.b32.xlu0 %v1153, 96
        %v2722 = vpop.permute.xlu0 %2721
        %2723 = vrot.lane.b32.xlu0 %v1154, 96
        %v2724 = vpop.permute.xlu0 %2723
        %2725 = vrot.lane.b32.xlu0 %v1155, 96
        %v2726 = vpop.permute.xlu0 %2725
        %2727 = vrot.lane.b32.xlu0 %v1156, 96
        %v2728 = vpop.permute.xlu0 %2727
        %2729 = vrot.lane.b32.xlu0 %v1141, 32
        %v2730 = vpop.permute.xlu0 %2729
        %2731 = vrot.lane.b32.xlu0 %v1142, 32
        %v2732 = vpop.permute.xlu0 %2731
        %2733 = vrot.lane.b32.xlu0 %v1143, 32
        %v2734 = vpop.permute.xlu0 %2733
        %2735 = vrot.lane.b32.xlu0 %v1144, 32
        %v2736 = vpop.permute.xlu0 %2735
        %2737 = vrot.lane.b32.xlu0 %v1145, 32
        %v2738 = vpop.permute.xlu0 %2737
        %2739 = vrot.lane.b32.xlu0 %v1146, 32
        %v2740 = vpop.permute.xlu0 %2739
        %2741 = vrot.lane.b32.xlu0 %v1147, 32
        %v2742 = vpop.permute.xlu0 %2741
        %2743 = vrot.lane.b32.xlu0 %v1148, 32
        %v2744 = vpop.permute.xlu0 %2743
        %2745 = vrot.lane.b32.xlu0 %v1149, 32
        %v2746 = vpop.permute.xlu0 %2745
        %2747 = vrot.lane.b32.xlu0 %v1150, 32
        %v2748 = vpop.permute.xlu0 %2747
        %2749 = vrot.lane.b32.xlu0 %v1151, 32
        %v2750 = vpop.permute.xlu0 %2749
        %2751 = vrot.lane.b32.xlu0 %v1152, 32
        %v2752 = vpop.permute.xlu0 %2751
        %2753 = vrot.lane.b32.xlu0 %v1153, 32
        %v2754 = vpop.permute.xlu0 %2753
        %2755 = vrot.lane.b32.xlu0 %v1154, 32
        %v2756 = vpop.permute.xlu0 %2755
        %2757 = vrot.lane.b32.xlu0 %v1155, 32
        %v2758 = vpop.permute.xlu0 %2757
        %2759 = vrot.lane.b32.xlu0 %v1156, 32
        %v2760 = vpop.permute.xlu0 %2759
        %v2762 = vsel %vm747, %v2698, 0
        %v2765 = vsel %vm747, %v2700, 0
        %v2768 = vsel %vm747, %v2702, 0
        %v2771 = vsel %vm747, %v2704, 0
        %v2774 = vsel %vm747, %v2706, 0
        %v2777 = vsel %vm747, %v2708, 0
        %v2780 = vsel %vm747, %v2710, 0
        %v2783 = vsel %vm747, %v2712, 0
        %v2786 = vsel %vm747, %v2714, 0
        %v2789 = vsel %vm747, %v2716, 0
        %v2792 = vsel %vm747, %v2718, 0
        %v2795 = vsel %vm747, %v2720, 0
        %v2798 = vsel %vm747, %v2722, 0
        %v2801 = vsel %vm747, %v2724, 0
        %v2804 = vsel %vm747, %v2726, 0
        %v2807 = vsel %vm747, %v2728, 0
        %v2810 = vsel %vm747, %v2730, 0
        %v2813 = vsel %vm747, %v2732, 0
        %v2816 = vsel %vm747, %v2734, 0
        %v2819 = vsel %vm747, %v2736, 0
        %v2822 = vsel %vm747, %v2738, 0
        %v2825 = vsel %vm747, %v2740, 0
        %v2828 = vsel %vm747, %v2742, 0
        %v2831 = vsel %vm747, %v2744, 0
        %v2834 = vsel %vm747, %v2746, 0
        %v2837 = vsel %vm747, %v2748, 0
        %v2840 = vsel %vm747, %v2750, 0
        %v2843 = vsel %vm747, %v2752, 0
        %v2846 = vsel %vm747, %v2754, 0
        %v2849 = vsel %vm747, %v2756, 0
        %v2852 = vsel %vm747, %v2758, 0
        %v2855 = vsel %vm747, %v2760, 0
        %2857 = vmatpush.bf16.xpose.msra.mxu0 %v2831
        %2858 = vmatpush.bf16.xpose.msra.mxu0 %v2828
        %2859 = vmatpush.bf16.xpose.msra.mxu0 %v2825
        %2860 = vmatpush.bf16.xpose.msra.mxu0 %v2822
        %2861 = vmatpush.bf16.xpose.msra.mxu0 %v2819
        %2862 = vmatpush.bf16.xpose.msra.mxu0 %v2816
        %2863 = vmatpush.bf16.xpose.msra.mxu0 %v2813
        %2864 = vmatpush.bf16.xpose.msra.mxu0 %v2810
        %2865 = vmatmul.bf16.gmra.mxu0 %v2762
        %v2866 = vpop.f32.mrf.mxu0
        %v2867 = vadd.f32 0.0, %v2866
        %v2868 = vpop.f32.mrf.mxu0
        %v2869 = vadd.f32 0.0, %v2868
        %2870 = vmatmul.bf16.gmra.mxu0 %v2765
        %v2871 = vpop.f32.mrf.mxu0
        %v2872 = vadd.f32 0.0, %v2871
        %v2873 = vpop.f32.mrf.mxu0
        %v2874 = vadd.f32 0.0, %v2873
        %2875 = vmatmul.bf16.gmra.mxu0 %v2768
        %v2876 = vpop.f32.mrf.mxu0
        %v2877 = vadd.f32 0.0, %v2876
        %v2878 = vpop.f32.mrf.mxu0
        %v2879 = vadd.f32 0.0, %v2878
        %2880 = vmatmul.bf16.gmra.mxu0 %v2771
        %v2881 = vpop.f32.mrf.mxu0
        %v2882 = vadd.f32 0.0, %v2881
        %v2883 = vpop.f32.mrf.mxu0
        %v2884 = vadd.f32 0.0, %v2883
        %2885 = vmatmul.bf16.gmra.mxu0 %v2774
        %v2886 = vpop.f32.mrf.mxu0
        %v2887 = vadd.f32 0.0, %v2886
        %v2888 = vpop.f32.mrf.mxu0
        %v2889 = vadd.f32 0.0, %v2888
        %2890 = vmatmul.bf16.gmra.mxu0 %v2777
        %v2891 = vpop.f32.mrf.mxu0
        %v2892 = vadd.f32 0.0, %v2891
        %v2893 = vpop.f32.mrf.mxu0
        %v2894 = vadd.f32 0.0, %v2893
        %2895 = vmatmul.bf16.gmra.mxu0 %v2780
        %v2896 = vpop.f32.mrf.mxu0
        %v2897 = vadd.f32 0.0, %v2896
        %v2898 = vpop.f32.mrf.mxu0
        %v2899 = vadd.f32 0.0, %v2898
        %2900 = vmatmul.bf16.gmra.mxu0 %v2783
        %v2901 = vpop.f32.mrf.mxu0
        %v2902 = vadd.f32 0.0, %v2901
        %v2903 = vpop.f32.mrf.mxu0
        %v2904 = vadd.f32 0.0, %v2903
        %2905 = vmatmul.bf16.gmra.mxu0 %v2786
        %v2906 = vpop.f32.mrf.mxu0
        %v2907 = vadd.f32 0.0, %v2906
        %v2908 = vpop.f32.mrf.mxu0
        %v2909 = vadd.f32 0.0, %v2908
        %2910 = vmatmul.bf16.gmra.mxu0 %v2789
        %v2911 = vpop.f32.mrf.mxu0
        %v2912 = vadd.f32 0.0, %v2911
        %v2913 = vpop.f32.mrf.mxu0
        %v2914 = vadd.f32 0.0, %v2913
        %2915 = vmatmul.bf16.gmra.mxu0 %v2792
        %v2916 = vpop.f32.mrf.mxu0
        %v2917 = vadd.f32 0.0, %v2916
        %v2918 = vpop.f32.mrf.mxu0
        %v2919 = vadd.f32 0.0, %v2918
        %2920 = vmatmul.bf16.gmra.mxu0 %v2795
        %v2921 = vpop.f32.mrf.mxu0
        %v2922 = vadd.f32 0.0, %v2921
        %v2923 = vpop.f32.mrf.mxu0
        %v2924 = vadd.f32 0.0, %v2923
        %2925 = vmatmul.bf16.gmra.mxu0 %v2798
        %v2926 = vpop.f32.mrf.mxu0
        %v2927 = vadd.f32 0.0, %v2926
        %v2928 = vpop.f32.mrf.mxu0
        %v2929 = vadd.f32 0.0, %v2928
        %2930 = vmatmul.bf16.gmra.mxu0 %v2801
        %v2931 = vpop.f32.mrf.mxu0
        %v2932 = vadd.f32 0.0, %v2931
        %v2933 = vpop.f32.mrf.mxu0
        %v2934 = vadd.f32 0.0, %v2933
        %2935 = vmatmul.bf16.gmra.mxu0 %v2804
        %v2936 = vpop.f32.mrf.mxu0
        %v2937 = vadd.f32 0.0, %v2936
        %v2938 = vpop.f32.mrf.mxu0
        %v2939 = vadd.f32 0.0, %v2938
        %2940 = vmatmul.bf16.gmra.mxu0 %v2807
        %v2941 = vpop.f32.mrf.mxu0
        %v2942 = vadd.f32 0.0, %v2941
        %v2943 = vpop.f32.mrf.mxu0
        %v2944 = vadd.f32 0.0, %v2943
        %2945 = vdwg.mxu0
        %2946 = vmatpush.bf16.xpose.msra.mxu0 %v2855
        %2947 = vmatpush.bf16.xpose.msra.mxu0 %v2852
        %2948 = vmatpush.bf16.xpose.msra.mxu0 %v2849
        %2949 = vmatpush.bf16.xpose.msra.mxu0 %v2846
        %2950 = vmatpush.bf16.xpose.msra.mxu0 %v2843
        %2951 = vmatpush.bf16.xpose.msra.mxu0 %v2840
        %2952 = vmatpush.bf16.xpose.msra.mxu0 %v2837
        %2953 = vmatpush.bf16.xpose.msra.mxu0 %v2834
        %2954 = vmatmul.bf16.gmra.mxu0 %v2762
        %v2955 = vpop.f32.mrf.mxu0
        %v2956 = vadd.f32 0.0, %v2955
        %v2957 = vpop.f32.mrf.mxu0
        %v2958 = vadd.f32 0.0, %v2957
        %2959 = vmatmul.bf16.gmra.mxu0 %v2765
        %v2960 = vpop.f32.mrf.mxu0
        %v2961 = vadd.f32 0.0, %v2960
        %v2962 = vpop.f32.mrf.mxu0
        %v2963 = vadd.f32 0.0, %v2962
        %2964 = vmatmul.bf16.gmra.mxu0 %v2768
        %v2965 = vpop.f32.mrf.mxu0
        %v2966 = vadd.f32 0.0, %v2965
        %v2967 = vpop.f32.mrf.mxu0
        %v2968 = vadd.f32 0.0, %v2967
        %2969 = vmatmul.bf16.gmra.mxu0 %v2771
        %v2970 = vpop.f32.mrf.mxu0
        %v2971 = vadd.f32 0.0, %v2970
        %v2972 = vpop.f32.mrf.mxu0
        %v2973 = vadd.f32 0.0, %v2972
        %2974 = vmatmul.bf16.gmra.mxu0 %v2774
        %v2975 = vpop.f32.mrf.mxu0
        %v2976 = vadd.f32 0.0, %v2975
        %v2977 = vpop.f32.mrf.mxu0
        %v2978 = vadd.f32 0.0, %v2977
        %2979 = vmatmul.bf16.gmra.mxu0 %v2777
        %v2980 = vpop.f32.mrf.mxu0
        %v2981 = vadd.f32 0.0, %v2980
        %v2982 = vpop.f32.mrf.mxu0
        %v2983 = vadd.f32 0.0, %v2982
        %2984 = vmatmul.bf16.gmra.mxu0 %v2780
        %v2985 = vpop.f32.mrf.mxu0
        %v2986 = vadd.f32 0.0, %v2985
        %v2987 = vpop.f32.mrf.mxu0
        %v2988 = vadd.f32 0.0, %v2987
        %2989 = vmatmul.bf16.gmra.mxu0 %v2783
        %v2990 = vpop.f32.mrf.mxu0
        %v2991 = vadd.f32 0.0, %v2990
        %v2992 = vpop.f32.mrf.mxu0
        %v2993 = vadd.f32 0.0, %v2992
        %2994 = vmatmul.bf16.gmra.mxu0 %v2786
        %v2995 = vpop.f32.mrf.mxu0
        %v2996 = vadd.f32 0.0, %v2995
        %v2997 = vpop.f32.mrf.mxu0
        %v2998 = vadd.f32 0.0, %v2997
        %2999 = vmatmul.bf16.gmra.mxu0 %v2789
        %v3000 = vpop.f32.mrf.mxu0
        %v3001 = vadd.f32 0.0, %v3000
        %v3002 = vpop.f32.mrf.mxu0
        %v3003 = vadd.f32 0.0, %v3002
        %3004 = vmatmul.bf16.gmra.mxu0 %v2792
        %v3005 = vpop.f32.mrf.mxu0
        %v3006 = vadd.f32 0.0, %v3005
        %v3007 = vpop.f32.mrf.mxu0
        %v3008 = vadd.f32 0.0, %v3007
        %3009 = vmatmul.bf16.gmra.mxu0 %v2795
        %v3010 = vpop.f32.mrf.mxu0
        %v3011 = vadd.f32 0.0, %v3010
        %v3012 = vpop.f32.mrf.mxu0
        %v3013 = vadd.f32 0.0, %v3012
        %3014 = vmatmul.bf16.gmra.mxu0 %v2798
        %v3015 = vpop.f32.mrf.mxu0
        %v3016 = vadd.f32 0.0, %v3015
        %v3017 = vpop.f32.mrf.mxu0
        %v3018 = vadd.f32 0.0, %v3017
        %3019 = vmatmul.bf16.gmra.mxu0 %v2801
        %v3020 = vpop.f32.mrf.mxu0
        %v3021 = vadd.f32 0.0, %v3020
        %v3022 = vpop.f32.mrf.mxu0
        %v3023 = vadd.f32 0.0, %v3022
        %3024 = vmatmul.bf16.gmra.mxu0 %v2804
        %v3025 = vpop.f32.mrf.mxu0
        %v3026 = vadd.f32 0.0, %v3025
        %v3027 = vpop.f32.mrf.mxu0
        %v3028 = vadd.f32 0.0, %v3027
        %3029 = vmatmul.bf16.gmra.mxu0 %v2807
        %v3030 = vpop.f32.mrf.mxu0
        %v3031 = vadd.f32 0.0, %v3030
        %v3032 = vpop.f32.mrf.mxu0
        %v3033 = vadd.f32 0.0, %v3032
        %3034 = vdwg.mxu0
        %v3035 = vmul.f32 %v2867, 0.015625
        %v3036 = vmul.f32 %v2956, 0.015625
        %v3037 = vmul.f32 %v2869, 0.015625
        %v3038 = vmul.f32 %v2958, 0.015625
        %v3039 = vmul.f32 %v2872, 0.015625
        %v3040 = vmul.f32 %v2961, 0.015625
        %v3041 = vmul.f32 %v2874, 0.015625
        %v3042 = vmul.f32 %v2963, 0.015625
        %v3043 = vmul.f32 %v2877, 0.015625
        %v3044 = vmul.f32 %v2966, 0.015625
        %v3045 = vmul.f32 %v2879, 0.015625
        %v3046 = vmul.f32 %v2968, 0.015625
        %v3047 = vmul.f32 %v2882, 0.015625
        %v3048 = vmul.f32 %v2971, 0.015625
        %v3049 = vmul.f32 %v2884, 0.015625
        %v3050 = vmul.f32 %v2973, 0.015625
        %v3051 = vmul.f32 %v2887, 0.015625
        %v3052 = vmul.f32 %v2976, 0.015625
        %v3053 = vmul.f32 %v2889, 0.015625
        %v3054 = vmul.f32 %v2978, 0.015625
        %v3055 = vmul.f32 %v2892, 0.015625
        %v3056 = vmul.f32 %v2981, 0.015625
        %v3057 = vmul.f32 %v2894, 0.015625
        %v3058 = vmul.f32 %v2983, 0.015625
        %v3059 = vmul.f32 %v2897, 0.015625
        %v3060 = vmul.f32 %v2986, 0.015625
        %v3061 = vmul.f32 %v2899, 0.015625
        %v3062 = vmul.f32 %v2988, 0.015625
        %v3063 = vmul.f32 %v2902, 0.015625
        %v3064 = vmul.f32 %v2991, 0.015625
        %v3065 = vmul.f32 %v2904, 0.015625
        %v3066 = vmul.f32 %v2993, 0.015625
        %v3067 = vmul.f32 %v2907, 0.015625
        %v3068 = vmul.f32 %v2996, 0.015625
        %v3069 = vmul.f32 %v2909, 0.015625
        %v3070 = vmul.f32 %v2998, 0.015625
        %v3071 = vmul.f32 %v2912, 0.015625
        %v3072 = vmul.f32 %v3001, 0.015625
        %v3073 = vmul.f32 %v2914, 0.015625
        %v3074 = vmul.f32 %v3003, 0.015625
        %v3075 = vmul.f32 %v2917, 0.015625
        %v3076 = vmul.f32 %v3006, 0.015625
        %v3077 = vmul.f32 %v2919, 0.015625
        %v3078 = vmul.f32 %v3008, 0.015625
        %v3079 = vmul.f32 %v2922, 0.015625
        %v3080 = vmul.f32 %v3011, 0.015625
        %v3081 = vmul.f32 %v2924, 0.015625
        %v3082 = vmul.f32 %v3013, 0.015625
        %v3083 = vmul.f32 %v2927, 0.015625
        %v3084 = vmul.f32 %v3016, 0.015625
        %v3085 = vmul.f32 %v2929, 0.015625
        %v3086 = vmul.f32 %v3018, 0.015625
        %v3087 = vmul.f32 %v2932, 0.015625
        %v3088 = vmul.f32 %v3021, 0.015625
        %v3089 = vmul.f32 %v2934, 0.015625
        %v3090 = vmul.f32 %v3023, 0.015625
        %v3091 = vmul.f32 %v2937, 0.015625
        %v3092 = vmul.f32 %v3026, 0.015625
        %v3093 = vmul.f32 %v2939, 0.015625
        %v3094 = vmul.f32 %v3028, 0.015625
        %v3095 = vmul.f32 %v2942, 0.015625
        %v3096 = vmul.f32 %v3031, 0.015625
        %v3097 = vmul.f32 %v2944, 0.015625
        %v3098 = vmul.f32 %v3033, 0.015625
        %v3099 = vadd.f32 %v3035, 0.5
        %v3100 = vadd.f32 %v3036, 0.5
        %v3101 = vadd.f32 %v3037, 0.5
        %v3102 = vadd.f32 %v3038, 0.5
        %v3103 = vadd.f32 %v3039, 0.5
        %v3104 = vadd.f32 %v3040, 0.5
        %v3105 = vadd.f32 %v3041, 0.5
        %v3106 = vadd.f32 %v3042, 0.5
        %v3107 = vadd.f32 %v3043, 0.5
        %v3108 = vadd.f32 %v3044, 0.5
        %v3109 = vadd.f32 %v3045, 0.5
        %v3110 = vadd.f32 %v3046, 0.5
        %v3111 = vadd.f32 %v3047, 0.5
        %v3112 = vadd.f32 %v3048, 0.5
        %v3113 = vadd.f32 %v3049, 0.5
        %v3114 = vadd.f32 %v3050, 0.5
        %v3115 = vadd.f32 %v3051, 0.5
        %v3116 = vadd.f32 %v3052, 0.5
        %v3117 = vadd.f32 %v3053, 0.5
        %v3118 = vadd.f32 %v3054, 0.5
        %v3119 = vadd.f32 %v3055, 0.5
        %v3120 = vadd.f32 %v3056, 0.5
        %v3121 = vadd.f32 %v3057, 0.5
        %v3122 = vadd.f32 %v3058, 0.5
        %v3123 = vadd.f32 %v3059, 0.5
        %v3124 = vadd.f32 %v3060, 0.5
        %v3125 = vadd.f32 %v3061, 0.5
        %v3126 = vadd.f32 %v3062, 0.5
        %v3127 = vadd.f32 %v3063, 0.5
        %v3128 = vadd.f32 %v3064, 0.5
        %v3129 = vadd.f32 %v3065, 0.5
        %v3130 = vadd.f32 %v3066, 0.5
        %v3131 = vadd.f32 %v3067, 0.5
        %v3132 = vadd.f32 %v3068, 0.5
        %v3133 = vadd.f32 %v3069, 0.5
        %v3134 = vadd.f32 %v3070, 0.5
        %v3135 = vadd.f32 %v3071, 0.5
        %v3136 = vadd.f32 %v3072, 0.5
        %v3137 = vadd.f32 %v3073, 0.5
        %v3138 = vadd.f32 %v3074, 0.5
        %v3139 = vadd.f32 %v3075, 0.5
        %v3140 = vadd.f32 %v3076, 0.5
        %v3141 = vadd.f32 %v3077, 0.5
        %v3142 = vadd.f32 %v3078, 0.5
        %v3143 = vadd.f32 %v3079, 0.5
        %v3144 = vadd.f32 %v3080, 0.5
        %v3145 = vadd.f32 %v3081, 0.5
        %v3146 = vadd.f32 %v3082, 0.5
        %v3147 = vadd.f32 %v3083, 0.5
        %v3148 = vadd.f32 %v3084, 0.5
        %v3149 = vadd.f32 %v3085, 0.5
        %v3150 = vadd.f32 %v3086, 0.5
        %v3151 = vadd.f32 %v3087, 0.5
        %v3152 = vadd.f32 %v3088, 0.5
        %v3153 = vadd.f32 %v3089, 0.5
        %v3154 = vadd.f32 %v3090, 0.5
        %v3155 = vadd.f32 %v3091, 0.5
        %v3156 = vadd.f32 %v3092, 0.5
        %v3157 = vadd.f32 %v3093, 0.5
        %v3158 = vadd.f32 %v3094, 0.5
        %v3159 = vadd.f32 %v3095, 0.5
        %v3160 = vadd.f32 %v3096, 0.5
        %v3161 = vadd.f32 %v3097, 0.5
        %v3162 = vadd.f32 %v3098, 0.5
        %v3163 = vmul.f32 %v3099, 1.442695
        %v3164 = vpow.pop %v3163
        %v3165 = vmul.f32 %v3100, 1.442695
        %v3166 = vpow.pop %v3165
        %v3167 = vmul.f32 %v3101, 1.442695
        %v3168 = vpow.pop %v3167
        %v3169 = vmul.f32 %v3102, 1.442695
        %v3170 = vpow.pop %v3169
        %v3171 = vmul.f32 %v3103, 1.442695
        %v3172 = vpow.pop %v3171
        %v3173 = vmul.f32 %v3104, 1.442695
        %v3174 = vpow.pop %v3173
        %v3175 = vmul.f32 %v3105, 1.442695
        %v3176 = vpow.pop %v3175
        %v3177 = vmul.f32 %v3106, 1.442695
        %v3178 = vpow.pop %v3177
        %v3179 = vmul.f32 %v3107, 1.442695
        %v3180 = vpow.pop %v3179
        %v3181 = vmul.f32 %v3108, 1.442695
        %v3182 = vpow.pop %v3181
        %v3183 = vmul.f32 %v3109, 1.442695
        %v3184 = vpow.pop %v3183
        %v3185 = vmul.f32 %v3110, 1.442695
        %v3186 = vpow.pop %v3185
        %v3187 = vmul.f32 %v3111, 1.442695
        %v3188 = vpow.pop %v3187
        %v3189 = vmul.f32 %v3112, 1.442695
        %v3190 = vpow.pop %v3189
        %v3191 = vmul.f32 %v3113, 1.442695
        %v3192 = vpow.pop %v3191
        %v3193 = vmul.f32 %v3114, 1.442695
        %v3194 = vpow.pop %v3193
        %v3195 = vmul.f32 %v3115, 1.442695
        %v3196 = vpow.pop %v3195
        %v3197 = vmul.f32 %v3116, 1.442695
        %v3198 = vpow.pop %v3197
        %v3199 = vmul.f32 %v3117, 1.442695
        %v3200 = vpow.pop %v3199
        %v3201 = vmul.f32 %v3118, 1.442695
        %v3202 = vpow.pop %v3201
        %v3203 = vmul.f32 %v3119, 1.442695
        %v3204 = vpow.pop %v3203
        %v3205 = vmul.f32 %v3120, 1.442695
        %v3206 = vpow.pop %v3205
        %v3207 = vmul.f32 %v3121, 1.442695
        %v3208 = vpow.pop %v3207
        %v3209 = vmul.f32 %v3122, 1.442695
        %v3210 = vpow.pop %v3209
        %v3211 = vmul.f32 %v3123, 1.442695
        %v3212 = vpow.pop %v3211
        %v3213 = vmul.f32 %v3124, 1.442695
        %v3214 = vpow.pop %v3213
        %v3215 = vmul.f32 %v3125, 1.442695
        %v3216 = vpow.pop %v3215
        %v3217 = vmul.f32 %v3126, 1.442695
        %v3218 = vpow.pop %v3217
        %v3219 = vmul.f32 %v3127, 1.442695
        %v3220 = vpow.pop %v3219
        %v3221 = vmul.f32 %v3128, 1.442695
        %v3222 = vpow.pop %v3221
        %v3223 = vmul.f32 %v3129, 1.442695
        %v3224 = vpow.pop %v3223
        %v3225 = vmul.f32 %v3130, 1.442695
        %v3226 = vpow.pop %v3225
        %v3227 = vmul.f32 %v3131, 1.442695
        %v3228 = vpow.pop %v3227
        %v3229 = vmul.f32 %v3132, 1.442695
        %v3230 = vpow.pop %v3229
        %v3231 = vmul.f32 %v3133, 1.442695
        %v3232 = vpow.pop %v3231
        %v3233 = vmul.f32 %v3134, 1.442695
        %v3234 = vpow.pop %v3233
        %v3235 = vmul.f32 %v3135, 1.442695
        %v3236 = vpow.pop %v3235
        %v3237 = vmul.f32 %v3136, 1.442695
        %v3238 = vpow.pop %v3237
        %v3239 = vmul.f32 %v3137, 1.442695
        %v3240 = vpow.pop %v3239
        %v3241 = vmul.f32 %v3138, 1.442695
        %v3242 = vpow.pop %v3241
        %v3243 = vmul.f32 %v3139, 1.442695
        %v3244 = vpow.pop %v3243
        %v3245 = vmul.f32 %v3140, 1.442695
        %v3246 = vpow.pop %v3245
        %v3247 = vmul.f32 %v3141, 1.442695
        %v3248 = vpow.pop %v3247
        %v3249 = vmul.f32 %v3142, 1.442695
        %v3250 = vpow.pop %v3249
        %v3251 = vmul.f32 %v3143, 1.442695
        %v3252 = vpow.pop %v3251
        %v3253 = vmul.f32 %v3144, 1.442695
        %v3254 = vpow.pop %v3253
        %v3255 = vmul.f32 %v3145, 1.442695
        %v3256 = vpow.pop %v3255
        %v3257 = vmul.f32 %v3146, 1.442695
        %v3258 = vpow.pop %v3257
        %v3259 = vmul.f32 %v3147, 1.442695
        %v3260 = vpow.pop %v3259
        %v3261 = vmul.f32 %v3148, 1.442695
        %v3262 = vpow.pop %v3261
        %v3263 = vmul.f32 %v3149, 1.442695
        %v3264 = vpow.pop %v3263
        %v3265 = vmul.f32 %v3150, 1.442695
        %v3266 = vpow.pop %v3265
        %v3267 = vmul.f32 %v3151, 1.442695
        %v3268 = vpow.pop %v3267
        %v3269 = vmul.f32 %v3152, 1.442695
        %v3270 = vpow.pop %v3269
        %v3271 = vmul.f32 %v3153, 1.442695
        %v3272 = vpow.pop %v3271
        %v3273 = vmul.f32 %v3154, 1.442695
        %v3274 = vpow.pop %v3273
        %v3275 = vmul.f32 %v3155, 1.442695
        %v3276 = vpow.pop %v3275
        %v3277 = vmul.f32 %v3156, 1.442695
        %v3278 = vpow.pop %v3277
        %v3279 = vmul.f32 %v3157, 1.442695
        %v3280 = vpow.pop %v3279
        %v3281 = vmul.f32 %v3158, 1.442695
        %v3282 = vpow.pop %v3281
        %v3283 = vmul.f32 %v3159, 1.442695
        %v3284 = vpow.pop %v3283
        %v3285 = vmul.f32 %v3160, 1.442695
        %v3286 = vpow.pop %v3285
        %v3287 = vmul.f32 %v3161, 1.442695
        %v3288 = vpow.pop %v3287
        %v3289 = vmul.f32 %v3162, 1.442695
        %v3290 = vpow.pop %v3289
        %v3291 = vadd.f32 %v3164, %v3166
        %3292 = vadd.xlane.f32.xlu0 %v3291
        %v3293 = vpop.xlane.xlu0 %3292
        %v3294 = vadd.f32 %v3168, %v3170
        %3295 = vadd.xlane.f32.xlu0 %v3294
        %v3296 = vpop.xlane.xlu0 %3295
        %v3297 = vadd.f32 %v3172, %v3174
        %3298 = vadd.xlane.f32.xlu0 %v3297
        %v3299 = vpop.xlane.xlu0 %3298
        %v3300 = vadd.f32 %v3176, %v3178
        %3301 = vadd.xlane.f32.xlu0 %v3300
        %v3302 = vpop.xlane.xlu0 %3301
        %v3303 = vadd.f32 %v3180, %v3182
        %3304 = vadd.xlane.f32.xlu0 %v3303
        %v3305 = vpop.xlane.xlu0 %3304
        %v3306 = vadd.f32 %v3184, %v3186
        %3307 = vadd.xlane.f32.xlu0 %v3306
        %v3308 = vpop.xlane.xlu0 %3307
        %v3309 = vadd.f32 %v3188, %v3190
        %3310 = vadd.xlane.f32.xlu0 %v3309
        %v3311 = vpop.xlane.xlu0 %3310
        %v3312 = vadd.f32 %v3192, %v3194
        %3313 = vadd.xlane.f32.xlu0 %v3312
        %v3314 = vpop.xlane.xlu0 %3313
        %v3315 = vadd.f32 %v3196, %v3198
        %3316 = vadd.xlane.f32.xlu0 %v3315
        %v3317 = vpop.xlane.xlu0 %3316
        %v3318 = vadd.f32 %v3200, %v3202
        %3319 = vadd.xlane.f32.xlu0 %v3318
        %v3320 = vpop.xlane.xlu0 %3319
        %v3321 = vadd.f32 %v3204, %v3206
        %3322 = vadd.xlane.f32.xlu0 %v3321
        %v3323 = vpop.xlane.xlu0 %3322
        %v3324 = vadd.f32 %v3208, %v3210
        %3325 = vadd.xlane.f32.xlu0 %v3324
        %v3326 = vpop.xlane.xlu0 %3325
        %v3327 = vadd.f32 %v3212, %v3214
        %3328 = vadd.xlane.f32.xlu0 %v3327
        %v3329 = vpop.xlane.xlu0 %3328
        %v3330 = vadd.f32 %v3216, %v3218
        %3331 = vadd.xlane.f32.xlu0 %v3330
        %v3332 = vpop.xlane.xlu0 %3331
        %v3333 = vadd.f32 %v3220, %v3222
        %3334 = vadd.xlane.f32.xlu0 %v3333
        %v3335 = vpop.xlane.xlu0 %3334
        %v3336 = vadd.f32 %v3224, %v3226
        %3337 = vadd.xlane.f32.xlu0 %v3336
        %v3338 = vpop.xlane.xlu0 %3337
        %v3339 = vadd.f32 %v3228, %v3230
        %3340 = vadd.xlane.f32.xlu0 %v3339
        %v3341 = vpop.xlane.xlu0 %3340
        %v3342 = vadd.f32 %v3232, %v3234
        %3343 = vadd.xlane.f32.xlu0 %v3342
        %v3344 = vpop.xlane.xlu0 %3343
        %v3345 = vadd.f32 %v3236, %v3238
        %3346 = vadd.xlane.f32.xlu0 %v3345
        %v3347 = vpop.xlane.xlu0 %3346
        %v3348 = vadd.f32 %v3240, %v3242
        %3349 = vadd.xlane.f32.xlu0 %v3348
        %v3350 = vpop.xlane.xlu0 %3349
        %v3351 = vadd.f32 %v3244, %v3246
        %3352 = vadd.xlane.f32.xlu0 %v3351
        %v3353 = vpop.xlane.xlu0 %3352
        %v3354 = vadd.f32 %v3248, %v3250
        %3355 = vadd.xlane.f32.xlu0 %v3354
        %v3356 = vpop.xlane.xlu0 %3355
        %v3357 = vadd.f32 %v3252, %v3254
        %3358 = vadd.xlane.f32.xlu0 %v3357
        %v3359 = vpop.xlane.xlu0 %3358
        %v3360 = vadd.f32 %v3256, %v3258
        %3361 = vadd.xlane.f32.xlu0 %v3360
        %v3362 = vpop.xlane.xlu0 %3361
        %v3363 = vadd.f32 %v3260, %v3262
        %3364 = vadd.xlane.f32.xlu0 %v3363
        %v3365 = vpop.xlane.xlu0 %3364
        %v3366 = vadd.f32 %v3264, %v3266
        %3367 = vadd.xlane.f32.xlu0 %v3366
        %v3368 = vpop.xlane.xlu0 %3367
        %v3369 = vadd.f32 %v3268, %v3270
        %3370 = vadd.xlane.f32.xlu0 %v3369
        %v3371 = vpop.xlane.xlu0 %3370
        %v3372 = vadd.f32 %v3272, %v3274
        %3373 = vadd.xlane.f32.xlu0 %v3372
        %v3374 = vpop.xlane.xlu0 %3373
        %v3375 = vadd.f32 %v3276, %v3278
        %3376 = vadd.xlane.f32.xlu0 %v3375
        %v3377 = vpop.xlane.xlu0 %3376
        %v3378 = vadd.f32 %v3280, %v3282
        %3379 = vadd.xlane.f32.xlu0 %v3378
        %v3380 = vpop.xlane.xlu0 %3379
        %v3381 = vadd.f32 %v3284, %v3286
        %3382 = vadd.xlane.f32.xlu0 %v3381
        %v3383 = vpop.xlane.xlu0 %3382
        %v3384 = vadd.f32 %v3288, %v3290
        %3385 = vadd.xlane.f32.xlu0 %v3384
        %v3386 = vpop.xlane.xlu0 %3385
        %v3387 = vrcp.pop %v3293
        %v3388 = vmul.f32 %v3293, %v3387
        %v3389 = vsub.f32 1.0, %v3388
        %v3390 = vmul.f32 %v3387, %v3389
        %v3391 = vadd.f32 %v3387, %v3390
        %vm3392 = vweird.f32 %v3293
        %vm3393 = vweird.f32 %v3387
        %vm3394 = vmor %vm3392, %vm3393
        %v3395 = vsel %vm3394, %v3387, %v3391
        %v3396 = vand.u32 2147483647, %v3293
        %vm3397 = vcmp.eq.f32.partialorder %v3396, 8.507059e+37
        %v3398 = vand.u32 %v3293, 2147483648
        %v3399 = vor.u32 1.1754944e-38, %v3398
        %v3400 = vsel %vm3397, %v3399, %v3395
        %v3401 = vrcp.pop %v3296
        %v3402 = vmul.f32 %v3296, %v3401
        %v3403 = vsub.f32 1.0, %v3402
        %v3404 = vmul.f32 %v3401, %v3403
        %v3405 = vadd.f32 %v3401, %v3404
        %vm3406 = vweird.f32 %v3296
        %vm3407 = vweird.f32 %v3401
        %vm3408 = vmor %vm3406, %vm3407
        %v3409 = vsel %vm3408, %v3401, %v3405
        %v3410 = vand.u32 2147483647, %v3296
        %vm3411 = vcmp.eq.f32.partialorder %v3410, 8.507059e+37
        %v3412 = vand.u32 %v3296, 2147483648
        %v3413 = vor.u32 1.1754944e-38, %v3412
        %v3414 = vsel %vm3411, %v3413, %v3409
        %v3415 = vrcp.pop %v3299
        %v3416 = vmul.f32 %v3299, %v3415
        %v3417 = vsub.f32 1.0, %v3416
        %v3418 = vmul.f32 %v3415, %v3417
        %v3419 = vadd.f32 %v3415, %v3418
        %vm3420 = vweird.f32 %v3299
        %vm3421 = vweird.f32 %v3415
        %vm3422 = vmor %vm3420, %vm3421
        %v3423 = vsel %vm3422, %v3415, %v3419
        %v3424 = vand.u32 2147483647, %v3299
        %vm3425 = vcmp.eq.f32.partialorder %v3424, 8.507059e+37
        %v3426 = vand.u32 %v3299, 2147483648
        %v3427 = vor.u32 1.1754944e-38, %v3426
        %v3428 = vsel %vm3425, %v3427, %v3423
        %v3429 = vrcp.pop %v3302
        %v3430 = vmul.f32 %v3302, %v3429
        %v3431 = vsub.f32 1.0, %v3430
        %v3432 = vmul.f32 %v3429, %v3431
        %v3433 = vadd.f32 %v3429, %v3432
        %vm3434 = vweird.f32 %v3302
        %vm3435 = vweird.f32 %v3429
        %vm3436 = vmor %vm3434, %vm3435
        %v3437 = vsel %vm3436, %v3429, %v3433
        %v3438 = vand.u32 2147483647, %v3302
        %vm3439 = vcmp.eq.f32.partialorder %v3438, 8.507059e+37
        %v3440 = vand.u32 %v3302, 2147483648
        %v3441 = vor.u32 1.1754944e-38, %v3440
        %v3442 = vsel %vm3439, %v3441, %v3437
        %v3443 = vrcp.pop %v3305
        %v3444 = vmul.f32 %v3305, %v3443
        %v3445 = vsub.f32 1.0, %v3444
        %v3446 = vmul.f32 %v3443, %v3445
        %v3447 = vadd.f32 %v3443, %v3446
        %vm3448 = vweird.f32 %v3305
        %vm3449 = vweird.f32 %v3443
        %vm3450 = vmor %vm3448, %vm3449
        %v3451 = vsel %vm3450, %v3443, %v3447
        %v3452 = vand.u32 2147483647, %v3305
        %vm3453 = vcmp.eq.f32.partialorder %v3452, 8.507059e+37
        %v3454 = vand.u32 %v3305, 2147483648
        %v3455 = vor.u32 1.1754944e-38, %v3454
        %v3456 = vsel %vm3453, %v3455, %v3451
        %v3457 = vrcp.pop %v3308
        %v3458 = vmul.f32 %v3308, %v3457
        %v3459 = vsub.f32 1.0, %v3458
        %v3460 = vmul.f32 %v3457, %v3459
        %v3461 = vadd.f32 %v3457, %v3460
        %vm3462 = vweird.f32 %v3308
        %vm3463 = vweird.f32 %v3457
        %vm3464 = vmor %vm3462, %vm3463
        %v3465 = vsel %vm3464, %v3457, %v3461
        %v3466 = vand.u32 2147483647, %v3308
        %vm3467 = vcmp.eq.f32.partialorder %v3466, 8.507059e+37
        %v3468 = vand.u32 %v3308, 2147483648
        %v3469 = vor.u32 1.1754944e-38, %v3468
        %v3470 = vsel %vm3467, %v3469, %v3465
        %v3471 = vrcp.pop %v3311
        %v3472 = vmul.f32 %v3311, %v3471
        %v3473 = vsub.f32 1.0, %v3472
        %v3474 = vmul.f32 %v3471, %v3473
        %v3475 = vadd.f32 %v3471, %v3474
        %vm3476 = vweird.f32 %v3311
        %vm3477 = vweird.f32 %v3471
        %vm3478 = vmor %vm3476, %vm3477
        %v3479 = vsel %vm3478, %v3471, %v3475
        %v3480 = vand.u32 2147483647, %v3311
        %vm3481 = vcmp.eq.f32.partialorder %v3480, 8.507059e+37
        %v3482 = vand.u32 %v3311, 2147483648
        %v3483 = vor.u32 1.1754944e-38, %v3482
        %v3484 = vsel %vm3481, %v3483, %v3479
        %v3485 = vrcp.pop %v3314
        %v3486 = vmul.f32 %v3314, %v3485
        %v3487 = vsub.f32 1.0, %v3486
        %v3488 = vmul.f32 %v3485, %v3487
        %v3489 = vadd.f32 %v3485, %v3488
        %vm3490 = vweird.f32 %v3314
        %vm3491 = vweird.f32 %v3485
        %vm3492 = vmor %vm3490, %vm3491
        %v3493 = vsel %vm3492, %v3485, %v3489
        %v3494 = vand.u32 2147483647, %v3314
        %vm3495 = vcmp.eq.f32.partialorder %v3494, 8.507059e+37
        %v3496 = vand.u32 %v3314, 2147483648
        %v3497 = vor.u32 1.1754944e-38, %v3496
        %v3498 = vsel %vm3495, %v3497, %v3493
        %v3499 = vrcp.pop %v3317
        %v3500 = vmul.f32 %v3317, %v3499
        %v3501 = vsub.f32 1.0, %v3500
        %v3502 = vmul.f32 %v3499, %v3501
        %v3503 = vadd.f32 %v3499, %v3502
        %vm3504 = vweird.f32 %v3317
        %vm3505 = vweird.f32 %v3499
        %vm3506 = vmor %vm3504, %vm3505
        %v3507 = vsel %vm3506, %v3499, %v3503
        %v3508 = vand.u32 2147483647, %v3317
        %vm3509 = vcmp.eq.f32.partialorder %v3508, 8.507059e+37
        %v3510 = vand.u32 %v3317, 2147483648
        %v3511 = vor.u32 1.1754944e-38, %v3510
        %v3512 = vsel %vm3509, %v3511, %v3507
        %v3513 = vrcp.pop %v3320
        %v3514 = vmul.f32 %v3320, %v3513
        %v3515 = vsub.f32 1.0, %v3514
        %v3516 = vmul.f32 %v3513, %v3515
        %v3517 = vadd.f32 %v3513, %v3516
        %vm3518 = vweird.f32 %v3320
        %vm3519 = vweird.f32 %v3513
        %vm3520 = vmor %vm3518, %vm3519
        %v3521 = vsel %vm3520, %v3513, %v3517
        %v3522 = vand.u32 2147483647, %v3320
        %vm3523 = vcmp.eq.f32.partialorder %v3522, 8.507059e+37
        %v3524 = vand.u32 %v3320, 2147483648
        %v3525 = vor.u32 1.1754944e-38, %v3524
        %v3526 = vsel %vm3523, %v3525, %v3521
        %v3527 = vrcp.pop %v3323
        %v3528 = vmul.f32 %v3323, %v3527
        %v3529 = vsub.f32 1.0, %v3528
        %v3530 = vmul.f32 %v3527, %v3529
        %v3531 = vadd.f32 %v3527, %v3530
        %vm3532 = vweird.f32 %v3323
        %vm3533 = vweird.f32 %v3527
        %vm3534 = vmor %vm3532, %vm3533
        %v3535 = vsel %vm3534, %v3527, %v3531
        %v3536 = vand.u32 2147483647, %v3323
        %vm3537 = vcmp.eq.f32.partialorder %v3536, 8.507059e+37
        %v3538 = vand.u32 %v3323, 2147483648
        %v3539 = vor.u32 1.1754944e-38, %v3538
        %v3540 = vsel %vm3537, %v3539, %v3535
        %v3541 = vrcp.pop %v3326
        %v3542 = vmul.f32 %v3326, %v3541
        %v3543 = vsub.f32 1.0, %v3542
        %v3544 = vmul.f32 %v3541, %v3543
        %v3545 = vadd.f32 %v3541, %v3544
        %vm3546 = vweird.f32 %v3326
        %vm3547 = vweird.f32 %v3541
        %vm3548 = vmor %vm3546, %vm3547
        %v3549 = vsel %vm3548, %v3541, %v3545
        %v3550 = vand.u32 2147483647, %v3326
        %vm3551 = vcmp.eq.f32.partialorder %v3550, 8.507059e+37
        %v3552 = vand.u32 %v3326, 2147483648
        %v3553 = vor.u32 1.1754944e-38, %v3552
        %v3554 = vsel %vm3551, %v3553, %v3549
        %v3555 = vrcp.pop %v3329
        %v3556 = vmul.f32 %v3329, %v3555
        %v3557 = vsub.f32 1.0, %v3556
        %v3558 = vmul.f32 %v3555, %v3557
        %v3559 = vadd.f32 %v3555, %v3558
        %vm3560 = vweird.f32 %v3329
        %vm3561 = vweird.f32 %v3555
        %vm3562 = vmor %vm3560, %vm3561
        %v3563 = vsel %vm3562, %v3555, %v3559
        %v3564 = vand.u32 2147483647, %v3329
        %vm3565 = vcmp.eq.f32.partialorder %v3564, 8.507059e+37
        %v3566 = vand.u32 %v3329, 2147483648
        %v3567 = vor.u32 1.1754944e-38, %v3566
        %v3568 = vsel %vm3565, %v3567, %v3563
        %v3569 = vrcp.pop %v3332
        %v3570 = vmul.f32 %v3332, %v3569
        %v3571 = vsub.f32 1.0, %v3570
        %v3572 = vmul.f32 %v3569, %v3571
        %v3573 = vadd.f32 %v3569, %v3572
        %vm3574 = vweird.f32 %v3332
        %vm3575 = vweird.f32 %v3569
        %vm3576 = vmor %vm3574, %vm3575
        %v3577 = vsel %vm3576, %v3569, %v3573
        %v3578 = vand.u32 2147483647, %v3332
        %vm3579 = vcmp.eq.f32.partialorder %v3578, 8.507059e+37
        %v3580 = vand.u32 %v3332, 2147483648
        %v3581 = vor.u32 1.1754944e-38, %v3580
        %v3582 = vsel %vm3579, %v3581, %v3577
        %v3583 = vrcp.pop %v3335
        %v3584 = vmul.f32 %v3335, %v3583
        %v3585 = vsub.f32 1.0, %v3584
        %v3586 = vmul.f32 %v3583, %v3585
        %v3587 = vadd.f32 %v3583, %v3586
        %vm3588 = vweird.f32 %v3335
        %vm3589 = vweird.f32 %v3583
        %vm3590 = vmor %vm3588, %vm3589
        %v3591 = vsel %vm3590, %v3583, %v3587
        %v3592 = vand.u32 2147483647, %v3335
        %vm3593 = vcmp.eq.f32.partialorder %v3592, 8.507059e+37
        %v3594 = vand.u32 %v3335, 2147483648
        %v3595 = vor.u32 1.1754944e-38, %v3594
        %v3596 = vsel %vm3593, %v3595, %v3591
        %v3597 = vrcp.pop %v3338
        %v3598 = vmul.f32 %v3338, %v3597
        %v3599 = vsub.f32 1.0, %v3598
        %v3600 = vmul.f32 %v3597, %v3599
        %v3601 = vadd.f32 %v3597, %v3600
        %vm3602 = vweird.f32 %v3338
        %vm3603 = vweird.f32 %v3597
        %vm3604 = vmor %vm3602, %vm3603
        %v3605 = vsel %vm3604, %v3597, %v3601
        %v3606 = vand.u32 2147483647, %v3338
        %vm3607 = vcmp.eq.f32.partialorder %v3606, 8.507059e+37
        %v3608 = vand.u32 %v3338, 2147483648
        %v3609 = vor.u32 1.1754944e-38, %v3608
        %v3610 = vsel %vm3607, %v3609, %v3605
        %v3611 = vrcp.pop %v3341
        %v3612 = vmul.f32 %v3341, %v3611
        %v3613 = vsub.f32 1.0, %v3612
        %v3614 = vmul.f32 %v3611, %v3613
        %v3615 = vadd.f32 %v3611, %v3614
        %vm3616 = vweird.f32 %v3341
        %vm3617 = vweird.f32 %v3611
        %vm3618 = vmor %vm3616, %vm3617
        %v3619 = vsel %vm3618, %v3611, %v3615
        %v3620 = vand.u32 2147483647, %v3341
        %vm3621 = vcmp.eq.f32.partialorder %v3620, 8.507059e+37
        %v3622 = vand.u32 %v3341, 2147483648
        %v3623 = vor.u32 1.1754944e-38, %v3622
        %v3624 = vsel %vm3621, %v3623, %v3619
        %v3625 = vrcp.pop %v3344
        %v3626 = vmul.f32 %v3344, %v3625
        %v3627 = vsub.f32 1.0, %v3626
        %v3628 = vmul.f32 %v3625, %v3627
        %v3629 = vadd.f32 %v3625, %v3628
        %vm3630 = vweird.f32 %v3344
        %vm3631 = vweird.f32 %v3625
        %vm3632 = vmor %vm3630, %vm3631
        %v3633 = vsel %vm3632, %v3625, %v3629
        %v3634 = vand.u32 2147483647, %v3344
        %vm3635 = vcmp.eq.f32.partialorder %v3634, 8.507059e+37
        %v3636 = vand.u32 %v3344, 2147483648
        %v3637 = vor.u32 1.1754944e-38, %v3636
        %v3638 = vsel %vm3635, %v3637, %v3633
        %v3639 = vrcp.pop %v3347
        %v3640 = vmul.f32 %v3347, %v3639
        %v3641 = vsub.f32 1.0, %v3640
        %v3642 = vmul.f32 %v3639, %v3641
        %v3643 = vadd.f32 %v3639, %v3642
        %vm3644 = vweird.f32 %v3347
        %vm3645 = vweird.f32 %v3639
        %vm3646 = vmor %vm3644, %vm3645
        %v3647 = vsel %vm3646, %v3639, %v3643
        %v3648 = vand.u32 2147483647, %v3347
        %vm3649 = vcmp.eq.f32.partialorder %v3648, 8.507059e+37
        %v3650 = vand.u32 %v3347, 2147483648
        %v3651 = vor.u32 1.1754944e-38, %v3650
        %v3652 = vsel %vm3649, %v3651, %v3647
        %v3653 = vrcp.pop %v3350
        %v3654 = vmul.f32 %v3350, %v3653
        %v3655 = vsub.f32 1.0, %v3654
        %v3656 = vmul.f32 %v3653, %v3655
        %v3657 = vadd.f32 %v3653, %v3656
        %vm3658 = vweird.f32 %v3350
        %vm3659 = vweird.f32 %v3653
        %vm3660 = vmor %vm3658, %vm3659
        %v3661 = vsel %vm3660, %v3653, %v3657
        %v3662 = vand.u32 2147483647, %v3350
        %vm3663 = vcmp.eq.f32.partialorder %v3662, 8.507059e+37
        %v3664 = vand.u32 %v3350, 2147483648
        %v3665 = vor.u32 1.1754944e-38, %v3664
        %v3666 = vsel %vm3663, %v3665, %v3661
        %v3667 = vrcp.pop %v3353
        %v3668 = vmul.f32 %v3353, %v3667
        %v3669 = vsub.f32 1.0, %v3668
        %v3670 = vmul.f32 %v3667, %v3669
        %v3671 = vadd.f32 %v3667, %v3670
        %vm3672 = vweird.f32 %v3353
        %vm3673 = vweird.f32 %v3667
        %vm3674 = vmor %vm3672, %vm3673
        %v3675 = vsel %vm3674, %v3667, %v3671
        %v3676 = vand.u32 2147483647, %v3353
        %vm3677 = vcmp.eq.f32.partialorder %v3676, 8.507059e+37
        %v3678 = vand.u32 %v3353, 2147483648
        %v3679 = vor.u32 1.1754944e-38, %v3678
        %v3680 = vsel %vm3677, %v3679, %v3675
        %v3681 = vrcp.pop %v3356
        %v3682 = vmul.f32 %v3356, %v3681
        %v3683 = vsub.f32 1.0, %v3682
        %v3684 = vmul.f32 %v3681, %v3683
        %v3685 = vadd.f32 %v3681, %v3684
        %vm3686 = vweird.f32 %v3356
        %vm3687 = vweird.f32 %v3681
        %vm3688 = vmor %vm3686, %vm3687
        %v3689 = vsel %vm3688, %v3681, %v3685
        %v3690 = vand.u32 2147483647, %v3356
        %vm3691 = vcmp.eq.f32.partialorder %v3690, 8.507059e+37
        %v3692 = vand.u32 %v3356, 2147483648
        %v3693 = vor.u32 1.1754944e-38, %v3692
        %v3694 = vsel %vm3691, %v3693, %v3689
        %v3695 = vrcp.pop %v3359
        %v3696 = vmul.f32 %v3359, %v3695
        %v3697 = vsub.f32 1.0, %v3696
        %v3698 = vmul.f32 %v3695, %v3697
        %v3699 = vadd.f32 %v3695, %v3698
        %vm3700 = vweird.f32 %v3359
        %vm3701 = vweird.f32 %v3695
        %vm3702 = vmor %vm3700, %vm3701
        %v3703 = vsel %vm3702, %v3695, %v3699
        %v3704 = vand.u32 2147483647, %v3359
        %vm3705 = vcmp.eq.f32.partialorder %v3704, 8.507059e+37
        %v3706 = vand.u32 %v3359, 2147483648
        %v3707 = vor.u32 1.1754944e-38, %v3706
        %v3708 = vsel %vm3705, %v3707, %v3703
        %v3709 = vrcp.pop %v3362
        %v3710 = vmul.f32 %v3362, %v3709
        %v3711 = vsub.f32 1.0, %v3710
        %v3712 = vmul.f32 %v3709, %v3711
        %v3713 = vadd.f32 %v3709, %v3712
        %vm3714 = vweird.f32 %v3362
        %vm3715 = vweird.f32 %v3709
        %vm3716 = vmor %vm3714, %vm3715
        %v3717 = vsel %vm3716, %v3709, %v3713
        %v3718 = vand.u32 2147483647, %v3362
        %vm3719 = vcmp.eq.f32.partialorder %v3718, 8.507059e+37
        %v3720 = vand.u32 %v3362, 2147483648
        %v3721 = vor.u32 1.1754944e-38, %v3720
        %v3722 = vsel %vm3719, %v3721, %v3717
        %v3723 = vrcp.pop %v3365
        %v3724 = vmul.f32 %v3365, %v3723
        %v3725 = vsub.f32 1.0, %v3724
        %v3726 = vmul.f32 %v3723, %v3725
        %v3727 = vadd.f32 %v3723, %v3726
        %vm3728 = vweird.f32 %v3365
        %vm3729 = vweird.f32 %v3723
        %vm3730 = vmor %vm3728, %vm3729
        %v3731 = vsel %vm3730, %v3723, %v3727
        %v3732 = vand.u32 2147483647, %v3365
        %vm3733 = vcmp.eq.f32.partialorder %v3732, 8.507059e+37
        %v3734 = vand.u32 %v3365, 2147483648
        %v3735 = vor.u32 1.1754944e-38, %v3734
        %v3736 = vsel %vm3733, %v3735, %v3731
        %v3737 = vrcp.pop %v3368
        %v3738 = vmul.f32 %v3368, %v3737
        %v3739 = vsub.f32 1.0, %v3738
        %v3740 = vmul.f32 %v3737, %v3739
        %v3741 = vadd.f32 %v3737, %v3740
        %vm3742 = vweird.f32 %v3368
        %vm3743 = vweird.f32 %v3737
        %vm3744 = vmor %vm3742, %vm3743
        %v3745 = vsel %vm3744, %v3737, %v3741
        %v3746 = vand.u32 2147483647, %v3368
        %vm3747 = vcmp.eq.f32.partialorder %v3746, 8.507059e+37
        %v3748 = vand.u32 %v3368, 2147483648
        %v3749 = vor.u32 1.1754944e-38, %v3748
        %v3750 = vsel %vm3747, %v3749, %v3745
        %v3751 = vrcp.pop %v3371
        %v3752 = vmul.f32 %v3371, %v3751
        %v3753 = vsub.f32 1.0, %v3752
        %v3754 = vmul.f32 %v3751, %v3753
        %v3755 = vadd.f32 %v3751, %v3754
        %vm3756 = vweird.f32 %v3371
        %vm3757 = vweird.f32 %v3751
        %vm3758 = vmor %vm3756, %vm3757
        %v3759 = vsel %vm3758, %v3751, %v3755
        %v3760 = vand.u32 2147483647, %v3371
        %vm3761 = vcmp.eq.f32.partialorder %v3760, 8.507059e+37
        %v3762 = vand.u32 %v3371, 2147483648
        %v3763 = vor.u32 1.1754944e-38, %v3762
        %v3764 = vsel %vm3761, %v3763, %v3759
        %v3765 = vrcp.pop %v3374
        %v3766 = vmul.f32 %v3374, %v3765
        %v3767 = vsub.f32 1.0, %v3766
        %v3768 = vmul.f32 %v3765, %v3767
        %v3769 = vadd.f32 %v3765, %v3768
        %vm3770 = vweird.f32 %v3374
        %vm3771 = vweird.f32 %v3765
        %vm3772 = vmor %vm3770, %vm3771
        %v3773 = vsel %vm3772, %v3765, %v3769
        %v3774 = vand.u32 2147483647, %v3374
        %vm3775 = vcmp.eq.f32.partialorder %v3774, 8.507059e+37
        %v3776 = vand.u32 %v3374, 2147483648
        %v3777 = vor.u32 1.1754944e-38, %v3776
        %v3778 = vsel %vm3775, %v3777, %v3773
        %v3779 = vrcp.pop %v3377
        %v3780 = vmul.f32 %v3377, %v3779
        %v3781 = vsub.f32 1.0, %v3780
        %v3782 = vmul.f32 %v3779, %v3781
        %v3783 = vadd.f32 %v3779, %v3782
        %vm3784 = vweird.f32 %v3377
        %vm3785 = vweird.f32 %v3779
        %vm3786 = vmor %vm3784, %vm3785
        %v3787 = vsel %vm3786, %v3779, %v3783
        %v3788 = vand.u32 2147483647, %v3377
        %vm3789 = vcmp.eq.f32.partialorder %v3788, 8.507059e+37
        %v3790 = vand.u32 %v3377, 2147483648
        %v3791 = vor.u32 1.1754944e-38, %v3790
        %v3792 = vsel %vm3789, %v3791, %v3787
        %v3793 = vrcp.pop %v3380
        %v3794 = vmul.f32 %v3380, %v3793
        %v3795 = vsub.f32 1.0, %v3794
        %v3796 = vmul.f32 %v3793, %v3795
        %v3797 = vadd.f32 %v3793, %v3796
        %vm3798 = vweird.f32 %v3380
        %vm3799 = vweird.f32 %v3793
        %vm3800 = vmor %vm3798, %vm3799
        %v3801 = vsel %vm3800, %v3793, %v3797
        %v3802 = vand.u32 2147483647, %v3380
        %vm3803 = vcmp.eq.f32.partialorder %v3802, 8.507059e+37
        %v3804 = vand.u32 %v3380, 2147483648
        %v3805 = vor.u32 1.1754944e-38, %v3804
        %v3806 = vsel %vm3803, %v3805, %v3801
        %v3807 = vrcp.pop %v3383
        %v3808 = vmul.f32 %v3383, %v3807
        %v3809 = vsub.f32 1.0, %v3808
        %v3810 = vmul.f32 %v3807, %v3809
        %v3811 = vadd.f32 %v3807, %v3810
        %vm3812 = vweird.f32 %v3383
        %vm3813 = vweird.f32 %v3807
        %vm3814 = vmor %vm3812, %vm3813
        %v3815 = vsel %vm3814, %v3807, %v3811
        %v3816 = vand.u32 2147483647, %v3383
        %vm3817 = vcmp.eq.f32.partialorder %v3816, 8.507059e+37
        %v3818 = vand.u32 %v3383, 2147483648
        %v3819 = vor.u32 1.1754944e-38, %v3818
        %v3820 = vsel %vm3817, %v3819, %v3815
        %v3821 = vrcp.pop %v3386
        %v3822 = vmul.f32 %v3386, %v3821
        %v3823 = vsub.f32 1.0, %v3822
        %v3824 = vmul.f32 %v3821, %v3823
        %v3825 = vadd.f32 %v3821, %v3824
        %vm3826 = vweird.f32 %v3386
        %vm3827 = vweird.f32 %v3821
        %vm3828 = vmor %vm3826, %vm3827
        %v3829 = vsel %vm3828, %v3821, %v3825
        %v3830 = vand.u32 2147483647, %v3386
        %vm3831 = vcmp.eq.f32.partialorder %v3830, 8.507059e+37
        %v3832 = vand.u32 %v3386, 2147483648
        %v3833 = vor.u32 1.1754944e-38, %v3832
        %v3834 = vsel %vm3831, %v3833, %v3829
        %v3835 = vmul.f32 %v3164, %v3400
        %v3836 = vmul.f32 %v3166, %v3400
        %v3837 = vmul.f32 %v3168, %v3414
        %v3838 = vmul.f32 %v3170, %v3414
        %v3839 = vmul.f32 %v3172, %v3428
        %v3840 = vmul.f32 %v3174, %v3428
        %v3841 = vmul.f32 %v3176, %v3442
        %v3842 = vmul.f32 %v3178, %v3442
        %v3843 = vmul.f32 %v3180, %v3456
        %v3844 = vmul.f32 %v3182, %v3456
        %v3845 = vmul.f32 %v3184, %v3470
        %v3846 = vmul.f32 %v3186, %v3470
        %v3847 = vmul.f32 %v3188, %v3484
        %v3848 = vmul.f32 %v3190, %v3484
        %v3849 = vmul.f32 %v3192, %v3498
        %v3850 = vmul.f32 %v3194, %v3498
        %v3851 = vmul.f32 %v3196, %v3512
        %v3852 = vmul.f32 %v3198, %v3512
        %v3853 = vmul.f32 %v3200, %v3526
        %v3854 = vmul.f32 %v3202, %v3526
        %v3855 = vmul.f32 %v3204, %v3540
        %v3856 = vmul.f32 %v3206, %v3540
        %v3857 = vmul.f32 %v3208, %v3554
        %v3858 = vmul.f32 %v3210, %v3554
        %v3859 = vmul.f32 %v3212, %v3568
        %v3860 = vmul.f32 %v3214, %v3568
        %v3861 = vmul.f32 %v3216, %v3582
        %v3862 = vmul.f32 %v3218, %v3582
        %v3863 = vmul.f32 %v3220, %v3596
        %v3864 = vmul.f32 %v3222, %v3596
        %v3865 = vmul.f32 %v3224, %v3610
        %v3866 = vmul.f32 %v3226, %v3610
        %v3867 = vmul.f32 %v3228, %v3624
        %v3868 = vmul.f32 %v3230, %v3624
        %v3869 = vmul.f32 %v3232, %v3638
        %v3870 = vmul.f32 %v3234, %v3638
        %v3871 = vmul.f32 %v3236, %v3652
        %v3872 = vmul.f32 %v3238, %v3652
        %v3873 = vmul.f32 %v3240, %v3666
        %v3874 = vmul.f32 %v3242, %v3666
        %v3875 = vmul.f32 %v3244, %v3680
        %v3876 = vmul.f32 %v3246, %v3680
        %v3877 = vmul.f32 %v3248, %v3694
        %v3878 = vmul.f32 %v3250, %v3694
        %v3879 = vmul.f32 %v3252, %v3708
        %v3880 = vmul.f32 %v3254, %v3708
        %v3881 = vmul.f32 %v3256, %v3722
        %v3882 = vmul.f32 %v3258, %v3722
        %v3883 = vmul.f32 %v3260, %v3736
        %v3884 = vmul.f32 %v3262, %v3736
        %v3885 = vmul.f32 %v3264, %v3750
        %v3886 = vmul.f32 %v3266, %v3750
        %v3887 = vmul.f32 %v3268, %v3764
        %v3888 = vmul.f32 %v3270, %v3764
        %v3889 = vmul.f32 %v3272, %v3778
        %v3890 = vmul.f32 %v3274, %v3778
        %v3891 = vmul.f32 %v3276, %v3792
        %v3892 = vmul.f32 %v3278, %v3792
        %v3893 = vmul.f32 %v3280, %v3806
        %v3894 = vmul.f32 %v3282, %v3806
        %v3895 = vmul.f32 %v3284, %v3820
        %v3896 = vmul.f32 %v3286, %v3820
        %v3897 = vmul.f32 %v3288, %v3834
        %v3898 = vmul.f32 %v3290, %v3834
        %s3899 = scalar_lea.vmem %s585, 512 [#allocation5]
        %3900 = vst [vmem:[%s3899] sm:$0xff] %v3835
        %3901 = vst [vmem:[%s3899 + $0x8] sm:$0xff] %v3836
        %3902 = vst [vmem:[%s3899 + $0x10] sm:$0xff] %v3837
        %3903 = vst [vmem:[%s3899 + $0x18] sm:$0xff] %v3838
        %3904 = vst [vmem:[%s3899 + $0x20] sm:$0xff] %v3839
        %3905 = vst [vmem:[%s3899 + $0x28] sm:$0xff] %v3840
        %3906 = vst [vmem:[%s3899 + $0x30] sm:$0xff] %v3841
        %3907 = vst [vmem:[%s3899 + $0x38] sm:$0xff] %v3842
        %3908 = vst [vmem:[%s3899 + $0x40] sm:$0xff] %v3843
        %3909 = vst [vmem:[%s3899 + $0x48] sm:$0xff] %v3844
        %3910 = vst [vmem:[%s3899 + $0x50] sm:$0xff] %v3845
        %3911 = vst [vmem:[%s3899 + $0x58] sm:$0xff] %v3846
        %3912 = vst [vmem:[%s3899 + $0x60] sm:$0xff] %v3847
        %3913 = vst [vmem:[%s3899 + $0x68] sm:$0xff] %v3848
        %3914 = vst [vmem:[%s3899 + $0x70] sm:$0xff] %v3849
        %3915 = vst [vmem:[%s3899 + $0x78] sm:$0xff] %v3850
        %3916 = vst [vmem:[%s3899 + $0x80] sm:$0xff] %v3851
        %3917 = vst [vmem:[%s3899 + $0x88] sm:$0xff] %v3852
        %3918 = vst [vmem:[%s3899 + $0x90] sm:$0xff] %v3853
        %3919 = vst [vmem:[%s3899 + $0x98] sm:$0xff] %v3854
        %3920 = vst [vmem:[%s3899 + $0xa0] sm:$0xff] %v3855
        %3921 = vst [vmem:[%s3899 + $0xa8] sm:$0xff] %v3856
        %3922 = vst [vmem:[%s3899 + $0xb0] sm:$0xff] %v3857
        %3923 = vst [vmem:[%s3899 + $0xb8] sm:$0xff] %v3858
        %3924 = vst [vmem:[%s3899 + $0xc0] sm:$0xff] %v3859
        %3925 = vst [vmem:[%s3899 + $0xc8] sm:$0xff] %v3860
        %3926 = vst [vmem:[%s3899 + $0xd0] sm:$0xff] %v3861
        %3927 = vst [vmem:[%s3899 + $0xd8] sm:$0xff] %v3862
        %3928 = vst [vmem:[%s3899 + $0xe0] sm:$0xff] %v3863
        %3929 = vst [vmem:[%s3899 + $0xe8] sm:$0xff] %v3864
        %3930 = vst [vmem:[%s3899 + $0xf0] sm:$0xff] %v3865
        %3931 = vst [vmem:[%s3899 + $0xf8] sm:$0xff] %v3866
        %3932 = vst [vmem:[%s3899 + $0x100] sm:$0xff] %v3867
        %3933 = vst [vmem:[%s3899 + $0x108] sm:$0xff] %v3868
        %3934 = vst [vmem:[%s3899 + $0x110] sm:$0xff] %v3869
        %3935 = vst [vmem:[%s3899 + $0x118] sm:$0xff] %v3870
        %3936 = vst [vmem:[%s3899 + $0x120] sm:$0xff] %v3871
        %3937 = vst [vmem:[%s3899 + $0x128] sm:$0xff] %v3872
        %3938 = vst [vmem:[%s3899 + $0x130] sm:$0xff] %v3873
        %3939 = vst [vmem:[%s3899 + $0x138] sm:$0xff] %v3874
        %3940 = vst [vmem:[%s3899 + $0x140] sm:$0xff] %v3875
        %3941 = vst [vmem:[%s3899 + $0x148] sm:$0xff] %v3876
        %3942 = vst [vmem:[%s3899 + $0x150] sm:$0xff] %v3877
        %3943 = vst [vmem:[%s3899 + $0x158] sm:$0xff] %v3878
        %3944 = vst [vmem:[%s3899 + $0x160] sm:$0xff] %v3879
        %3945 = vst [vmem:[%s3899 + $0x168] sm:$0xff] %v3880
        %3946 = vst [vmem:[%s3899 + $0x170] sm:$0xff] %v3881
        %3947 = vst [vmem:[%s3899 + $0x178] sm:$0xff] %v3882
        %3948 = vst [vmem:[%s3899 + $0x180] sm:$0xff] %v3883
        %3949 = vst [vmem:[%s3899 + $0x188] sm:$0xff] %v3884
        %3950 = vst [vmem:[%s3899 + $0x190] sm:$0xff] %v3885
        %3951 = vst [vmem:[%s3899 + $0x198] sm:$0xff] %v3886
        %3952 = vst [vmem:[%s3899 + $0x1a0] sm:$0xff] %v3887
        %3953 = vst [vmem:[%s3899 + $0x1a8] sm:$0xff] %v3888
        %3954 = vst [vmem:[%s3899 + $0x1b0] sm:$0xff] %v3889
        %3955 = vst [vmem:[%s3899 + $0x1b8] sm:$0xff] %v3890
        %3956 = vst [vmem:[%s3899 + $0x1c0] sm:$0xff] %v3891
        %3957 = vst [vmem:[%s3899 + $0x1c8] sm:$0xff] %v3892
        %3958 = vst [vmem:[%s3899 + $0x1d0] sm:$0xff] %v3893
        %3959 = vst [vmem:[%s3899 + $0x1d8] sm:$0xff] %v3894
        %3960 = vst [vmem:[%s3899 + $0x1e0] sm:$0xff] %v3895
        %3961 = vst [vmem:[%s3899 + $0x1e8] sm:$0xff] %v3896
        %3962 = vst [vmem:[%s3899 + $0x1f0] sm:$0xff] %v3897
        %3963 = vst [vmem:[%s3899 + $0x1f8] sm:$0xff] %v3898
        %v3964 = vpack.c.bf16 %v3837, %v3835
        %v3965 = vpack.c.bf16 %v3838, %v3836
        %v3966 = vpack.c.bf16 %v3841, %v3839
        %v3967 = vpack.c.bf16 %v3842, %v3840
        %v3968 = vpack.c.bf16 %v3845, %v3843
        %v3969 = vpack.c.bf16 %v3846, %v3844
        %v3970 = vpack.c.bf16 %v3849, %v3847
        %v3971 = vpack.c.bf16 %v3850, %v3848
        %v3972 = vpack.c.bf16 %v3853, %v3851
        %v3973 = vpack.c.bf16 %v3854, %v3852
        %v3974 = vpack.c.bf16 %v3857, %v3855
        %v3975 = vpack.c.bf16 %v3858, %v3856
        %v3976 = vpack.c.bf16 %v3861, %v3859
        %v3977 = vpack.c.bf16 %v3862, %v3860
        %v3978 = vpack.c.bf16 %v3865, %v3863
        %v3979 = vpack.c.bf16 %v3866, %v3864
        %v3980 = vpack.c.bf16 %v3869, %v3867
        %v3981 = vpack.c.bf16 %v3870, %v3868
        %v3982 = vpack.c.bf16 %v3873, %v3871
        %v3983 = vpack.c.bf16 %v3874, %v3872
        %v3984 = vpack.c.bf16 %v3877, %v3875
        %v3985 = vpack.c.bf16 %v3878, %v3876
        %v3986 = vpack.c.bf16 %v3881, %v3879
        %v3987 = vpack.c.bf16 %v3882, %v3880
        %v3988 = vpack.c.bf16 %v3885, %v3883
        %v3989 = vpack.c.bf16 %v3886, %v3884
        %v3990 = vpack.c.bf16 %v3889, %v3887
        %v3991 = vpack.c.bf16 %v3890, %v3888
        %v3992 = vpack.c.bf16 %v3893, %v3891
        %v3993 = vpack.c.bf16 %v3894, %v3892
        %v3994 = vpack.c.bf16 %v3897, %v3895
        %v3995 = vpack.c.bf16 %v3898, %v3896
        %3996 = vrot.lane.b32.xlu0 %v2487, 96
        %v3997 = vpop.permute.xlu0 %3996
        %3998 = vrot.lane.b32.xlu0 %v2488, 96
        %v3999 = vpop.permute.xlu0 %3998
        %4000 = vrot.lane.b32.xlu0 %v2489, 96
        %v4001 = vpop.permute.xlu0 %4000
        %4002 = vrot.lane.b32.xlu0 %v2490, 96
        %v4003 = vpop.permute.xlu0 %4002
        %4004 = vrot.lane.b32.xlu0 %v2491, 96
        %v4005 = vpop.permute.xlu0 %4004
        %4006 = vrot.lane.b32.xlu0 %v2492, 96
        %v4007 = vpop.permute.xlu0 %4006
        %4008 = vrot.lane.b32.xlu0 %v2493, 96
        %v4009 = vpop.permute.xlu0 %4008
        %4010 = vrot.lane.b32.xlu0 %v2494, 96
        %v4011 = vpop.permute.xlu0 %4010
        %4012 = vrot.lane.b32.xlu0 %v2495, 96
        %v4013 = vpop.permute.xlu0 %4012
        %4014 = vrot.lane.b32.xlu0 %v2496, 96
        %v4015 = vpop.permute.xlu0 %4014
        %4016 = vrot.lane.b32.xlu0 %v2497, 96
        %v4017 = vpop.permute.xlu0 %4016
        %4018 = vrot.lane.b32.xlu0 %v2498, 96
        %v4019 = vpop.permute.xlu0 %4018
        %4020 = vrot.lane.b32.xlu0 %v2499, 96
        %v4021 = vpop.permute.xlu0 %4020
        %4022 = vrot.lane.b32.xlu0 %v2500, 96
        %v4023 = vpop.permute.xlu0 %4022
        %4024 = vrot.lane.b32.xlu0 %v2501, 96
        %v4025 = vpop.permute.xlu0 %4024
        %4026 = vrot.lane.b32.xlu0 %v2502, 96
        %v4027 = vpop.permute.xlu0 %4026
        %4044 = vmatpush.bf16.msra.mxu0 %v4011
        %4045 = vmatpush.bf16.msra.mxu0 %v4009
        %4046 = vmatpush.bf16.msra.mxu0 %v4007
        %4047 = vmatpush.bf16.msra.mxu0 %v4005
        %4048 = vmatpush.bf16.msra.mxu0 %v4003
        %4049 = vmatpush.bf16.msra.mxu0 %v4001
        %4050 = vmatpush.bf16.msra.mxu0 %v3999
        %4051 = vmatpush.bf16.msra.mxu0 %v3997
        %4052 = vmatmul.bf16.gmra.mxu0 %v3964
        %v4053 = vpop.f32.mrf.mxu0
        %v4054 = vadd.f32 0.0, %v4053
        %v4055 = vpop.f32.mrf.mxu0
        %v4056 = vadd.f32 0.0, %v4055
        %4057 = vmatmul.bf16.gmra.mxu0 %v3966
        %v4058 = vpop.f32.mrf.mxu0
        %v4059 = vadd.f32 0.0, %v4058
        %v4060 = vpop.f32.mrf.mxu0
        %v4061 = vadd.f32 0.0, %v4060
        %4062 = vmatmul.bf16.gmra.mxu0 %v3968
        %v4063 = vpop.f32.mrf.mxu0
        %v4064 = vadd.f32 0.0, %v4063
        %v4065 = vpop.f32.mrf.mxu0
        %v4066 = vadd.f32 0.0, %v4065
        %4067 = vmatmul.bf16.gmra.mxu0 %v3970
        %v4068 = vpop.f32.mrf.mxu0
        %v4069 = vadd.f32 0.0, %v4068
        %v4070 = vpop.f32.mrf.mxu0
        %v4071 = vadd.f32 0.0, %v4070
        %4072 = vmatmul.bf16.gmra.mxu0 %v3972
        %v4073 = vpop.f32.mrf.mxu0
        %v4074 = vadd.f32 0.0, %v4073
        %v4075 = vpop.f32.mrf.mxu0
        %v4076 = vadd.f32 0.0, %v4075
        %4077 = vmatmul.bf16.gmra.mxu0 %v3974
        %v4078 = vpop.f32.mrf.mxu0
        %v4079 = vadd.f32 0.0, %v4078
        %v4080 = vpop.f32.mrf.mxu0
        %v4081 = vadd.f32 0.0, %v4080
        %4082 = vmatmul.bf16.gmra.mxu0 %v3976
        %v4083 = vpop.f32.mrf.mxu0
        %v4084 = vadd.f32 0.0, %v4083
        %v4085 = vpop.f32.mrf.mxu0
        %v4086 = vadd.f32 0.0, %v4085
        %4087 = vmatmul.bf16.gmra.mxu0 %v3978
        %v4088 = vpop.f32.mrf.mxu0
        %v4089 = vadd.f32 0.0, %v4088
        %v4090 = vpop.f32.mrf.mxu0
        %v4091 = vadd.f32 0.0, %v4090
        %4092 = vmatmul.bf16.gmra.mxu0 %v3980
        %v4093 = vpop.f32.mrf.mxu0
        %v4094 = vadd.f32 0.0, %v4093
        %v4095 = vpop.f32.mrf.mxu0
        %v4096 = vadd.f32 0.0, %v4095
        %4097 = vmatmul.bf16.gmra.mxu0 %v3982
        %v4098 = vpop.f32.mrf.mxu0
        %v4099 = vadd.f32 0.0, %v4098
        %v4100 = vpop.f32.mrf.mxu0
        %v4101 = vadd.f32 0.0, %v4100
        %4102 = vmatmul.bf16.gmra.mxu0 %v3984
        %v4103 = vpop.f32.mrf.mxu0
        %v4104 = vadd.f32 0.0, %v4103
        %v4105 = vpop.f32.mrf.mxu0
        %v4106 = vadd.f32 0.0, %v4105
        %4107 = vmatmul.bf16.gmra.mxu0 %v3986
        %v4108 = vpop.f32.mrf.mxu0
        %v4109 = vadd.f32 0.0, %v4108
        %v4110 = vpop.f32.mrf.mxu0
        %v4111 = vadd.f32 0.0, %v4110
        %4112 = vmatmul.bf16.gmra.mxu0 %v3988
        %v4113 = vpop.f32.mrf.mxu0
        %v4114 = vadd.f32 0.0, %v4113
        %v4115 = vpop.f32.mrf.mxu0
        %v4116 = vadd.f32 0.0, %v4115
        %4117 = vmatmul.bf16.gmra.mxu0 %v3990
        %v4118 = vpop.f32.mrf.mxu0
        %v4119 = vadd.f32 0.0, %v4118
        %v4120 = vpop.f32.mrf.mxu0
        %v4121 = vadd.f32 0.0, %v4120
        %4122 = vmatmul.bf16.gmra.mxu0 %v3992
        %v4123 = vpop.f32.mrf.mxu0
        %v4124 = vadd.f32 0.0, %v4123
        %v4125 = vpop.f32.mrf.mxu0
        %v4126 = vadd.f32 0.0, %v4125
        %4127 = vmatmul.bf16.gmra.mxu0 %v3994
        %v4128 = vpop.f32.mrf.mxu0
        %v4129 = vadd.f32 0.0, %v4128
        %v4130 = vpop.f32.mrf.mxu0
        %v4131 = vadd.f32 0.0, %v4130
        %4132 = vdwg.mxu0
        %4133 = vmatpush.bf16.msra.mxu0 %v4027
        %4134 = vmatpush.bf16.msra.mxu0 %v4025
        %4135 = vmatpush.bf16.msra.mxu0 %v4023
        %4136 = vmatpush.bf16.msra.mxu0 %v4021
        %4137 = vmatpush.bf16.msra.mxu0 %v4019
        %4138 = vmatpush.bf16.msra.mxu0 %v4017
        %4139 = vmatpush.bf16.msra.mxu0 %v4015
        %4140 = vmatpush.bf16.msra.mxu0 %v4013
        %4141 = vmatmul.bf16.gmra.mxu0 %v3965
        %v4142 = vpop.f32.mrf.mxu0
        %v4143 = vadd.f32 %v4054, %v4142
        %v4144 = vpop.f32.mrf.mxu0
        %v4145 = vadd.f32 %v4056, %v4144
        %4146 = vmatmul.bf16.gmra.mxu0 %v3967
        %v4147 = vpop.f32.mrf.mxu0
        %v4148 = vadd.f32 %v4059, %v4147
        %v4149 = vpop.f32.mrf.mxu0
        %v4150 = vadd.f32 %v4061, %v4149
        %4151 = vmatmul.bf16.gmra.mxu0 %v3969
        %v4152 = vpop.f32.mrf.mxu0
        %v4153 = vadd.f32 %v4064, %v4152
        %v4154 = vpop.f32.mrf.mxu0
        %v4155 = vadd.f32 %v4066, %v4154
        %4156 = vmatmul.bf16.gmra.mxu0 %v3971
        %v4157 = vpop.f32.mrf.mxu0
        %v4158 = vadd.f32 %v4069, %v4157
        %v4159 = vpop.f32.mrf.mxu0
        %v4160 = vadd.f32 %v4071, %v4159
        %4161 = vmatmul.bf16.gmra.mxu0 %v3973
        %v4162 = vpop.f32.mrf.mxu0
        %v4163 = vadd.f32 %v4074, %v4162
        %v4164 = vpop.f32.mrf.mxu0
        %v4165 = vadd.f32 %v4076, %v4164
        %4166 = vmatmul.bf16.gmra.mxu0 %v3975
        %v4167 = vpop.f32.mrf.mxu0
        %v4168 = vadd.f32 %v4079, %v4167
        %v4169 = vpop.f32.mrf.mxu0
        %v4170 = vadd.f32 %v4081, %v4169
        %4171 = vmatmul.bf16.gmra.mxu0 %v3977
        %v4172 = vpop.f32.mrf.mxu0
        %v4173 = vadd.f32 %v4084, %v4172
        %v4174 = vpop.f32.mrf.mxu0
        %v4175 = vadd.f32 %v4086, %v4174
        %4176 = vmatmul.bf16.gmra.mxu0 %v3979
        %v4177 = vpop.f32.mrf.mxu0
        %v4178 = vadd.f32 %v4089, %v4177
        %v4179 = vpop.f32.mrf.mxu0
        %v4180 = vadd.f32 %v4091, %v4179
        %4181 = vmatmul.bf16.gmra.mxu0 %v3981
        %v4182 = vpop.f32.mrf.mxu0
        %v4183 = vadd.f32 %v4094, %v4182
        %v4184 = vpop.f32.mrf.mxu0
        %v4185 = vadd.f32 %v4096, %v4184
        %4186 = vmatmul.bf16.gmra.mxu0 %v3983
        %v4187 = vpop.f32.mrf.mxu0
        %v4188 = vadd.f32 %v4099, %v4187
        %v4189 = vpop.f32.mrf.mxu0
        %v4190 = vadd.f32 %v4101, %v4189
        %4191 = vmatmul.bf16.gmra.mxu0 %v3985
        %v4192 = vpop.f32.mrf.mxu0
        %v4193 = vadd.f32 %v4104, %v4192
        %v4194 = vpop.f32.mrf.mxu0
        %v4195 = vadd.f32 %v4106, %v4194
        %4196 = vmatmul.bf16.gmra.mxu0 %v3987
        %v4197 = vpop.f32.mrf.mxu0
        %v4198 = vadd.f32 %v4109, %v4197
        %v4199 = vpop.f32.mrf.mxu0
        %v4200 = vadd.f32 %v4111, %v4199
        %4201 = vmatmul.bf16.gmra.mxu0 %v3989
        %v4202 = vpop.f32.mrf.mxu0
        %v4203 = vadd.f32 %v4114, %v4202
        %v4204 = vpop.f32.mrf.mxu0
        %v4205 = vadd.f32 %v4116, %v4204
        %4206 = vmatmul.bf16.gmra.mxu0 %v3991
        %v4207 = vpop.f32.mrf.mxu0
        %v4208 = vadd.f32 %v4119, %v4207
        %v4209 = vpop.f32.mrf.mxu0
        %v4210 = vadd.f32 %v4121, %v4209
        %4211 = vmatmul.bf16.gmra.mxu0 %v3993
        %v4212 = vpop.f32.mrf.mxu0
        %v4213 = vadd.f32 %v4124, %v4212
        %v4214 = vpop.f32.mrf.mxu0
        %v4215 = vadd.f32 %v4126, %v4214
        %4216 = vmatmul.bf16.gmra.mxu0 %v3995
        %v4217 = vpop.f32.mrf.mxu0
        %v4218 = vadd.f32 %v4129, %v4217
        %v4219 = vpop.f32.mrf.mxu0
        %v4220 = vadd.f32 %v4131, %v4219
        %4221 = vdwg.mxu0
        %4254 = vrot.lane.b32.xlu0 %v4143, 32
        %v4255 = vpop.permute.xlu0 %4254
        %4256 = vrot.lane.b32.xlu0 %v4145, 32
        %v4257 = vpop.permute.xlu0 %4256
        %4258 = vrot.lane.b32.xlu0 %v4148, 32
        %v4259 = vpop.permute.xlu0 %4258
        %4260 = vrot.lane.b32.xlu0 %v4150, 32
        %v4261 = vpop.permute.xlu0 %4260
        %4262 = vrot.lane.b32.xlu0 %v4153, 32
        %v4263 = vpop.permute.xlu0 %4262
        %4264 = vrot.lane.b32.xlu0 %v4155, 32
        %v4265 = vpop.permute.xlu0 %4264
        %4266 = vrot.lane.b32.xlu0 %v4158, 32
        %v4267 = vpop.permute.xlu0 %4266
        %4268 = vrot.lane.b32.xlu0 %v4160, 32
        %v4269 = vpop.permute.xlu0 %4268
        %4270 = vrot.lane.b32.xlu0 %v4163, 32
        %v4271 = vpop.permute.xlu0 %4270
        %4272 = vrot.lane.b32.xlu0 %v4165, 32
        %v4273 = vpop.permute.xlu0 %4272
        %4274 = vrot.lane.b32.xlu0 %v4168, 32
        %v4275 = vpop.permute.xlu0 %4274
        %4276 = vrot.lane.b32.xlu0 %v4170, 32
        %v4277 = vpop.permute.xlu0 %4276
        %4278 = vrot.lane.b32.xlu0 %v4173, 32
        %v4279 = vpop.permute.xlu0 %4278
        %4280 = vrot.lane.b32.xlu0 %v4175, 32
        %v4281 = vpop.permute.xlu0 %4280
        %4282 = vrot.lane.b32.xlu0 %v4178, 32
        %v4283 = vpop.permute.xlu0 %4282
        %4284 = vrot.lane.b32.xlu0 %v4180, 32
        %v4285 = vpop.permute.xlu0 %4284
        %4286 = vrot.lane.b32.xlu0 %v4183, 32
        %v4287 = vpop.permute.xlu0 %4286
        %4288 = vrot.lane.b32.xlu0 %v4185, 32
        %v4289 = vpop.permute.xlu0 %4288
        %4290 = vrot.lane.b32.xlu0 %v4188, 32
        %v4291 = vpop.permute.xlu0 %4290
        %4292 = vrot.lane.b32.xlu0 %v4190, 32
        %v4293 = vpop.permute.xlu0 %4292
        %4294 = vrot.lane.b32.xlu0 %v4193, 32
        %v4295 = vpop.permute.xlu0 %4294
        %4296 = vrot.lane.b32.xlu0 %v4195, 32
        %v4297 = vpop.permute.xlu0 %4296
        %4298 = vrot.lane.b32.xlu0 %v4198, 32
        %v4299 = vpop.permute.xlu0 %4298
        %4300 = vrot.lane.b32.xlu0 %v4200, 32
        %v4301 = vpop.permute.xlu0 %4300
        %4302 = vrot.lane.b32.xlu0 %v4203, 32
        %v4303 = vpop.permute.xlu0 %4302
        %4304 = vrot.lane.b32.xlu0 %v4205, 32
        %v4305 = vpop.permute.xlu0 %4304
        %4306 = vrot.lane.b32.xlu0 %v4208, 32
        %v4307 = vpop.permute.xlu0 %4306
        %4308 = vrot.lane.b32.xlu0 %v4210, 32
        %v4309 = vpop.permute.xlu0 %4308
        %4310 = vrot.lane.b32.xlu0 %v4213, 32
        %v4311 = vpop.permute.xlu0 %4310
        %4312 = vrot.lane.b32.xlu0 %v4215, 32
        %v4313 = vpop.permute.xlu0 %4312
        %4314 = vrot.lane.b32.xlu0 %v4218, 32
        %v4315 = vpop.permute.xlu0 %4314
        %4316 = vrot.lane.b32.xlu0 %v4220, 32
        %v4317 = vpop.permute.xlu0 %4316
        %v4350 = vsel %vm747, %v2618, %v4255
        %v4351 = vsel %vm747, %v2620, %v4257
        %v4352 = vsel %vm747, %v2623, %v4259
        %v4353 = vsel %vm747, %v2625, %v4261
        %v4354 = vsel %vm747, %v2628, %v4263
        %v4355 = vsel %vm747, %v2630, %v4265
        %v4356 = vsel %vm747, %v2633, %v4267
        %v4357 = vsel %vm747, %v2635, %v4269
        %v4358 = vsel %vm747, %v2638, %v4271
        %v4359 = vsel %vm747, %v2640, %v4273
        %v4360 = vsel %vm747, %v2643, %v4275
        %v4361 = vsel %vm747, %v2645, %v4277
        %v4362 = vsel %vm747, %v2648, %v4279
        %v4363 = vsel %vm747, %v2650, %v4281
        %v4364 = vsel %vm747, %v2653, %v4283
        %v4365 = vsel %vm747, %v2655, %v4285
        %v4366 = vsel %vm747, %v2658, %v4287
        %v4367 = vsel %vm747, %v2660, %v4289
        %v4368 = vsel %vm747, %v2663, %v4291
        %v4369 = vsel %vm747, %v2665, %v4293
        %v4370 = vsel %vm747, %v2668, %v4295
        %v4371 = vsel %vm747, %v2670, %v4297
        %v4372 = vsel %vm747, %v2673, %v4299
        %v4373 = vsel %vm747, %v2675, %v4301
        %v4374 = vsel %vm747, %v2678, %v4303
        %v4375 = vsel %vm747, %v2680, %v4305
        %v4376 = vsel %vm747, %v2683, %v4307
        %v4377 = vsel %vm747, %v2685, %v4309
        %v4378 = vsel %vm747, %v2688, %v4311
        %v4379 = vsel %vm747, %v2690, %v4313
        %v4380 = vsel %vm747, %v2693, %v4315
        %v4381 = vsel %vm747, %v2695, %v4317
        %vm4382 = vcmask 523264
        %4383 = vst.msk [vmem:[%s578] sm:$0xff] %vm4382, %v4350
        %4384 = vst.msk [vmem:[%s578 + $0x8] sm:$0xff] %vm4382, %v4351
        %4385 = vst.msk [vmem:[%s578 + $0x10] sm:$0xff] %vm4382, %v4352
        %4386 = vst.msk [vmem:[%s578 + $0x18] sm:$0xff] %vm4382, %v4353
        %4387 = vst.msk [vmem:[%s578 + $0x20] sm:$0xff] %vm4382, %v4354
        %4388 = vst.msk [vmem:[%s578 + $0x28] sm:$0xff] %vm4382, %v4355
        %4389 = vst.msk [vmem:[%s578 + $0x30] sm:$0xff] %vm4382, %v4356
        %4390 = vst.msk [vmem:[%s578 + $0x38] sm:$0xff] %vm4382, %v4357
        %4391 = vst.msk [vmem:[%s578 + $0x40] sm:$0xff] %vm4382, %v4358
        %4392 = vst.msk [vmem:[%s578 + $0x48] sm:$0xff] %vm4382, %v4359
        %4393 = vst.msk [vmem:[%s578 + $0x50] sm:$0xff] %vm4382, %v4360
        %4394 = vst.msk [vmem:[%s578 + $0x58] sm:$0xff] %vm4382, %v4361
        %4395 = vst.msk [vmem:[%s578 + $0x60] sm:$0xff] %vm4382, %v4362
        %4396 = vst.msk [vmem:[%s578 + $0x68] sm:$0xff] %vm4382, %v4363
        %4397 = vst.msk [vmem:[%s578 + $0x70] sm:$0xff] %vm4382, %v4364
        %4398 = vst.msk [vmem:[%s578 + $0x78] sm:$0xff] %vm4382, %v4365
        %4399 = vst.msk [vmem:[%s578 + $0x80] sm:$0xff] %vm4382, %v4366
        %4400 = vst.msk [vmem:[%s578 + $0x88] sm:$0xff] %vm4382, %v4367
        %4401 = vst.msk [vmem:[%s578 + $0x90] sm:$0xff] %vm4382, %v4368
        %4402 = vst.msk [vmem:[%s578 + $0x98] sm:$0xff] %vm4382, %v4369
        %4403 = vst.msk [vmem:[%s578 + $0xa0] sm:$0xff] %vm4382, %v4370
        %4404 = vst.msk [vmem:[%s578 + $0xa8] sm:$0xff] %vm4382, %v4371
        %4405 = vst.msk [vmem:[%s578 + $0xb0] sm:$0xff] %vm4382, %v4372
        %4406 = vst.msk [vmem:[%s578 + $0xb8] sm:$0xff] %vm4382, %v4373
        %4407 = vst.msk [vmem:[%s578 + $0xc0] sm:$0xff] %vm4382, %v4374
        %4408 = vst.msk [vmem:[%s578 + $0xc8] sm:$0xff] %vm4382, %v4375
        %4409 = vst.msk [vmem:[%s578 + $0xd0] sm:$0xff] %vm4382, %v4376
        %4410 = vst.msk [vmem:[%s578 + $0xd8] sm:$0xff] %vm4382, %v4377
        %4411 = vst.msk [vmem:[%s578 + $0xe0] sm:$0xff] %vm4382, %v4378
        %4412 = vst.msk [vmem:[%s578 + $0xe8] sm:$0xff] %vm4382, %v4379
        %4413 = vst.msk [vmem:[%s578 + $0xf0] sm:$0xff] %vm4382, %v4380
        %4414 = vst.msk [vmem:[%s578 + $0xf8] sm:$0xff] %vm4382, %v4381
        %s4415 = sand.u32 %s122, 1
        %s4416 = sand.u32 %s122, 1
        %s4417 = smul.addr %s4416, 256
        %s4418 = scalar_lea.vmem [#allocation4], %s4417
        %s4419 = sand.u32 %s148, 1
        %s4420 = scalar_lea.sflag [#allocation6], %s4419
        %s4421 = sand.u32 %s148, 1
        %s4422 = smul.addr %s4421, 1024
        %s4423 = scalar_lea.vmem [#allocation5], %s4422
        // Predicated region
        $region119: #{multi_head_attention.4} parent=109 // pred_check
          %p4424 = pneg %p132
        $region120: #{multi_head_attention.4} parent=109 // pred_check_branch
          %4426 = sbr.rel (%p4424) target = $region122
        $region121: #{multi_head_attention.4} parent=109 // pred_region
          %s4427 = smul.addr %s20, 8
          %s4428 = smul.addr %s4427, 8
          %s4429 = scalar_lea.vmem %s4, %s4428
          // Predicated region
          $region123: #{multi_head_attention.4} parent=121 // pred_check
            _
          $region124: #{multi_head_attention.4} parent=121 // pred_check_branch
            %4431 = sbr.rel (0) target = $region126
          $region125: #{multi_head_attention.4} parent=121 // pred_region
            // Predicated region
            $region127: #{multi_head_attention.4} parent=125 // pred_check
              _
            $region128: #{multi_head_attention.4} parent=125 // pred_check_branch
              %4433 = sbr.rel (0) target = $region130
            $region129: #{multi_head_attention.4} parent=125 // pred_region
              // Predicated region
              $region142: #{multi_head_attention.4} parent=129 // pred_check
                _
              $region143: #{multi_head_attention.4} parent=129 // pred_check_branch
                %4511 = sbr.rel (0) target = $region145
              $region144: #{multi_head_attention.4} parent=129 // pred_region
                loop: start=0, step=1, limit=1
                $region146: #{multi_head_attention.4} parent=144 // loop_pre_header
                  _
                $region147: #{multi_head_attention.4} parent=144 // loop_header
                  %s4513 = sphi 0, %s4517
                  %p4514 = scmp.ge.s32.totalorder %s4513, 1
                  %s4518 = sphi %s4418, %s4418
                  %s4519 = sphi %s4429, %s4429
                $region148: #{multi_head_attention.4} parent=144 // loop_header_branch
                  %4516 = sbr.rel (%p4514) target = $region152
                $region149: #{multi_head_attention.4} parent=144 // loop_body
                  %v4520 = vld [vmem:[%s4518] sm:$0xff]
                  %4521 = vst [vmem:[%s4519] sm:$0xff] %v4520
                  %v4522 = vld [vmem:[%s4518 + $0x8] sm:$0xff]
                  %4523 = vst [vmem:[%s4519 + $0x8] sm:$0xff] %v4522
                  %v4524 = vld [vmem:[%s4518 + $0x10] sm:$0xff]
                  %4525 = vst [vmem:[%s4519 + $0x10] sm:$0xff] %v4524
                  %v4526 = vld [vmem:[%s4518 + $0x18] sm:$0xff]
                  %4527 = vst [vmem:[%s4519 + $0x18] sm:$0xff] %v4526
                  %v4528 = vld [vmem:[%s4518 + $0x20] sm:$0xff]
                  %4529 = vst [vmem:[%s4519 + $0x20] sm:$0xff] %v4528
                  %v4530 = vld [vmem:[%s4518 + $0x28] sm:$0xff]
                  %4531 = vst [vmem:[%s4519 + $0x28] sm:$0xff] %v4530
                  %v4532 = vld [vmem:[%s4518 + $0x30] sm:$0xff]
                  %4533 = vst [vmem:[%s4519 + $0x30] sm:$0xff] %v4532
                  %v4534 = vld [vmem:[%s4518 + $0x38] sm:$0xff]
                  %4535 = vst [vmem:[%s4519 + $0x38] sm:$0xff] %v4534
                  %v4536 = vld [vmem:[%s4518 + $0x40] sm:$0xff]
                  %4537 = vst [vmem:[%s4519 + $0x80] sm:$0xff] %v4536
                  %v4538 = vld [vmem:[%s4518 + $0x48] sm:$0xff]
                  %4539 = vst [vmem:[%s4519 + $0x88] sm:$0xff] %v4538
                  %v4540 = vld [vmem:[%s4518 + $0x50] sm:$0xff]
                  %4541 = vst [vmem:[%s4519 + $0x90] sm:$0xff] %v4540
                  %v4542 = vld [vmem:[%s4518 + $0x58] sm:$0xff]
                  %4543 = vst [vmem:[%s4519 + $0x98] sm:$0xff] %v4542
                  %v4544 = vld [vmem:[%s4518 + $0x60] sm:$0xff]
                  %4545 = vst [vmem:[%s4519 + $0xa0] sm:$0xff] %v4544
                  %v4546 = vld [vmem:[%s4518 + $0x68] sm:$0xff]
                  %4547 = vst [vmem:[%s4519 + $0xa8] sm:$0xff] %v4546
                  %v4548 = vld [vmem:[%s4518 + $0x70] sm:$0xff]
                  %4549 = vst [vmem:[%s4519 + $0xb0] sm:$0xff] %v4548
                  %v4550 = vld [vmem:[%s4518 + $0x78] sm:$0xff]
                  %4551 = vst [vmem:[%s4519 + $0xb8] sm:$0xff] %v4550
                  %v4552 = vld [vmem:[%s4518 + $0x80] sm:$0xff]
                  %4553 = vst [vmem:[%s4519 + $0x100] sm:$0xff] %v4552
                  %v4554 = vld [vmem:[%s4518 + $0x88] sm:$0xff]
                  %4555 = vst [vmem:[%s4519 + $0x108] sm:$0xff] %v4554
                  %v4556 = vld [vmem:[%s4518 + $0x90] sm:$0xff]
                  %4557 = vst [vmem:[%s4519 + $0x110] sm:$0xff] %v4556
                  %v4558 = vld [vmem:[%s4518 + $0x98] sm:$0xff]
                  %4559 = vst [vmem:[%s4519 + $0x118] sm:$0xff] %v4558
                  %v4560 = vld [vmem:[%s4518 + $0xa0] sm:$0xff]
                  %4561 = vst [vmem:[%s4519 + $0x120] sm:$0xff] %v4560
                  %v4562 = vld [vmem:[%s4518 + $0xa8] sm:$0xff]
                  %4563 = vst [vmem:[%s4519 + $0x128] sm:$0xff] %v4562
                  %v4564 = vld [vmem:[%s4518 + $0xb0] sm:$0xff]
                  %4565 = vst [vmem:[%s4519 + $0x130] sm:$0xff] %v4564
                  %v4566 = vld [vmem:[%s4518 + $0xb8] sm:$0xff]
                  %4567 = vst [vmem:[%s4519 + $0x138] sm:$0xff] %v4566
                  %v4568 = vld [vmem:[%s4518 + $0xc0] sm:$0xff]
                  %4569 = vst [vmem:[%s4519 + $0x180] sm:$0xff] %v4568
                  %v4570 = vld [vmem:[%s4518 + $0xc8] sm:$0xff]
                  %4571 = vst [vmem:[%s4519 + $0x188] sm:$0xff] %v4570
                  %v4572 = vld [vmem:[%s4518 + $0xd0] sm:$0xff]
                  %4573 = vst [vmem:[%s4519 + $0x190] sm:$0xff] %v4572
                  %v4574 = vld [vmem:[%s4518 + $0xd8] sm:$0xff]
                  %4575 = vst [vmem:[%s4519 + $0x198] sm:$0xff] %v4574
                  %v4576 = vld [vmem:[%s4518 + $0xe0] sm:$0xff]
                  %4577 = vst [vmem:[%s4519 + $0x1a0] sm:$0xff] %v4576
                  %v4578 = vld [vmem:[%s4518 + $0xe8] sm:$0xff]
                  %4579 = vst [vmem:[%s4519 + $0x1a8] sm:$0xff] %v4578
                  %v4580 = vld [vmem:[%s4518 + $0xf0] sm:$0xff]
                  %4581 = vst [vmem:[%s4519 + $0x1b0] sm:$0xff] %v4580
                  %v4582 = vld [vmem:[%s4518 + $0xf8] sm:$0xff]
                  %4583 = vst [vmem:[%s4519 + $0x1b8] sm:$0xff] %v4582
                $region150: #{multi_head_attention.4} parent=144 // loop_footer
                  %s4517 = sadd.s32 1, %s4513
                $region151: #{multi_head_attention.4} parent=144 // loop_footer_branch
                  %4512 = sbr.rel target = $region147
                $region152: #{multi_head_attention.4} parent=144 // loop_exit
                  _
              $region145: #{multi_head_attention.4} parent=129 // pred_fallthru
                _
              // Predicated region
              $region153: #{multi_head_attention.4} parent=129 // pred_check
                _
              $region154: #{multi_head_attention.4} parent=129 // pred_check_branch
                %4585 = sbr.rel target = $region156
              $region155: #{multi_head_attention.4} parent=129 // pred_region
                _
              $region156: #{multi_head_attention.4} parent=129 // pred_fallthru
                _
            $region130: #{multi_head_attention.4} parent=125 // pred_fallthru
              _
            // Predicated region
            $region131: #{multi_head_attention.4} parent=125 // pred_check
              _
            $region132: #{multi_head_attention.4} parent=125 // pred_check_branch
              %4435 = sbr.rel target = $region134
            $region133: #{multi_head_attention.4} parent=125 // pred_region
              %s4437 = ssub.s32 256, 1
              loop: start=0, step=1, limit=1
              $region135: #{multi_head_attention.4} parent=133 // loop_pre_header
                _
              $region136: #{multi_head_attention.4} parent=133 // loop_header
                %s4439 = sphi 0, %s4443
                %p4440 = scmp.ge.s32.totalorder %s4439, 1
                %s4444 = sphi %s4418, %s4418
                %s4445 = sphi %s4429, %s4429
              $region137: #{multi_head_attention.4} parent=133 // loop_header_branch
                %4442 = sbr.rel (%p4440) target = $region141
              $region138: #{multi_head_attention.4} parent=133 // loop_body
                %v4446 = vld [vmem:[%s4444] sm:%s4437]
                %4447 = vst [vmem:[%s4445] sm:%s4437] %v4446
                %v4448 = vld [vmem:[%s4444 + $0x8] sm:%s4437]
                %4449 = vst [vmem:[%s4445 + $0x8] sm:%s4437] %v4448
                %v4450 = vld [vmem:[%s4444 + $0x10] sm:%s4437]
                %4451 = vst [vmem:[%s4445 + $0x10] sm:%s4437] %v4450
                %v4452 = vld [vmem:[%s4444 + $0x18] sm:%s4437]
                %4453 = vst [vmem:[%s4445 + $0x18] sm:%s4437] %v4452
                %v4454 = vld [vmem:[%s4444 + $0x20] sm:%s4437]
                %4455 = vst [vmem:[%s4445 + $0x20] sm:%s4437] %v4454
                %v4456 = vld [vmem:[%s4444 + $0x28] sm:%s4437]
                %4457 = vst [vmem:[%s4445 + $0x28] sm:%s4437] %v4456
                %v4458 = vld [vmem:[%s4444 + $0x30] sm:%s4437]
                %4459 = vst [vmem:[%s4445 + $0x30] sm:%s4437] %v4458
                %v4460 = vld [vmem:[%s4444 + $0x38] sm:%s4437]
                %4461 = vst [vmem:[%s4445 + $0x38] sm:%s4437] %v4460
                %v4462 = vld [vmem:[%s4444 + $0x40] sm:%s4437]
                %4463 = vst [vmem:[%s4445 + $0x80] sm:%s4437] %v4462
                %v4464 = vld [vmem:[%s4444 + $0x48] sm:%s4437]
                %4465 = vst [vmem:[%s4445 + $0x88] sm:%s4437] %v4464
                %v4466 = vld [vmem:[%s4444 + $0x50] sm:%s4437]
                %4467 = vst [vmem:[%s4445 + $0x90] sm:%s4437] %v4466
                %v4468 = vld [vmem:[%s4444 + $0x58] sm:%s4437]
                %4469 = vst [vmem:[%s4445 + $0x98] sm:%s4437] %v4468
                %v4470 = vld [vmem:[%s4444 + $0x60] sm:%s4437]
                %4471 = vst [vmem:[%s4445 + $0xa0] sm:%s4437] %v4470
                %v4472 = vld [vmem:[%s4444 + $0x68] sm:%s4437]
                %4473 = vst [vmem:[%s4445 + $0xa8] sm:%s4437] %v4472
                %v4474 = vld [vmem:[%s4444 + $0x70] sm:%s4437]
                %4475 = vst [vmem:[%s4445 + $0xb0] sm:%s4437] %v4474
                %v4476 = vld [vmem:[%s4444 + $0x78] sm:%s4437]
                %4477 = vst [vmem:[%s4445 + $0xb8] sm:%s4437] %v4476
                %v4478 = vld [vmem:[%s4444 + $0x80] sm:%s4437]
                %4479 = vst [vmem:[%s4445 + $0x100] sm:%s4437] %v4478
                %v4480 = vld [vmem:[%s4444 + $0x88] sm:%s4437]
                %4481 = vst [vmem:[%s4445 + $0x108] sm:%s4437] %v4480
                %v4482 = vld [vmem:[%s4444 + $0x90] sm:%s4437]
                %4483 = vst [vmem:[%s4445 + $0x110] sm:%s4437] %v4482
                %v4484 = vld [vmem:[%s4444 + $0x98] sm:%s4437]
                %4485 = vst [vmem:[%s4445 + $0x118] sm:%s4437] %v4484
                %v4486 = vld [vmem:[%s4444 + $0xa0] sm:%s4437]
                %4487 = vst [vmem:[%s4445 + $0x120] sm:%s4437] %v4486
                %v4488 = vld [vmem:[%s4444 + $0xa8] sm:%s4437]
                %4489 = vst [vmem:[%s4445 + $0x128] sm:%s4437] %v4488
                %v4490 = vld [vmem:[%s4444 + $0xb0] sm:%s4437]
                %4491 = vst [vmem:[%s4445 + $0x130] sm:%s4437] %v4490
                %v4492 = vld [vmem:[%s4444 + $0xb8] sm:%s4437]
                %4493 = vst [vmem:[%s4445 + $0x138] sm:%s4437] %v4492
                %v4494 = vld [vmem:[%s4444 + $0xc0] sm:%s4437]
                %4495 = vst [vmem:[%s4445 + $0x180] sm:%s4437] %v4494
                %v4496 = vld [vmem:[%s4444 + $0xc8] sm:%s4437]
                %4497 = vst [vmem:[%s4445 + $0x188] sm:%s4437] %v4496
                %v4498 = vld [vmem:[%s4444 + $0xd0] sm:%s4437]
                %4499 = vst [vmem:[%s4445 + $0x190] sm:%s4437] %v4498
                %v4500 = vld [vmem:[%s4444 + $0xd8] sm:%s4437]
                %4501 = vst [vmem:[%s4445 + $0x198] sm:%s4437] %v4500
                %v4502 = vld [vmem:[%s4444 + $0xe0] sm:%s4437]
                %4503 = vst [vmem:[%s4445 + $0x1a0] sm:%s4437] %v4502
                %v4504 = vld [vmem:[%s4444 + $0xe8] sm:%s4437]
                %4505 = vst [vmem:[%s4445 + $0x1a8] sm:%s4437] %v4504
                %v4506 = vld [vmem:[%s4444 + $0xf0] sm:%s4437]
                %4507 = vst [vmem:[%s4445 + $0x1b0] sm:%s4437] %v4506
                %v4508 = vld [vmem:[%s4444 + $0xf8] sm:%s4437]
                %4509 = vst [vmem:[%s4445 + $0x1b8] sm:%s4437] %v4508
              $region139: #{multi_head_attention.4} parent=133 // loop_footer
                %s4443 = sadd.s32 1, %s4439
              $region140: #{multi_head_attention.4} parent=133 // loop_footer_branch
                %4438 = sbr.rel target = $region136
              $region141: #{multi_head_attention.4} parent=133 // loop_exit
                _
            $region134: #{multi_head_attention.4} parent=125 // pred_fallthru
              _
          $region126: #{multi_head_attention.4} parent=121 // pred_fallthru
            _
          %4586 = vnop
        $region122: #{multi_head_attention.4} parent=109 // pred_fallthru
          _
        // Predicated region
        $region157: #{multi_head_attention.4} parent=109 // pred_check
          %p4587 = pneg %p158
        $region158: #{multi_head_attention.4} parent=109 // pred_check_branch
          %4589 = sbr.rel (%p4587) target = $region160
        $region159: #{multi_head_attention.4} parent=109 // pred_region
          %4591 = vsyncadd %s4420, 0
          %s4592 = smul.addr %s20, 128
          %s4593 = smul.addr %s4592, 8
          %s4594 = scalar_lea.hbm %s5, %s4593
          %s4595 = sshll.u32 %s4423, 4
          %s4596 = int_to_ptr.vmem [resolvable:$true] %s4595
          %s4597 = sshll.u32 %s4594, 4
          %s4598 = int_to_ptr.hbm [resolvable:$true] %s4597
          %4603 = dma.vmem_to_hbm [thread:$0]  %s4596, 16384, %s4598, %s4420, 256, 256, 16
        $region160: #{multi_head_attention.4} parent=109 // pred_fallthru
          _
      $region110: #{multi_head_attention.4} parent=5 // pred_fallthru
        _
      %p4604 = scmp.le.s32.totalorder 2, %s15
      // Predicated region
      $region161: #{multi_head_attention.4} parent=5 // pred_check
        %p4605 = pneg %p4604
      $region162: #{multi_head_attention.4} parent=5 // pred_check_branch
        %4607 = sbr.rel (%p4605) target = $region164
      $region163: #{multi_head_attention.4} parent=5 // pred_region
        %s4608 = ssub.s32 %s15, 2
        // Predicated region
        $region165: #{multi_head_attention.4} parent=163 // pred_check
          %p4609 = pneg %p138
        $region166: #{multi_head_attention.4} parent=163 // pred_check_branch
          %4611 = sbr.rel (%p4609) target = $region168
        $region167: #{multi_head_attention.4} parent=163 // pred_region
          %s4612 = sand.u32 %s123, 1
          %s4613 = sand.u32 %s123, 1
          %s4614 = smul.addr %s4613, 256
          %s4615 = scalar_lea.vmem [#allocation4], %s4614
        $region168: #{multi_head_attention.4} parent=163 // pred_fallthru
          _
        // Predicated region
        $region169: #{multi_head_attention.4} parent=163 // pred_check
          %p4616 = pneg %p164
        $region170: #{multi_head_attention.4} parent=163 // pred_check_branch
          %4618 = sbr.rel (%p4616) target = $region172
        $region171: #{multi_head_attention.4} parent=163 // pred_region
          %s4619 = sand.u32 %s149, 1
          %s4620 = scalar_lea.sflag [#allocation6], %s4619
          %s4621 = sand.u32 %s149, 1
          %s4622 = smul.addr %s4621, 1024
          %s4623 = scalar_lea.vmem [#allocation5], %s4622
          %4625 = dma.done %s4620, 16384
        $region172: #{multi_head_attention.4} parent=163 // pred_fallthru
          _
      $region164: #{multi_head_attention.4} parent=5 // pred_fallthru
        _
    $region6: #{multi_head_attention.4} parent=1 // loop_footer
      %s19 = sadd.s32 1, %s15
    $region7: #{multi_head_attention.4} parent=1 // loop_footer_branch
      %14 = sbr.rel target = $region3
    $region8: #{multi_head_attention.4} parent=1 // loop_exit
      _
    %4626 = vsyncpa [#allocation6], 1
    %s4627 = scalar_lea.sflag [#allocation6], 1
    %4628 = vsyncpa %s4627, 1

// kernel: multi_head_attention.5
$region0: #{multi_head_attention.5}
  #allocation0 [shape = 'u32[]', space=smem, size = 0x4, offset = 0x4, fixed_abs, tag = 'smem constant byte address 0x4 - core index']
  #allocation1 [shape = 'u32[72,128]{1,0:T(1,128)}', space=vmem, size = 0x9000, scoped, tag = 'internal scratch']
  #allocation2 [shape = 'f32[4,128,64]{2,1,0:T(8,128)}', space=vmem, size = 0x40000, scoped, tag = 'scratch operand']
  #allocation3 [shape = 'bf16[4,128,64]{2,1,0:T(8,128)(2,1)}', space=vmem, size = 0x20000, scoped, tag = 'scratch operand']
  #allocation4 [shape = 'f32[4,128,32]{2,1,0:T(8,128)}', space=vmem, size = 0x40000, scoped, tag = 'scratch operand']
  %s0 = inlined_call_operand.vmem [shape: f32[512,64], index: 0, kind: input, shape index: {}]
  %s1 = inlined_call_operand.vmem [shape: bf16[64,32], index: 1, kind: input, shape index: {}]
  %s2 = inlined_call_operand.vmem [shape: f32[1,32], index: 2, kind: input, shape index: {}]
  %s3 = inlined_call_operand.hbm [shape: f32[4,128,32], index: 3, kind: output, shape index: {}]
  %s4 = sld [smem:[#allocation0]]
  $region22: #{multi_head_attention.5} parent=0
    _
  %s6 = ssub.s32 1, %s4
  %s7 = scalar_select 0, %s6, %s4
  $region1: #{multi_head_attention.5} parent=0
    #allocation5 [shape = 'u8[262144]{0}', space=vmem, size = 0x40000, scoped, tag = 'output window, operand 0, single buffered']
    #allocation6 [shape = 's32[1]{0}', space=sflag, size = 0x4, scoped, tag = 'scoped memory for multi_head_attention.5']
    %8 = vsyncpa [#allocation6], 0
    // Predicated region
    $region2: #{multi_head_attention.5} parent=1 // pred_check
      _
    $region3: #{multi_head_attention.5} parent=1 // pred_check_branch
      %10 = sbr.rel (0) target = $region5
    $region4: #{multi_head_attention.5} parent=1 // pred_region
      _
    $region5: #{multi_head_attention.5} parent=1 // pred_fallthru
      _
    // Predicated region
    $region6: #{multi_head_attention.5} parent=1 // pred_check
      _
    $region7: #{multi_head_attention.5} parent=1 // pred_check_branch
      %12 = sbr.rel (0) target = $region9
    $region8: #{multi_head_attention.5} parent=1 // pred_region
      _
    $region9: #{multi_head_attention.5} parent=1 // pred_fallthru
      _
    // Predicated region
    $region10: #{multi_head_attention.5} parent=1 // pred_check
      _
    $region11: #{multi_head_attention.5} parent=1 // pred_check_branch
      %14 = sbr.rel (0) target = $region13
    $region12: #{multi_head_attention.5} parent=1 // pred_region
      _
    $region13: #{multi_head_attention.5} parent=1 // pred_fallthru
      _
    %v16 = vld [vmem:[%s0] sm:$0xff]
    %v17 = vld [vmem:[%s0 + $0x8] sm:$0xff]
    %v18 = vld [vmem:[%s0 + $0x10] sm:$0xff]
    %v19 = vld [vmem:[%s0 + $0x18] sm:$0xff]
    %v20 = vld [vmem:[%s0 + $0x20] sm:$0xff]
    %v21 = vld [vmem:[%s0 + $0x28] sm:$0xff]
    %v22 = vld [vmem:[%s0 + $0x30] sm:$0xff]
    %v23 = vld [vmem:[%s0 + $0x38] sm:$0xff]
    %v24 = vld [vmem:[%s0 + $0x40] sm:$0xff]
    %v25 = vld [vmem:[%s0 + $0x48] sm:$0xff]
    %v26 = vld [vmem:[%s0 + $0x50] sm:$0xff]
    %v27 = vld [vmem:[%s0 + $0x58] sm:$0xff]
    %v28 = vld [vmem:[%s0 + $0x60] sm:$0xff]
    %v29 = vld [vmem:[%s0 + $0x68] sm:$0xff]
    %v30 = vld [vmem:[%s0 + $0x70] sm:$0xff]
    %v31 = vld [vmem:[%s0 + $0x78] sm:$0xff]
    %v32 = vld [vmem:[%s0 + $0x80] sm:$0xff]
    %v33 = vld [vmem:[%s0 + $0x88] sm:$0xff]
    %v34 = vld [vmem:[%s0 + $0x90] sm:$0xff]
    %v35 = vld [vmem:[%s0 + $0x98] sm:$0xff]
    %v36 = vld [vmem:[%s0 + $0xa0] sm:$0xff]
    %v37 = vld [vmem:[%s0 + $0xa8] sm:$0xff]
    %v38 = vld [vmem:[%s0 + $0xb0] sm:$0xff]
    %v39 = vld [vmem:[%s0 + $0xb8] sm:$0xff]
    %v40 = vld [vmem:[%s0 + $0xc0] sm:$0xff]
    %v41 = vld [vmem:[%s0 + $0xc8] sm:$0xff]
    %v42 = vld [vmem:[%s0 + $0xd0] sm:$0xff]
    %v43 = vld [vmem:[%s0 + $0xd8] sm:$0xff]
    %v44 = vld [vmem:[%s0 + $0xe0] sm:$0xff]
    %v45 = vld [vmem:[%s0 + $0xe8] sm:$0xff]
    %v46 = vld [vmem:[%s0 + $0xf0] sm:$0xff]
    %v47 = vld [vmem:[%s0 + $0xf8] sm:$0xff]
    %v48 = vld [vmem:[%s0 + $0x100] sm:$0xff]
    %v49 = vld [vmem:[%s0 + $0x108] sm:$0xff]
    %v50 = vld [vmem:[%s0 + $0x110] sm:$0xff]
    %v51 = vld [vmem:[%s0 + $0x118] sm:$0xff]
    %v52 = vld [vmem:[%s0 + $0x120] sm:$0xff]
    %v53 = vld [vmem:[%s0 + $0x128] sm:$0xff]
    %v54 = vld [vmem:[%s0 + $0x130] sm:$0xff]
    %v55 = vld [vmem:[%s0 + $0x138] sm:$0xff]
    %v56 = vld [vmem:[%s0 + $0x140] sm:$0xff]
    %v57 = vld [vmem:[%s0 + $0x148] sm:$0xff]
    %v58 = vld [vmem:[%s0 + $0x150] sm:$0xff]
    %v59 = vld [vmem:[%s0 + $0x158] sm:$0xff]
    %v60 = vld [vmem:[%s0 + $0x160] sm:$0xff]
    %v61 = vld [vmem:[%s0 + $0x168] sm:$0xff]
    %v62 = vld [vmem:[%s0 + $0x170] sm:$0xff]
    %v63 = vld [vmem:[%s0 + $0x178] sm:$0xff]
    %v64 = vld [vmem:[%s0 + $0x180] sm:$0xff]
    %v65 = vld [vmem:[%s0 + $0x188] sm:$0xff]
    %v66 = vld [vmem:[%s0 + $0x190] sm:$0xff]
    %v67 = vld [vmem:[%s0 + $0x198] sm:$0xff]
    %v68 = vld [vmem:[%s0 + $0x1a0] sm:$0xff]
    %v69 = vld [vmem:[%s0 + $0x1a8] sm:$0xff]
    %v70 = vld [vmem:[%s0 + $0x1b0] sm:$0xff]
    %v71 = vld [vmem:[%s0 + $0x1b8] sm:$0xff]
    %v72 = vld [vmem:[%s0 + $0x1c0] sm:$0xff]
    %v73 = vld [vmem:[%s0 + $0x1c8] sm:$0xff]
    %v74 = vld [vmem:[%s0 + $0x1d0] sm:$0xff]
    %v75 = vld [vmem:[%s0 + $0x1d8] sm:$0xff]
    %v76 = vld [vmem:[%s0 + $0x1e0] sm:$0xff]
    %v77 = vld [vmem:[%s0 + $0x1e8] sm:$0xff]
    %v78 = vld [vmem:[%s0 + $0x1f0] sm:$0xff]
    %v79 = vld [vmem:[%s0 + $0x1f8] sm:$0xff]
    %vm80 = vcmask 523264
    %v81 = vsel %vm80, %v16, 0.0
    %v82 = vsel %vm80, %v17, 0.0
    %v83 = vadd.f32 %v81, %v82
    %v84 = vsel %vm80, %v18, 0.0
    %v85 = vadd.f32 %v83, %v84
    %v86 = vsel %vm80, %v19, 0.0
    %v87 = vadd.f32 %v85, %v86
    %v88 = vsel %vm80, %v20, 0.0
    %v89 = vadd.f32 %v87, %v88
    %v90 = vsel %vm80, %v21, 0.0
    %v91 = vadd.f32 %v89, %v90
    %v92 = vsel %vm80, %v22, 0.0
    %v93 = vadd.f32 %v91, %v92
    %v94 = vsel %vm80, %v23, 0.0
    %v95 = vadd.f32 %v93, %v94
    %v96 = vsel %vm80, %v24, 0.0
    %v97 = vadd.f32 %v95, %v96
    %v98 = vsel %vm80, %v25, 0.0
    %v99 = vadd.f32 %v97, %v98
    %v100 = vsel %vm80, %v26, 0.0
    %v101 = vadd.f32 %v99, %v100
    %v102 = vsel %vm80, %v27, 0.0
    %v103 = vadd.f32 %v101, %v102
    %v104 = vsel %vm80, %v28, 0.0
    %v105 = vadd.f32 %v103, %v104
    %v106 = vsel %vm80, %v29, 0.0
    %v107 = vadd.f32 %v105, %v106
    %v108 = vsel %vm80, %v30, 0.0
    %v109 = vadd.f32 %v107, %v108
    %v110 = vsel %vm80, %v31, 0.0
    %v111 = vadd.f32 %v109, %v110
    %v112 = vsel %vm80, %v32, 0.0
    %v113 = vadd.f32 %v111, %v112
    %v114 = vsel %vm80, %v33, 0.0
    %v115 = vadd.f32 %v113, %v114
    %v116 = vsel %vm80, %v34, 0.0
    %v117 = vadd.f32 %v115, %v116
    %v118 = vsel %vm80, %v35, 0.0
    %v119 = vadd.f32 %v117, %v118
    %v120 = vsel %vm80, %v36, 0.0
    %v121 = vadd.f32 %v119, %v120
    %v122 = vsel %vm80, %v37, 0.0
    %v123 = vadd.f32 %v121, %v122
    %v124 = vsel %vm80, %v38, 0.0
    %v125 = vadd.f32 %v123, %v124
    %v126 = vsel %vm80, %v39, 0.0
    %v127 = vadd.f32 %v125, %v126
    %v128 = vsel %vm80, %v40, 0.0
    %v129 = vadd.f32 %v127, %v128
    %v130 = vsel %vm80, %v41, 0.0
    %v131 = vadd.f32 %v129, %v130
    %v132 = vsel %vm80, %v42, 0.0
    %v133 = vadd.f32 %v131, %v132
    %v134 = vsel %vm80, %v43, 0.0
    %v135 = vadd.f32 %v133, %v134
    %v136 = vsel %vm80, %v44, 0.0
    %v137 = vadd.f32 %v135, %v136
    %v138 = vsel %vm80, %v45, 0.0
    %v139 = vadd.f32 %v137, %v138
    %v140 = vsel %vm80, %v46, 0.0
    %v141 = vadd.f32 %v139, %v140
    %v142 = vsel %vm80, %v47, 0.0
    %v143 = vadd.f32 %v141, %v142
    %v144 = vsel %vm80, %v48, 0.0
    %v145 = vadd.f32 %v143, %v144
    %v146 = vsel %vm80, %v49, 0.0
    %v147 = vadd.f32 %v145, %v146
    %v148 = vsel %vm80, %v50, 0.0
    %v149 = vadd.f32 %v147, %v148
    %v150 = vsel %vm80, %v51, 0.0
    %v151 = vadd.f32 %v149, %v150
    %v152 = vsel %vm80, %v52, 0.0
    %v153 = vadd.f32 %v151, %v152
    %v154 = vsel %vm80, %v53, 0.0
    %v155 = vadd.f32 %v153, %v154
    %v156 = vsel %vm80, %v54, 0.0
    %v157 = vadd.f32 %v155, %v156
    %v158 = vsel %vm80, %v55, 0.0
    %v159 = vadd.f32 %v157, %v158
    %v160 = vsel %vm80, %v56, 0.0
    %v161 = vadd.f32 %v159, %v160
    %v162 = vsel %vm80, %v57, 0.0
    %v163 = vadd.f32 %v161, %v162
    %v164 = vsel %vm80, %v58, 0.0
    %v165 = vadd.f32 %v163, %v164
    %v166 = vsel %vm80, %v59, 0.0
    %v167 = vadd.f32 %v165, %v166
    %v168 = vsel %vm80, %v60, 0.0
    %v169 = vadd.f32 %v167, %v168
    %v170 = vsel %vm80, %v61, 0.0
    %v171 = vadd.f32 %v169, %v170
    %v172 = vsel %vm80, %v62, 0.0
    %v173 = vadd.f32 %v171, %v172
    %v174 = vsel %vm80, %v63, 0.0
    %v175 = vadd.f32 %v173, %v174
    %v176 = vsel %vm80, %v64, 0.0
    %v177 = vadd.f32 %v175, %v176
    %v178 = vsel %vm80, %v65, 0.0
    %v179 = vadd.f32 %v177, %v178
    %v180 = vsel %vm80, %v66, 0.0
    %v181 = vadd.f32 %v179, %v180
    %v182 = vsel %vm80, %v67, 0.0
    %v183 = vadd.f32 %v181, %v182
    %v184 = vsel %vm80, %v68, 0.0
    %v185 = vadd.f32 %v183, %v184
    %v186 = vsel %vm80, %v69, 0.0
    %v187 = vadd.f32 %v185, %v186
    %v188 = vsel %vm80, %v70, 0.0
    %v189 = vadd.f32 %v187, %v188
    %v190 = vsel %vm80, %v71, 0.0
    %v191 = vadd.f32 %v189, %v190
    %v192 = vsel %vm80, %v72, 0.0
    %v193 = vadd.f32 %v191, %v192
    %v194 = vsel %vm80, %v73, 0.0
    %v195 = vadd.f32 %v193, %v194
    %v196 = vsel %vm80, %v74, 0.0
    %v197 = vadd.f32 %v195, %v196
    %v198 = vsel %vm80, %v75, 0.0
    %v199 = vadd.f32 %v197, %v198
    %v200 = vsel %vm80, %v76, 0.0
    %v201 = vadd.f32 %v199, %v200
    %v202 = vsel %vm80, %v77, 0.0
    %v203 = vadd.f32 %v201, %v202
    %v204 = vsel %vm80, %v78, 0.0
    %v205 = vadd.f32 %v203, %v204
    %v206 = vsel %vm80, %v79, 0.0
    %v207 = vadd.f32 %v205, %v206
    %v208 = vrot.slane %v207, 4
    %v209 = vadd.f32 %v207, %v208
    %v210 = vrot.slane %v209, 2
    %v211 = vadd.f32 %v209, %v210
    %v212 = vrot.slane %v211, 1
    %v213 = vadd.f32 %v211, %v212
    %v214 = vmul.f32 %v213, 0.001953125
    %v215 = vmul.f32 %v16, %v16
    %v216 = vmul.f32 %v17, %v17
    %v217 = vmul.f32 %v18, %v18
    %v218 = vmul.f32 %v19, %v19
    %v219 = vmul.f32 %v20, %v20
    %v220 = vmul.f32 %v21, %v21
    %v221 = vmul.f32 %v22, %v22
    %v222 = vmul.f32 %v23, %v23
    %v223 = vmul.f32 %v24, %v24
    %v224 = vmul.f32 %v25, %v25
    %v225 = vmul.f32 %v26, %v26
    %v226 = vmul.f32 %v27, %v27
    %v227 = vmul.f32 %v28, %v28
    %v228 = vmul.f32 %v29, %v29
    %v229 = vmul.f32 %v30, %v30
    %v230 = vmul.f32 %v31, %v31
    %v231 = vmul.f32 %v32, %v32
    %v232 = vmul.f32 %v33, %v33
    %v233 = vmul.f32 %v34, %v34
    %v234 = vmul.f32 %v35, %v35
    %v235 = vmul.f32 %v36, %v36
    %v236 = vmul.f32 %v37, %v37
    %v237 = vmul.f32 %v38, %v38
    %v238 = vmul.f32 %v39, %v39
    %v239 = vmul.f32 %v40, %v40
    %v240 = vmul.f32 %v41, %v41
    %v241 = vmul.f32 %v42, %v42
    %v242 = vmul.f32 %v43, %v43
    %v243 = vmul.f32 %v44, %v44
    %v244 = vmul.f32 %v45, %v45
    %v245 = vmul.f32 %v46, %v46
    %v246 = vmul.f32 %v47, %v47
    %v247 = vmul.f32 %v48, %v48
    %v248 = vmul.f32 %v49, %v49
    %v249 = vmul.f32 %v50, %v50
    %v250 = vmul.f32 %v51, %v51
    %v251 = vmul.f32 %v52, %v52
    %v252 = vmul.f32 %v53, %v53
    %v253 = vmul.f32 %v54, %v54
    %v254 = vmul.f32 %v55, %v55
    %v255 = vmul.f32 %v56, %v56
    %v256 = vmul.f32 %v57, %v57
    %v257 = vmul.f32 %v58, %v58
    %v258 = vmul.f32 %v59, %v59
    %v259 = vmul.f32 %v60, %v60
    %v260 = vmul.f32 %v61, %v61
    %v261 = vmul.f32 %v62, %v62
    %v262 = vmul.f32 %v63, %v63
    %v263 = vmul.f32 %v64, %v64
    %v264 = vmul.f32 %v65, %v65
    %v265 = vmul.f32 %v66, %v66
    %v266 = vmul.f32 %v67, %v67
    %v267 = vmul.f32 %v68, %v68
    %v268 = vmul.f32 %v69, %v69
    %v269 = vmul.f32 %v70, %v70
    %v270 = vmul.f32 %v71, %v71
    %v271 = vmul.f32 %v72, %v72
    %v272 = vmul.f32 %v73, %v73
    %v273 = vmul.f32 %v74, %v74
    %v274 = vmul.f32 %v75, %v75
    %v275 = vmul.f32 %v76, %v76
    %v276 = vmul.f32 %v77, %v77
    %v277 = vmul.f32 %v78, %v78
    %v278 = vmul.f32 %v79, %v79
    %v279 = vsel %vm80, %v215, 0.0
    %v280 = vsel %vm80, %v216, 0.0
    %v281 = vadd.f32 %v279, %v280
    %v282 = vsel %vm80, %v217, 0.0
    %v283 = vadd.f32 %v281, %v282
    %v284 = vsel %vm80, %v218, 0.0
    %v285 = vadd.f32 %v283, %v284
    %v286 = vsel %vm80, %v219, 0.0
    %v287 = vadd.f32 %v285, %v286
    %v288 = vsel %vm80, %v220, 0.0
    %v289 = vadd.f32 %v287, %v288
    %v290 = vsel %vm80, %v221, 0.0
    %v291 = vadd.f32 %v289, %v290
    %v292 = vsel %vm80, %v222, 0.0
    %v293 = vadd.f32 %v291, %v292
    %v294 = vsel %vm80, %v223, 0.0
    %v295 = vadd.f32 %v293, %v294
    %v296 = vsel %vm80, %v224, 0.0
    %v297 = vadd.f32 %v295, %v296
    %v298 = vsel %vm80, %v225, 0.0
    %v299 = vadd.f32 %v297, %v298
    %v300 = vsel %vm80, %v226, 0.0
    %v301 = vadd.f32 %v299, %v300
    %v302 = vsel %vm80, %v227, 0.0
    %v303 = vadd.f32 %v301, %v302
    %v304 = vsel %vm80, %v228, 0.0
    %v305 = vadd.f32 %v303, %v304
    %v306 = vsel %vm80, %v229, 0.0
    %v307 = vadd.f32 %v305, %v306
    %v308 = vsel %vm80, %v230, 0.0
    %v309 = vadd.f32 %v307, %v308
    %v310 = vsel %vm80, %v231, 0.0
    %v311 = vadd.f32 %v309, %v310
    %v312 = vsel %vm80, %v232, 0.0
    %v313 = vadd.f32 %v311, %v312
    %v314 = vsel %vm80, %v233, 0.0
    %v315 = vadd.f32 %v313, %v314
    %v316 = vsel %vm80, %v234, 0.0
    %v317 = vadd.f32 %v315, %v316
    %v318 = vsel %vm80, %v235, 0.0
    %v319 = vadd.f32 %v317, %v318
    %v320 = vsel %vm80, %v236, 0.0
    %v321 = vadd.f32 %v319, %v320
    %v322 = vsel %vm80, %v237, 0.0
    %v323 = vadd.f32 %v321, %v322
    %v324 = vsel %vm80, %v238, 0.0
    %v325 = vadd.f32 %v323, %v324
    %v326 = vsel %vm80, %v239, 0.0
    %v327 = vadd.f32 %v325, %v326
    %v328 = vsel %vm80, %v240, 0.0
    %v329 = vadd.f32 %v327, %v328
    %v330 = vsel %vm80, %v241, 0.0
    %v331 = vadd.f32 %v329, %v330
    %v332 = vsel %vm80, %v242, 0.0
    %v333 = vadd.f32 %v331, %v332
    %v334 = vsel %vm80, %v243, 0.0
    %v335 = vadd.f32 %v333, %v334
    %v336 = vsel %vm80, %v244, 0.0
    %v337 = vadd.f32 %v335, %v336
    %v338 = vsel %vm80, %v245, 0.0
    %v339 = vadd.f32 %v337, %v338
    %v340 = vsel %vm80, %v246, 0.0
    %v341 = vadd.f32 %v339, %v340
    %v342 = vsel %vm80, %v247, 0.0
    %v343 = vadd.f32 %v341, %v342
    %v344 = vsel %vm80, %v248, 0.0
    %v345 = vadd.f32 %v343, %v344
    %v346 = vsel %vm80, %v249, 0.0
    %v347 = vadd.f32 %v345, %v346
    %v348 = vsel %vm80, %v250, 0.0
    %v349 = vadd.f32 %v347, %v348
    %v350 = vsel %vm80, %v251, 0.0
    %v351 = vadd.f32 %v349, %v350
    %v352 = vsel %vm80, %v252, 0.0
    %v353 = vadd.f32 %v351, %v352
    %v354 = vsel %vm80, %v253, 0.0
    %v355 = vadd.f32 %v353, %v354
    %v356 = vsel %vm80, %v254, 0.0
    %v357 = vadd.f32 %v355, %v356
    %v358 = vsel %vm80, %v255, 0.0
    %v359 = vadd.f32 %v357, %v358
    %v360 = vsel %vm80, %v256, 0.0
    %v361 = vadd.f32 %v359, %v360
    %v362 = vsel %vm80, %v257, 0.0
    %v363 = vadd.f32 %v361, %v362
    %v364 = vsel %vm80, %v258, 0.0
    %v365 = vadd.f32 %v363, %v364
    %v366 = vsel %vm80, %v259, 0.0
    %v367 = vadd.f32 %v365, %v366
    %v368 = vsel %vm80, %v260, 0.0
    %v369 = vadd.f32 %v367, %v368
    %v370 = vsel %vm80, %v261, 0.0
    %v371 = vadd.f32 %v369, %v370
    %v372 = vsel %vm80, %v262, 0.0
    %v373 = vadd.f32 %v371, %v372
    %v374 = vsel %vm80, %v263, 0.0
    %v375 = vadd.f32 %v373, %v374
    %v376 = vsel %vm80, %v264, 0.0
    %v377 = vadd.f32 %v375, %v376
    %v378 = vsel %vm80, %v265, 0.0
    %v379 = vadd.f32 %v377, %v378
    %v380 = vsel %vm80, %v266, 0.0
    %v381 = vadd.f32 %v379, %v380
    %v382 = vsel %vm80, %v267, 0.0
    %v383 = vadd.f32 %v381, %v382
    %v384 = vsel %vm80, %v268, 0.0
    %v385 = vadd.f32 %v383, %v384
    %v386 = vsel %vm80, %v269, 0.0
    %v387 = vadd.f32 %v385, %v386
    %v388 = vsel %vm80, %v270, 0.0
    %v389 = vadd.f32 %v387, %v388
    %v390 = vsel %vm80, %v271, 0.0
    %v391 = vadd.f32 %v389, %v390
    %v392 = vsel %vm80, %v272, 0.0
    %v393 = vadd.f32 %v391, %v392
    %v394 = vsel %vm80, %v273, 0.0
    %v395 = vadd.f32 %v393, %v394
    %v396 = vsel %vm80, %v274, 0.0
    %v397 = vadd.f32 %v395, %v396
    %v398 = vsel %vm80, %v275, 0.0
    %v399 = vadd.f32 %v397, %v398
    %v400 = vsel %vm80, %v276, 0.0
    %v401 = vadd.f32 %v399, %v400
    %v402 = vsel %vm80, %v277, 0.0
    %v403 = vadd.f32 %v401, %v402
    %v404 = vsel %vm80, %v278, 0.0
    %v405 = vadd.f32 %v403, %v404
    %v406 = vrot.slane %v405, 4
    %v407 = vadd.f32 %v405, %v406
    %v408 = vrot.slane %v407, 2
    %v409 = vadd.f32 %v407, %v408
    %v410 = vrot.slane %v409, 1
    %v411 = vadd.f32 %v409, %v410
    %v412 = vmul.f32 %v411, 0.001953125
    %v413 = vmul.f32 %v214, %v214
    %v414 = vsub.f32 %v412, %v413
    %v415 = vmax.f32 %v414, 0.0
    %v416 = vadd.f32 %v415, 1e-05
    %v417 = vrsqrt.pop %v416
    %v418 = vmul.f32 %v417, %v416
    %v419 = vmul.f32 %v418, %v417
    %v420 = vmul.f32 0.5, %v419
    %v421 = vsub.f32 1.5, %v420
    %v422 = vmul.f32 %v417, %v421
    %vm423 = vweird.f32 %v416
    %vm424 = vweird.f32 %v417
    %vm425 = vmor %vm423, %vm424
    %v426 = vsel %vm425, %v417, %v422
    %v427 = vsub.f32 0.0, %v214
    %v428 = vmul.f32 %v427, %v426
    %v429 = vmul.f32 %v16, %v426
    %v430 = vmul.f32 %v17, %v426
    %v431 = vmul.f32 %v18, %v426
    %v432 = vmul.f32 %v19, %v426
    %v433 = vmul.f32 %v20, %v426
    %v434 = vmul.f32 %v21, %v426
    %v435 = vmul.f32 %v22, %v426
    %v436 = vmul.f32 %v23, %v426
    %v437 = vmul.f32 %v24, %v426
    %v438 = vmul.f32 %v25, %v426
    %v439 = vmul.f32 %v26, %v426
    %v440 = vmul.f32 %v27, %v426
    %v441 = vmul.f32 %v28, %v426
    %v442 = vmul.f32 %v29, %v426
    %v443 = vmul.f32 %v30, %v426
    %v444 = vmul.f32 %v31, %v426
    %v445 = vmul.f32 %v32, %v426
    %v446 = vmul.f32 %v33, %v426
    %v447 = vmul.f32 %v34, %v426
    %v448 = vmul.f32 %v35, %v426
    %v449 = vmul.f32 %v36, %v426
    %v450 = vmul.f32 %v37, %v426
    %v451 = vmul.f32 %v38, %v426
    %v452 = vmul.f32 %v39, %v426
    %v453 = vmul.f32 %v40, %v426
    %v454 = vmul.f32 %v41, %v426
    %v455 = vmul.f32 %v42, %v426
    %v456 = vmul.f32 %v43, %v426
    %v457 = vmul.f32 %v44, %v426
    %v458 = vmul.f32 %v45, %v426
    %v459 = vmul.f32 %v46, %v426
    %v460 = vmul.f32 %v47, %v426
    %v461 = vmul.f32 %v48, %v426
    %v462 = vmul.f32 %v49, %v426
    %v463 = vmul.f32 %v50, %v426
    %v464 = vmul.f32 %v51, %v426
    %v465 = vmul.f32 %v52, %v426
    %v466 = vmul.f32 %v53, %v426
    %v467 = vmul.f32 %v54, %v426
    %v468 = vmul.f32 %v55, %v426
    %v469 = vmul.f32 %v56, %v426
    %v470 = vmul.f32 %v57, %v426
    %v471 = vmul.f32 %v58, %v426
    %v472 = vmul.f32 %v59, %v426
    %v473 = vmul.f32 %v60, %v426
    %v474 = vmul.f32 %v61, %v426
    %v475 = vmul.f32 %v62, %v426
    %v476 = vmul.f32 %v63, %v426
    %v477 = vmul.f32 %v64, %v426
    %v478 = vmul.f32 %v65, %v426
    %v479 = vmul.f32 %v66, %v426
    %v480 = vmul.f32 %v67, %v426
    %v481 = vmul.f32 %v68, %v426
    %v482 = vmul.f32 %v69, %v426
    %v483 = vmul.f32 %v70, %v426
    %v484 = vmul.f32 %v71, %v426
    %v485 = vmul.f32 %v72, %v426
    %v486 = vmul.f32 %v73, %v426
    %v487 = vmul.f32 %v74, %v426
    %v488 = vmul.f32 %v75, %v426
    %v489 = vmul.f32 %v76, %v426
    %v490 = vmul.f32 %v77, %v426
    %v491 = vmul.f32 %v78, %v426
    %v492 = vmul.f32 %v79, %v426
    %v493 = vadd.f32 %v429, %v428
    %v494 = vadd.f32 %v430, %v428
    %v495 = vadd.f32 %v431, %v428
    %v496 = vadd.f32 %v432, %v428
    %v497 = vadd.f32 %v433, %v428
    %v498 = vadd.f32 %v434, %v428
    %v499 = vadd.f32 %v435, %v428
    %v500 = vadd.f32 %v436, %v428
    %v501 = vadd.f32 %v437, %v428
    %v502 = vadd.f32 %v438, %v428
    %v503 = vadd.f32 %v439, %v428
    %v504 = vadd.f32 %v440, %v428
    %v505 = vadd.f32 %v441, %v428
    %v506 = vadd.f32 %v442, %v428
    %v507 = vadd.f32 %v443, %v428
    %v508 = vadd.f32 %v444, %v428
    %v509 = vadd.f32 %v445, %v428
    %v510 = vadd.f32 %v446, %v428
    %v511 = vadd.f32 %v447, %v428
    %v512 = vadd.f32 %v448, %v428
    %v513 = vadd.f32 %v449, %v428
    %v514 = vadd.f32 %v450, %v428
    %v515 = vadd.f32 %v451, %v428
    %v516 = vadd.f32 %v452, %v428
    %v517 = vadd.f32 %v453, %v428
    %v518 = vadd.f32 %v454, %v428
    %v519 = vadd.f32 %v455, %v428
    %v520 = vadd.f32 %v456, %v428
    %v521 = vadd.f32 %v457, %v428
    %v522 = vadd.f32 %v458, %v428
    %v523 = vadd.f32 %v459, %v428
    %v524 = vadd.f32 %v460, %v428
    %v525 = vadd.f32 %v461, %v428
    %v526 = vadd.f32 %v462, %v428
    %v527 = vadd.f32 %v463, %v428
    %v528 = vadd.f32 %v464, %v428
    %v529 = vadd.f32 %v465, %v428
    %v530 = vadd.f32 %v466, %v428
    %v531 = vadd.f32 %v467, %v428
    %v532 = vadd.f32 %v468, %v428
    %v533 = vadd.f32 %v469, %v428
    %v534 = vadd.f32 %v470, %v428
    %v535 = vadd.f32 %v471, %v428
    %v536 = vadd.f32 %v472, %v428
    %v537 = vadd.f32 %v473, %v428
    %v538 = vadd.f32 %v474, %v428
    %v539 = vadd.f32 %v475, %v428
    %v540 = vadd.f32 %v476, %v428
    %v541 = vadd.f32 %v477, %v428
    %v542 = vadd.f32 %v478, %v428
    %v543 = vadd.f32 %v479, %v428
    %v544 = vadd.f32 %v480, %v428
    %v545 = vadd.f32 %v481, %v428
    %v546 = vadd.f32 %v482, %v428
    %v547 = vadd.f32 %v483, %v428
    %v548 = vadd.f32 %v484, %v428
    %v549 = vadd.f32 %v485, %v428
    %v550 = vadd.f32 %v486, %v428
    %v551 = vadd.f32 %v487, %v428
    %v552 = vadd.f32 %v488, %v428
    %v553 = vadd.f32 %v489, %v428
    %v554 = vadd.f32 %v490, %v428
    %v555 = vadd.f32 %v491, %v428
    %v556 = vadd.f32 %v492, %v428
    %557 = vst.msk [vmem:[#allocation2] sm:$0xff] %vm80, %v493
    %558 = vst.msk [vmem:[#allocation2 + $0x8] sm:$0xff] %vm80, %v494
    %559 = vst.msk [vmem:[#allocation2 + $0x10] sm:$0xff] %vm80, %v495
    %560 = vst.msk [vmem:[#allocation2 + $0x18] sm:$0xff] %vm80, %v496
    %561 = vst.msk [vmem:[#allocation2 + $0x20] sm:$0xff] %vm80, %v497
    %562 = vst.msk [vmem:[#allocation2 + $0x28] sm:$0xff] %vm80, %v498
    %563 = vst.msk [vmem:[#allocation2 + $0x30] sm:$0xff] %vm80, %v499
    %564 = vst.msk [vmem:[#allocation2 + $0x38] sm:$0xff] %vm80, %v500
    %565 = vst.msk [vmem:[#allocation2 + $0x40] sm:$0xff] %vm80, %v501
    %566 = vst.msk [vmem:[#allocation2 + $0x48] sm:$0xff] %vm80, %v502
    %567 = vst.msk [vmem:[#allocation2 + $0x50] sm:$0xff] %vm80, %v503
    %568 = vst.msk [vmem:[#allocation2 + $0x58] sm:$0xff] %vm80, %v504
    %569 = vst.msk [vmem:[#allocation2 + $0x60] sm:$0xff] %vm80, %v505
    %570 = vst.msk [vmem:[#allocation2 + $0x68] sm:$0xff] %vm80, %v506
    %571 = vst.msk [vmem:[#allocation2 + $0x70] sm:$0xff] %vm80, %v507
    %572 = vst.msk [vmem:[#allocation2 + $0x78] sm:$0xff] %vm80, %v508
    %573 = vst.msk [vmem:[#allocation2 + $0x80] sm:$0xff] %vm80, %v509
    %574 = vst.msk [vmem:[#allocation2 + $0x88] sm:$0xff] %vm80, %v510
    %575 = vst.msk [vmem:[#allocation2 + $0x90] sm:$0xff] %vm80, %v511
    %576 = vst.msk [vmem:[#allocation2 + $0x98] sm:$0xff] %vm80, %v512
    %577 = vst.msk [vmem:[#allocation2 + $0xa0] sm:$0xff] %vm80, %v513
    %578 = vst.msk [vmem:[#allocation2 + $0xa8] sm:$0xff] %vm80, %v514
    %579 = vst.msk [vmem:[#allocation2 + $0xb0] sm:$0xff] %vm80, %v515
    %580 = vst.msk [vmem:[#allocation2 + $0xb8] sm:$0xff] %vm80, %v516
    %581 = vst.msk [vmem:[#allocation2 + $0xc0] sm:$0xff] %vm80, %v517
    %582 = vst.msk [vmem:[#allocation2 + $0xc8] sm:$0xff] %vm80, %v518
    %583 = vst.msk [vmem:[#allocation2 + $0xd0] sm:$0xff] %vm80, %v519
    %584 = vst.msk [vmem:[#allocation2 + $0xd8] sm:$0xff] %vm80, %v520
    %585 = vst.msk [vmem:[#allocation2 + $0xe0] sm:$0xff] %vm80, %v521
    %586 = vst.msk [vmem:[#allocation2 + $0xe8] sm:$0xff] %vm80, %v522
    %587 = vst.msk [vmem:[#allocation2 + $0xf0] sm:$0xff] %vm80, %v523
    %588 = vst.msk [vmem:[#allocation2 + $0xf8] sm:$0xff] %vm80, %v524
    %589 = vst.msk [vmem:[#allocation2 + $0x100] sm:$0xff] %vm80, %v525
    %590 = vst.msk [vmem:[#allocation2 + $0x108] sm:$0xff] %vm80, %v526
    %591 = vst.msk [vmem:[#allocation2 + $0x110] sm:$0xff] %vm80, %v527
    %592 = vst.msk [vmem:[#allocation2 + $0x118] sm:$0xff] %vm80, %v528
    %593 = vst.msk [vmem:[#allocation2 + $0x120] sm:$0xff] %vm80, %v529
    %594 = vst.msk [vmem:[#allocation2 + $0x128] sm:$0xff] %vm80, %v530
    %595 = vst.msk [vmem:[#allocation2 + $0x130] sm:$0xff] %vm80, %v531
    %596 = vst.msk [vmem:[#allocation2 + $0x138] sm:$0xff] %vm80, %v532
    %597 = vst.msk [vmem:[#allocation2 + $0x140] sm:$0xff] %vm80, %v533
    %598 = vst.msk [vmem:[#allocation2 + $0x148] sm:$0xff] %vm80, %v534
    %599 = vst.msk [vmem:[#allocation2 + $0x150] sm:$0xff] %vm80, %v535
    %600 = vst.msk [vmem:[#allocation2 + $0x158] sm:$0xff] %vm80, %v536
    %601 = vst.msk [vmem:[#allocation2 + $0x160] sm:$0xff] %vm80, %v537
    %602 = vst.msk [vmem:[#allocation2 + $0x168] sm:$0xff] %vm80, %v538
    %603 = vst.msk [vmem:[#allocation2 + $0x170] sm:$0xff] %vm80, %v539
    %604 = vst.msk [vmem:[#allocation2 + $0x178] sm:$0xff] %vm80, %v540
    %605 = vst.msk [vmem:[#allocation2 + $0x180] sm:$0xff] %vm80, %v541
    %606 = vst.msk [vmem:[#allocation2 + $0x188] sm:$0xff] %vm80, %v542
    %607 = vst.msk [vmem:[#allocation2 + $0x190] sm:$0xff] %vm80, %v543
    %608 = vst.msk [vmem:[#allocation2 + $0x198] sm:$0xff] %vm80, %v544
    %609 = vst.msk [vmem:[#allocation2 + $0x1a0] sm:$0xff] %vm80, %v545
    %610 = vst.msk [vmem:[#allocation2 + $0x1a8] sm:$0xff] %vm80, %v546
    %611 = vst.msk [vmem:[#allocation2 + $0x1b0] sm:$0xff] %vm80, %v547
    %612 = vst.msk [vmem:[#allocation2 + $0x1b8] sm:$0xff] %vm80, %v548
    %613 = vst.msk [vmem:[#allocation2 + $0x1c0] sm:$0xff] %vm80, %v549
    %614 = vst.msk [vmem:[#allocation2 + $0x1c8] sm:$0xff] %vm80, %v550
    %615 = vst.msk [vmem:[#allocation2 + $0x1d0] sm:$0xff] %vm80, %v551
    %616 = vst.msk [vmem:[#allocation2 + $0x1d8] sm:$0xff] %vm80, %v552
    %617 = vst.msk [vmem:[#allocation2 + $0x1e0] sm:$0xff] %vm80, %v553
    %618 = vst.msk [vmem:[#allocation2 + $0x1e8] sm:$0xff] %vm80, %v554
    %619 = vst.msk [vmem:[#allocation2 + $0x1f0] sm:$0xff] %vm80, %v555
    %620 = vst.msk [vmem:[#allocation2 + $0x1f8] sm:$0xff] %vm80, %v556
    %v621 = vld [vmem:[#allocation2] sm:$0xff]
    %v622 = vld [vmem:[#allocation2 + $0x8] sm:$0xff]
    %v623 = vld [vmem:[#allocation2 + $0x10] sm:$0xff]
    %v624 = vld [vmem:[#allocation2 + $0x18] sm:$0xff]
    %v625 = vld [vmem:[#allocation2 + $0x20] sm:$0xff]
    %v626 = vld [vmem:[#allocation2 + $0x28] sm:$0xff]
    %v627 = vld [vmem:[#allocation2 + $0x30] sm:$0xff]
    %v628 = vld [vmem:[#allocation2 + $0x38] sm:$0xff]
    %v629 = vld [vmem:[#allocation2 + $0x40] sm:$0xff]
    %v630 = vld [vmem:[#allocation2 + $0x48] sm:$0xff]
    %v631 = vld [vmem:[#allocation2 + $0x50] sm:$0xff]
    %v632 = vld [vmem:[#allocation2 + $0x58] sm:$0xff]
    %v633 = vld [vmem:[#allocation2 + $0x60] sm:$0xff]
    %v634 = vld [vmem:[#allocation2 + $0x68] sm:$0xff]
    %v635 = vld [vmem:[#allocation2 + $0x70] sm:$0xff]
    %v636 = vld [vmem:[#allocation2 + $0x78] sm:$0xff]
    %v637 = vadd.f32 %v621, 0.0
    %v638 = vadd.f32 %v622, 0.0
    %v639 = vadd.f32 %v623, 0.0
    %v640 = vadd.f32 %v624, 0.0
    %v641 = vadd.f32 %v625, 0.0
    %v642 = vadd.f32 %v626, 0.0
    %v643 = vadd.f32 %v627, 0.0
    %v644 = vadd.f32 %v628, 0.0
    %v645 = vadd.f32 %v629, 0.0
    %v646 = vadd.f32 %v630, 0.0
    %v647 = vadd.f32 %v631, 0.0
    %v648 = vadd.f32 %v632, 0.0
    %v649 = vadd.f32 %v633, 0.0
    %v650 = vadd.f32 %v634, 0.0
    %v651 = vadd.f32 %v635, 0.0
    %v652 = vadd.f32 %v636, 0.0
    %v653 = vmul.f32 %v637, 0.5
    %v654 = vmul.f32 %v638, 0.5
    %v655 = vmul.f32 %v639, 0.5
    %v656 = vmul.f32 %v640, 0.5
    %v657 = vmul.f32 %v641, 0.5
    %v658 = vmul.f32 %v642, 0.5
    %v659 = vmul.f32 %v643, 0.5
    %v660 = vmul.f32 %v644, 0.5
    %v661 = vmul.f32 %v645, 0.5
    %v662 = vmul.f32 %v646, 0.5
    %v663 = vmul.f32 %v647, 0.5
    %v664 = vmul.f32 %v648, 0.5
    %v665 = vmul.f32 %v649, 0.5
    %v666 = vmul.f32 %v650, 0.5
    %v667 = vmul.f32 %v651, 0.5
    %v668 = vmul.f32 %v652, 0.5
    %vm669 = vcmp.ge.f32.partialorder %v653, 1.0
    %vm670 = vcmp.ge.f32.partialorder %v654, 1.0
    %vm671 = vcmp.ge.f32.partialorder %v655, 1.0
    %vm672 = vcmp.ge.f32.partialorder %v656, 1.0
    %vm673 = vcmp.ge.f32.partialorder %v657, 1.0
    %vm674 = vcmp.ge.f32.partialorder %v658, 1.0
    %vm675 = vcmp.ge.f32.partialorder %v659, 1.0
    %vm676 = vcmp.ge.f32.partialorder %v660, 1.0
    %vm677 = vcmp.ge.f32.partialorder %v661, 1.0
    %vm678 = vcmp.ge.f32.partialorder %v662, 1.0
    %vm679 = vcmp.ge.f32.partialorder %v663, 1.0
    %vm680 = vcmp.ge.f32.partialorder %v664, 1.0
    %vm681 = vcmp.ge.f32.partialorder %v665, 1.0
    %vm682 = vcmp.ge.f32.partialorder %v666, 1.0
    %vm683 = vcmp.ge.f32.partialorder %v667, 1.0
    %vm684 = vcmp.ge.f32.partialorder %v668, 1.0
    %v685 = vsel %vm669, 1, 0
    %v686 = vsel %vm670, 1, 0
    %v687 = vsel %vm671, 1, 0
    %v688 = vsel %vm672, 1, 0
    %v689 = vsel %vm673, 1, 0
    %v690 = vsel %vm674, 1, 0
    %v691 = vsel %vm675, 1, 0
    %v692 = vsel %vm676, 1, 0
    %v693 = vsel %vm677, 1, 0
    %v694 = vsel %vm678, 1, 0
    %v695 = vsel %vm679, 1, 0
    %v696 = vsel %vm680, 1, 0
    %v697 = vsel %vm681, 1, 0
    %v698 = vsel %vm682, 1, 0
    %v699 = vsel %vm683, 1, 0
    %v700 = vsel %vm684, 1, 0
    %v701 = vcvt.s32.f32 %v685
    %v702 = vcvt.s32.f32 %v686
    %v703 = vcvt.s32.f32 %v687
    %v704 = vcvt.s32.f32 %v688
    %v705 = vcvt.s32.f32 %v689
    %v706 = vcvt.s32.f32 %v690
    %v707 = vcvt.s32.f32 %v691
    %v708 = vcvt.s32.f32 %v692
    %v709 = vcvt.s32.f32 %v693
    %v710 = vcvt.s32.f32 %v694
    %v711 = vcvt.s32.f32 %v695
    %v712 = vcvt.s32.f32 %v696
    %v713 = vcvt.s32.f32 %v697
    %v714 = vcvt.s32.f32 %v698
    %v715 = vcvt.s32.f32 %v699
    %v716 = vcvt.s32.f32 %v700
    %v717 = vsub.f32 %v653, %v701
    %v718 = vsub.f32 %v654, %v702
    %v719 = vsub.f32 %v655, %v703
    %v720 = vsub.f32 %v656, %v704
    %v721 = vsub.f32 %v657, %v705
    %v722 = vsub.f32 %v658, %v706
    %v723 = vsub.f32 %v659, %v707
    %v724 = vsub.f32 %v660, %v708
    %v725 = vsub.f32 %v661, %v709
    %v726 = vsub.f32 %v662, %v710
    %v727 = vsub.f32 %v663, %v711
    %v728 = vsub.f32 %v664, %v712
    %v729 = vsub.f32 %v665, %v713
    %v730 = vsub.f32 %v666, %v714
    %v731 = vsub.f32 %v667, %v715
    %v732 = vsub.f32 %v668, %v716
    %v733 = vpack.c.bf16 %v701, %v701
    %v734 = vpack.c.bf16 %v702, %v702
    %v735 = vpack.c.bf16 %v703, %v703
    %v736 = vpack.c.bf16 %v704, %v704
    %v737 = vpack.c.bf16 %v705, %v705
    %v738 = vpack.c.bf16 %v706, %v706
    %v739 = vpack.c.bf16 %v707, %v707
    %v740 = vpack.c.bf16 %v708, %v708
    %v741 = vpack.c.bf16 %v709, %v709
    %v742 = vpack.c.bf16 %v710, %v710
    %v743 = vpack.c.bf16 %v711, %v711
    %v744 = vpack.c.bf16 %v712, %v712
    %v745 = vpack.c.bf16 %v713, %v713
    %v746 = vpack.c.bf16 %v714, %v714
    %v747 = vpack.c.bf16 %v715, %v715
    %v748 = vpack.c.bf16 %v716, %v716
    %vm749 = vcmask 519168
    %750 = vst.msk [vmem:[#allocation3] sm:$0xf] %vm749, %v733
    %751 = vst.msk [vmem:[#allocation3 + $0x4] sm:$0xf] %vm749, %v734
    %752 = vst.msk [vmem:[#allocation3 + $0x8] sm:$0xf] %vm749, %v735
    %753 = vst.msk [vmem:[#allocation3 + $0xc] sm:$0xf] %vm749, %v736
    %754 = vst.msk [vmem:[#allocation3 + $0x10] sm:$0xf] %vm749, %v737
    %755 = vst.msk [vmem:[#allocation3 + $0x14] sm:$0xf] %vm749, %v738
    %756 = vst.msk [vmem:[#allocation3 + $0x18] sm:$0xf] %vm749, %v739
    %757 = vst.msk [vmem:[#allocation3 + $0x1c] sm:$0xf] %vm749, %v740
    %758 = vst.msk [vmem:[#allocation3 + $0x20] sm:$0xf] %vm749, %v741
    %759 = vst.msk [vmem:[#allocation3 + $0x24] sm:$0xf] %vm749, %v742
    %760 = vst.msk [vmem:[#allocation3 + $0x28] sm:$0xf] %vm749, %v743
    %761 = vst.msk [vmem:[#allocation3 + $0x2c] sm:$0xf] %vm749, %v744
    %762 = vst.msk [vmem:[#allocation3 + $0x30] sm:$0xf] %vm749, %v745
    %763 = vst.msk [vmem:[#allocation3 + $0x34] sm:$0xf] %vm749, %v746
    %764 = vst.msk [vmem:[#allocation3 + $0x38] sm:$0xf] %vm749, %v747
    %765 = vst.msk [vmem:[#allocation3 + $0x3c] sm:$0xf] %vm749, %v748
    %s766 = scalar_lea.vmem [#allocation2], 128
    %v767 = vld [vmem:[%s766] sm:$0xff]
    %v768 = vld [vmem:[%s766 + $0x8] sm:$0xff]
    %v769 = vld [vmem:[%s766 + $0x10] sm:$0xff]
    %v770 = vld [vmem:[%s766 + $0x18] sm:$0xff]
    %v771 = vld [vmem:[%s766 + $0x20] sm:$0xff]
    %v772 = vld [vmem:[%s766 + $0x28] sm:$0xff]
    %v773 = vld [vmem:[%s766 + $0x30] sm:$0xff]
    %v774 = vld [vmem:[%s766 + $0x38] sm:$0xff]
    %v775 = vld [vmem:[%s766 + $0x40] sm:$0xff]
    %v776 = vld [vmem:[%s766 + $0x48] sm:$0xff]
    %v777 = vld [vmem:[%s766 + $0x50] sm:$0xff]
    %v778 = vld [vmem:[%s766 + $0x58] sm:$0xff]
    %v779 = vld [vmem:[%s766 + $0x60] sm:$0xff]
    %v780 = vld [vmem:[%s766 + $0x68] sm:$0xff]
    %v781 = vld [vmem:[%s766 + $0x70] sm:$0xff]
    %v782 = vld [vmem:[%s766 + $0x78] sm:$0xff]
    %v783 = vadd.f32 %v717, %v767
    %v784 = vadd.f32 %v718, %v768
    %v785 = vadd.f32 %v719, %v769
    %v786 = vadd.f32 %v720, %v770
    %v787 = vadd.f32 %v721, %v771
    %v788 = vadd.f32 %v722, %v772
    %v789 = vadd.f32 %v723, %v773
    %v790 = vadd.f32 %v724, %v774
    %v791 = vadd.f32 %v725, %v775
    %v792 = vadd.f32 %v726, %v776
    %v793 = vadd.f32 %v727, %v777
    %v794 = vadd.f32 %v728, %v778
    %v795 = vadd.f32 %v729, %v779
    %v796 = vadd.f32 %v730, %v780
    %v797 = vadd.f32 %v731, %v781
    %v798 = vadd.f32 %v732, %v782
    %v799 = vmul.f32 %v783, 0.5
    %v800 = vmul.f32 %v784, 0.5
    %v801 = vmul.f32 %v785, 0.5
    %v802 = vmul.f32 %v786, 0.5
    %v803 = vmul.f32 %v787, 0.5
    %v804 = vmul.f32 %v788, 0.5
    %v805 = vmul.f32 %v789, 0.5
    %v806 = vmul.f32 %v790, 0.5
    %v807 = vmul.f32 %v791, 0.5
    %v808 = vmul.f32 %v792, 0.5
    %v809 = vmul.f32 %v793, 0.5
    %v810 = vmul.f32 %v794, 0.5
    %v811 = vmul.f32 %v795, 0.5
    %v812 = vmul.f32 %v796, 0.5
    %v813 = vmul.f32 %v797, 0.5
    %v814 = vmul.f32 %v798, 0.5
    %vm815 = vcmp.ge.f32.partialorder %v799, 1.0
    %vm816 = vcmp.ge.f32.partialorder %v800, 1.0
    %vm817 = vcmp.ge.f32.partialorder %v801, 1.0
    %vm818 = vcmp.ge.f32.partialorder %v802, 1.0
    %vm819 = vcmp.ge.f32.partialorder %v803, 1.0
    %vm820 = vcmp.ge.f32.partialorder %v804, 1.0
    %vm821 = vcmp.ge.f32.partialorder %v805, 1.0
    %vm822 = vcmp.ge.f32.partialorder %v806, 1.0
    %vm823 = vcmp.ge.f32.partialorder %v807, 1.0
    %vm824 = vcmp.ge.f32.partialorder %v808, 1.0
    %vm825 = vcmp.ge.f32.partialorder %v809, 1.0
    %vm826 = vcmp.ge.f32.partialorder %v810, 1.0
    %vm827 = vcmp.ge.f32.partialorder %v811, 1.0
    %vm828 = vcmp.ge.f32.partialorder %v812, 1.0
    %vm829 = vcmp.ge.f32.partialorder %v813, 1.0
    %vm830 = vcmp.ge.f32.partialorder %v814, 1.0
    %v831 = vsel %vm815, 1, 0
    %v832 = vsel %vm816, 1, 0
    %v833 = vsel %vm817, 1, 0
    %v834 = vsel %vm818, 1, 0
    %v835 = vsel %vm819, 1, 0
    %v836 = vsel %vm820, 1, 0
    %v837 = vsel %vm821, 1, 0
    %v838 = vsel %vm822, 1, 0
    %v839 = vsel %vm823, 1, 0
    %v840 = vsel %vm824, 1, 0
    %v841 = vsel %vm825, 1, 0
    %v842 = vsel %vm826, 1, 0
    %v843 = vsel %vm827, 1, 0
    %v844 = vsel %vm828, 1, 0
    %v845 = vsel %vm829, 1, 0
    %v846 = vsel %vm830, 1, 0
    %v847 = vcvt.s32.f32 %v831
    %v848 = vcvt.s32.f32 %v832
    %v849 = vcvt.s32.f32 %v833
    %v850 = vcvt.s32.f32 %v834
    %v851 = vcvt.s32.f32 %v835
    %v852 = vcvt.s32.f32 %v836
    %v853 = vcvt.s32.f32 %v837
    %v854 = vcvt.s32.f32 %v838
    %v855 = vcvt.s32.f32 %v839
    %v856 = vcvt.s32.f32 %v840
    %v857 = vcvt.s32.f32 %v841
    %v858 = vcvt.s32.f32 %v842
    %v859 = vcvt.s32.f32 %v843
    %v860 = vcvt.s32.f32 %v844
    %v861 = vcvt.s32.f32 %v845
    %v862 = vcvt.s32.f32 %v846
    %v863 = vsub.f32 %v799, %v847
    %v864 = vsub.f32 %v800, %v848
    %v865 = vsub.f32 %v801, %v849
    %v866 = vsub.f32 %v802, %v850
    %v867 = vsub.f32 %v803, %v851
    %v868 = vsub.f32 %v804, %v852
    %v869 = vsub.f32 %v805, %v853
    %v870 = vsub.f32 %v806, %v854
    %v871 = vsub.f32 %v807, %v855
    %v872 = vsub.f32 %v808, %v856
    %v873 = vsub.f32 %v809, %v857
    %v874 = vsub.f32 %v810, %v858
    %v875 = vsub.f32 %v811, %v859
    %v876 = vsub.f32 %v812, %v860
    %v877 = vsub.f32 %v813, %v861
    %v878 = vsub.f32 %v814, %v862
    %v879 = vpack.c.bf16 %v847, %v847
    %v880 = vpack.c.bf16 %v848, %v848
    %v881 = vpack.c.bf16 %v849, %v849
    %v882 = vpack.c.bf16 %v850, %v850
    %v883 = vpack.c.bf16 %v851, %v851
    %v884 = vpack.c.bf16 %v852, %v852
    %v885 = vpack.c.bf16 %v853, %v853
    %v886 = vpack.c.bf16 %v854, %v854
    %v887 = vpack.c.bf16 %v855, %v855
    %v888 = vpack.c.bf16 %v856, %v856
    %v889 = vpack.c.bf16 %v857, %v857
    %v890 = vpack.c.bf16 %v858, %v858
    %v891 = vpack.c.bf16 %v859, %v859
    %v892 = vpack.c.bf16 %v860, %v860
    %v893 = vpack.c.bf16 %v861, %v861
    %v894 = vpack.c.bf16 %v862, %v862
    %s895 = scalar_lea.vmem [#allocation3], 64
    %896 = vst.msk [vmem:[%s895] sm:$0xf] %vm749, %v879
    %897 = vst.msk [vmem:[%s895 + $0x4] sm:$0xf] %vm749, %v880
    %898 = vst.msk [vmem:[%s895 + $0x8] sm:$0xf] %vm749, %v881
    %899 = vst.msk [vmem:[%s895 + $0xc] sm:$0xf] %vm749, %v882
    %900 = vst.msk [vmem:[%s895 + $0x10] sm:$0xf] %vm749, %v883
    %901 = vst.msk [vmem:[%s895 + $0x14] sm:$0xf] %vm749, %v884
    %902 = vst.msk [vmem:[%s895 + $0x18] sm:$0xf] %vm749, %v885
    %903 = vst.msk [vmem:[%s895 + $0x1c] sm:$0xf] %vm749, %v886
    %904 = vst.msk [vmem:[%s895 + $0x20] sm:$0xf] %vm749, %v887
    %905 = vst.msk [vmem:[%s895 + $0x24] sm:$0xf] %vm749, %v888
    %906 = vst.msk [vmem:[%s895 + $0x28] sm:$0xf] %vm749, %v889
    %907 = vst.msk [vmem:[%s895 + $0x2c] sm:$0xf] %vm749, %v890
    %908 = vst.msk [vmem:[%s895 + $0x30] sm:$0xf] %vm749, %v891
    %909 = vst.msk [vmem:[%s895 + $0x34] sm:$0xf] %vm749, %v892
    %910 = vst.msk [vmem:[%s895 + $0x38] sm:$0xf] %vm749, %v893
    %911 = vst.msk [vmem:[%s895 + $0x3c] sm:$0xf] %vm749, %v894
    %s912 = scalar_lea.vmem [#allocation2], 256
    %v913 = vld [vmem:[%s912] sm:$0xff]
    %v914 = vld [vmem:[%s912 + $0x8] sm:$0xff]
    %v915 = vld [vmem:[%s912 + $0x10] sm:$0xff]
    %v916 = vld [vmem:[%s912 + $0x18] sm:$0xff]
    %v917 = vld [vmem:[%s912 + $0x20] sm:$0xff]
    %v918 = vld [vmem:[%s912 + $0x28] sm:$0xff]
    %v919 = vld [vmem:[%s912 + $0x30] sm:$0xff]
    %v920 = vld [vmem:[%s912 + $0x38] sm:$0xff]
    %v921 = vld [vmem:[%s912 + $0x40] sm:$0xff]
    %v922 = vld [vmem:[%s912 + $0x48] sm:$0xff]
    %v923 = vld [vmem:[%s912 + $0x50] sm:$0xff]
    %v924 = vld [vmem:[%s912 + $0x58] sm:$0xff]
    %v925 = vld [vmem:[%s912 + $0x60] sm:$0xff]
    %v926 = vld [vmem:[%s912 + $0x68] sm:$0xff]
    %v927 = vld [vmem:[%s912 + $0x70] sm:$0xff]
    %v928 = vld [vmem:[%s912 + $0x78] sm:$0xff]
    %v929 = vadd.f32 %v863, %v913
    %v930 = vadd.f32 %v864, %v914
    %v931 = vadd.f32 %v865, %v915
    %v932 = vadd.f32 %v866, %v916
    %v933 = vadd.f32 %v867, %v917
    %v934 = vadd.f32 %v868, %v918
    %v935 = vadd.f32 %v869, %v919
    %v936 = vadd.f32 %v870, %v920
    %v937 = vadd.f32 %v871, %v921
    %v938 = vadd.f32 %v872, %v922
    %v939 = vadd.f32 %v873, %v923
    %v940 = vadd.f32 %v874, %v924
    %v941 = vadd.f32 %v875, %v925
    %v942 = vadd.f32 %v876, %v926
    %v943 = vadd.f32 %v877, %v927
    %v944 = vadd.f32 %v878, %v928
    %v945 = vmul.f32 %v929, 0.5
    %v946 = vmul.f32 %v930, 0.5
    %v947 = vmul.f32 %v931, 0.5
    %v948 = vmul.f32 %v932, 0.5
    %v949 = vmul.f32 %v933, 0.5
    %v950 = vmul.f32 %v934, 0.5
    %v951 = vmul.f32 %v935, 0.5
    %v952 = vmul.f32 %v936, 0.5
    %v953 = vmul.f32 %v937, 0.5
    %v954 = vmul.f32 %v938, 0.5
    %v955 = vmul.f32 %v939, 0.5
    %v956 = vmul.f32 %v940, 0.5
    %v957 = vmul.f32 %v941, 0.5
    %v958 = vmul.f32 %v942, 0.5
    %v959 = vmul.f32 %v943, 0.5
    %v960 = vmul.f32 %v944, 0.5
    %vm961 = vcmp.ge.f32.partialorder %v945, 1.0
    %vm962 = vcmp.ge.f32.partialorder %v946, 1.0
    %vm963 = vcmp.ge.f32.partialorder %v947, 1.0
    %vm964 = vcmp.ge.f32.partialorder %v948, 1.0
    %vm965 = vcmp.ge.f32.partialorder %v949, 1.0
    %vm966 = vcmp.ge.f32.partialorder %v950, 1.0
    %vm967 = vcmp.ge.f32.partialorder %v951, 1.0
    %vm968 = vcmp.ge.f32.partialorder %v952, 1.0
    %vm969 = vcmp.ge.f32.partialorder %v953, 1.0
    %vm970 = vcmp.ge.f32.partialorder %v954, 1.0
    %vm971 = vcmp.ge.f32.partialorder %v955, 1.0
    %vm972 = vcmp.ge.f32.partialorder %v956, 1.0
    %vm973 = vcmp.ge.f32.partialorder %v957, 1.0
    %vm974 = vcmp.ge.f32.partialorder %v958, 1.0
    %vm975 = vcmp.ge.f32.partialorder %v959, 1.0
    %vm976 = vcmp.ge.f32.partialorder %v960, 1.0
    %v977 = vsel %vm961, 1, 0
    %v978 = vsel %vm962, 1, 0
    %v979 = vsel %vm963, 1, 0
    %v980 = vsel %vm964, 1, 0
    %v981 = vsel %vm965, 1, 0
    %v982 = vsel %vm966, 1, 0
    %v983 = vsel %vm967, 1, 0
    %v984 = vsel %vm968, 1, 0
    %v985 = vsel %vm969, 1, 0
    %v986 = vsel %vm970, 1, 0
    %v987 = vsel %vm971, 1, 0
    %v988 = vsel %vm972, 1, 0
    %v989 = vsel %vm973, 1, 0
    %v990 = vsel %vm974, 1, 0
    %v991 = vsel %vm975, 1, 0
    %v992 = vsel %vm976, 1, 0
    %v993 = vcvt.s32.f32 %v977
    %v994 = vcvt.s32.f32 %v978
    %v995 = vcvt.s32.f32 %v979
    %v996 = vcvt.s32.f32 %v980
    %v997 = vcvt.s32.f32 %v981
    %v998 = vcvt.s32.f32 %v982
    %v999 = vcvt.s32.f32 %v983
    %v1000 = vcvt.s32.f32 %v984
    %v1001 = vcvt.s32.f32 %v985
    %v1002 = vcvt.s32.f32 %v986
    %v1003 = vcvt.s32.f32 %v987
    %v1004 = vcvt.s32.f32 %v988
    %v1005 = vcvt.s32.f32 %v989
    %v1006 = vcvt.s32.f32 %v990
    %v1007 = vcvt.s32.f32 %v991
    %v1008 = vcvt.s32.f32 %v992
    %v1009 = vsub.f32 %v945, %v993
    %v1010 = vsub.f32 %v946, %v994
    %v1011 = vsub.f32 %v947, %v995
    %v1012 = vsub.f32 %v948, %v996
    %v1013 = vsub.f32 %v949, %v997
    %v1014 = vsub.f32 %v950, %v998
    %v1015 = vsub.f32 %v951, %v999
    %v1016 = vsub.f32 %v952, %v1000
    %v1017 = vsub.f32 %v953, %v1001
    %v1018 = vsub.f32 %v954, %v1002
    %v1019 = vsub.f32 %v955, %v1003
    %v1020 = vsub.f32 %v956, %v1004
    %v1021 = vsub.f32 %v957, %v1005
    %v1022 = vsub.f32 %v958, %v1006
    %v1023 = vsub.f32 %v959, %v1007
    %v1024 = vsub.f32 %v960, %v1008
    %v1025 = vpack.c.bf16 %v993, %v993
    %v1026 = vpack.c.bf16 %v994, %v994
    %v1027 = vpack.c.bf16 %v995, %v995
    %v1028 = vpack.c.bf16 %v996, %v996
    %v1029 = vpack.c.bf16 %v997, %v997
    %v1030 = vpack.c.bf16 %v998, %v998
    %v1031 = vpack.c.bf16 %v999, %v999
    %v1032 = vpack.c.bf16 %v1000, %v1000
    %v1033 = vpack.c.bf16 %v1001, %v1001
    %v1034 = vpack.c.bf16 %v1002, %v1002
    %v1035 = vpack.c.bf16 %v1003, %v1003
    %v1036 = vpack.c.bf16 %v1004, %v1004
    %v1037 = vpack.c.bf16 %v1005, %v1005
    %v1038 = vpack.c.bf16 %v1006, %v1006
    %v1039 = vpack.c.bf16 %v1007, %v1007
    %v1040 = vpack.c.bf16 %v1008, %v1008
    %s1041 = scalar_lea.vmem [#allocation3], 128
    %1042 = vst.msk [vmem:[%s1041] sm:$0xf] %vm749, %v1025
    %1043 = vst.msk [vmem:[%s1041 + $0x4] sm:$0xf] %vm749, %v1026
    %1044 = vst.msk [vmem:[%s1041 + $0x8] sm:$0xf] %vm749, %v1027
    %1045 = vst.msk [vmem:[%s1041 + $0xc] sm:$0xf] %vm749, %v1028
    %1046 = vst.msk [vmem:[%s1041 + $0x10] sm:$0xf] %vm749, %v1029
    %1047 = vst.msk [vmem:[%s1041 + $0x14] sm:$0xf] %vm749, %v1030
    %1048 = vst.msk [vmem:[%s1041 + $0x18] sm:$0xf] %vm749, %v1031
    %1049 = vst.msk [vmem:[%s1041 + $0x1c] sm:$0xf] %vm749, %v1032
    %1050 = vst.msk [vmem:[%s1041 + $0x20] sm:$0xf] %vm749, %v1033
    %1051 = vst.msk [vmem:[%s1041 + $0x24] sm:$0xf] %vm749, %v1034
    %1052 = vst.msk [vmem:[%s1041 + $0x28] sm:$0xf] %vm749, %v1035
    %1053 = vst.msk [vmem:[%s1041 + $0x2c] sm:$0xf] %vm749, %v1036
    %1054 = vst.msk [vmem:[%s1041 + $0x30] sm:$0xf] %vm749, %v1037
    %1055 = vst.msk [vmem:[%s1041 + $0x34] sm:$0xf] %vm749, %v1038
    %1056 = vst.msk [vmem:[%s1041 + $0x38] sm:$0xf] %vm749, %v1039
    %1057 = vst.msk [vmem:[%s1041 + $0x3c] sm:$0xf] %vm749, %v1040
    %s1058 = scalar_lea.vmem [#allocation2], 384
    %v1059 = vld [vmem:[%s1058] sm:$0xff]
    %v1060 = vld [vmem:[%s1058 + $0x8] sm:$0xff]
    %v1061 = vld [vmem:[%s1058 + $0x10] sm:$0xff]
    %v1062 = vld [vmem:[%s1058 + $0x18] sm:$0xff]
    %v1063 = vld [vmem:[%s1058 + $0x20] sm:$0xff]
    %v1064 = vld [vmem:[%s1058 + $0x28] sm:$0xff]
    %v1065 = vld [vmem:[%s1058 + $0x30] sm:$0xff]
    %v1066 = vld [vmem:[%s1058 + $0x38] sm:$0xff]
    %v1067 = vld [vmem:[%s1058 + $0x40] sm:$0xff]
    %v1068 = vld [vmem:[%s1058 + $0x48] sm:$0xff]
    %v1069 = vld [vmem:[%s1058 + $0x50] sm:$0xff]
    %v1070 = vld [vmem:[%s1058 + $0x58] sm:$0xff]
    %v1071 = vld [vmem:[%s1058 + $0x60] sm:$0xff]
    %v1072 = vld [vmem:[%s1058 + $0x68] sm:$0xff]
    %v1073 = vld [vmem:[%s1058 + $0x70] sm:$0xff]
    %v1074 = vld [vmem:[%s1058 + $0x78] sm:$0xff]
    %v1075 = vadd.f32 %v1009, %v1059
    %v1076 = vadd.f32 %v1010, %v1060
    %v1077 = vadd.f32 %v1011, %v1061
    %v1078 = vadd.f32 %v1012, %v1062
    %v1079 = vadd.f32 %v1013, %v1063
    %v1080 = vadd.f32 %v1014, %v1064
    %v1081 = vadd.f32 %v1015, %v1065
    %v1082 = vadd.f32 %v1016, %v1066
    %v1083 = vadd.f32 %v1017, %v1067
    %v1084 = vadd.f32 %v1018, %v1068
    %v1085 = vadd.f32 %v1019, %v1069
    %v1086 = vadd.f32 %v1020, %v1070
    %v1087 = vadd.f32 %v1021, %v1071
    %v1088 = vadd.f32 %v1022, %v1072
    %v1089 = vadd.f32 %v1023, %v1073
    %v1090 = vadd.f32 %v1024, %v1074
    %v1091 = vmul.f32 %v1075, 0.5
    %v1092 = vmul.f32 %v1076, 0.5
    %v1093 = vmul.f32 %v1077, 0.5
    %v1094 = vmul.f32 %v1078, 0.5
    %v1095 = vmul.f32 %v1079, 0.5
    %v1096 = vmul.f32 %v1080, 0.5
    %v1097 = vmul.f32 %v1081, 0.5
    %v1098 = vmul.f32 %v1082, 0.5
    %v1099 = vmul.f32 %v1083, 0.5
    %v1100 = vmul.f32 %v1084, 0.5
    %v1101 = vmul.f32 %v1085, 0.5
    %v1102 = vmul.f32 %v1086, 0.5
    %v1103 = vmul.f32 %v1087, 0.5
    %v1104 = vmul.f32 %v1088, 0.5
    %v1105 = vmul.f32 %v1089, 0.5
    %v1106 = vmul.f32 %v1090, 0.5
    %vm1107 = vcmp.ge.f32.partialorder %v1091, 1.0
    %vm1108 = vcmp.ge.f32.partialorder %v1092, 1.0
    %vm1109 = vcmp.ge.f32.partialorder %v1093, 1.0
    %vm1110 = vcmp.ge.f32.partialorder %v1094, 1.0
    %vm1111 = vcmp.ge.f32.partialorder %v1095, 1.0
    %vm1112 = vcmp.ge.f32.partialorder %v1096, 1.0
    %vm1113 = vcmp.ge.f32.partialorder %v1097, 1.0
    %vm1114 = vcmp.ge.f32.partialorder %v1098, 1.0
    %vm1115 = vcmp.ge.f32.partialorder %v1099, 1.0
    %vm1116 = vcmp.ge.f32.partialorder %v1100, 1.0
    %vm1117 = vcmp.ge.f32.partialorder %v1101, 1.0
    %vm1118 = vcmp.ge.f32.partialorder %v1102, 1.0
    %vm1119 = vcmp.ge.f32.partialorder %v1103, 1.0
    %vm1120 = vcmp.ge.f32.partialorder %v1104, 1.0
    %vm1121 = vcmp.ge.f32.partialorder %v1105, 1.0
    %vm1122 = vcmp.ge.f32.partialorder %v1106, 1.0
    %v1123 = vsel %vm1107, 1, 0
    %v1124 = vsel %vm1108, 1, 0
    %v1125 = vsel %vm1109, 1, 0
    %v1126 = vsel %vm1110, 1, 0
    %v1127 = vsel %vm1111, 1, 0
    %v1128 = vsel %vm1112, 1, 0
    %v1129 = vsel %vm1113, 1, 0
    %v1130 = vsel %vm1114, 1, 0
    %v1131 = vsel %vm1115, 1, 0
    %v1132 = vsel %vm1116, 1, 0
    %v1133 = vsel %vm1117, 1, 0
    %v1134 = vsel %vm1118, 1, 0
    %v1135 = vsel %vm1119, 1, 0
    %v1136 = vsel %vm1120, 1, 0
    %v1137 = vsel %vm1121, 1, 0
    %v1138 = vsel %vm1122, 1, 0
    %v1139 = vcvt.s32.f32 %v1123
    %v1140 = vcvt.s32.f32 %v1124
    %v1141 = vcvt.s32.f32 %v1125
    %v1142 = vcvt.s32.f32 %v1126
    %v1143 = vcvt.s32.f32 %v1127
    %v1144 = vcvt.s32.f32 %v1128
    %v1145 = vcvt.s32.f32 %v1129
    %v1146 = vcvt.s32.f32 %v1130
    %v1147 = vcvt.s32.f32 %v1131
    %v1148 = vcvt.s32.f32 %v1132
    %v1149 = vcvt.s32.f32 %v1133
    %v1150 = vcvt.s32.f32 %v1134
    %v1151 = vcvt.s32.f32 %v1135
    %v1152 = vcvt.s32.f32 %v1136
    %v1153 = vcvt.s32.f32 %v1137
    %v1154 = vcvt.s32.f32 %v1138
    %v1155 = vpack.c.bf16 %v1139, %v1139
    %v1156 = vpack.c.bf16 %v1140, %v1140
    %v1157 = vpack.c.bf16 %v1141, %v1141
    %v1158 = vpack.c.bf16 %v1142, %v1142
    %v1159 = vpack.c.bf16 %v1143, %v1143
    %v1160 = vpack.c.bf16 %v1144, %v1144
    %v1161 = vpack.c.bf16 %v1145, %v1145
    %v1162 = vpack.c.bf16 %v1146, %v1146
    %v1163 = vpack.c.bf16 %v1147, %v1147
    %v1164 = vpack.c.bf16 %v1148, %v1148
    %v1165 = vpack.c.bf16 %v1149, %v1149
    %v1166 = vpack.c.bf16 %v1150, %v1150
    %v1167 = vpack.c.bf16 %v1151, %v1151
    %v1168 = vpack.c.bf16 %v1152, %v1152
    %v1169 = vpack.c.bf16 %v1153, %v1153
    %v1170 = vpack.c.bf16 %v1154, %v1154
    %s1171 = scalar_lea.vmem [#allocation3], 192
    %1172 = vst.msk [vmem:[%s1171] sm:$0xf] %vm749, %v1155
    %1173 = vst.msk [vmem:[%s1171 + $0x4] sm:$0xf] %vm749, %v1156
    %1174 = vst.msk [vmem:[%s1171 + $0x8] sm:$0xf] %vm749, %v1157
    %1175 = vst.msk [vmem:[%s1171 + $0xc] sm:$0xf] %vm749, %v1158
    %1176 = vst.msk [vmem:[%s1171 + $0x10] sm:$0xf] %vm749, %v1159
    %1177 = vst.msk [vmem:[%s1171 + $0x14] sm:$0xf] %vm749, %v1160
    %1178 = vst.msk [vmem:[%s1171 + $0x18] sm:$0xf] %vm749, %v1161
    %1179 = vst.msk [vmem:[%s1171 + $0x1c] sm:$0xf] %vm749, %v1162
    %1180 = vst.msk [vmem:[%s1171 + $0x20] sm:$0xf] %vm749, %v1163
    %1181 = vst.msk [vmem:[%s1171 + $0x24] sm:$0xf] %vm749, %v1164
    %1182 = vst.msk [vmem:[%s1171 + $0x28] sm:$0xf] %vm749, %v1165
    %1183 = vst.msk [vmem:[%s1171 + $0x2c] sm:$0xf] %vm749, %v1166
    %1184 = vst.msk [vmem:[%s1171 + $0x30] sm:$0xf] %vm749, %v1167
    %1185 = vst.msk [vmem:[%s1171 + $0x34] sm:$0xf] %vm749, %v1168
    %1186 = vst.msk [vmem:[%s1171 + $0x38] sm:$0xf] %vm749, %v1169
    %1187 = vst.msk [vmem:[%s1171 + $0x3c] sm:$0xf] %vm749, %v1170
    %v1188 = vld [vmem:[#allocation3] sm:$0xf]
    %v1189 = vld [vmem:[#allocation3 + $0x4] sm:$0xf]
    %v1190 = vld [vmem:[#allocation3 + $0x8] sm:$0xf]
    %v1191 = vld [vmem:[#allocation3 + $0xc] sm:$0xf]
    %v1192 = vld [vmem:[#allocation3 + $0x10] sm:$0xf]
    %v1193 = vld [vmem:[#allocation3 + $0x14] sm:$0xf]
    %v1194 = vld [vmem:[#allocation3 + $0x18] sm:$0xf]
    %v1195 = vld [vmem:[#allocation3 + $0x1c] sm:$0xf]
    %v1196 = vld [vmem:[#allocation3 + $0x20] sm:$0xf]
    %v1197 = vld [vmem:[#allocation3 + $0x24] sm:$0xf]
    %v1198 = vld [vmem:[#allocation3 + $0x28] sm:$0xf]
    %v1199 = vld [vmem:[#allocation3 + $0x2c] sm:$0xf]
    %v1200 = vld [vmem:[#allocation3 + $0x30] sm:$0xf]
    %v1201 = vld [vmem:[#allocation3 + $0x34] sm:$0xf]
    %v1202 = vld [vmem:[#allocation3 + $0x38] sm:$0xf]
    %v1203 = vld [vmem:[#allocation3 + $0x3c] sm:$0xf]
    %v1204 = vld [vmem:[#allocation3 + $0x40] sm:$0xf]
    %v1205 = vld [vmem:[#allocation3 + $0x44] sm:$0xf]
    %v1206 = vld [vmem:[#allocation3 + $0x48] sm:$0xf]
    %v1207 = vld [vmem:[#allocation3 + $0x4c] sm:$0xf]
    %v1208 = vld [vmem:[#allocation3 + $0x50] sm:$0xf]
    %v1209 = vld [vmem:[#allocation3 + $0x54] sm:$0xf]
    %v1210 = vld [vmem:[#allocation3 + $0x58] sm:$0xf]
    %v1211 = vld [vmem:[#allocation3 + $0x5c] sm:$0xf]
    %v1212 = vld [vmem:[#allocation3 + $0x60] sm:$0xf]
    %v1213 = vld [vmem:[#allocation3 + $0x64] sm:$0xf]
    %v1214 = vld [vmem:[#allocation3 + $0x68] sm:$0xf]
    %v1215 = vld [vmem:[#allocation3 + $0x6c] sm:$0xf]
    %v1216 = vld [vmem:[#allocation3 + $0x70] sm:$0xf]
    %v1217 = vld [vmem:[#allocation3 + $0x74] sm:$0xf]
    %v1218 = vld [vmem:[#allocation3 + $0x78] sm:$0xf]
    %v1219 = vld [vmem:[#allocation3 + $0x7c] sm:$0xf]
    %v1220 = vld [vmem:[#allocation3 + $0x80] sm:$0xf]
    %v1221 = vld [vmem:[#allocation3 + $0x84] sm:$0xf]
    %v1222 = vld [vmem:[#allocation3 + $0x88] sm:$0xf]
    %v1223 = vld [vmem:[#allocation3 + $0x8c] sm:$0xf]
    %v1224 = vld [vmem:[#allocation3 + $0x90] sm:$0xf]
    %v1225 = vld [vmem:[#allocation3 + $0x94] sm:$0xf]
    %v1226 = vld [vmem:[#allocation3 + $0x98] sm:$0xf]
    %v1227 = vld [vmem:[#allocation3 + $0x9c] sm:$0xf]
    %v1228 = vld [vmem:[#allocation3 + $0xa0] sm:$0xf]
    %v1229 = vld [vmem:[#allocation3 + $0xa4] sm:$0xf]
    %v1230 = vld [vmem:[#allocation3 + $0xa8] sm:$0xf]
    %v1231 = vld [vmem:[#allocation3 + $0xac] sm:$0xf]
    %v1232 = vld [vmem:[#allocation3 + $0xb0] sm:$0xf]
    %v1233 = vld [vmem:[#allocation3 + $0xb4] sm:$0xf]
    %v1234 = vld [vmem:[#allocation3 + $0xb8] sm:$0xf]
    %v1235 = vld [vmem:[#allocation3 + $0xbc] sm:$0xf]
    %v1236 = vld [vmem:[#allocation3 + $0xc0] sm:$0xf]
    %v1237 = vld [vmem:[#allocation3 + $0xc4] sm:$0xf]
    %v1238 = vld [vmem:[#allocation3 + $0xc8] sm:$0xf]
    %v1239 = vld [vmem:[#allocation3 + $0xcc] sm:$0xf]
    %v1240 = vld [vmem:[#allocation3 + $0xd0] sm:$0xf]
    %v1241 = vld [vmem:[#allocation3 + $0xd4] sm:$0xf]
    %v1242 = vld [vmem:[#allocation3 + $0xd8] sm:$0xf]
    %v1243 = vld [vmem:[#allocation3 + $0xdc] sm:$0xf]
    %v1244 = vld [vmem:[#allocation3 + $0xe0] sm:$0xf]
    %v1245 = vld [vmem:[#allocation3 + $0xe4] sm:$0xf]
    %v1246 = vld [vmem:[#allocation3 + $0xe8] sm:$0xf]
    %v1247 = vld [vmem:[#allocation3 + $0xec] sm:$0xf]
    %v1248 = vld [vmem:[#allocation3 + $0xf0] sm:$0xf]
    %v1249 = vld [vmem:[#allocation3 + $0xf4] sm:$0xf]
    %v1250 = vld [vmem:[#allocation3 + $0xf8] sm:$0xf]
    %v1251 = vld [vmem:[#allocation3 + $0xfc] sm:$0xf]
    %v1252 = vld [vmem:[%s1] sm:$0xf]
    %v1253 = vld [vmem:[%s1 + $0x4] sm:$0xf]
    %v1254 = vld [vmem:[%s1 + $0x8] sm:$0xf]
    %v1255 = vld [vmem:[%s1 + $0xc] sm:$0xf]
    %v1256 = vld [vmem:[%s1 + $0x10] sm:$0xf]
    %v1257 = vld [vmem:[%s1 + $0x14] sm:$0xf]
    %v1258 = vld [vmem:[%s1 + $0x18] sm:$0xf]
    %v1259 = vld [vmem:[%s1 + $0x1c] sm:$0xf]
    %v1260 = vld [vmem:[%s2] sm:$0x1]
    %v1262 = vperm.slane %v1260, 0
    %v1328 = vunpack.c.l.b16 %v1188
    %v1329 = vunpack.c.l.b16 %v1189
    %v1330 = vunpack.c.l.b16 %v1190
    %v1331 = vunpack.c.l.b16 %v1191
    %v1332 = vunpack.c.l.b16 %v1192
    %v1333 = vunpack.c.l.b16 %v1193
    %v1334 = vunpack.c.l.b16 %v1194
    %v1335 = vunpack.c.l.b16 %v1195
    %v1336 = vunpack.c.l.b16 %v1196
    %v1337 = vunpack.c.l.b16 %v1197
    %v1338 = vunpack.c.l.b16 %v1198
    %v1339 = vunpack.c.l.b16 %v1199
    %v1340 = vunpack.c.l.b16 %v1200
    %v1341 = vunpack.c.l.b16 %v1201
    %v1342 = vunpack.c.l.b16 %v1202
    %v1343 = vunpack.c.l.b16 %v1203
    %v1344 = vunpack.c.l.b16 %v1204
    %v1345 = vunpack.c.l.b16 %v1205
    %v1346 = vunpack.c.l.b16 %v1206
    %v1347 = vunpack.c.l.b16 %v1207
    %v1348 = vunpack.c.l.b16 %v1208
    %v1349 = vunpack.c.l.b16 %v1209
    %v1350 = vunpack.c.l.b16 %v1210
    %v1351 = vunpack.c.l.b16 %v1211
    %v1352 = vunpack.c.l.b16 %v1212
    %v1353 = vunpack.c.l.b16 %v1213
    %v1354 = vunpack.c.l.b16 %v1214
    %v1355 = vunpack.c.l.b16 %v1215
    %v1356 = vunpack.c.l.b16 %v1216
    %v1357 = vunpack.c.l.b16 %v1217
    %v1358 = vunpack.c.l.b16 %v1218
    %v1359 = vunpack.c.l.b16 %v1219
    %v1360 = vunpack.c.l.b16 %v1220
    %v1361 = vunpack.c.l.b16 %v1221
    %v1362 = vunpack.c.l.b16 %v1222
    %v1363 = vunpack.c.l.b16 %v1223
    %v1364 = vunpack.c.l.b16 %v1224
    %v1365 = vunpack.c.l.b16 %v1225
    %v1366 = vunpack.c.l.b16 %v1226
    %v1367 = vunpack.c.l.b16 %v1227
    %v1368 = vunpack.c.l.b16 %v1228
    %v1369 = vunpack.c.l.b16 %v1229
    %v1370 = vunpack.c.l.b16 %v1230
    %v1371 = vunpack.c.l.b16 %v1231
    %v1372 = vunpack.c.l.b16 %v1232
    %v1373 = vunpack.c.l.b16 %v1233
    %v1374 = vunpack.c.l.b16 %v1234
    %v1375 = vunpack.c.l.b16 %v1235
    %v1376 = vunpack.c.l.b16 %v1236
    %v1377 = vunpack.c.l.b16 %v1237
    %v1378 = vunpack.c.l.b16 %v1238
    %v1379 = vunpack.c.l.b16 %v1239
    %v1380 = vunpack.c.l.b16 %v1240
    %v1381 = vunpack.c.l.b16 %v1241
    %v1382 = vunpack.c.l.b16 %v1242
    %v1383 = vunpack.c.l.b16 %v1243
    %v1384 = vunpack.c.l.b16 %v1244
    %v1385 = vunpack.c.l.b16 %v1245
    %v1386 = vunpack.c.l.b16 %v1246
    %v1387 = vunpack.c.l.b16 %v1247
    %v1388 = vunpack.c.l.b16 %v1248
    %v1389 = vunpack.c.l.b16 %v1249
    %v1390 = vunpack.c.l.b16 %v1250
    %v1391 = vunpack.c.l.b16 %v1251
    %v1392 = vpack.c.b16 %v1329, %v1328
    %v1393 = vpack.c.b16 %v1331, %v1330
    %v1394 = vpack.c.b16 %v1333, %v1332
    %v1395 = vpack.c.b16 %v1335, %v1334
    %v1396 = vpack.c.b16 %v1337, %v1336
    %v1397 = vpack.c.b16 %v1339, %v1338
    %v1398 = vpack.c.b16 %v1341, %v1340
    %v1399 = vpack.c.b16 %v1343, %v1342
    %v1400 = vpack.c.b16 %v1345, %v1344
    %v1401 = vpack.c.b16 %v1347, %v1346
    %v1402 = vpack.c.b16 %v1349, %v1348
    %v1403 = vpack.c.b16 %v1351, %v1350
    %v1404 = vpack.c.b16 %v1353, %v1352
    %v1405 = vpack.c.b16 %v1355, %v1354
    %v1406 = vpack.c.b16 %v1357, %v1356
    %v1407 = vpack.c.b16 %v1359, %v1358
    %v1408 = vpack.c.b16 %v1361, %v1360
    %v1409 = vpack.c.b16 %v1363, %v1362
    %v1410 = vpack.c.b16 %v1365, %v1364
    %v1411 = vpack.c.b16 %v1367, %v1366
    %v1412 = vpack.c.b16 %v1369, %v1368
    %v1413 = vpack.c.b16 %v1371, %v1370
    %v1414 = vpack.c.b16 %v1373, %v1372
    %v1415 = vpack.c.b16 %v1375, %v1374
    %v1416 = vpack.c.b16 %v1377, %v1376
    %v1417 = vpack.c.b16 %v1379, %v1378
    %v1418 = vpack.c.b16 %v1381, %v1380
    %v1419 = vpack.c.b16 %v1383, %v1382
    %v1420 = vpack.c.b16 %v1385, %v1384
    %v1421 = vpack.c.b16 %v1387, %v1386
    %v1422 = vpack.c.b16 %v1389, %v1388
    %v1423 = vpack.c.b16 %v1391, %v1390
    %v1432 = vunpack.c.l.b16 %v1252
    %v1433 = vunpack.c.l.b16 %v1253
    %v1434 = vunpack.c.l.b16 %v1254
    %v1435 = vunpack.c.l.b16 %v1255
    %v1436 = vunpack.c.l.b16 %v1256
    %v1437 = vunpack.c.l.b16 %v1257
    %v1438 = vunpack.c.l.b16 %v1258
    %v1439 = vunpack.c.l.b16 %v1259
    %v1440 = vpack.c.b16 %v1433, %v1432
    %v1441 = vpack.c.b16 %v1435, %v1434
    %v1442 = vpack.c.b16 %v1437, %v1436
    %v1443 = vpack.c.b16 %v1439, %v1438
    %v1449 = vsel %vm80, %v1392, 0
    %v1452 = vsel %vm80, %v1393, 0
    %v1455 = vsel %vm80, %v1394, 0
    %v1458 = vsel %vm80, %v1395, 0
    %v1461 = vsel %vm80, %v1396, 0
    %v1464 = vsel %vm80, %v1397, 0
    %v1467 = vsel %vm80, %v1398, 0
    %v1470 = vsel %vm80, %v1399, 0
    %v1473 = vsel %vm80, %v1400, 0
    %v1476 = vsel %vm80, %v1401, 0
    %v1479 = vsel %vm80, %v1402, 0
    %v1482 = vsel %vm80, %v1403, 0
    %v1485 = vsel %vm80, %v1404, 0
    %v1488 = vsel %vm80, %v1405, 0
    %v1491 = vsel %vm80, %v1406, 0
    %v1494 = vsel %vm80, %v1407, 0
    %v1497 = vsel %vm80, %v1408, 0
    %v1500 = vsel %vm80, %v1409, 0
    %v1503 = vsel %vm80, %v1410, 0
    %v1506 = vsel %vm80, %v1411, 0
    %v1509 = vsel %vm80, %v1412, 0
    %v1512 = vsel %vm80, %v1413, 0
    %v1515 = vsel %vm80, %v1414, 0
    %v1518 = vsel %vm80, %v1415, 0
    %v1521 = vsel %vm80, %v1416, 0
    %v1524 = vsel %vm80, %v1417, 0
    %v1527 = vsel %vm80, %v1418, 0
    %v1530 = vsel %vm80, %v1419, 0
    %v1533 = vsel %vm80, %v1420, 0
    %v1536 = vsel %vm80, %v1421, 0
    %v1539 = vsel %vm80, %v1422, 0
    %v1542 = vsel %vm80, %v1423, 0
    %1544 = vmatpush.bf16.msra.mxu0 0
    %1545 = vmatpush.bf16.msra.mxu0 0
    %1546 = vmatpush.bf16.msra.mxu0 0
    %1547 = vmatpush.bf16.msra.mxu0 0
    %1548 = vmatpush.bf16.msra.mxu0 %v1443
    %1549 = vmatpush.bf16.msra.mxu0 %v1442
    %1550 = vmatpush.bf16.msra.mxu0 %v1441
    %1551 = vmatpush.bf16.msra.mxu0 %v1440
    %1552 = vmatmul.bf16.gmra.mxu0 %v1449
    %v1553 = vpop.f32.mrf.mxu0
    %v1554 = vadd.f32 %v1262, %v1553
    %v1555 = vpop.f32.mrf.mxu0
    %v1556 = vadd.f32 %v1262, %v1555
    %1557 = vmatmul.bf16.gmra.mxu0 %v1452
    %v1558 = vpop.f32.mrf.mxu0
    %v1559 = vadd.f32 %v1262, %v1558
    %v1560 = vpop.f32.mrf.mxu0
    %v1561 = vadd.f32 %v1262, %v1560
    %1562 = vmatmul.bf16.gmra.mxu0 %v1455
    %v1563 = vpop.f32.mrf.mxu0
    %v1564 = vadd.f32 %v1262, %v1563
    %v1565 = vpop.f32.mrf.mxu0
    %v1566 = vadd.f32 %v1262, %v1565
    %1567 = vmatmul.bf16.gmra.mxu0 %v1458
    %v1568 = vpop.f32.mrf.mxu0
    %v1569 = vadd.f32 %v1262, %v1568
    %v1570 = vpop.f32.mrf.mxu0
    %v1571 = vadd.f32 %v1262, %v1570
    %1572 = vmatmul.bf16.gmra.mxu0 %v1461
    %v1573 = vpop.f32.mrf.mxu0
    %v1574 = vadd.f32 %v1262, %v1573
    %v1575 = vpop.f32.mrf.mxu0
    %v1576 = vadd.f32 %v1262, %v1575
    %1577 = vmatmul.bf16.gmra.mxu0 %v1464
    %v1578 = vpop.f32.mrf.mxu0
    %v1579 = vadd.f32 %v1262, %v1578
    %v1580 = vpop.f32.mrf.mxu0
    %v1581 = vadd.f32 %v1262, %v1580
    %1582 = vmatmul.bf16.gmra.mxu0 %v1467
    %v1583 = vpop.f32.mrf.mxu0
    %v1584 = vadd.f32 %v1262, %v1583
    %v1585 = vpop.f32.mrf.mxu0
    %v1586 = vadd.f32 %v1262, %v1585
    %1587 = vmatmul.bf16.gmra.mxu0 %v1470
    %v1588 = vpop.f32.mrf.mxu0
    %v1589 = vadd.f32 %v1262, %v1588
    %v1590 = vpop.f32.mrf.mxu0
    %v1591 = vadd.f32 %v1262, %v1590
    %1592 = vmatmul.bf16.gmra.mxu0 %v1473
    %v1593 = vpop.f32.mrf.mxu0
    %v1594 = vadd.f32 %v1262, %v1593
    %v1595 = vpop.f32.mrf.mxu0
    %v1596 = vadd.f32 %v1262, %v1595
    %1597 = vmatmul.bf16.gmra.mxu0 %v1476
    %v1598 = vpop.f32.mrf.mxu0
    %v1599 = vadd.f32 %v1262, %v1598
    %v1600 = vpop.f32.mrf.mxu0
    %v1601 = vadd.f32 %v1262, %v1600
    %1602 = vmatmul.bf16.gmra.mxu0 %v1479
    %v1603 = vpop.f32.mrf.mxu0
    %v1604 = vadd.f32 %v1262, %v1603
    %v1605 = vpop.f32.mrf.mxu0
    %v1606 = vadd.f32 %v1262, %v1605
    %1607 = vmatmul.bf16.gmra.mxu0 %v1482
    %v1608 = vpop.f32.mrf.mxu0
    %v1609 = vadd.f32 %v1262, %v1608
    %v1610 = vpop.f32.mrf.mxu0
    %v1611 = vadd.f32 %v1262, %v1610
    %1612 = vmatmul.bf16.gmra.mxu0 %v1485
    %v1613 = vpop.f32.mrf.mxu0
    %v1614 = vadd.f32 %v1262, %v1613
    %v1615 = vpop.f32.mrf.mxu0
    %v1616 = vadd.f32 %v1262, %v1615
    %1617 = vmatmul.bf16.gmra.mxu0 %v1488
    %v1618 = vpop.f32.mrf.mxu0
    %v1619 = vadd.f32 %v1262, %v1618
    %v1620 = vpop.f32.mrf.mxu0
    %v1621 = vadd.f32 %v1262, %v1620
    %1622 = vmatmul.bf16.gmra.mxu0 %v1491
    %v1623 = vpop.f32.mrf.mxu0
    %v1624 = vadd.f32 %v1262, %v1623
    %v1625 = vpop.f32.mrf.mxu0
    %v1626 = vadd.f32 %v1262, %v1625
    %1627 = vmatmul.bf16.gmra.mxu0 %v1494
    %v1628 = vpop.f32.mrf.mxu0
    %v1629 = vadd.f32 %v1262, %v1628
    %v1630 = vpop.f32.mrf.mxu0
    %v1631 = vadd.f32 %v1262, %v1630
    %1632 = vmatmul.bf16.gmra.mxu0 %v1497
    %v1633 = vpop.f32.mrf.mxu0
    %v1634 = vadd.f32 %v1262, %v1633
    %v1635 = vpop.f32.mrf.mxu0
    %v1636 = vadd.f32 %v1262, %v1635
    %1637 = vmatmul.bf16.gmra.mxu0 %v1500
    %v1638 = vpop.f32.mrf.mxu0
    %v1639 = vadd.f32 %v1262, %v1638
    %v1640 = vpop.f32.mrf.mxu0
    %v1641 = vadd.f32 %v1262, %v1640
    %1642 = vmatmul.bf16.gmra.mxu0 %v1503
    %v1643 = vpop.f32.mrf.mxu0
    %v1644 = vadd.f32 %v1262, %v1643
    %v1645 = vpop.f32.mrf.mxu0
    %v1646 = vadd.f32 %v1262, %v1645
    %1647 = vmatmul.bf16.gmra.mxu0 %v1506
    %v1648 = vpop.f32.mrf.mxu0
    %v1649 = vadd.f32 %v1262, %v1648
    %v1650 = vpop.f32.mrf.mxu0
    %v1651 = vadd.f32 %v1262, %v1650
    %1652 = vmatmul.bf16.gmra.mxu0 %v1509
    %v1653 = vpop.f32.mrf.mxu0
    %v1654 = vadd.f32 %v1262, %v1653
    %v1655 = vpop.f32.mrf.mxu0
    %v1656 = vadd.f32 %v1262, %v1655
    %1657 = vmatmul.bf16.gmra.mxu0 %v1512
    %v1658 = vpop.f32.mrf.mxu0
    %v1659 = vadd.f32 %v1262, %v1658
    %v1660 = vpop.f32.mrf.mxu0
    %v1661 = vadd.f32 %v1262, %v1660
    %1662 = vmatmul.bf16.gmra.mxu0 %v1515
    %v1663 = vpop.f32.mrf.mxu0
    %v1664 = vadd.f32 %v1262, %v1663
    %v1665 = vpop.f32.mrf.mxu0
    %v1666 = vadd.f32 %v1262, %v1665
    %1667 = vmatmul.bf16.gmra.mxu0 %v1518
    %v1668 = vpop.f32.mrf.mxu0
    %v1669 = vadd.f32 %v1262, %v1668
    %v1670 = vpop.f32.mrf.mxu0
    %v1671 = vadd.f32 %v1262, %v1670
    %1672 = vmatmul.bf16.gmra.mxu0 %v1521
    %v1673 = vpop.f32.mrf.mxu0
    %v1674 = vadd.f32 %v1262, %v1673
    %v1675 = vpop.f32.mrf.mxu0
    %v1676 = vadd.f32 %v1262, %v1675
    %1677 = vmatmul.bf16.gmra.mxu0 %v1524
    %v1678 = vpop.f32.mrf.mxu0
    %v1679 = vadd.f32 %v1262, %v1678
    %v1680 = vpop.f32.mrf.mxu0
    %v1681 = vadd.f32 %v1262, %v1680
    %1682 = vmatmul.bf16.gmra.mxu0 %v1527
    %v1683 = vpop.f32.mrf.mxu0
    %v1684 = vadd.f32 %v1262, %v1683
    %v1685 = vpop.f32.mrf.mxu0
    %v1686 = vadd.f32 %v1262, %v1685
    %1687 = vmatmul.bf16.gmra.mxu0 %v1530
    %v1688 = vpop.f32.mrf.mxu0
    %v1689 = vadd.f32 %v1262, %v1688
    %v1690 = vpop.f32.mrf.mxu0
    %v1691 = vadd.f32 %v1262, %v1690
    %1692 = vmatmul.bf16.gmra.mxu0 %v1533
    %v1693 = vpop.f32.mrf.mxu0
    %v1694 = vadd.f32 %v1262, %v1693
    %v1695 = vpop.f32.mrf.mxu0
    %v1696 = vadd.f32 %v1262, %v1695
    %1697 = vmatmul.bf16.gmra.mxu0 %v1536
    %v1698 = vpop.f32.mrf.mxu0
    %v1699 = vadd.f32 %v1262, %v1698
    %v1700 = vpop.f32.mrf.mxu0
    %v1701 = vadd.f32 %v1262, %v1700
    %1702 = vmatmul.bf16.gmra.mxu0 %v1539
    %v1703 = vpop.f32.mrf.mxu0
    %v1704 = vadd.f32 %v1262, %v1703
    %v1705 = vpop.f32.mrf.mxu0
    %v1706 = vadd.f32 %v1262, %v1705
    %1707 = vmatmul.bf16.gmra.mxu0 %v1542
    %v1708 = vpop.f32.mrf.mxu0
    %v1709 = vadd.f32 %v1262, %v1708
    %v1710 = vpop.f32.mrf.mxu0
    %v1711 = vadd.f32 %v1262, %v1710
    %1712 = vdwg.mxu0
    %vm1713 = vcmask 261120
    %v1714 = vsel %vm1713, %v1554, 0.0
    %v1715 = vsel %vm1713, %v1556, 0.0
    %v1716 = vadd.f32 %v1714, %v1715
    %v1717 = vsel %vm1713, %v1559, 0.0
    %v1718 = vadd.f32 %v1716, %v1717
    %v1719 = vsel %vm1713, %v1561, 0.0
    %v1720 = vadd.f32 %v1718, %v1719
    %v1721 = vsel %vm1713, %v1564, 0.0
    %v1722 = vadd.f32 %v1720, %v1721
    %v1723 = vsel %vm1713, %v1566, 0.0
    %v1724 = vadd.f32 %v1722, %v1723
    %v1725 = vsel %vm1713, %v1569, 0.0
    %v1726 = vadd.f32 %v1724, %v1725
    %v1727 = vsel %vm1713, %v1571, 0.0
    %v1728 = vadd.f32 %v1726, %v1727
    %v1729 = vsel %vm1713, %v1574, 0.0
    %v1730 = vadd.f32 %v1728, %v1729
    %v1731 = vsel %vm1713, %v1576, 0.0
    %v1732 = vadd.f32 %v1730, %v1731
    %v1733 = vsel %vm1713, %v1579, 0.0
    %v1734 = vadd.f32 %v1732, %v1733
    %v1735 = vsel %vm1713, %v1581, 0.0
    %v1736 = vadd.f32 %v1734, %v1735
    %v1737 = vsel %vm1713, %v1584, 0.0
    %v1738 = vadd.f32 %v1736, %v1737
    %v1739 = vsel %vm1713, %v1586, 0.0
    %v1740 = vadd.f32 %v1738, %v1739
    %v1741 = vsel %vm1713, %v1589, 0.0
    %v1742 = vadd.f32 %v1740, %v1741
    %v1743 = vsel %vm1713, %v1591, 0.0
    %v1744 = vadd.f32 %v1742, %v1743
    %v1745 = vsel %vm1713, %v1594, 0.0
    %v1746 = vadd.f32 %v1744, %v1745
    %v1747 = vsel %vm1713, %v1596, 0.0
    %v1748 = vadd.f32 %v1746, %v1747
    %v1749 = vsel %vm1713, %v1599, 0.0
    %v1750 = vadd.f32 %v1748, %v1749
    %v1751 = vsel %vm1713, %v1601, 0.0
    %v1752 = vadd.f32 %v1750, %v1751
    %v1753 = vsel %vm1713, %v1604, 0.0
    %v1754 = vadd.f32 %v1752, %v1753
    %v1755 = vsel %vm1713, %v1606, 0.0
    %v1756 = vadd.f32 %v1754, %v1755
    %v1757 = vsel %vm1713, %v1609, 0.0
    %v1758 = vadd.f32 %v1756, %v1757
    %v1759 = vsel %vm1713, %v1611, 0.0
    %v1760 = vadd.f32 %v1758, %v1759
    %v1761 = vsel %vm1713, %v1614, 0.0
    %v1762 = vadd.f32 %v1760, %v1761
    %v1763 = vsel %vm1713, %v1616, 0.0
    %v1764 = vadd.f32 %v1762, %v1763
    %v1765 = vsel %vm1713, %v1619, 0.0
    %v1766 = vadd.f32 %v1764, %v1765
    %v1767 = vsel %vm1713, %v1621, 0.0
    %v1768 = vadd.f32 %v1766, %v1767
    %v1769 = vsel %vm1713, %v1624, 0.0
    %v1770 = vadd.f32 %v1768, %v1769
    %v1771 = vsel %vm1713, %v1626, 0.0
    %v1772 = vadd.f32 %v1770, %v1771
    %v1773 = vsel %vm1713, %v1629, 0.0
    %v1774 = vadd.f32 %v1772, %v1773
    %v1775 = vsel %vm1713, %v1631, 0.0
    %v1776 = vadd.f32 %v1774, %v1775
    %v1777 = vsel %vm1713, %v1634, 0.0
    %v1778 = vadd.f32 %v1776, %v1777
    %v1779 = vsel %vm1713, %v1636, 0.0
    %v1780 = vadd.f32 %v1778, %v1779
    %v1781 = vsel %vm1713, %v1639, 0.0
    %v1782 = vadd.f32 %v1780, %v1781
    %v1783 = vsel %vm1713, %v1641, 0.0
    %v1784 = vadd.f32 %v1782, %v1783
    %v1785 = vsel %vm1713, %v1644, 0.0
    %v1786 = vadd.f32 %v1784, %v1785
    %v1787 = vsel %vm1713, %v1646, 0.0
    %v1788 = vadd.f32 %v1786, %v1787
    %v1789 = vsel %vm1713, %v1649, 0.0
    %v1790 = vadd.f32 %v1788, %v1789
    %v1791 = vsel %vm1713, %v1651, 0.0
    %v1792 = vadd.f32 %v1790, %v1791
    %v1793 = vsel %vm1713, %v1654, 0.0
    %v1794 = vadd.f32 %v1792, %v1793
    %v1795 = vsel %vm1713, %v1656, 0.0
    %v1796 = vadd.f32 %v1794, %v1795
    %v1797 = vsel %vm1713, %v1659, 0.0
    %v1798 = vadd.f32 %v1796, %v1797
    %v1799 = vsel %vm1713, %v1661, 0.0
    %v1800 = vadd.f32 %v1798, %v1799
    %v1801 = vsel %vm1713, %v1664, 0.0
    %v1802 = vadd.f32 %v1800, %v1801
    %v1803 = vsel %vm1713, %v1666, 0.0
    %v1804 = vadd.f32 %v1802, %v1803
    %v1805 = vsel %vm1713, %v1669, 0.0
    %v1806 = vadd.f32 %v1804, %v1805
    %v1807 = vsel %vm1713, %v1671, 0.0
    %v1808 = vadd.f32 %v1806, %v1807
    %v1809 = vsel %vm1713, %v1674, 0.0
    %v1810 = vadd.f32 %v1808, %v1809
    %v1811 = vsel %vm1713, %v1676, 0.0
    %v1812 = vadd.f32 %v1810, %v1811
    %v1813 = vsel %vm1713, %v1679, 0.0
    %v1814 = vadd.f32 %v1812, %v1813
    %v1815 = vsel %vm1713, %v1681, 0.0
    %v1816 = vadd.f32 %v1814, %v1815
    %v1817 = vsel %vm1713, %v1684, 0.0
    %v1818 = vadd.f32 %v1816, %v1817
    %v1819 = vsel %vm1713, %v1686, 0.0
    %v1820 = vadd.f32 %v1818, %v1819
    %v1821 = vsel %vm1713, %v1689, 0.0
    %v1822 = vadd.f32 %v1820, %v1821
    %v1823 = vsel %vm1713, %v1691, 0.0
    %v1824 = vadd.f32 %v1822, %v1823
    %v1825 = vsel %vm1713, %v1694, 0.0
    %v1826 = vadd.f32 %v1824, %v1825
    %v1827 = vsel %vm1713, %v1696, 0.0
    %v1828 = vadd.f32 %v1826, %v1827
    %v1829 = vsel %vm1713, %v1699, 0.0
    %v1830 = vadd.f32 %v1828, %v1829
    %v1831 = vsel %vm1713, %v1701, 0.0
    %v1832 = vadd.f32 %v1830, %v1831
    %v1833 = vsel %vm1713, %v1704, 0.0
    %v1834 = vadd.f32 %v1832, %v1833
    %v1835 = vsel %vm1713, %v1706, 0.0
    %v1836 = vadd.f32 %v1834, %v1835
    %v1837 = vsel %vm1713, %v1709, 0.0
    %v1838 = vadd.f32 %v1836, %v1837
    %v1839 = vsel %vm1713, %v1711, 0.0
    %v1840 = vadd.f32 %v1838, %v1839
    %v1841 = vrot.slane %v1840, 4
    %v1842 = vadd.f32 %v1840, %v1841
    %v1843 = vrot.slane %v1842, 2
    %v1844 = vadd.f32 %v1842, %v1843
    %v1845 = vrot.slane %v1844, 1
    %v1846 = vadd.f32 %v1844, %v1845
    %v1847 = vmul.f32 %v1846, 0.001953125
    %v1848 = vmul.f32 %v1554, %v1554
    %v1849 = vmul.f32 %v1556, %v1556
    %v1850 = vmul.f32 %v1559, %v1559
    %v1851 = vmul.f32 %v1561, %v1561
    %v1852 = vmul.f32 %v1564, %v1564
    %v1853 = vmul.f32 %v1566, %v1566
    %v1854 = vmul.f32 %v1569, %v1569
    %v1855 = vmul.f32 %v1571, %v1571
    %v1856 = vmul.f32 %v1574, %v1574
    %v1857 = vmul.f32 %v1576, %v1576
    %v1858 = vmul.f32 %v1579, %v1579
    %v1859 = vmul.f32 %v1581, %v1581
    %v1860 = vmul.f32 %v1584, %v1584
    %v1861 = vmul.f32 %v1586, %v1586
    %v1862 = vmul.f32 %v1589, %v1589
    %v1863 = vmul.f32 %v1591, %v1591
    %v1864 = vmul.f32 %v1594, %v1594
    %v1865 = vmul.f32 %v1596, %v1596
    %v1866 = vmul.f32 %v1599, %v1599
    %v1867 = vmul.f32 %v1601, %v1601
    %v1868 = vmul.f32 %v1604, %v1604
    %v1869 = vmul.f32 %v1606, %v1606
    %v1870 = vmul.f32 %v1609, %v1609
    %v1871 = vmul.f32 %v1611, %v1611
    %v1872 = vmul.f32 %v1614, %v1614
    %v1873 = vmul.f32 %v1616, %v1616
    %v1874 = vmul.f32 %v1619, %v1619
    %v1875 = vmul.f32 %v1621, %v1621
    %v1876 = vmul.f32 %v1624, %v1624
    %v1877 = vmul.f32 %v1626, %v1626
    %v1878 = vmul.f32 %v1629, %v1629
    %v1879 = vmul.f32 %v1631, %v1631
    %v1880 = vmul.f32 %v1634, %v1634
    %v1881 = vmul.f32 %v1636, %v1636
    %v1882 = vmul.f32 %v1639, %v1639
    %v1883 = vmul.f32 %v1641, %v1641
    %v1884 = vmul.f32 %v1644, %v1644
    %v1885 = vmul.f32 %v1646, %v1646
    %v1886 = vmul.f32 %v1649, %v1649
    %v1887 = vmul.f32 %v1651, %v1651
    %v1888 = vmul.f32 %v1654, %v1654
    %v1889 = vmul.f32 %v1656, %v1656
    %v1890 = vmul.f32 %v1659, %v1659
    %v1891 = vmul.f32 %v1661, %v1661
    %v1892 = vmul.f32 %v1664, %v1664
    %v1893 = vmul.f32 %v1666, %v1666
    %v1894 = vmul.f32 %v1669, %v1669
    %v1895 = vmul.f32 %v1671, %v1671
    %v1896 = vmul.f32 %v1674, %v1674
    %v1897 = vmul.f32 %v1676, %v1676
    %v1898 = vmul.f32 %v1679, %v1679
    %v1899 = vmul.f32 %v1681, %v1681
    %v1900 = vmul.f32 %v1684, %v1684
    %v1901 = vmul.f32 %v1686, %v1686
    %v1902 = vmul.f32 %v1689, %v1689
    %v1903 = vmul.f32 %v1691, %v1691
    %v1904 = vmul.f32 %v1694, %v1694
    %v1905 = vmul.f32 %v1696, %v1696
    %v1906 = vmul.f32 %v1699, %v1699
    %v1907 = vmul.f32 %v1701, %v1701
    %v1908 = vmul.f32 %v1704, %v1704
    %v1909 = vmul.f32 %v1706, %v1706
    %v1910 = vmul.f32 %v1709, %v1709
    %v1911 = vmul.f32 %v1711, %v1711
    %v1912 = vsel %vm1713, %v1848, 0.0
    %v1913 = vsel %vm1713, %v1849, 0.0
    %v1914 = vadd.f32 %v1912, %v1913
    %v1915 = vsel %vm1713, %v1850, 0.0
    %v1916 = vadd.f32 %v1914, %v1915
    %v1917 = vsel %vm1713, %v1851, 0.0
    %v1918 = vadd.f32 %v1916, %v1917
    %v1919 = vsel %vm1713, %v1852, 0.0
    %v1920 = vadd.f32 %v1918, %v1919
    %v1921 = vsel %vm1713, %v1853, 0.0
    %v1922 = vadd.f32 %v1920, %v1921
    %v1923 = vsel %vm1713, %v1854, 0.0
    %v1924 = vadd.f32 %v1922, %v1923
    %v1925 = vsel %vm1713, %v1855, 0.0
    %v1926 = vadd.f32 %v1924, %v1925
    %v1927 = vsel %vm1713, %v1856, 0.0
    %v1928 = vadd.f32 %v1926, %v1927
    %v1929 = vsel %vm1713, %v1857, 0.0
    %v1930 = vadd.f32 %v1928, %v1929
    %v1931 = vsel %vm1713, %v1858, 0.0
    %v1932 = vadd.f32 %v1930, %v1931
    %v1933 = vsel %vm1713, %v1859, 0.0
    %v1934 = vadd.f32 %v1932, %v1933
    %v1935 = vsel %vm1713, %v1860, 0.0
    %v1936 = vadd.f32 %v1934, %v1935
    %v1937 = vsel %vm1713, %v1861, 0.0
    %v1938 = vadd.f32 %v1936, %v1937
    %v1939 = vsel %vm1713, %v1862, 0.0
    %v1940 = vadd.f32 %v1938, %v1939
    %v1941 = vsel %vm1713, %v1863, 0.0
    %v1942 = vadd.f32 %v1940, %v1941
    %v1943 = vsel %vm1713, %v1864, 0.0
    %v1944 = vadd.f32 %v1942, %v1943
    %v1945 = vsel %vm1713, %v1865, 0.0
    %v1946 = vadd.f32 %v1944, %v1945
    %v1947 = vsel %vm1713, %v1866, 0.0
    %v1948 = vadd.f32 %v1946, %v1947
    %v1949 = vsel %vm1713, %v1867, 0.0
    %v1950 = vadd.f32 %v1948, %v1949
    %v1951 = vsel %vm1713, %v1868, 0.0
    %v1952 = vadd.f32 %v1950, %v1951
    %v1953 = vsel %vm1713, %v1869, 0.0
    %v1954 = vadd.f32 %v1952, %v1953
    %v1955 = vsel %vm1713, %v1870, 0.0
    %v1956 = vadd.f32 %v1954, %v1955
    %v1957 = vsel %vm1713, %v1871, 0.0
    %v1958 = vadd.f32 %v1956, %v1957
    %v1959 = vsel %vm1713, %v1872, 0.0
    %v1960 = vadd.f32 %v1958, %v1959
    %v1961 = vsel %vm1713, %v1873, 0.0
    %v1962 = vadd.f32 %v1960, %v1961
    %v1963 = vsel %vm1713, %v1874, 0.0
    %v1964 = vadd.f32 %v1962, %v1963
    %v1965 = vsel %vm1713, %v1875, 0.0
    %v1966 = vadd.f32 %v1964, %v1965
    %v1967 = vsel %vm1713, %v1876, 0.0
    %v1968 = vadd.f32 %v1966, %v1967
    %v1969 = vsel %vm1713, %v1877, 0.0
    %v1970 = vadd.f32 %v1968, %v1969
    %v1971 = vsel %vm1713, %v1878, 0.0
    %v1972 = vadd.f32 %v1970, %v1971
    %v1973 = vsel %vm1713, %v1879, 0.0
    %v1974 = vadd.f32 %v1972, %v1973
    %v1975 = vsel %vm1713, %v1880, 0.0
    %v1976 = vadd.f32 %v1974, %v1975
    %v1977 = vsel %vm1713, %v1881, 0.0
    %v1978 = vadd.f32 %v1976, %v1977
    %v1979 = vsel %vm1713, %v1882, 0.0
    %v1980 = vadd.f32 %v1978, %v1979
    %v1981 = vsel %vm1713, %v1883, 0.0
    %v1982 = vadd.f32 %v1980, %v1981
    %v1983 = vsel %vm1713, %v1884, 0.0
    %v1984 = vadd.f32 %v1982, %v1983
    %v1985 = vsel %vm1713, %v1885, 0.0
    %v1986 = vadd.f32 %v1984, %v1985
    %v1987 = vsel %vm1713, %v1886, 0.0
    %v1988 = vadd.f32 %v1986, %v1987
    %v1989 = vsel %vm1713, %v1887, 0.0
    %v1990 = vadd.f32 %v1988, %v1989
    %v1991 = vsel %vm1713, %v1888, 0.0
    %v1992 = vadd.f32 %v1990, %v1991
    %v1993 = vsel %vm1713, %v1889, 0.0
    %v1994 = vadd.f32 %v1992, %v1993
    %v1995 = vsel %vm1713, %v1890, 0.0
    %v1996 = vadd.f32 %v1994, %v1995
    %v1997 = vsel %vm1713, %v1891, 0.0
    %v1998 = vadd.f32 %v1996, %v1997
    %v1999 = vsel %vm1713, %v1892, 0.0
    %v2000 = vadd.f32 %v1998, %v1999
    %v2001 = vsel %vm1713, %v1893, 0.0
    %v2002 = vadd.f32 %v2000, %v2001
    %v2003 = vsel %vm1713, %v1894, 0.0
    %v2004 = vadd.f32 %v2002, %v2003
    %v2005 = vsel %vm1713, %v1895, 0.0
    %v2006 = vadd.f32 %v2004, %v2005
    %v2007 = vsel %vm1713, %v1896, 0.0
    %v2008 = vadd.f32 %v2006, %v2007
    %v2009 = vsel %vm1713, %v1897, 0.0
    %v2010 = vadd.f32 %v2008, %v2009
    %v2011 = vsel %vm1713, %v1898, 0.0
    %v2012 = vadd.f32 %v2010, %v2011
    %v2013 = vsel %vm1713, %v1899, 0.0
    %v2014 = vadd.f32 %v2012, %v2013
    %v2015 = vsel %vm1713, %v1900, 0.0
    %v2016 = vadd.f32 %v2014, %v2015
    %v2017 = vsel %vm1713, %v1901, 0.0
    %v2018 = vadd.f32 %v2016, %v2017
    %v2019 = vsel %vm1713, %v1902, 0.0
    %v2020 = vadd.f32 %v2018, %v2019
    %v2021 = vsel %vm1713, %v1903, 0.0
    %v2022 = vadd.f32 %v2020, %v2021
    %v2023 = vsel %vm1713, %v1904, 0.0
    %v2024 = vadd.f32 %v2022, %v2023
    %v2025 = vsel %vm1713, %v1905, 0.0
    %v2026 = vadd.f32 %v2024, %v2025
    %v2027 = vsel %vm1713, %v1906, 0.0
    %v2028 = vadd.f32 %v2026, %v2027
    %v2029 = vsel %vm1713, %v1907, 0.0
    %v2030 = vadd.f32 %v2028, %v2029
    %v2031 = vsel %vm1713, %v1908, 0.0
    %v2032 = vadd.f32 %v2030, %v2031
    %v2033 = vsel %vm1713, %v1909, 0.0
    %v2034 = vadd.f32 %v2032, %v2033
    %v2035 = vsel %vm1713, %v1910, 0.0
    %v2036 = vadd.f32 %v2034, %v2035
    %v2037 = vsel %vm1713, %v1911, 0.0
    %v2038 = vadd.f32 %v2036, %v2037
    %v2039 = vrot.slane %v2038, 4
    %v2040 = vadd.f32 %v2038, %v2039
    %v2041 = vrot.slane %v2040, 2
    %v2042 = vadd.f32 %v2040, %v2041
    %v2043 = vrot.slane %v2042, 1
    %v2044 = vadd.f32 %v2042, %v2043
    %v2045 = vmul.f32 %v2044, 0.001953125
    %v2046 = vmul.f32 %v1847, %v1847
    %v2047 = vsub.f32 %v2045, %v2046
    %v2048 = vmax.f32 %v2047, 0.0
    %v2049 = vadd.f32 %v2048, 1e-05
    %v2050 = vrsqrt.pop %v2049
    %v2051 = vmul.f32 %v2050, %v2049
    %v2052 = vmul.f32 %v2051, %v2050
    %v2053 = vmul.f32 0.5, %v2052
    %v2054 = vsub.f32 1.5, %v2053
    %v2055 = vmul.f32 %v2050, %v2054
    %vm2056 = vweird.f32 %v2049
    %vm2057 = vweird.f32 %v2050
    %vm2058 = vmor %vm2056, %vm2057
    %v2059 = vsel %vm2058, %v2050, %v2055
    %v2060 = vsub.f32 0.0, %v1847
    %v2061 = vmul.f32 %v2060, %v2059
    %v2062 = vmul.f32 %v1554, %v2059
    %v2063 = vmul.f32 %v1556, %v2059
    %v2064 = vmul.f32 %v1559, %v2059
    %v2065 = vmul.f32 %v1561, %v2059
    %v2066 = vmul.f32 %v1564, %v2059
    %v2067 = vmul.f32 %v1566, %v2059
    %v2068 = vmul.f32 %v1569, %v2059
    %v2069 = vmul.f32 %v1571, %v2059
    %v2070 = vmul.f32 %v1574, %v2059
    %v2071 = vmul.f32 %v1576, %v2059
    %v2072 = vmul.f32 %v1579, %v2059
    %v2073 = vmul.f32 %v1581, %v2059
    %v2074 = vmul.f32 %v1584, %v2059
    %v2075 = vmul.f32 %v1586, %v2059
    %v2076 = vmul.f32 %v1589, %v2059
    %v2077 = vmul.f32 %v1591, %v2059
    %v2078 = vmul.f32 %v1594, %v2059
    %v2079 = vmul.f32 %v1596, %v2059
    %v2080 = vmul.f32 %v1599, %v2059
    %v2081 = vmul.f32 %v1601, %v2059
    %v2082 = vmul.f32 %v1604, %v2059
    %v2083 = vmul.f32 %v1606, %v2059
    %v2084 = vmul.f32 %v1609, %v2059
    %v2085 = vmul.f32 %v1611, %v2059
    %v2086 = vmul.f32 %v1614, %v2059
    %v2087 = vmul.f32 %v1616, %v2059
    %v2088 = vmul.f32 %v1619, %v2059
    %v2089 = vmul.f32 %v1621, %v2059
    %v2090 = vmul.f32 %v1624, %v2059
    %v2091 = vmul.f32 %v1626, %v2059
    %v2092 = vmul.f32 %v1629, %v2059
    %v2093 = vmul.f32 %v1631, %v2059
    %v2094 = vmul.f32 %v1634, %v2059
    %v2095 = vmul.f32 %v1636, %v2059
    %v2096 = vmul.f32 %v1639, %v2059
    %v2097 = vmul.f32 %v1641, %v2059
    %v2098 = vmul.f32 %v1644, %v2059
    %v2099 = vmul.f32 %v1646, %v2059
    %v2100 = vmul.f32 %v1649, %v2059
    %v2101 = vmul.f32 %v1651, %v2059
    %v2102 = vmul.f32 %v1654, %v2059
    %v2103 = vmul.f32 %v1656, %v2059
    %v2104 = vmul.f32 %v1659, %v2059
    %v2105 = vmul.f32 %v1661, %v2059
    %v2106 = vmul.f32 %v1664, %v2059
    %v2107 = vmul.f32 %v1666, %v2059
    %v2108 = vmul.f32 %v1669, %v2059
    %v2109 = vmul.f32 %v1671, %v2059
    %v2110 = vmul.f32 %v1674, %v2059
    %v2111 = vmul.f32 %v1676, %v2059
    %v2112 = vmul.f32 %v1679, %v2059
    %v2113 = vmul.f32 %v1681, %v2059
    %v2114 = vmul.f32 %v1684, %v2059
    %v2115 = vmul.f32 %v1686, %v2059
    %v2116 = vmul.f32 %v1689, %v2059
    %v2117 = vmul.f32 %v1691, %v2059
    %v2118 = vmul.f32 %v1694, %v2059
    %v2119 = vmul.f32 %v1696, %v2059
    %v2120 = vmul.f32 %v1699, %v2059
    %v2121 = vmul.f32 %v1701, %v2059
    %v2122 = vmul.f32 %v1704, %v2059
    %v2123 = vmul.f32 %v1706, %v2059
    %v2124 = vmul.f32 %v1709, %v2059
    %v2125 = vmul.f32 %v1711, %v2059
    %v2126 = vadd.f32 %v2062, %v2061
    %v2127 = vadd.f32 %v2063, %v2061
    %v2128 = vadd.f32 %v2064, %v2061
    %v2129 = vadd.f32 %v2065, %v2061
    %v2130 = vadd.f32 %v2066, %v2061
    %v2131 = vadd.f32 %v2067, %v2061
    %v2132 = vadd.f32 %v2068, %v2061
    %v2133 = vadd.f32 %v2069, %v2061
    %v2134 = vadd.f32 %v2070, %v2061
    %v2135 = vadd.f32 %v2071, %v2061
    %v2136 = vadd.f32 %v2072, %v2061
    %v2137 = vadd.f32 %v2073, %v2061
    %v2138 = vadd.f32 %v2074, %v2061
    %v2139 = vadd.f32 %v2075, %v2061
    %v2140 = vadd.f32 %v2076, %v2061
    %v2141 = vadd.f32 %v2077, %v2061
    %v2142 = vadd.f32 %v2078, %v2061
    %v2143 = vadd.f32 %v2079, %v2061
    %v2144 = vadd.f32 %v2080, %v2061
    %v2145 = vadd.f32 %v2081, %v2061
    %v2146 = vadd.f32 %v2082, %v2061
    %v2147 = vadd.f32 %v2083, %v2061
    %v2148 = vadd.f32 %v2084, %v2061
    %v2149 = vadd.f32 %v2085, %v2061
    %v2150 = vadd.f32 %v2086, %v2061
    %v2151 = vadd.f32 %v2087, %v2061
    %v2152 = vadd.f32 %v2088, %v2061
    %v2153 = vadd.f32 %v2089, %v2061
    %v2154 = vadd.f32 %v2090, %v2061
    %v2155 = vadd.f32 %v2091, %v2061
    %v2156 = vadd.f32 %v2092, %v2061
    %v2157 = vadd.f32 %v2093, %v2061
    %v2158 = vadd.f32 %v2094, %v2061
    %v2159 = vadd.f32 %v2095, %v2061
    %v2160 = vadd.f32 %v2096, %v2061
    %v2161 = vadd.f32 %v2097, %v2061
    %v2162 = vadd.f32 %v2098, %v2061
    %v2163 = vadd.f32 %v2099, %v2061
    %v2164 = vadd.f32 %v2100, %v2061
    %v2165 = vadd.f32 %v2101, %v2061
    %v2166 = vadd.f32 %v2102, %v2061
    %v2167 = vadd.f32 %v2103, %v2061
    %v2168 = vadd.f32 %v2104, %v2061
    %v2169 = vadd.f32 %v2105, %v2061
    %v2170 = vadd.f32 %v2106, %v2061
    %v2171 = vadd.f32 %v2107, %v2061
    %v2172 = vadd.f32 %v2108, %v2061
    %v2173 = vadd.f32 %v2109, %v2061
    %v2174 = vadd.f32 %v2110, %v2061
    %v2175 = vadd.f32 %v2111, %v2061
    %v2176 = vadd.f32 %v2112, %v2061
    %v2177 = vadd.f32 %v2113, %v2061
    %v2178 = vadd.f32 %v2114, %v2061
    %v2179 = vadd.f32 %v2115, %v2061
    %v2180 = vadd.f32 %v2116, %v2061
    %v2181 = vadd.f32 %v2117, %v2061
    %v2182 = vadd.f32 %v2118, %v2061
    %v2183 = vadd.f32 %v2119, %v2061
    %v2184 = vadd.f32 %v2120, %v2061
    %v2185 = vadd.f32 %v2121, %v2061
    %v2186 = vadd.f32 %v2122, %v2061
    %v2187 = vadd.f32 %v2123, %v2061
    %v2188 = vadd.f32 %v2124, %v2061
    %v2189 = vadd.f32 %v2125, %v2061
    %2190 = vst.msk [vmem:[#allocation4] sm:$0xff] %vm1713, %v2126
    %2191 = vst.msk [vmem:[#allocation4 + $0x8] sm:$0xff] %vm1713, %v2127
    %2192 = vst.msk [vmem:[#allocation4 + $0x10] sm:$0xff] %vm1713, %v2128
    %2193 = vst.msk [vmem:[#allocation4 + $0x18] sm:$0xff] %vm1713, %v2129
    %2194 = vst.msk [vmem:[#allocation4 + $0x20] sm:$0xff] %vm1713, %v2130
    %2195 = vst.msk [vmem:[#allocation4 + $0x28] sm:$0xff] %vm1713, %v2131
    %2196 = vst.msk [vmem:[#allocation4 + $0x30] sm:$0xff] %vm1713, %v2132
    %2197 = vst.msk [vmem:[#allocation4 + $0x38] sm:$0xff] %vm1713, %v2133
    %2198 = vst.msk [vmem:[#allocation4 + $0x40] sm:$0xff] %vm1713, %v2134
    %2199 = vst.msk [vmem:[#allocation4 + $0x48] sm:$0xff] %vm1713, %v2135
    %2200 = vst.msk [vmem:[#allocation4 + $0x50] sm:$0xff] %vm1713, %v2136
    %2201 = vst.msk [vmem:[#allocation4 + $0x58] sm:$0xff] %vm1713, %v2137
    %2202 = vst.msk [vmem:[#allocation4 + $0x60] sm:$0xff] %vm1713, %v2138
    %2203 = vst.msk [vmem:[#allocation4 + $0x68] sm:$0xff] %vm1713, %v2139
    %2204 = vst.msk [vmem:[#allocation4 + $0x70] sm:$0xff] %vm1713, %v2140
    %2205 = vst.msk [vmem:[#allocation4 + $0x78] sm:$0xff] %vm1713, %v2141
    %2206 = vst.msk [vmem:[#allocation4 + $0x80] sm:$0xff] %vm1713, %v2142
    %2207 = vst.msk [vmem:[#allocation4 + $0x88] sm:$0xff] %vm1713, %v2143
    %2208 = vst.msk [vmem:[#allocation4 + $0x90] sm:$0xff] %vm1713, %v2144
    %2209 = vst.msk [vmem:[#allocation4 + $0x98] sm:$0xff] %vm1713, %v2145
    %2210 = vst.msk [vmem:[#allocation4 + $0xa0] sm:$0xff] %vm1713, %v2146
    %2211 = vst.msk [vmem:[#allocation4 + $0xa8] sm:$0xff] %vm1713, %v2147
    %2212 = vst.msk [vmem:[#allocation4 + $0xb0] sm:$0xff] %vm1713, %v2148
    %2213 = vst.msk [vmem:[#allocation4 + $0xb8] sm:$0xff] %vm1713, %v2149
    %2214 = vst.msk [vmem:[#allocation4 + $0xc0] sm:$0xff] %vm1713, %v2150
    %2215 = vst.msk [vmem:[#allocation4 + $0xc8] sm:$0xff] %vm1713, %v2151
    %2216 = vst.msk [vmem:[#allocation4 + $0xd0] sm:$0xff] %vm1713, %v2152
    %2217 = vst.msk [vmem:[#allocation4 + $0xd8] sm:$0xff] %vm1713, %v2153
    %2218 = vst.msk [vmem:[#allocation4 + $0xe0] sm:$0xff] %vm1713, %v2154
    %2219 = vst.msk [vmem:[#allocation4 + $0xe8] sm:$0xff] %vm1713, %v2155
    %2220 = vst.msk [vmem:[#allocation4 + $0xf0] sm:$0xff] %vm1713, %v2156
    %2221 = vst.msk [vmem:[#allocation4 + $0xf8] sm:$0xff] %vm1713, %v2157
    %2222 = vst.msk [vmem:[#allocation4 + $0x100] sm:$0xff] %vm1713, %v2158
    %2223 = vst.msk [vmem:[#allocation4 + $0x108] sm:$0xff] %vm1713, %v2159
    %2224 = vst.msk [vmem:[#allocation4 + $0x110] sm:$0xff] %vm1713, %v2160
    %2225 = vst.msk [vmem:[#allocation4 + $0x118] sm:$0xff] %vm1713, %v2161
    %2226 = vst.msk [vmem:[#allocation4 + $0x120] sm:$0xff] %vm1713, %v2162
    %2227 = vst.msk [vmem:[#allocation4 + $0x128] sm:$0xff] %vm1713, %v2163
    %2228 = vst.msk [vmem:[#allocation4 + $0x130] sm:$0xff] %vm1713, %v2164
    %2229 = vst.msk [vmem:[#allocation4 + $0x138] sm:$0xff] %vm1713, %v2165
    %2230 = vst.msk [vmem:[#allocation4 + $0x140] sm:$0xff] %vm1713, %v2166
    %2231 = vst.msk [vmem:[#allocation4 + $0x148] sm:$0xff] %vm1713, %v2167
    %2232 = vst.msk [vmem:[#allocation4 + $0x150] sm:$0xff] %vm1713, %v2168
    %2233 = vst.msk [vmem:[#allocation4 + $0x158] sm:$0xff] %vm1713, %v2169
    %2234 = vst.msk [vmem:[#allocation4 + $0x160] sm:$0xff] %vm1713, %v2170
    %2235 = vst.msk [vmem:[#allocation4 + $0x168] sm:$0xff] %vm1713, %v2171
    %2236 = vst.msk [vmem:[#allocation4 + $0x170] sm:$0xff] %vm1713, %v2172
    %2237 = vst.msk [vmem:[#allocation4 + $0x178] sm:$0xff] %vm1713, %v2173
    %2238 = vst.msk [vmem:[#allocation4 + $0x180] sm:$0xff] %vm1713, %v2174
    %2239 = vst.msk [vmem:[#allocation4 + $0x188] sm:$0xff] %vm1713, %v2175
    %2240 = vst.msk [vmem:[#allocation4 + $0x190] sm:$0xff] %vm1713, %v2176
    %2241 = vst.msk [vmem:[#allocation4 + $0x198] sm:$0xff] %vm1713, %v2177
    %2242 = vst.msk [vmem:[#allocation4 + $0x1a0] sm:$0xff] %vm1713, %v2178
    %2243 = vst.msk [vmem:[#allocation4 + $0x1a8] sm:$0xff] %vm1713, %v2179
    %2244 = vst.msk [vmem:[#allocation4 + $0x1b0] sm:$0xff] %vm1713, %v2180
    %2245 = vst.msk [vmem:[#allocation4 + $0x1b8] sm:$0xff] %vm1713, %v2181
    %2246 = vst.msk [vmem:[#allocation4 + $0x1c0] sm:$0xff] %vm1713, %v2182
    %2247 = vst.msk [vmem:[#allocation4 + $0x1c8] sm:$0xff] %vm1713, %v2183
    %2248 = vst.msk [vmem:[#allocation4 + $0x1d0] sm:$0xff] %vm1713, %v2184
    %2249 = vst.msk [vmem:[#allocation4 + $0x1d8] sm:$0xff] %vm1713, %v2185
    %2250 = vst.msk [vmem:[#allocation4 + $0x1e0] sm:$0xff] %vm1713, %v2186
    %2251 = vst.msk [vmem:[#allocation4 + $0x1e8] sm:$0xff] %vm1713, %v2187
    %2252 = vst.msk [vmem:[#allocation4 + $0x1f0] sm:$0xff] %vm1713, %v2188
    %2253 = vst.msk [vmem:[#allocation4 + $0x1f8] sm:$0xff] %vm1713, %v2189
    %v2254 = vld [vmem:[#allocation4] sm:$0xff]
    %v2255 = vld [vmem:[#allocation4 + $0x8] sm:$0xff]
    %v2256 = vld [vmem:[#allocation4 + $0x10] sm:$0xff]
    %v2257 = vld [vmem:[#allocation4 + $0x18] sm:$0xff]
    %v2258 = vld [vmem:[#allocation4 + $0x20] sm:$0xff]
    %v2259 = vld [vmem:[#allocation4 + $0x28] sm:$0xff]
    %v2260 = vld [vmem:[#allocation4 + $0x30] sm:$0xff]
    %v2261 = vld [vmem:[#allocation4 + $0x38] sm:$0xff]
    %v2262 = vld [vmem:[#allocation4 + $0x40] sm:$0xff]
    %v2263 = vld [vmem:[#allocation4 + $0x48] sm:$0xff]
    %v2264 = vld [vmem:[#allocation4 + $0x50] sm:$0xff]
    %v2265 = vld [vmem:[#allocation4 + $0x58] sm:$0xff]
    %v2266 = vld [vmem:[#allocation4 + $0x60] sm:$0xff]
    %v2267 = vld [vmem:[#allocation4 + $0x68] sm:$0xff]
    %v2268 = vld [vmem:[#allocation4 + $0x70] sm:$0xff]
    %v2269 = vld [vmem:[#allocation4 + $0x78] sm:$0xff]
    %v2270 = vadd.f32 %v2254, 0.0
    %v2271 = vadd.f32 %v2255, 0.0
    %v2272 = vadd.f32 %v2256, 0.0
    %v2273 = vadd.f32 %v2257, 0.0
    %v2274 = vadd.f32 %v2258, 0.0
    %v2275 = vadd.f32 %v2259, 0.0
    %v2276 = vadd.f32 %v2260, 0.0
    %v2277 = vadd.f32 %v2261, 0.0
    %v2278 = vadd.f32 %v2262, 0.0
    %v2279 = vadd.f32 %v2263, 0.0
    %v2280 = vadd.f32 %v2264, 0.0
    %v2281 = vadd.f32 %v2265, 0.0
    %v2282 = vadd.f32 %v2266, 0.0
    %v2283 = vadd.f32 %v2267, 0.0
    %v2284 = vadd.f32 %v2268, 0.0
    %v2285 = vadd.f32 %v2269, 0.0
    %v2286 = vmul.f32 %v2270, 0.5
    %v2287 = vmul.f32 %v2271, 0.5
    %v2288 = vmul.f32 %v2272, 0.5
    %v2289 = vmul.f32 %v2273, 0.5
    %v2290 = vmul.f32 %v2274, 0.5
    %v2291 = vmul.f32 %v2275, 0.5
    %v2292 = vmul.f32 %v2276, 0.5
    %v2293 = vmul.f32 %v2277, 0.5
    %v2294 = vmul.f32 %v2278, 0.5
    %v2295 = vmul.f32 %v2279, 0.5
    %v2296 = vmul.f32 %v2280, 0.5
    %v2297 = vmul.f32 %v2281, 0.5
    %v2298 = vmul.f32 %v2282, 0.5
    %v2299 = vmul.f32 %v2283, 0.5
    %v2300 = vmul.f32 %v2284, 0.5
    %v2301 = vmul.f32 %v2285, 0.5
    %vm2302 = vcmp.ge.f32.partialorder %v2286, 1.0
    %vm2303 = vcmp.ge.f32.partialorder %v2287, 1.0
    %vm2304 = vcmp.ge.f32.partialorder %v2288, 1.0
    %vm2305 = vcmp.ge.f32.partialorder %v2289, 1.0
    %vm2306 = vcmp.ge.f32.partialorder %v2290, 1.0
    %vm2307 = vcmp.ge.f32.partialorder %v2291, 1.0
    %vm2308 = vcmp.ge.f32.partialorder %v2292, 1.0
    %vm2309 = vcmp.ge.f32.partialorder %v2293, 1.0
    %vm2310 = vcmp.ge.f32.partialorder %v2294, 1.0
    %vm2311 = vcmp.ge.f32.partialorder %v2295, 1.0
    %vm2312 = vcmp.ge.f32.partialorder %v2296, 1.0
    %vm2313 = vcmp.ge.f32.partialorder %v2297, 1.0
    %vm2314 = vcmp.ge.f32.partialorder %v2298, 1.0
    %vm2315 = vcmp.ge.f32.partialorder %v2299, 1.0
    %vm2316 = vcmp.ge.f32.partialorder %v2300, 1.0
    %vm2317 = vcmp.ge.f32.partialorder %v2301, 1.0
    %v2318 = vsel %vm2302, 1, 0
    %v2319 = vsel %vm2303, 1, 0
    %v2320 = vsel %vm2304, 1, 0
    %v2321 = vsel %vm2305, 1, 0
    %v2322 = vsel %vm2306, 1, 0
    %v2323 = vsel %vm2307, 1, 0
    %v2324 = vsel %vm2308, 1, 0
    %v2325 = vsel %vm2309, 1, 0
    %v2326 = vsel %vm2310, 1, 0
    %v2327 = vsel %vm2311, 1, 0
    %v2328 = vsel %vm2312, 1, 0
    %v2329 = vsel %vm2313, 1, 0
    %v2330 = vsel %vm2314, 1, 0
    %v2331 = vsel %vm2315, 1, 0
    %v2332 = vsel %vm2316, 1, 0
    %v2333 = vsel %vm2317, 1, 0
    %v2334 = vcvt.s32.f32 %v2318
    %v2335 = vcvt.s32.f32 %v2319
    %v2336 = vcvt.s32.f32 %v2320
    %v2337 = vcvt.s32.f32 %v2321
    %v2338 = vcvt.s32.f32 %v2322
    %v2339 = vcvt.s32.f32 %v2323
    %v2340 = vcvt.s32.f32 %v2324
    %v2341 = vcvt.s32.f32 %v2325
    %v2342 = vcvt.s32.f32 %v2326
    %v2343 = vcvt.s32.f32 %v2327
    %v2344 = vcvt.s32.f32 %v2328
    %v2345 = vcvt.s32.f32 %v2329
    %v2346 = vcvt.s32.f32 %v2330
    %v2347 = vcvt.s32.f32 %v2331
    %v2348 = vcvt.s32.f32 %v2332
    %v2349 = vcvt.s32.f32 %v2333
    %v2350 = vsub.f32 %v2286, %v2334
    %v2351 = vsub.f32 %v2287, %v2335
    %v2352 = vsub.f32 %v2288, %v2336
    %v2353 = vsub.f32 %v2289, %v2337
    %v2354 = vsub.f32 %v2290, %v2338
    %v2355 = vsub.f32 %v2291, %v2339
    %v2356 = vsub.f32 %v2292, %v2340
    %v2357 = vsub.f32 %v2293, %v2341
    %v2358 = vsub.f32 %v2294, %v2342
    %v2359 = vsub.f32 %v2295, %v2343
    %v2360 = vsub.f32 %v2296, %v2344
    %v2361 = vsub.f32 %v2297, %v2345
    %v2362 = vsub.f32 %v2298, %v2346
    %v2363 = vsub.f32 %v2299, %v2347
    %v2364 = vsub.f32 %v2300, %v2348
    %v2365 = vsub.f32 %v2301, %v2349
    %2366 = vst.msk [vmem:[#allocation5] sm:$0xff] %vm1713, %v2334
    %2367 = vst.msk [vmem:[#allocation5 + $0x8] sm:$0xff] %vm1713, %v2335
    %2368 = vst.msk [vmem:[#allocation5 + $0x10] sm:$0xff] %vm1713, %v2336
    %2369 = vst.msk [vmem:[#allocation5 + $0x18] sm:$0xff] %vm1713, %v2337
    %2370 = vst.msk [vmem:[#allocation5 + $0x20] sm:$0xff] %vm1713, %v2338
    %2371 = vst.msk [vmem:[#allocation5 + $0x28] sm:$0xff] %vm1713, %v2339
    %2372 = vst.msk [vmem:[#allocation5 + $0x30] sm:$0xff] %vm1713, %v2340
    %2373 = vst.msk [vmem:[#allocation5 + $0x38] sm:$0xff] %vm1713, %v2341
    %2374 = vst.msk [vmem:[#allocation5 + $0x40] sm:$0xff] %vm1713, %v2342
    %2375 = vst.msk [vmem:[#allocation5 + $0x48] sm:$0xff] %vm1713, %v2343
    %2376 = vst.msk [vmem:[#allocation5 + $0x50] sm:$0xff] %vm1713, %v2344
    %2377 = vst.msk [vmem:[#allocation5 + $0x58] sm:$0xff] %vm1713, %v2345
    %2378 = vst.msk [vmem:[#allocation5 + $0x60] sm:$0xff] %vm1713, %v2346
    %2379 = vst.msk [vmem:[#allocation5 + $0x68] sm:$0xff] %vm1713, %v2347
    %2380 = vst.msk [vmem:[#allocation5 + $0x70] sm:$0xff] %vm1713, %v2348
    %2381 = vst.msk [vmem:[#allocation5 + $0x78] sm:$0xff] %vm1713, %v2349
    %s2382 = scalar_lea.vmem [#allocation4], 128
    %v2383 = vld [vmem:[%s2382] sm:$0xff]
    %v2384 = vld [vmem:[%s2382 + $0x8] sm:$0xff]
    %v2385 = vld [vmem:[%s2382 + $0x10] sm:$0xff]
    %v2386 = vld [vmem:[%s2382 + $0x18] sm:$0xff]
    %v2387 = vld [vmem:[%s2382 + $0x20] sm:$0xff]
    %v2388 = vld [vmem:[%s2382 + $0x28] sm:$0xff]
    %v2389 = vld [vmem:[%s2382 + $0x30] sm:$0xff]
    %v2390 = vld [vmem:[%s2382 + $0x38] sm:$0xff]
    %v2391 = vld [vmem:[%s2382 + $0x40] sm:$0xff]
    %v2392 = vld [vmem:[%s2382 + $0x48] sm:$0xff]
    %v2393 = vld [vmem:[%s2382 + $0x50] sm:$0xff]
    %v2394 = vld [vmem:[%s2382 + $0x58] sm:$0xff]
    %v2395 = vld [vmem:[%s2382 + $0x60] sm:$0xff]
    %v2396 = vld [vmem:[%s2382 + $0x68] sm:$0xff]
    %v2397 = vld [vmem:[%s2382 + $0x70] sm:$0xff]
    %v2398 = vld [vmem:[%s2382 + $0x78] sm:$0xff]
    %v2399 = vadd.f32 %v2350, %v2383
    %v2400 = vadd.f32 %v2351, %v2384
    %v2401 = vadd.f32 %v2352, %v2385
    %v2402 = vadd.f32 %v2353, %v2386
    %v2403 = vadd.f32 %v2354, %v2387
    %v2404 = vadd.f32 %v2355, %v2388
    %v2405 = vadd.f32 %v2356, %v2389
    %v2406 = vadd.f32 %v2357, %v2390
    %v2407 = vadd.f32 %v2358, %v2391
    %v2408 = vadd.f32 %v2359, %v2392
    %v2409 = vadd.f32 %v2360, %v2393
    %v2410 = vadd.f32 %v2361, %v2394
    %v2411 = vadd.f32 %v2362, %v2395
    %v2412 = vadd.f32 %v2363, %v2396
    %v2413 = vadd.f32 %v2364, %v2397
    %v2414 = vadd.f32 %v2365, %v2398
    %v2415 = vmul.f32 %v2399, 0.5
    %v2416 = vmul.f32 %v2400, 0.5
    %v2417 = vmul.f32 %v2401, 0.5
    %v2418 = vmul.f32 %v2402, 0.5
    %v2419 = vmul.f32 %v2403, 0.5
    %v2420 = vmul.f32 %v2404, 0.5
    %v2421 = vmul.f32 %v2405, 0.5
    %v2422 = vmul.f32 %v2406, 0.5
    %v2423 = vmul.f32 %v2407, 0.5
    %v2424 = vmul.f32 %v2408, 0.5
    %v2425 = vmul.f32 %v2409, 0.5
    %v2426 = vmul.f32 %v2410, 0.5
    %v2427 = vmul.f32 %v2411, 0.5
    %v2428 = vmul.f32 %v2412, 0.5
    %v2429 = vmul.f32 %v2413, 0.5
    %v2430 = vmul.f32 %v2414, 0.5
    %vm2431 = vcmp.ge.f32.partialorder %v2415, 1.0
    %vm2432 = vcmp.ge.f32.partialorder %v2416, 1.0
    %vm2433 = vcmp.ge.f32.partialorder %v2417, 1.0
    %vm2434 = vcmp.ge.f32.partialorder %v2418, 1.0
    %vm2435 = vcmp.ge.f32.partialorder %v2419, 1.0
    %vm2436 = vcmp.ge.f32.partialorder %v2420, 1.0
    %vm2437 = vcmp.ge.f32.partialorder %v2421, 1.0
    %vm2438 = vcmp.ge.f32.partialorder %v2422, 1.0
    %vm2439 = vcmp.ge.f32.partialorder %v2423, 1.0
    %vm2440 = vcmp.ge.f32.partialorder %v2424, 1.0
    %vm2441 = vcmp.ge.f32.partialorder %v2425, 1.0
    %vm2442 = vcmp.ge.f32.partialorder %v2426, 1.0
    %vm2443 = vcmp.ge.f32.partialorder %v2427, 1.0
    %vm2444 = vcmp.ge.f32.partialorder %v2428, 1.0
    %vm2445 = vcmp.ge.f32.partialorder %v2429, 1.0
    %vm2446 = vcmp.ge.f32.partialorder %v2430, 1.0
    %v2447 = vsel %vm2431, 1, 0
    %v2448 = vsel %vm2432, 1, 0
    %v2449 = vsel %vm2433, 1, 0
    %v2450 = vsel %vm2434, 1, 0
    %v2451 = vsel %vm2435, 1, 0
    %v2452 = vsel %vm2436, 1, 0
    %v2453 = vsel %vm2437, 1, 0
    %v2454 = vsel %vm2438, 1, 0
    %v2455 = vsel %vm2439, 1, 0
    %v2456 = vsel %vm2440, 1, 0
    %v2457 = vsel %vm2441, 1, 0
    %v2458 = vsel %vm2442, 1, 0
    %v2459 = vsel %vm2443, 1, 0
    %v2460 = vsel %vm2444, 1, 0
    %v2461 = vsel %vm2445, 1, 0
    %v2462 = vsel %vm2446, 1, 0
    %v2463 = vcvt.s32.f32 %v2447
    %v2464 = vcvt.s32.f32 %v2448
    %v2465 = vcvt.s32.f32 %v2449
    %v2466 = vcvt.s32.f32 %v2450
    %v2467 = vcvt.s32.f32 %v2451
    %v2468 = vcvt.s32.f32 %v2452
    %v2469 = vcvt.s32.f32 %v2453
    %v2470 = vcvt.s32.f32 %v2454
    %v2471 = vcvt.s32.f32 %v2455
    %v2472 = vcvt.s32.f32 %v2456
    %v2473 = vcvt.s32.f32 %v2457
    %v2474 = vcvt.s32.f32 %v2458
    %v2475 = vcvt.s32.f32 %v2459
    %v2476 = vcvt.s32.f32 %v2460
    %v2477 = vcvt.s32.f32 %v2461
    %v2478 = vcvt.s32.f32 %v2462
    %v2479 = vsub.f32 %v2415, %v2463
    %v2480 = vsub.f32 %v2416, %v2464
    %v2481 = vsub.f32 %v2417, %v2465
    %v2482 = vsub.f32 %v2418, %v2466
    %v2483 = vsub.f32 %v2419, %v2467
    %v2484 = vsub.f32 %v2420, %v2468
    %v2485 = vsub.f32 %v2421, %v2469
    %v2486 = vsub.f32 %v2422, %v2470
    %v2487 = vsub.f32 %v2423, %v2471
    %v2488 = vsub.f32 %v2424, %v2472
    %v2489 = vsub.f32 %v2425, %v2473
    %v2490 = vsub.f32 %v2426, %v2474
    %v2491 = vsub.f32 %v2427, %v2475
    %v2492 = vsub.f32 %v2428, %v2476
    %v2493 = vsub.f32 %v2429, %v2477
    %v2494 = vsub.f32 %v2430, %v2478
    %s2495 = scalar_lea.vmem [#allocation5], 128
    %2496 = vst.msk [vmem:[%s2495] sm:$0xff] %vm1713, %v2463
    %2497 = vst.msk [vmem:[%s2495 + $0x8] sm:$0xff] %vm1713, %v2464
    %2498 = vst.msk [vmem:[%s2495 + $0x10] sm:$0xff] %vm1713, %v2465
    %2499 = vst.msk [vmem:[%s2495 + $0x18] sm:$0xff] %vm1713, %v2466
    %2500 = vst.msk [vmem:[%s2495 + $0x20] sm:$0xff] %vm1713, %v2467
    %2501 = vst.msk [vmem:[%s2495 + $0x28] sm:$0xff] %vm1713, %v2468
    %2502 = vst.msk [vmem:[%s2495 + $0x30] sm:$0xff] %vm1713, %v2469
    %2503 = vst.msk [vmem:[%s2495 + $0x38] sm:$0xff] %vm1713, %v2470
    %2504 = vst.msk [vmem:[%s2495 + $0x40] sm:$0xff] %vm1713, %v2471
    %2505 = vst.msk [vmem:[%s2495 + $0x48] sm:$0xff] %vm1713, %v2472
    %2506 = vst.msk [vmem:[%s2495 + $0x50] sm:$0xff] %vm1713, %v2473
    %2507 = vst.msk [vmem:[%s2495 + $0x58] sm:$0xff] %vm1713, %v2474
    %2508 = vst.msk [vmem:[%s2495 + $0x60] sm:$0xff] %vm1713, %v2475
    %2509 = vst.msk [vmem:[%s2495 + $0x68] sm:$0xff] %vm1713, %v2476
    %2510 = vst.msk [vmem:[%s2495 + $0x70] sm:$0xff] %vm1713, %v2477
    %2511 = vst.msk [vmem:[%s2495 + $0x78] sm:$0xff] %vm1713, %v2478
    %s2512 = scalar_lea.vmem [#allocation4], 256
    %v2513 = vld [vmem:[%s2512] sm:$0xff]
    %v2514 = vld [vmem:[%s2512 + $0x8] sm:$0xff]
    %v2515 = vld [vmem:[%s2512 + $0x10] sm:$0xff]
    %v2516 = vld [vmem:[%s2512 + $0x18] sm:$0xff]
    %v2517 = vld [vmem:[%s2512 + $0x20] sm:$0xff]
    %v2518 = vld [vmem:[%s2512 + $0x28] sm:$0xff]
    %v2519 = vld [vmem:[%s2512 + $0x30] sm:$0xff]
    %v2520 = vld [vmem:[%s2512 + $0x38] sm:$0xff]
    %v2521 = vld [vmem:[%s2512 + $0x40] sm:$0xff]
    %v2522 = vld [vmem:[%s2512 + $0x48] sm:$0xff]
    %v2523 = vld [vmem:[%s2512 + $0x50] sm:$0xff]
    %v2524 = vld [vmem:[%s2512 + $0x58] sm:$0xff]
    %v2525 = vld [vmem:[%s2512 + $0x60] sm:$0xff]
    %v2526 = vld [vmem:[%s2512 + $0x68] sm:$0xff]
    %v2527 = vld [vmem:[%s2512 + $0x70] sm:$0xff]
    %v2528 = vld [vmem:[%s2512 + $0x78] sm:$0xff]
    %v2529 = vadd.f32 %v2479, %v2513
    %v2530 = vadd.f32 %v2480, %v2514
    %v2531 = vadd.f32 %v2481, %v2515
    %v2532 = vadd.f32 %v2482, %v2516
    %v2533 = vadd.f32 %v2483, %v2517
    %v2534 = vadd.f32 %v2484, %v2518
    %v2535 = vadd.f32 %v2485, %v2519
    %v2536 = vadd.f32 %v2486, %v2520
    %v2537 = vadd.f32 %v2487, %v2521
    %v2538 = vadd.f32 %v2488, %v2522
    %v2539 = vadd.f32 %v2489, %v2523
    %v2540 = vadd.f32 %v2490, %v2524
    %v2541 = vadd.f32 %v2491, %v2525
    %v2542 = vadd.f32 %v2492, %v2526
    %v2543 = vadd.f32 %v2493, %v2527
    %v2544 = vadd.f32 %v2494, %v2528
    %v2545 = vmul.f32 %v2529, 0.5
    %v2546 = vmul.f32 %v2530, 0.5
    %v2547 = vmul.f32 %v2531, 0.5
    %v2548 = vmul.f32 %v2532, 0.5
    %v2549 = vmul.f32 %v2533, 0.5
    %v2550 = vmul.f32 %v2534, 0.5
    %v2551 = vmul.f32 %v2535, 0.5
    %v2552 = vmul.f32 %v2536, 0.5
    %v2553 = vmul.f32 %v2537, 0.5
    %v2554 = vmul.f32 %v2538, 0.5
    %v2555 = vmul.f32 %v2539, 0.5
    %v2556 = vmul.f32 %v2540, 0.5
    %v2557 = vmul.f32 %v2541, 0.5
    %v2558 = vmul.f32 %v2542, 0.5
    %v2559 = vmul.f32 %v2543, 0.5
    %v2560 = vmul.f32 %v2544, 0.5
    %vm2561 = vcmp.ge.f32.partialorder %v2545, 1.0
    %vm2562 = vcmp.ge.f32.partialorder %v2546, 1.0
    %vm2563 = vcmp.ge.f32.partialorder %v2547, 1.0
    %vm2564 = vcmp.ge.f32.partialorder %v2548, 1.0
    %vm2565 = vcmp.ge.f32.partialorder %v2549, 1.0
    %vm2566 = vcmp.ge.f32.partialorder %v2550, 1.0
    %vm2567 = vcmp.ge.f32.partialorder %v2551, 1.0
    %vm2568 = vcmp.ge.f32.partialorder %v2552, 1.0
    %vm2569 = vcmp.ge.f32.partialorder %v2553, 1.0
    %vm2570 = vcmp.ge.f32.partialorder %v2554, 1.0
    %vm2571 = vcmp.ge.f32.partialorder %v2555, 1.0
    %vm2572 = vcmp.ge.f32.partialorder %v2556, 1.0
    %vm2573 = vcmp.ge.f32.partialorder %v2557, 1.0
    %vm2574 = vcmp.ge.f32.partialorder %v2558, 1.0
    %vm2575 = vcmp.ge.f32.partialorder %v2559, 1.0
    %vm2576 = vcmp.ge.f32.partialorder %v2560, 1.0
    %v2577 = vsel %vm2561, 1, 0
    %v2578 = vsel %vm2562, 1, 0
    %v2579 = vsel %vm2563, 1, 0
    %v2580 = vsel %vm2564, 1, 0
    %v2581 = vsel %vm2565, 1, 0
    %v2582 = vsel %vm2566, 1, 0
    %v2583 = vsel %vm2567, 1, 0
    %v2584 = vsel %vm2568, 1, 0
    %v2585 = vsel %vm2569, 1, 0
    %v2586 = vsel %vm2570, 1, 0
    %v2587 = vsel %vm2571, 1, 0
    %v2588 = vsel %vm2572, 1, 0
    %v2589 = vsel %vm2573, 1, 0
    %v2590 = vsel %vm2574, 1, 0
    %v2591 = vsel %vm2575, 1, 0
    %v2592 = vsel %vm2576, 1, 0
    %v2593 = vcvt.s32.f32 %v2577
    %v2594 = vcvt.s32.f32 %v2578
    %v2595 = vcvt.s32.f32 %v2579
    %v2596 = vcvt.s32.f32 %v2580
    %v2597 = vcvt.s32.f32 %v2581
    %v2598 = vcvt.s32.f32 %v2582
    %v2599 = vcvt.s32.f32 %v2583
    %v2600 = vcvt.s32.f32 %v2584
    %v2601 = vcvt.s32.f32 %v2585
    %v2602 = vcvt.s32.f32 %v2586
    %v2603 = vcvt.s32.f32 %v2587
    %v2604 = vcvt.s32.f32 %v2588
    %v2605 = vcvt.s32.f32 %v2589
    %v2606 = vcvt.s32.f32 %v2590
    %v2607 = vcvt.s32.f32 %v2591
    %v2608 = vcvt.s32.f32 %v2592
    %v2609 = vsub.f32 %v2545, %v2593
    %v2610 = vsub.f32 %v2546, %v2594
    %v2611 = vsub.f32 %v2547, %v2595
    %v2612 = vsub.f32 %v2548, %v2596
    %v2613 = vsub.f32 %v2549, %v2597
    %v2614 = vsub.f32 %v2550, %v2598
    %v2615 = vsub.f32 %v2551, %v2599
    %v2616 = vsub.f32 %v2552, %v2600
    %v2617 = vsub.f32 %v2553, %v2601
    %v2618 = vsub.f32 %v2554, %v2602
    %v2619 = vsub.f32 %v2555, %v2603
    %v2620 = vsub.f32 %v2556, %v2604
    %v2621 = vsub.f32 %v2557, %v2605
    %v2622 = vsub.f32 %v2558, %v2606
    %v2623 = vsub.f32 %v2559, %v2607
    %v2624 = vsub.f32 %v2560, %v2608
    %s2625 = scalar_lea.vmem [#allocation5], 256
    %2626 = vst.msk [vmem:[%s2625] sm:$0xff] %vm1713, %v2593
    %2627 = vst.msk [vmem:[%s2625 + $0x8] sm:$0xff] %vm1713, %v2594
    %2628 = vst.msk [vmem:[%s2625 + $0x10] sm:$0xff] %vm1713, %v2595
    %2629 = vst.msk [vmem:[%s2625 + $0x18] sm:$0xff] %vm1713, %v2596
    %2630 = vst.msk [vmem:[%s2625 + $0x20] sm:$0xff] %vm1713, %v2597
    %2631 = vst.msk [vmem:[%s2625 + $0x28] sm:$0xff] %vm1713, %v2598
    %2632 = vst.msk [vmem:[%s2625 + $0x30] sm:$0xff] %vm1713, %v2599
    %2633 = vst.msk [vmem:[%s2625 + $0x38] sm:$0xff] %vm1713, %v2600
    %2634 = vst.msk [vmem:[%s2625 + $0x40] sm:$0xff] %vm1713, %v2601
    %2635 = vst.msk [vmem:[%s2625 + $0x48] sm:$0xff] %vm1713, %v2602
    %2636 = vst.msk [vmem:[%s2625 + $0x50] sm:$0xff] %vm1713, %v2603
    %2637 = vst.msk [vmem:[%s2625 + $0x58] sm:$0xff] %vm1713, %v2604
    %2638 = vst.msk [vmem:[%s2625 + $0x60] sm:$0xff] %vm1713, %v2605
    %2639 = vst.msk [vmem:[%s2625 + $0x68] sm:$0xff] %vm1713, %v2606
    %2640 = vst.msk [vmem:[%s2625 + $0x70] sm:$0xff] %vm1713, %v2607
    %2641 = vst.msk [vmem:[%s2625 + $0x78] sm:$0xff] %vm1713, %v2608
    %s2642 = scalar_lea.vmem [#allocation4], 384
    %v2643 = vld [vmem:[%s2642] sm:$0xff]
    %v2644 = vld [vmem:[%s2642 + $0x8] sm:$0xff]
    %v2645 = vld [vmem:[%s2642 + $0x10] sm:$0xff]
    %v2646 = vld [vmem:[%s2642 + $0x18] sm:$0xff]
    %v2647 = vld [vmem:[%s2642 + $0x20] sm:$0xff]
    %v2648 = vld [vmem:[%s2642 + $0x28] sm:$0xff]
    %v2649 = vld [vmem:[%s2642 + $0x30] sm:$0xff]
    %v2650 = vld [vmem:[%s2642 + $0x38] sm:$0xff]
    %v2651 = vld [vmem:[%s2642 + $0x40] sm:$0xff]
    %v2652 = vld [vmem:[%s2642 + $0x48] sm:$0xff]
    %v2653 = vld [vmem:[%s2642 + $0x50] sm:$0xff]
    %v2654 = vld [vmem:[%s2642 + $0x58] sm:$0xff]
    %v2655 = vld [vmem:[%s2642 + $0x60] sm:$0xff]
    %v2656 = vld [vmem:[%s2642 + $0x68] sm:$0xff]
    %v2657 = vld [vmem:[%s2642 + $0x70] sm:$0xff]
    %v2658 = vld [vmem:[%s2642 + $0x78] sm:$0xff]
    %v2659 = vadd.f32 %v2609, %v2643
    %v2660 = vadd.f32 %v2610, %v2644
    %v2661 = vadd.f32 %v2611, %v2645
    %v2662 = vadd.f32 %v2612, %v2646
    %v2663 = vadd.f32 %v2613, %v2647
    %v2664 = vadd.f32 %v2614, %v2648
    %v2665 = vadd.f32 %v2615, %v2649
    %v2666 = vadd.f32 %v2616, %v2650
    %v2667 = vadd.f32 %v2617, %v2651
    %v2668 = vadd.f32 %v2618, %v2652
    %v2669 = vadd.f32 %v2619, %v2653
    %v2670 = vadd.f32 %v2620, %v2654
    %v2671 = vadd.f32 %v2621, %v2655
    %v2672 = vadd.f32 %v2622, %v2656
    %v2673 = vadd.f32 %v2623, %v2657
    %v2674 = vadd.f32 %v2624, %v2658
    %v2675 = vmul.f32 %v2659, 0.5
    %v2676 = vmul.f32 %v2660, 0.5
    %v2677 = vmul.f32 %v2661, 0.5
    %v2678 = vmul.f32 %v2662, 0.5
    %v2679 = vmul.f32 %v2663, 0.5
    %v2680 = vmul.f32 %v2664, 0.5
    %v2681 = vmul.f32 %v2665, 0.5
    %v2682 = vmul.f32 %v2666, 0.5
    %v2683 = vmul.f32 %v2667, 0.5
    %v2684 = vmul.f32 %v2668, 0.5
    %v2685 = vmul.f32 %v2669, 0.5
    %v2686 = vmul.f32 %v2670, 0.5
    %v2687 = vmul.f32 %v2671, 0.5
    %v2688 = vmul.f32 %v2672, 0.5
    %v2689 = vmul.f32 %v2673, 0.5
    %v2690 = vmul.f32 %v2674, 0.5
    %vm2691 = vcmp.ge.f32.partialorder %v2675, 1.0
    %vm2692 = vcmp.ge.f32.partialorder %v2676, 1.0
    %vm2693 = vcmp.ge.f32.partialorder %v2677, 1.0
    %vm2694 = vcmp.ge.f32.partialorder %v2678, 1.0
    %vm2695 = vcmp.ge.f32.partialorder %v2679, 1.0
    %vm2696 = vcmp.ge.f32.partialorder %v2680, 1.0
    %vm2697 = vcmp.ge.f32.partialorder %v2681, 1.0
    %vm2698 = vcmp.ge.f32.partialorder %v2682, 1.0
    %vm2699 = vcmp.ge.f32.partialorder %v2683, 1.0
    %vm2700 = vcmp.ge.f32.partialorder %v2684, 1.0
    %vm2701 = vcmp.ge.f32.partialorder %v2685, 1.0
    %vm2702 = vcmp.ge.f32.partialorder %v2686, 1.0
    %vm2703 = vcmp.ge.f32.partialorder %v2687, 1.0
    %vm2704 = vcmp.ge.f32.partialorder %v2688, 1.0
    %vm2705 = vcmp.ge.f32.partialorder %v2689, 1.0
    %vm2706 = vcmp.ge.f32.partialorder %v2690, 1.0
    %v2707 = vsel %vm2691, 1, 0
    %v2708 = vsel %vm2692, 1, 0
    %v2709 = vsel %vm2693, 1, 0
    %v2710 = vsel %vm2694, 1, 0
    %v2711 = vsel %vm2695, 1, 0
    %v2712 = vsel %vm2696, 1, 0
    %v2713 = vsel %vm2697, 1, 0
    %v2714 = vsel %vm2698, 1, 0
    %v2715 = vsel %vm2699, 1, 0
    %v2716 = vsel %vm2700, 1, 0
    %v2717 = vsel %vm2701, 1, 0
    %v2718 = vsel %vm2702, 1, 0
    %v2719 = vsel %vm2703, 1, 0
    %v2720 = vsel %vm2704, 1, 0
    %v2721 = vsel %vm2705, 1, 0
    %v2722 = vsel %vm2706, 1, 0
    %v2723 = vcvt.s32.f32 %v2707
    %v2724 = vcvt.s32.f32 %v2708
    %v2725 = vcvt.s32.f32 %v2709
    %v2726 = vcvt.s32.f32 %v2710
    %v2727 = vcvt.s32.f32 %v2711
    %v2728 = vcvt.s32.f32 %v2712
    %v2729 = vcvt.s32.f32 %v2713
    %v2730 = vcvt.s32.f32 %v2714
    %v2731 = vcvt.s32.f32 %v2715
    %v2732 = vcvt.s32.f32 %v2716
    %v2733 = vcvt.s32.f32 %v2717
    %v2734 = vcvt.s32.f32 %v2718
    %v2735 = vcvt.s32.f32 %v2719
    %v2736 = vcvt.s32.f32 %v2720
    %v2737 = vcvt.s32.f32 %v2721
    %v2738 = vcvt.s32.f32 %v2722
    %s2739 = scalar_lea.vmem [#allocation5], 384
    %2740 = vst.msk [vmem:[%s2739] sm:$0xff] %vm1713, %v2723
    %2741 = vst.msk [vmem:[%s2739 + $0x8] sm:$0xff] %vm1713, %v2724
    %2742 = vst.msk [vmem:[%s2739 + $0x10] sm:$0xff] %vm1713, %v2725
    %2743 = vst.msk [vmem:[%s2739 + $0x18] sm:$0xff] %vm1713, %v2726
    %2744 = vst.msk [vmem:[%s2739 + $0x20] sm:$0xff] %vm1713, %v2727
    %2745 = vst.msk [vmem:[%s2739 + $0x28] sm:$0xff] %vm1713, %v2728
    %2746 = vst.msk [vmem:[%s2739 + $0x30] sm:$0xff] %vm1713, %v2729
    %2747 = vst.msk [vmem:[%s2739 + $0x38] sm:$0xff] %vm1713, %v2730
    %2748 = vst.msk [vmem:[%s2739 + $0x40] sm:$0xff] %vm1713, %v2731
    %2749 = vst.msk [vmem:[%s2739 + $0x48] sm:$0xff] %vm1713, %v2732
    %2750 = vst.msk [vmem:[%s2739 + $0x50] sm:$0xff] %vm1713, %v2733
    %2751 = vst.msk [vmem:[%s2739 + $0x58] sm:$0xff] %vm1713, %v2734
    %2752 = vst.msk [vmem:[%s2739 + $0x60] sm:$0xff] %vm1713, %v2735
    %2753 = vst.msk [vmem:[%s2739 + $0x68] sm:$0xff] %vm1713, %v2736
    %2754 = vst.msk [vmem:[%s2739 + $0x70] sm:$0xff] %vm1713, %v2737
    %2755 = vst.msk [vmem:[%s2739 + $0x78] sm:$0xff] %vm1713, %v2738
    // Predicated region
    $region14: #{multi_head_attention.5} parent=1 // pred_check
      _
    $region15: #{multi_head_attention.5} parent=1 // pred_check_branch
      %2757 = sbr.rel (0) target = $region17
    $region16: #{multi_head_attention.5} parent=1 // pred_region
      %2759 = vsyncadd [#allocation6], 0
      %s2760 = sshll.u32 [#allocation5], 4
      %s2761 = int_to_ptr.vmem [resolvable:$true] %s2760
      %s2762 = sshll.u32 %s3, 4
      %s2763 = int_to_ptr.hbm [resolvable:$true] %s2762
      %2768 = dma.vmem_to_hbm [thread:$0]  %s2761, 8192, %s2763, [#allocation6], 128, 128, 8
    $region17: #{multi_head_attention.5} parent=1 // pred_fallthru
      _
    // Predicated region
    $region18: #{multi_head_attention.5} parent=1 // pred_check
      _
    $region19: #{multi_head_attention.5} parent=1 // pred_check_branch
      %2770 = sbr.rel (0) target = $region21
    $region20: #{multi_head_attention.5} parent=1 // pred_region
      %2772 = dma.done [#allocation6], 8192
    $region21: #{multi_head_attention.5} parent=1 // pred_fallthru
      _
    %2773 = vsyncpa [#allocation6], 1

</llo_original>
